<compile_context>
chip_gen: v7x
topology: tpu7x:2x2x1
jax: 0.10.0
libtpu: 0.0.40
codegen_flags: <defaults>
</compile_context>

<pallas_src>
import functools

import jax
import jax.numpy as jnp
from jax import lax
from jax.experimental import pallas as pl
from jax.experimental.pallas import tpu as pltpu


# ---------------------------------------------------------------------------
# In-kernel helpers
# ---------------------------------------------------------------------------

def _zero_border(xpad_ref, H, W, C):
    """Zero only the 1-pixel halo border of the (H+2, W+2, C) scratch."""
    dt = xpad_ref.dtype
    zrow = jnp.zeros((1, W + 2, C), dt)
    zcol = jnp.zeros((H, 1, C), dt)
    xpad_ref[0:1, :, :] = zrow
    xpad_ref[H + 1:H + 2, :, :] = zrow
    xpad_ref[1:H + 1, 0:1, :] = zcol
    xpad_ref[1:H + 1, W + 1:W + 2, :] = zcol


def _conv3x3_acc(xpad_ref, w_ref, H, W, Cin):
    """3x3 / stride-1 / pad-1 conv on the padded VMEM buffer.

    9 accumulating MXU matmuls on shifted views of xpad; no im2col patch
    matrix is materialized and the f32 accumulator is an SSA value.
    Weight rows are ordered (dy, dx, cin) to match w.reshape(9*Cin, Cout).
    """
    acc = None
    for t in range(9):
        dy, dx = divmod(t, 3)
        lhs = xpad_ref[dy:dy + H, dx:dx + W, :].reshape(H * W, Cin)
        d = jnp.dot(lhs, w_ref[t * Cin:(t + 1) * Cin, :],
                    preferred_element_type=jnp.float32)
        acc = d if acc is None else acc + d
    return acc


def _resblock_kernel(p0_ref, wf_ref, bf_ref, s1_ref,
                     w2_ref, b2_ref, s2_ref,
                     w3_ref, b3_ref, s3_ref,
                     o_ref, xpad_ref, *, H, W, F):
    """Whole ResBlock for one batch element, entirely in VMEM."""
    HW = H * W
    cdt = xpad_ref.dtype

    # ---- conv1 + skip conv fused along Cout: one (HW,K0P)x(K0P,2F) matmul.
    acc0 = jnp.dot(p0_ref[0], wf_ref[...], preferred_element_type=jnp.float32)
    acc0 = acc0 + bf_ref[...].astype(jnp.float32)
    h = jnp.maximum(acc0[:, :F], 0.0) + s1_ref[...].astype(jnp.float32)
    skip = acc0[:, F:]                      # skip path: stays f32, stays in VMEM

    # Zero only the halo border, once per grid step (interior is fully
    # overwritten before each conv; border persists for conv3 as well).
    _zero_border(xpad_ref, H, W, F)

    # ---- conv2 (+ bias, ReLU, folded-BN shift)
    xpad_ref[1:H + 1, 1:W + 1, :] = h.reshape(H, W, F).astype(cdt)
    acc = _conv3x3_acc(xpad_ref, w2_ref, H, W, F)
    h = (jnp.maximum(acc + b2_ref[...].astype(jnp.float32), 0.0)
         + s2_ref[...].astype(jnp.float32))

    # ---- conv3 (+ bias, ReLU, folded-BN shift) + residual add
    xpad_ref[1:H + 1, 1:W + 1, :] = h.reshape(H, W, F).astype(cdt)
    acc = _conv3x3_acc(xpad_ref, w3_ref, H, W, F)
    y = (jnp.maximum(acc + b3_ref[...].astype(jnp.float32), 0.0)
         + s3_ref[...].astype(jnp.float32) + skip)

    o_ref[0] = y.astype(o_ref.dtype)        # (HW, F), lane-dense f32 output


# ---------------------------------------------------------------------------
# Forward pass (mirrors ResBlock.forward; NCHW in, NCHW out like PyTorch)
# ---------------------------------------------------------------------------

def resblock_forward(prep, x_nchw, *, compute_dtype=jnp.bfloat16):
    B, Cin, H, W = x_nchw.shape
    F = prep['filters']
    K0P = prep['w_first'].shape[0]
    k0 = 9 * Cin

    x = jnp.transpose(x_nchw, (0, 2, 3, 1))            # -> NHWC, f32
    # First-layer im2col in plain XLA (tiny: B*H*W x 9*Cin), zero-padded to a
    # lane-aligned K so the kernel's first conv is a single clean matmul.
    xp = jnp.pad(x, ((0, 0), (1, 1), (1, 1), (0, 0)))
    cols = [xp[:, dy:dy + H, dx:dx + W, :]
            for dy in range(3) for dx in range(3)]
    p0 = jnp.concatenate(cols, axis=-1).reshape(B, H * W, k0)
    p0 = jnp.pad(p0, ((0, 0), (0, 0), (0, K0P - k0))).astype(compute_dtype)

    kernel = functools.partial(_resblock_kernel, H=H, W=W, F=F)
    const2 = lambda i: (0, 0)
    out = pl.pallas_call(
        kernel,
        out_shape=jax.ShapeDtypeStruct((B, H * W, F), jnp.float32),
        grid=(B,),
        in_specs=[
            pl.BlockSpec((1, H * W, K0P), lambda i: (i, 0, 0)),
            pl.BlockSpec((K0P, 2 * F), const2),     # constant -> DMA'd once
            pl.BlockSpec((1, 2 * F), const2),
            pl.BlockSpec((1, F), const2),
            pl.BlockSpec((9 * F, F), const2),
            pl.BlockSpec((1, F), const2),
            pl.BlockSpec((1, F), const2),
            pl.BlockSpec((9 * F, F), const2),
            pl.BlockSpec((1, F), const2),
            pl.BlockSpec((1, F), const2),
        ],
        out_specs=pl.BlockSpec((1, H * W, F), lambda i: (i, 0, 0)),
        scratch_shapes=[pltpu.VMEM((H + 2, W + 2, F), compute_dtype)],
        compiler_params=pltpu.CompilerParams(
            dimension_semantics=("parallel",)),
    )(p0, prep['w_first'], prep['b_first'], prep['s1'],
      prep['w2'], prep['b2'], prep['s2'],
      prep['w3'], prep['b3'], prep['s3'])

    out = out.reshape(B, H, W, F)
    return jnp.transpose(out, (0, 3, 1, 2))             # -> NCHW


# ---------------------------------------------------------------------------
# Parameters (PyTorch-equivalent, eval mode) and host-side packing
# ---------------------------------------------------------------------------

def init_params(key, in_channel=4, filters=128):
    ks = iter(jax.random.split(key, 8))

    def conv_p(cin, cout):
        fan_in = cin * 9
        w = jax.random.normal(next(ks), (3, 3, cin, cout),
                              jnp.float32) / jnp.sqrt(fan_in)
        b = jax.random.normal(next(ks), (cout,), jnp.float32) * 0.05
        return w, b

    def bn_p(c):
        # nn.BatchNorm2d defaults, eval mode.
        return dict(gamma=jnp.ones((c,), jnp.float32),
                    beta=jnp.zeros((c,), jnp.float32),
                    mean=jnp.zeros((c,), jnp.float32),
                    var=jnp.ones((c,), jnp.float32),
                    eps=1e-5)

    return dict(
        skip=conv_p(in_channel, filters),
        c1=conv_p(in_channel, filters), bn1=bn_p(filters),
        c2=conv_p(filters, filters),    bn2=bn_p(filters),
        c3=conv_p(filters, filters),    bn3=bn_p(filters),
    )


def _fold_bn(conv, bn):
    # Module order is conv -> ReLU -> BN.  In eval mode
    #   BN(ReLU(z)) = ReLU(z)*scale + shift,  scale = gamma/sqrt(var+eps) > 0,
    # and for scale > 0:  ReLU(z)*scale == ReLU(z*scale)  ->  scale folds into
    # the conv weights & bias; shift is added after the ReLU in the kernel.
    w, b = conv
    scale = bn['gamma'] / jnp.sqrt(bn['var'] + bn['eps'])
    shift = bn['beta'] - bn['mean'] * scale
    return w * scale, b * scale, shift


def _im2col_w(w):
    # (3,3,Cin,Cout) -> (9*Cin, Cout); row order (dy, dx, cin) matches the
    # patch / shifted-view column order used in the kernel.
    return w.reshape(-1, w.shape[-1])


def prepare_params(params, compute_dtype=jnp.bfloat16):
    w1, b1, s1 = _fold_bn(params['c1'], params['bn1'])
    w2, b2, s2 = _fold_bn(params['c2'], params['bn2'])
    w3, b3, s3 = _fold_bn(params['c3'], params['bn3'])
    wsk, bsk = params['skip']
    F = wsk.shape[-1]
    cin = wsk.shape[2]
    k0 = 9 * cin
    k0p = max(128, -(-k0 // 128) * 128)     # lane-aligned K for the first conv

    # Fuse block-conv1 + skip conv along Cout (same input, same Cin),
    # zero-pad K rows to match the zero-padded im2col columns.
    w_first = jnp.concatenate([_im2col_w(w1), _im2col_w(wsk)], axis=-1)
    w_first = jnp.pad(w_first, ((0, k0p - k0), (0, 0)))
    b_first = jnp.concatenate([b1, bsk]).reshape(1, 2 * F)

    return dict(
        filters=F,
        w_first=w_first.astype(compute_dtype),
        b_first=b_first.astype(jnp.float32),
        s1=s1.reshape(1, F).astype(jnp.float32),
        w2=_im2col_w(w2).astype(compute_dtype),
        b2=b2.reshape(1, F).astype(jnp.float32),
        s2=s2.reshape(1, F).astype(jnp.float32),
        w3=_im2col_w(w3).astype(compute_dtype),
        b3=b3.reshape(1, F).astype(jnp.float32),
        s3=s3.reshape(1, F).astype(jnp.float32),
    )


def resblock_reference(params, x_nchw):
    """Pure-JAX f32 reference of the PyTorch module (eval mode)."""
    x = jnp.transpose(x_nchw, (0, 2, 3, 1))

    def conv(h, wb):
        w, b = wb
        y = lax.conv_general_dilated(
            h, w, window_strides=(1, 1), padding='SAME',
            dimension_numbers=('NHWC', 'HWIO', 'NHWC'))
        return y + b

    def bn(h, p):
        scale = p['gamma'] / jnp.sqrt(p['var'] + p['eps'])
        return (h - p['mean']) * scale + p['beta']

    h = bn(jax.nn.relu(conv(x, params['c1'])), params['bn1'])
    h = bn(jax.nn.relu(conv(h, params['c2'])), params['bn2'])
    h = bn(jax.nn.relu(conv(h, params['c3'])), params['bn3'])
    out = conv(x, params['skip']) + h
    return jnp.transpose(out, (0, 3, 1, 2))


# ---------------------------------------------------------------------------

if __name__ == "__main__":
    key = jax.random.PRNGKey(0)
    kp, kx = jax.random.split(key)

    B, C, H, W = 2, 4, 16, 16          # NCHW input, like the PyTorch module
    filters = 128

    params = init_params(kp, in_channel=C, filters=filters)
    prep = prepare_params(params)
    x = jax.random.normal(kx, (B, C, H, W), jnp.float32)

    fwd = jax.jit(functools.partial(resblock_forward, prep))
    out = jax.block_until_ready(fwd(x))

    assert out.shape == (B, filters, H, W), out.shape
    assert bool(jnp.all(jnp.isfinite(out)))

    # Loose-tolerance check (bf16 matmuls, f32 accumulation) against a
    # pure-JAX f32 reference of the module.
    ref = resblock_reference(params, x)
    max_err = float(jnp.max(jnp.abs(out - ref)))
    assert max_err < 0.5, f"max abs error vs reference: {max_err}"

    print("KERNEL_OK")
</pallas_src>

<mosaic_0001>
module attributes {stable_mosaic.version = 11 : i64} {
  func.func @_resblock_kernel(%arg0: i32, %arg1: memref<1x256x128xbf16, #tpu.memory_space<vmem>>, %arg2: memref<128x256xbf16, #tpu.memory_space<vmem>>, %arg3: memref<1x256xf32, #tpu.memory_space<vmem>>, %arg4: memref<1x128xf32, #tpu.memory_space<vmem>>, %arg5: memref<1152x128xbf16, #tpu.memory_space<vmem>>, %arg6: memref<1x128xf32, #tpu.memory_space<vmem>>, %arg7: memref<1x128xf32, #tpu.memory_space<vmem>>, %arg8: memref<1152x128xbf16, #tpu.memory_space<vmem>>, %arg9: memref<1x128xf32, #tpu.memory_space<vmem>>, %arg10: memref<1x128xf32, #tpu.memory_space<vmem>>, %arg11: memref<1x256x128xf32, #tpu.memory_space<vmem>>, %arg12: memref<18x18x128xbf16, #tpu.memory_space<vmem>>) attributes {dimension_semantics = [#tpu.dimension_semantics<parallel>], iteration_bounds = array<i64: 2>, scalar_prefetch = 0 : i64, scratch_operands = 1 : i64, tpu.core_type = #tpu.core_type<tc>, window_params = [{transform_indices = @transform_0, window_bounds = array<i64: 1, 256, 128>}, {pipeline_mode = #tpu.pipeline_mode<synchronous>, transform_indices = @transform_1, window_bounds = array<i64: 128, 256>}, {pipeline_mode = #tpu.pipeline_mode<synchronous>, transform_indices = @transform_2, window_bounds = array<i64: 1, 256>}, {pipeline_mode = #tpu.pipeline_mode<synchronous>, transform_indices = @transform_3, window_bounds = array<i64: 1, 128>}, {pipeline_mode = #tpu.pipeline_mode<synchronous>, transform_indices = @transform_4, window_bounds = array<i64: 1152, 128>}, {pipeline_mode = #tpu.pipeline_mode<synchronous>, transform_indices = @transform_5, window_bounds = array<i64: 1, 128>}, {pipeline_mode = #tpu.pipeline_mode<synchronous>, transform_indices = @transform_6, window_bounds = array<i64: 1, 128>}, {pipeline_mode = #tpu.pipeline_mode<synchronous>, transform_indices = @transform_7, window_bounds = array<i64: 1152, 128>}, {pipeline_mode = #tpu.pipeline_mode<synchronous>, transform_indices = @transform_8, window_bounds = array<i64: 1, 128>}, {pipeline_mode = #tpu.pipeline_mode<synchronous>, transform_indices = @transform_9, window_bounds = array<i64: 1, 128>}, {transform_indices = @transform_10, window_bounds = array<i64: 1, 256, 128>}]} {
    %c0 = arith.constant 0 : index
    %c0_0 = arith.constant 0 : index
    %c0_1 = arith.constant 0 : index
    %0 = vector.load %arg1[%c0, %c0_0, %c0_1] : memref<1x256x128xbf16, #tpu.memory_space<vmem>>, vector<1x256x128xbf16>
    %1 = vector.shape_cast %0 : vector<1x256x128xbf16> to vector<256x128xbf16>
    %c0_2 = arith.constant 0 : index
    %c0_3 = arith.constant 0 : index
    %2 = vector.load %arg2[%c0_2, %c0_3] : memref<128x256xbf16, #tpu.memory_space<vmem>>, vector<128x256xbf16>
    %cst = arith.constant dense<0.000000e+00> : vector<256x256xf32>
    %3 = tpu.matmul %1, %2, %cst {dimension_numbers = #tpu.dot_dimension_numbers<[1], [0], [0], [1], [0, 0, 1, 1], [], []>} : vector<256x128xbf16>, vector<128x256xbf16>, vector<256x256xf32> -> vector<256x256xf32>
    %c0_4 = arith.constant 0 : index
    %c0_5 = arith.constant 0 : index
    %4 = vector.load %arg3[%c0_4, %c0_5] : memref<1x256xf32, #tpu.memory_space<vmem>>, vector<1x256xf32>
    %5 = vector.broadcast %4 : vector<1x256xf32> to vector<256x256xf32>
    %6 = arith.addf %3, %5 : vector<256x256xf32>
    %7 = vector.extract_strided_slice %6 {offsets = [0, 0], sizes = [256, 128], strides = [1, 1]} : vector<256x256xf32> to vector<256x128xf32>
    %cst_6 = arith.constant 0.000000e+00 : f32
    %8 = vector.broadcast %cst_6 : f32 to vector<256x128xf32>
    %9 = arith.maximumf %7, %8 : vector<256x128xf32>
    %c0_7 = arith.constant 0 : index
    %c0_8 = arith.constant 0 : index
    %10 = vector.load %arg4[%c0_7, %c0_8] : memref<1x128xf32, #tpu.memory_space<vmem>>, vector<1x128xf32>
    %11 = vector.broadcast %10 : vector<1x128xf32> to vector<256x128xf32>
    %12 = arith.addf %9, %11 : vector<256x128xf32>
    %13 = vector.extract_strided_slice %6 {offsets = [0, 128], sizes = [256, 128], strides = [1, 1]} : vector<256x256xf32> to vector<256x128xf32>
    %cst_9 = arith.constant 0.000000e+00 : bf16
    %14 = vector.broadcast %cst_9 : bf16 to vector<1x18x128xbf16>
    %cst_10 = arith.constant 0.000000e+00 : bf16
    %15 = vector.broadcast %cst_10 : bf16 to vector<16x1x128xbf16>
    %c0_11 = arith.constant 0 : index
    %c0_12 = arith.constant 0 : index
    %c0_13 = arith.constant 0 : index
    %16 = vector.load %arg12[%c0_11, %c0_12, %c0_13] : memref<18x18x128xbf16, #tpu.memory_space<vmem>>, vector<1x18x128xbf16>
    tpu.vector_store %arg12[%c0_11, %c0_12, %c0_13], %14 {strides = array<i32>} : memref<18x18x128xbf16, #tpu.memory_space<vmem>>, vector<1x18x128xbf16>,
    %c17 = arith.constant 17 : index
    %c0_14 = arith.constant 0 : index
    %c0_15 = arith.constant 0 : index
    %17 = vector.load %arg12[%c17, %c0_14, %c0_15] : memref<18x18x128xbf16, #tpu.memory_space<vmem>>, vector<1x18x128xbf16>
    tpu.vector_store %arg12[%c17, %c0_14, %c0_15], %14 {strides = array<i32>} : memref<18x18x128xbf16, #tpu.memory_space<vmem>>, vector<1x18x128xbf16>,
    %c1 = arith.constant 1 : index
    %c0_16 = arith.constant 0 : index
    %c0_17 = arith.constant 0 : index
    %18 = vector.load %arg12[%c1, %c0_16, %c0_17] : memref<18x18x128xbf16, #tpu.memory_space<vmem>>, vector<16x1x128xbf16>
    tpu.vector_store %arg12[%c1, %c0_16, %c0_17], %15 {strides = array<i32>} : memref<18x18x128xbf16, #tpu.memory_space<vmem>>, vector<16x1x128xbf16>,
    %c1_18 = arith.constant 1 : index
    %c17_19 = arith.constant 17 : index
    %c0_20 = arith.constant 0 : index
    %19 = vector.load %arg12[%c1_18, %c17_19, %c0_20] : memref<18x18x128xbf16, #tpu.memory_space<vmem>>, vector<16x1x128xbf16>
    tpu.vector_store %arg12[%c1_18, %c17_19, %c0_20], %15 {strides = array<i32>} : memref<18x18x128xbf16, #tpu.memory_space<vmem>>, vector<16x1x128xbf16>,
    %20 = vector.shape_cast %12 : vector<256x128xf32> to vector<16x16x128xf32>
    %21 = arith.truncf %20 : vector<16x16x128xf32> to vector<16x16x128xbf16>
    %c1_21 = arith.constant 1 : index
    %c1_22 = arith.constant 1 : index
    %c0_23 = arith.constant 0 : index
    %22 = vector.load %arg12[%c1_21, %c1_22, %c0_23] : memref<18x18x128xbf16, #tpu.memory_space<vmem>>, vector<16x16x128xbf16>
    tpu.vector_store %arg12[%c1_21, %c1_22, %c0_23], %21 {strides = array<i32>} : memref<18x18x128xbf16, #tpu.memory_space<vmem>>, vector<16x16x128xbf16>,
    %c0_24 = arith.constant 0 : index
    %c0_25 = arith.constant 0 : index
    %c0_26 = arith.constant 0 : index
    %23 = vector.load %arg12[%c0_24, %c0_25, %c0_26] : memref<18x18x128xbf16, #tpu.memory_space<vmem>>, vector<16x16x128xbf16>
    %24 = vector.shape_cast %23 : vector<16x16x128xbf16> to vector<256x128xbf16>
    %c0_27 = arith.constant 0 : index
    %c0_28 = arith.constant 0 : index
    %25 = vector.load %arg5[%c0_27, %c0_28] : memref<1152x128xbf16, #tpu.memory_space<vmem>>, vector<128x128xbf16>
    %cst_29 = arith.constant dense<0.000000e+00> : vector<256x128xf32>
    %26 = tpu.matmul %24, %25, %cst_29 {dimension_numbers = #tpu.dot_dimension_numbers<[1], [0], [0], [1], [0, 0, 1, 1], [], []>} : vector<256x128xbf16>, vector<128x128xbf16>, vector<256x128xf32> -> vector<256x128xf32>
    %c0_30 = arith.constant 0 : index
    %c1_31 = arith.constant 1 : index
    %c0_32 = arith.constant 0 : index
    %27 = vector.load %arg12[%c0_30, %c1_31, %c0_32] : memref<18x18x128xbf16, #tpu.memory_space<vmem>>, vector<16x16x128xbf16>
    %28 = vector.shape_cast %27 : vector<16x16x128xbf16> to vector<256x128xbf16>
    %c128 = arith.constant 128 : index
    %c0_33 = arith.constant 0 : index
    %29 = vector.load %arg5[%c128, %c0_33] : memref<1152x128xbf16, #tpu.memory_space<vmem>>, vector<128x128xbf16>
    %cst_34 = arith.constant dense<0.000000e+00> : vector<256x128xf32>
    %30 = tpu.matmul %28, %29, %cst_34 {dimension_numbers = #tpu.dot_dimension_numbers<[1], [0], [0], [1], [0, 0, 1, 1], [], []>} : vector<256x128xbf16>, vector<128x128xbf16>, vector<256x128xf32> -> vector<256x128xf32>
    %31 = arith.addf %26, %30 : vector<256x128xf32>
    %c0_35 = arith.constant 0 : index
    %c2 = arith.constant 2 : index
    %c0_36 = arith.constant 0 : index
    %32 = vector.load %arg12[%c0_35, %c2, %c0_36] : memref<18x18x128xbf16, #tpu.memory_space<vmem>>, vector<16x16x128xbf16>
    %33 = vector.shape_cast %32 : vector<16x16x128xbf16> to vector<256x128xbf16>
    %c256 = arith.constant 256 : index
    %c0_37 = arith.constant 0 : index
    %34 = vector.load %arg5[%c256, %c0_37] : memref<1152x128xbf16, #tpu.memory_space<vmem>>, vector<128x128xbf16>
    %cst_38 = arith.constant dense<0.000000e+00> : vector<256x128xf32>
    %35 = tpu.matmul %33, %34, %cst_38 {dimension_numbers = #tpu.dot_dimension_numbers<[1], [0], [0], [1], [0, 0, 1, 1], [], []>} : vector<256x128xbf16>, vector<128x128xbf16>, vector<256x128xf32> -> vector<256x128xf32>
    %36 = arith.addf %31, %35 : vector<256x128xf32>
    %c1_39 = arith.constant 1 : index
    %c0_40 = arith.constant 0 : index
    %c0_41 = arith.constant 0 : index
    %37 = vector.load %arg12[%c1_39, %c0_40, %c0_41] : memref<18x18x128xbf16, #tpu.memory_space<vmem>>, vector<16x16x128xbf16>
    %38 = vector.shape_cast %37 : vector<16x16x128xbf16> to vector<256x128xbf16>
    %c384 = arith.constant 384 : index
    %c0_42 = arith.constant 0 : index
    %39 = vector.load %arg5[%c384, %c0_42] : memref<1152x128xbf16, #tpu.memory_space<vmem>>, vector<128x128xbf16>
    %cst_43 = arith.constant dense<0.000000e+00> : vector<256x128xf32>
    %40 = tpu.matmul %38, %39, %cst_43 {dimension_numbers = #tpu.dot_dimension_numbers<[1], [0], [0], [1], [0, 0, 1, 1], [], []>} : vector<256x128xbf16>, vector<128x128xbf16>, vector<256x128xf32> -> vector<256x128xf32>
    %41 = arith.addf %36, %40 : vector<256x128xf32>
    %c1_44 = arith.constant 1 : index
    %c1_45 = arith.constant 1 : index
    %c0_46 = arith.constant 0 : index
    %42 = vector.load %arg12[%c1_44, %c1_45, %c0_46] : memref<18x18x128xbf16, #tpu.memory_space<vmem>>, vector<16x16x128xbf16>
    %43 = vector.shape_cast %42 : vector<16x16x128xbf16> to vector<256x128xbf16>
    %c512 = arith.constant 512 : index
    %c0_47 = arith.constant 0 : index
    %44 = vector.load %arg5[%c512, %c0_47] : memref<1152x128xbf16, #tpu.memory_space<vmem>>, vector<128x128xbf16>
    %cst_48 = arith.constant dense<0.000000e+00> : vector<256x128xf32>
    %45 = tpu.matmul %43, %44, %cst_48 {dimension_numbers = #tpu.dot_dimension_numbers<[1], [0], [0], [1], [0, 0, 1, 1], [], []>} : vector<256x128xbf16>, vector<128x128xbf16>, vector<256x128xf32> -> vector<256x128xf32>
    %46 = arith.addf %41, %45 : vector<256x128xf32>
    %c1_49 = arith.constant 1 : index
    %c2_50 = arith.constant 2 : index
    %c0_51 = arith.constant 0 : index
    %47 = vector.load %arg12[%c1_49, %c2_50, %c0_51] : memref<18x18x128xbf16, #tpu.memory_space<vmem>>, vector<16x16x128xbf16>
    %48 = vector.shape_cast %47 : vector<16x16x128xbf16> to vector<256x128xbf16>
    %c640 = arith.constant 640 : index
    %c0_52 = arith.constant 0 : index
    %49 = vector.load %arg5[%c640, %c0_52] : memref<1152x128xbf16, #tpu.memory_space<vmem>>, vector<128x128xbf16>
    %cst_53 = arith.constant dense<0.000000e+00> : vector<256x128xf32>
    %50 = tpu.matmul %48, %49, %cst_53 {dimension_numbers = #tpu.dot_dimension_numbers<[1], [0], [0], [1], [0, 0, 1, 1], [], []>} : vector<256x128xbf16>, vector<128x128xbf16>, vector<256x128xf32> -> vector<256x128xf32>
    %51 = arith.addf %46, %50 : vector<256x128xf32>
    %c2_54 = arith.constant 2 : index
    %c0_55 = arith.constant 0 : index
    %c0_56 = arith.constant 0 : index
    %52 = vector.load %arg12[%c2_54, %c0_55, %c0_56] : memref<18x18x128xbf16, #tpu.memory_space<vmem>>, vector<16x16x128xbf16>
    %53 = vector.shape_cast %52 : vector<16x16x128xbf16> to vector<256x128xbf16>
    %c768 = arith.constant 768 : index
    %c0_57 = arith.constant 0 : index
    %54 = vector.load %arg5[%c768, %c0_57] : memref<1152x128xbf16, #tpu.memory_space<vmem>>, vector<128x128xbf16>
    %cst_58 = arith.constant dense<0.000000e+00> : vector<256x128xf32>
    %55 = tpu.matmul %53, %54, %cst_58 {dimension_numbers = #tpu.dot_dimension_numbers<[1], [0], [0], [1], [0, 0, 1, 1], [], []>} : vector<256x128xbf16>, vector<128x128xbf16>, vector<256x128xf32> -> vector<256x128xf32>
    %56 = arith.addf %51, %55 : vector<256x128xf32>
    %c2_59 = arith.constant 2 : index
    %c1_60 = arith.constant 1 : index
    %c0_61 = arith.constant 0 : index
    %57 = vector.load %arg12[%c2_59, %c1_60, %c0_61] : memref<18x18x128xbf16, #tpu.memory_space<vmem>>, vector<16x16x128xbf16>
    %58 = vector.shape_cast %57 : vector<16x16x128xbf16> to vector<256x128xbf16>
    %c896 = arith.constant 896 : index
    %c0_62 = arith.constant 0 : index
    %59 = vector.load %arg5[%c896, %c0_62] : memref<1152x128xbf16, #tpu.memory_space<vmem>>, vector<128x128xbf16>
    %cst_63 = arith.constant dense<0.000000e+00> : vector<256x128xf32>
    %60 = tpu.matmul %58, %59, %cst_63 {dimension_numbers = #tpu.dot_dimension_numbers<[1], [0], [0], [1], [0, 0, 1, 1], [], []>} : vector<256x128xbf16>, vector<128x128xbf16>, vector<256x128xf32> -> vector<256x128xf32>
    %61 = arith.addf %56, %60 : vector<256x128xf32>
    %c2_64 = arith.constant 2 : index
    %c2_65 = arith.constant 2 : index
    %c0_66 = arith.constant 0 : index
    %62 = vector.load %arg12[%c2_64, %c2_65, %c0_66] : memref<18x18x128xbf16, #tpu.memory_space<vmem>>, vector<16x16x128xbf16>
    %63 = vector.shape_cast %62 : vector<16x16x128xbf16> to vector<256x128xbf16>
    %c1024 = arith.constant 1024 : index
    %c0_67 = arith.constant 0 : index
    %64 = vector.load %arg5[%c1024, %c0_67] : memref<1152x128xbf16, #tpu.memory_space<vmem>>, vector<128x128xbf16>
    %cst_68 = arith.constant dense<0.000000e+00> : vector<256x128xf32>
    %65 = tpu.matmul %63, %64, %cst_68 {dimension_numbers = #tpu.dot_dimension_numbers<[1], [0], [0], [1], [0, 0, 1, 1], [], []>} : vector<256x128xbf16>, vector<128x128xbf16>, vector<256x128xf32> -> vector<256x128xf32>
    %66 = arith.addf %61, %65 : vector<256x128xf32>
    %c0_69 = arith.constant 0 : index
    %c0_70 = arith.constant 0 : index
    %67 = vector.load %arg6[%c0_69, %c0_70] : memref<1x128xf32, #tpu.memory_space<vmem>>, vector<1x128xf32>
    %68 = vector.broadcast %67 : vector<1x128xf32> to vector<256x128xf32>
    %69 = arith.addf %66, %68 : vector<256x128xf32>
    %cst_71 = arith.constant 0.000000e+00 : f32
    %70 = vector.broadcast %cst_71 : f32 to vector<256x128xf32>
    %71 = arith.maximumf %69, %70 : vector<256x128xf32>
    %c0_72 = arith.constant 0 : index
    %c0_73 = arith.constant 0 : index
    %72 = vector.load %arg7[%c0_72, %c0_73] : memref<1x128xf32, #tpu.memory_space<vmem>>, vector<1x128xf32>
    %73 = vector.broadcast %72 : vector<1x128xf32> to vector<256x128xf32>
    %74 = arith.addf %71, %73 : vector<256x128xf32>
    %75 = vector.shape_cast %74 : vector<256x128xf32> to vector<16x16x128xf32>
    %76 = arith.truncf %75 : vector<16x16x128xf32> to vector<16x16x128xbf16>
    %c1_74 = arith.constant 1 : index
    %c1_75 = arith.constant 1 : index
    %c0_76 = arith.constant 0 : index
    %77 = vector.load %arg12[%c1_74, %c1_75, %c0_76] : memref<18x18x128xbf16, #tpu.memory_space<vmem>>, vector<16x16x128xbf16>
    tpu.vector_store %arg12[%c1_74, %c1_75, %c0_76], %76 {strides = array<i32>} : memref<18x18x128xbf16, #tpu.memory_space<vmem>>, vector<16x16x128xbf16>,
    %c0_77 = arith.constant 0 : index
    %c0_78 = arith.constant 0 : index
    %c0_79 = arith.constant 0 : index
    %78 = vector.load %arg12[%c0_77, %c0_78, %c0_79] : memref<18x18x128xbf16, #tpu.memory_space<vmem>>, vector<16x16x128xbf16>
    %79 = vector.shape_cast %78 : vector<16x16x128xbf16> to vector<256x128xbf16>
    %c0_80 = arith.constant 0 : index
    %c0_81 = arith.constant 0 : index
    %80 = vector.load %arg8[%c0_80, %c0_81] : memref<1152x128xbf16, #tpu.memory_space<vmem>>, vector<128x128xbf16>
    %cst_82 = arith.constant dense<0.000000e+00> : vector<256x128xf32>
    %81 = tpu.matmul %79, %80, %cst_82 {dimension_numbers = #tpu.dot_dimension_numbers<[1], [0], [0], [1], [0, 0, 1, 1], [], []>} : vector<256x128xbf16>, vector<128x128xbf16>, vector<256x128xf32> -> vector<256x128xf32>
    %c0_83 = arith.constant 0 : index
    %c1_84 = arith.constant 1 : index
    %c0_85 = arith.constant 0 : index
    %82 = vector.load %arg12[%c0_83, %c1_84, %c0_85] : memref<18x18x128xbf16, #tpu.memory_space<vmem>>, vector<16x16x128xbf16>
    %83 = vector.shape_cast %82 : vector<16x16x128xbf16> to vector<256x128xbf16>
    %c128_86 = arith.constant 128 : index
    %c0_87 = arith.constant 0 : index
    %84 = vector.load %arg8[%c128_86, %c0_87] : memref<1152x128xbf16, #tpu.memory_space<vmem>>, vector<128x128xbf16>
    %cst_88 = arith.constant dense<0.000000e+00> : vector<256x128xf32>
    %85 = tpu.matmul %83, %84, %cst_88 {dimension_numbers = #tpu.dot_dimension_numbers<[1], [0], [0], [1], [0, 0, 1, 1], [], []>} : vector<256x128xbf16>, vector<128x128xbf16>, vector<256x128xf32> -> vector<256x128xf32>
    %86 = arith.addf %81, %85 : vector<256x128xf32>
    %c0_89 = arith.constant 0 : index
    %c2_90 = arith.constant 2 : index
    %c0_91 = arith.constant 0 : index
    %87 = vector.load %arg12[%c0_89, %c2_90, %c0_91] : memref<18x18x128xbf16, #tpu.memory_space<vmem>>, vector<16x16x128xbf16>
    %88 = vector.shape_cast %87 : vector<16x16x128xbf16> to vector<256x128xbf16>
    %c256_92 = arith.constant 256 : index
    %c0_93 = arith.constant 0 : index
    %89 = vector.load %arg8[%c256_92, %c0_93] : memref<1152x128xbf16, #tpu.memory_space<vmem>>, vector<128x128xbf16>
    %cst_94 = arith.constant dense<0.000000e+00> : vector<256x128xf32>
    %90 = tpu.matmul %88, %89, %cst_94 {dimension_numbers = #tpu.dot_dimension_numbers<[1], [0], [0], [1], [0, 0, 1, 1], [], []>} : vector<256x128xbf16>, vector<128x128xbf16>, vector<256x128xf32> -> vector<256x128xf32>
    %91 = arith.addf %86, %90 : vector<256x128xf32>
    %c1_95 = arith.constant 1 : index
    %c0_96 = arith.constant 0 : index
    %c0_97 = arith.constant 0 : index
    %92 = vector.load %arg12[%c1_95, %c0_96, %c0_97] : memref<18x18x128xbf16, #tpu.memory_space<vmem>>, vector<16x16x128xbf16>
    %93 = vector.shape_cast %92 : vector<16x16x128xbf16> to vector<256x128xbf16>
    %c384_98 = arith.constant 384 : index
    %c0_99 = arith.constant 0 : index
    %94 = vector.load %arg8[%c384_98, %c0_99] : memref<1152x128xbf16, #tpu.memory_space<vmem>>, vector<128x128xbf16>
    %cst_100 = arith.constant dense<0.000000e+00> : vector<256x128xf32>
    %95 = tpu.matmul %93, %94, %cst_100 {dimension_numbers = #tpu.dot_dimension_numbers<[1], [0], [0], [1], [0, 0, 1, 1], [], []>} : vector<256x128xbf16>, vector<128x128xbf16>, vector<256x128xf32> -> vector<256x128xf32>
    %96 = arith.addf %91, %95 : vector<256x128xf32>
    %c1_101 = arith.constant 1 : index
    %c1_102 = arith.constant 1 : index
    %c0_103 = arith.constant 0 : index
    %97 = vector.load %arg12[%c1_101, %c1_102, %c0_103] : memref<18x18x128xbf16, #tpu.memory_space<vmem>>, vector<16x16x128xbf16>
    %98 = vector.shape_cast %97 : vector<16x16x128xbf16> to vector<256x128xbf16>
    %c512_104 = arith.constant 512 : index
    %c0_105 = arith.constant 0 : index
    %99 = vector.load %arg8[%c512_104, %c0_105] : memref<1152x128xbf16, #tpu.memory_space<vmem>>, vector<128x128xbf16>
    %cst_106 = arith.constant dense<0.000000e+00> : vector<256x128xf32>
    %100 = tpu.matmul %98, %99, %cst_106 {dimension_numbers = #tpu.dot_dimension_numbers<[1], [0], [0], [1], [0, 0, 1, 1], [], []>} : vector<256x128xbf16>, vector<128x128xbf16>, vector<256x128xf32> -> vector<256x128xf32>
    %101 = arith.addf %96, %100 : vector<256x128xf32>
    %c1_107 = arith.constant 1 : index
    %c2_108 = arith.constant 2 : index
    %c0_109 = arith.constant 0 : index
    %102 = vector.load %arg12[%c1_107, %c2_108, %c0_109] : memref<18x18x128xbf16, #tpu.memory_space<vmem>>, vector<16x16x128xbf16>
    %103 = vector.shape_cast %102 : vector<16x16x128xbf16> to vector<256x128xbf16>
    %c640_110 = arith.constant 640 : index
    %c0_111 = arith.constant 0 : index
    %104 = vector.load %arg8[%c640_110, %c0_111] : memref<1152x128xbf16, #tpu.memory_space<vmem>>, vector<128x128xbf16>
    %cst_112 = arith.constant dense<0.000000e+00> : vector<256x128xf32>
    %105 = tpu.matmul %103, %104, %cst_112 {dimension_numbers = #tpu.dot_dimension_numbers<[1], [0], [0], [1], [0, 0, 1, 1], [], []>} : vector<256x128xbf16>, vector<128x128xbf16>, vector<256x128xf32> -> vector<256x128xf32>
    %106 = arith.addf %101, %105 : vector<256x128xf32>
    %c2_113 = arith.constant 2 : index
    %c0_114 = arith.constant 0 : index
    %c0_115 = arith.constant 0 : index
    %107 = vector.load %arg12[%c2_113, %c0_114, %c0_115] : memref<18x18x128xbf16, #tpu.memory_space<vmem>>, vector<16x16x128xbf16>
    %108 = vector.shape_cast %107 : vector<16x16x128xbf16> to vector<256x128xbf16>
    %c768_116 = arith.constant 768 : index
    %c0_117 = arith.constant 0 : index
    %109 = vector.load %arg8[%c768_116, %c0_117] : memref<1152x128xbf16, #tpu.memory_space<vmem>>, vector<128x128xbf16>
    %cst_118 = arith.constant dense<0.000000e+00> : vector<256x128xf32>
    %110 = tpu.matmul %108, %109, %cst_118 {dimension_numbers = #tpu.dot_dimension_numbers<[1], [0], [0], [1], [0, 0, 1, 1], [], []>} : vector<256x128xbf16>, vector<128x128xbf16>, vector<256x128xf32> -> vector<256x128xf32>
    %111 = arith.addf %106, %110 : vector<256x128xf32>
    %c2_119 = arith.constant 2 : index
    %c1_120 = arith.constant 1 : index
    %c0_121 = arith.constant 0 : index
    %112 = vector.load %arg12[%c2_119, %c1_120, %c0_121] : memref<18x18x128xbf16, #tpu.memory_space<vmem>>, vector<16x16x128xbf16>
    %113 = vector.shape_cast %112 : vector<16x16x128xbf16> to vector<256x128xbf16>
    %c896_122 = arith.constant 896 : index
    %c0_123 = arith.constant 0 : index
    %114 = vector.load %arg8[%c896_122, %c0_123] : memref<1152x128xbf16, #tpu.memory_space<vmem>>, vector<128x128xbf16>
    %cst_124 = arith.constant dense<0.000000e+00> : vector<256x128xf32>
    %115 = tpu.matmul %113, %114, %cst_124 {dimension_numbers = #tpu.dot_dimension_numbers<[1], [0], [0], [1], [0, 0, 1, 1], [], []>} : vector<256x128xbf16>, vector<128x128xbf16>, vector<256x128xf32> -> vector<256x128xf32>
    %116 = arith.addf %111, %115 : vector<256x128xf32>
    %c2_125 = arith.constant 2 : index
    %c2_126 = arith.constant 2 : index
    %c0_127 = arith.constant 0 : index
    %117 = vector.load %arg12[%c2_125, %c2_126, %c0_127] : memref<18x18x128xbf16, #tpu.memory_space<vmem>>, vector<16x16x128xbf16>
    %118 = vector.shape_cast %117 : vector<16x16x128xbf16> to vector<256x128xbf16>
    %c1024_128 = arith.constant 1024 : index
    %c0_129 = arith.constant 0 : index
    %119 = vector.load %arg8[%c1024_128, %c0_129] : memref<1152x128xbf16, #tpu.memory_space<vmem>>, vector<128x128xbf16>
    %cst_130 = arith.constant dense<0.000000e+00> : vector<256x128xf32>
    %120 = tpu.matmul %118, %119, %cst_130 {dimension_numbers = #tpu.dot_dimension_numbers<[1], [0], [0], [1], [0, 0, 1, 1], [], []>} : vector<256x128xbf16>, vector<128x128xbf16>, vector<256x128xf32> -> vector<256x128xf32>
    %121 = arith.addf %116, %120 : vector<256x128xf32>
    %c0_131 = arith.constant 0 : index
    %c0_132 = arith.constant 0 : index
    %122 = vector.load %arg9[%c0_131, %c0_132] : memref<1x128xf32, #tpu.memory_space<vmem>>, vector<1x128xf32>
    %123 = vector.broadcast %122 : vector<1x128xf32> to vector<256x128xf32>
    %124 = arith.addf %121, %123 : vector<256x128xf32>
    %cst_133 = arith.constant 0.000000e+00 : f32
    %125 = vector.broadcast %cst_133 : f32 to vector<256x128xf32>
    %126 = arith.maximumf %124, %125 : vector<256x128xf32>
    %c0_134 = arith.constant 0 : index
    %c0_135 = arith.constant 0 : index
    %127 = vector.load %arg10[%c0_134, %c0_135] : memref<1x128xf32, #tpu.memory_space<vmem>>, vector<1x128xf32>
    %128 = vector.broadcast %127 : vector<1x128xf32> to vector<256x128xf32>
    %129 = arith.addf %126, %128 : vector<256x128xf32>
    %130 = arith.addf %129, %13 : vector<256x128xf32>
    %c0_136 = arith.constant 0 : index
    %c0_137 = arith.constant 0 : index
    %c0_138 = arith.constant 0 : index
    %131 = vector.load %arg11[%c0_136, %c0_137, %c0_138] : memref<1x256x128xf32, #tpu.memory_space<vmem>>, vector<1x256x128xf32>
    %132 = vector.shape_cast %131 : vector<1x256x128xf32> to vector<256x128xf32>
    %133 = vector.shape_cast %130 : vector<256x128xf32> to vector<1x256x128xf32>
    tpu.vector_store %arg11[%c0_136, %c0_137, %c0_138], %133 {strides = array<i32>} : memref<1x256x128xf32, #tpu.memory_space<vmem>>, vector<1x256x128xf32>,
    return
  }
  func.func @transform_0(%arg0: i32) -> (i32, i32, i32) {
    %c0_i32 = arith.constant 0 : i32
    %c0_i32_0 = arith.constant 0 : i32
    %c0_i32_1 = arith.constant 0 : i32
    return %arg0, %c0_i32, %c0_i32_0 : i32, i32, i32
  }
  func.func @transform_1(%arg0: i32) -> (i32, i32) {
    %c0_i32 = arith.constant 0 : i32
    %c0_i32_0 = arith.constant 0 : i32
    %c0_i32_1 = arith.constant 0 : i32
    return %c0_i32, %c0_i32_0 : i32, i32
  }
  func.func @transform_2(%arg0: i32) -> (i32, i32) {
    %c0_i32 = arith.constant 0 : i32
    %c0_i32_0 = arith.constant 0 : i32
    %c0_i32_1 = arith.constant 0 : i32
    return %c0_i32, %c0_i32_0 : i32, i32
  }
  func.func @transform_3(%arg0: i32) -> (i32, i32) {
    %c0_i32 = arith.constant 0 : i32
    %c0_i32_0 = arith.constant 0 : i32
    %c0_i32_1 = arith.constant 0 : i32
    return %c0_i32, %c0_i32_0 : i32, i32
  }
  func.func @transform_4(%arg0: i32) -> (i32, i32) {
    %c0_i32 = arith.constant 0 : i32
    %c0_i32_0 = arith.constant 0 : i32
    %c0_i32_1 = arith.constant 0 : i32
    return %c0_i32, %c0_i32_0 : i32, i32
  }
  func.func @transform_5(%arg0: i32) -> (i32, i32) {
    %c0_i32 = arith.constant 0 : i32
    %c0_i32_0 = arith.constant 0 : i32
    %c0_i32_1 = arith.constant 0 : i32
    return %c0_i32, %c0_i32_0 : i32, i32
  }
  func.func @transform_6(%arg0: i32) -> (i32, i32) {
    %c0_i32 = arith.constant 0 : i32
    %c0_i32_0 = arith.constant 0 : i32
    %c0_i32_1 = arith.constant 0 : i32
    return %c0_i32, %c0_i32_0 : i32, i32
  }
  func.func @transform_7(%arg0: i32) -> (i32, i32) {
    %c0_i32 = arith.constant 0 : i32
    %c0_i32_0 = arith.constant 0 : i32
    %c0_i32_1 = arith.constant 0 : i32
    return %c0_i32, %c0_i32_0 : i32, i32
  }
  func.func @transform_8(%arg0: i32) -> (i32, i32) {
    %c0_i32 = arith.constant 0 : i32
    %c0_i32_0 = arith.constant 0 : i32
    %c0_i32_1 = arith.constant 0 : i32
    return %c0_i32, %c0_i32_0 : i32, i32
  }
  func.func @transform_9(%arg0: i32) -> (i32, i32) {
    %c0_i32 = arith.constant 0 : i32
    %c0_i32_0 = arith.constant 0 : i32
    %c0_i32_1 = arith.constant 0 : i32
    return %c0_i32, %c0_i32_0 : i32, i32
  }
  func.func @transform_10(%arg0: i32) -> (i32, i32, i32) {
    %c0_i32 = arith.constant 0 : i32
    %c0_i32_0 = arith.constant 0 : i32
    %c0_i32_1 = arith.constant 0 : i32
    return %arg0, %c0_i32, %c0_i32_0 : i32, i32, i32
  }
}

</mosaic_0001>

<llo_original>
// kernel: resblock_forward.1
$region0: #{resblock_forward.1}
  #allocation0 [shape = 'u32[]', space=smem, size = 0x4, offset = 0x4, fixed_abs, tag = 'smem constant byte address 0x4 - core index']
  #allocation1 [shape = 'u32[144,128]{1,0:T(1,128)}', space=vmem, size = 0x12000, scoped, tag = 'internal scratch']
  #allocation2 [shape = 'bf16[18,18,128]{2,1,0:T(8,128)(2,1)}', space=vmem, size = 0x1b000, scoped, tag = 'scratch operand']
  %s0 = inlined_call_operand.vmem [shape: bf16[2,256,128], index: 0, kind: input, shape index: {}]
  %s1 = inlined_call_operand.vmem [shape: bf16[128,256], index: 1, kind: input, shape index: {}]
  %s2 = inlined_call_operand.vmem [shape: f32[1,256], index: 2, kind: input, shape index: {}]
  %s3 = inlined_call_operand.vmem [shape: f32[1,128], index: 3, kind: input, shape index: {}, may-alias: {3,6,9}]
  %s4 = inlined_call_operand.vmem [shape: bf16[1152,128], index: 4, kind: input, shape index: {}]
  %s5 = inlined_call_operand.vmem [shape: f32[1,128], index: 5, kind: input, shape index: {}]
  %s6 = inlined_call_operand.vmem [shape: f32[1,128], index: 6, kind: input, shape index: {}, may-alias: {3,6,9}]
  %s7 = inlined_call_operand.vmem [shape: bf16[1152,128], index: 7, kind: input, shape index: {}]
  %s8 = inlined_call_operand.vmem [shape: f32[1,128], index: 8, kind: input, shape index: {}]
  %s9 = inlined_call_operand.vmem [shape: f32[1,128], index: 9, kind: input, shape index: {}, may-alias: {3,6,9}]
  %s10 = inlined_call_operand.hbm [shape: f32[2,256,128], index: 10, kind: output, shape index: {}]
  %s11 = sld [smem:[#allocation0]]
  $region73: #{resblock_forward.1} parent=0
    _
  %s13 = ssub.s32 1, %s11
  %s14 = scalar_select 0, %s13, %s11
  $region1: #{resblock_forward.1} parent=0
    #allocation3 [shape = 'u8[262144]{0}', space=vmem, size = 0x40000, scoped, tag = 'output window, operand 0']
    #allocation4 [shape = 's32[2]{0}', space=sflag, size = 0x8, scoped, tag = 'scoped memory for resblock_forward.1']
    %15 = vsyncpa [#allocation4], 0
    %s16 = scalar_lea.sflag [#allocation4], 1
    %17 = vsyncpa %s16, 0
    loop: start=0, step=1, limit=4
    $region2: #{resblock_forward.1} parent=1 // loop_pre_header
      _
    $region3: #{resblock_forward.1} parent=1 // loop_header
      %s19 = sphi 0, %s23
      %p20 = scmp.ge.s32.totalorder %s19, 4
      %s29 = sphi 0, %s31
      %s32 = sphi 0, %s29
      %s33 = sphi 0, %s32
      %s49 = sphi 0, %s33
      %s53 = sphi 0, %s53
      %s55 = sphi 0, %s53
      %s56 = sphi 0, %s55
      %s70 = sphi 0, %s56
      %s74 = sphi 0, %s74
      %s76 = sphi 0, %s74
      %s77 = sphi 0, %s76
      %s91 = sphi 0, %s77
      %s95 = sphi 0, %s95
      %s97 = sphi 0, %s95
      %s98 = sphi 0, %s97
      %s112 = sphi 0, %s98
      %s116 = sphi 0, %s116
      %s118 = sphi 0, %s116
      %s119 = sphi 0, %s118
      %s133 = sphi 0, %s119
      %s137 = sphi 0, %s137
      %s139 = sphi 0, %s137
      %s140 = sphi 0, %s139
      %s154 = sphi 0, %s140
      %s158 = sphi 0, %s158
      %s160 = sphi 0, %s158
      %s161 = sphi 0, %s160
      %s175 = sphi 0, %s161
      %s179 = sphi 0, %s179
      %s181 = sphi 0, %s179
      %s182 = sphi 0, %s181
      %s196 = sphi 0, %s182
      %s200 = sphi 0, %s200
      %s202 = sphi 0, %s200
      %s203 = sphi 0, %s202
      %s217 = sphi 0, %s203
      %s221 = sphi 0, %s221
      %s223 = sphi 0, %s221
      %s224 = sphi 0, %s223
      %s238 = sphi 0, %s224
      %s244 = sphi 0, %s246
      %s247 = sphi 0, %s244
      %s248 = sphi 0, %s247
      %s264 = sphi 0, %s248
    $region4: #{resblock_forward.1} parent=1 // loop_header_branch
      %22 = sbr.rel (%p20) target = $region8
    $region5: #{resblock_forward.1} parent=1 // loop_body
      %s24 = ssub.s32 %s19, 1
      %s25 = ssub.s32 %s19, 2
      %s26 = sadd.s32 %s19, 1
      %s27 = ssub.s32 %s19, %s26
      %p28 = scmp.eq.s32.totalorder %s27, 0
      %s30 = sadd.s32 %s29, 1
      %s31 = scalar_select %p28, %s29, %s30
      %p34 = pneg %p28
      %p35 = scmp.eq.s32.totalorder %s19, 1
      %p36 = por %p34, %p35
      %p37 = scmp.ne.s32.totalorder %s29, %s32
      %p38 = scmp.eq.s32.totalorder %s19, 0
      %p39 = por %p37, %p38
      %p40 = scmp.ne.s32.totalorder %s29, %s32
      %p41 = scmp.eq.s32.totalorder %s24, 1
      %p42 = por %p40, %p41
      %p43 = scmp.ne.s32.totalorder %s32, %s33
      %p44 = scmp.eq.s32.totalorder %s24, 0
      %p45 = por %p43, %p44
      %p46 = scmp.ne.s32.totalorder %s32, %s33
      %p47 = scmp.eq.s32.totalorder %s25, 1
      %p48 = por %p46, %p47
      %p50 = scmp.ne.s32.totalorder %s33, %s49
      %p51 = scmp.eq.s32.totalorder %s25, 0
      %p52 = por %p50, %p51
      %s54 = sadd.s32 %s53, 1
      %p57 = scmp.eq.s32.totalorder %s19, 1
      %p58 = scmp.ne.s32.totalorder %s53, %s55
      %p59 = scmp.eq.s32.totalorder %s19, 0
      %p60 = por %p58, %p59
      %p61 = scmp.ne.s32.totalorder %s53, %s55
      %p62 = scmp.eq.s32.totalorder %s24, 1
      %p63 = por %p61, %p62
      %p64 = scmp.ne.s32.totalorder %s55, %s56
      %p65 = scmp.eq.s32.totalorder %s24, 0
      %p66 = por %p64, %p65
      %p67 = scmp.ne.s32.totalorder %s55, %s56
      %p68 = scmp.eq.s32.totalorder %s25, 1
      %p69 = por %p67, %p68
      %p71 = scmp.ne.s32.totalorder %s56, %s70
      %p72 = scmp.eq.s32.totalorder %s25, 0
      %p73 = por %p71, %p72
      %s75 = sadd.s32 %s74, 1
      %p78 = scmp.eq.s32.totalorder %s19, 1
      %p79 = scmp.ne.s32.totalorder %s74, %s76
      %p80 = scmp.eq.s32.totalorder %s19, 0
      %p81 = por %p79, %p80
      %p82 = scmp.ne.s32.totalorder %s74, %s76
      %p83 = scmp.eq.s32.totalorder %s24, 1
      %p84 = por %p82, %p83
      %p85 = scmp.ne.s32.totalorder %s76, %s77
      %p86 = scmp.eq.s32.totalorder %s24, 0
      %p87 = por %p85, %p86
      %p88 = scmp.ne.s32.totalorder %s76, %s77
      %p89 = scmp.eq.s32.totalorder %s25, 1
      %p90 = por %p88, %p89
      %p92 = scmp.ne.s32.totalorder %s77, %s91
      %p93 = scmp.eq.s32.totalorder %s25, 0
      %p94 = por %p92, %p93
      %s96 = sadd.s32 %s95, 1
      %p99 = scmp.eq.s32.totalorder %s19, 1
      %p100 = scmp.ne.s32.totalorder %s95, %s97
      %p101 = scmp.eq.s32.totalorder %s19, 0
      %p102 = por %p100, %p101
      %p103 = scmp.ne.s32.totalorder %s95, %s97
      %p104 = scmp.eq.s32.totalorder %s24, 1
      %p105 = por %p103, %p104
      %p106 = scmp.ne.s32.totalorder %s97, %s98
      %p107 = scmp.eq.s32.totalorder %s24, 0
      %p108 = por %p106, %p107
      %p109 = scmp.ne.s32.totalorder %s97, %s98
      %p110 = scmp.eq.s32.totalorder %s25, 1
      %p111 = por %p109, %p110
      %p113 = scmp.ne.s32.totalorder %s98, %s112
      %p114 = scmp.eq.s32.totalorder %s25, 0
      %p115 = por %p113, %p114
      %s117 = sadd.s32 %s116, 1
      %p120 = scmp.eq.s32.totalorder %s19, 1
      %p121 = scmp.ne.s32.totalorder %s116, %s118
      %p122 = scmp.eq.s32.totalorder %s19, 0
      %p123 = por %p121, %p122
      %p124 = scmp.ne.s32.totalorder %s116, %s118
      %p125 = scmp.eq.s32.totalorder %s24, 1
      %p126 = por %p124, %p125
      %p127 = scmp.ne.s32.totalorder %s118, %s119
      %p128 = scmp.eq.s32.totalorder %s24, 0
      %p129 = por %p127, %p128
      %p130 = scmp.ne.s32.totalorder %s118, %s119
      %p131 = scmp.eq.s32.totalorder %s25, 1
      %p132 = por %p130, %p131
      %p134 = scmp.ne.s32.totalorder %s119, %s133
      %p135 = scmp.eq.s32.totalorder %s25, 0
      %p136 = por %p134, %p135
      %s138 = sadd.s32 %s137, 1
      %p141 = scmp.eq.s32.totalorder %s19, 1
      %p142 = scmp.ne.s32.totalorder %s137, %s139
      %p143 = scmp.eq.s32.totalorder %s19, 0
      %p144 = por %p142, %p143
      %p145 = scmp.ne.s32.totalorder %s137, %s139
      %p146 = scmp.eq.s32.totalorder %s24, 1
      %p147 = por %p145, %p146
      %p148 = scmp.ne.s32.totalorder %s139, %s140
      %p149 = scmp.eq.s32.totalorder %s24, 0
      %p150 = por %p148, %p149
      %p151 = scmp.ne.s32.totalorder %s139, %s140
      %p152 = scmp.eq.s32.totalorder %s25, 1
      %p153 = por %p151, %p152
      %p155 = scmp.ne.s32.totalorder %s140, %s154
      %p156 = scmp.eq.s32.totalorder %s25, 0
      %p157 = por %p155, %p156
      %s159 = sadd.s32 %s158, 1
      %p162 = scmp.eq.s32.totalorder %s19, 1
      %p163 = scmp.ne.s32.totalorder %s158, %s160
      %p164 = scmp.eq.s32.totalorder %s19, 0
      %p165 = por %p163, %p164
      %p166 = scmp.ne.s32.totalorder %s158, %s160
      %p167 = scmp.eq.s32.totalorder %s24, 1
      %p168 = por %p166, %p167
      %p169 = scmp.ne.s32.totalorder %s160, %s161
      %p170 = scmp.eq.s32.totalorder %s24, 0
      %p171 = por %p169, %p170
      %p172 = scmp.ne.s32.totalorder %s160, %s161
      %p173 = scmp.eq.s32.totalorder %s25, 1
      %p174 = por %p172, %p173
      %p176 = scmp.ne.s32.totalorder %s161, %s175
      %p177 = scmp.eq.s32.totalorder %s25, 0
      %p178 = por %p176, %p177
      %s180 = sadd.s32 %s179, 1
      %p183 = scmp.eq.s32.totalorder %s19, 1
      %p184 = scmp.ne.s32.totalorder %s179, %s181
      %p185 = scmp.eq.s32.totalorder %s19, 0
      %p186 = por %p184, %p185
      %p187 = scmp.ne.s32.totalorder %s179, %s181
      %p188 = scmp.eq.s32.totalorder %s24, 1
      %p189 = por %p187, %p188
      %p190 = scmp.ne.s32.totalorder %s181, %s182
      %p191 = scmp.eq.s32.totalorder %s24, 0
      %p192 = por %p190, %p191
      %p193 = scmp.ne.s32.totalorder %s181, %s182
      %p194 = scmp.eq.s32.totalorder %s25, 1
      %p195 = por %p193, %p194
      %p197 = scmp.ne.s32.totalorder %s182, %s196
      %p198 = scmp.eq.s32.totalorder %s25, 0
      %p199 = por %p197, %p198
      %s201 = sadd.s32 %s200, 1
      %p204 = scmp.eq.s32.totalorder %s19, 1
      %p205 = scmp.ne.s32.totalorder %s200, %s202
      %p206 = scmp.eq.s32.totalorder %s19, 0
      %p207 = por %p205, %p206
      %p208 = scmp.ne.s32.totalorder %s200, %s202
      %p209 = scmp.eq.s32.totalorder %s24, 1
      %p210 = por %p208, %p209
      %p211 = scmp.ne.s32.totalorder %s202, %s203
      %p212 = scmp.eq.s32.totalorder %s24, 0
      %p213 = por %p211, %p212
      %p214 = scmp.ne.s32.totalorder %s202, %s203
      %p215 = scmp.eq.s32.totalorder %s25, 1
      %p216 = por %p214, %p215
      %p218 = scmp.ne.s32.totalorder %s203, %s217
      %p219 = scmp.eq.s32.totalorder %s25, 0
      %p220 = por %p218, %p219
      %s222 = sadd.s32 %s221, 1
      %p225 = scmp.eq.s32.totalorder %s19, 1
      %p226 = scmp.ne.s32.totalorder %s221, %s223
      %p227 = scmp.eq.s32.totalorder %s19, 0
      %p228 = por %p226, %p227
      %p229 = scmp.ne.s32.totalorder %s221, %s223
      %p230 = scmp.eq.s32.totalorder %s24, 1
      %p231 = por %p229, %p230
      %p232 = scmp.ne.s32.totalorder %s223, %s224
      %p233 = scmp.eq.s32.totalorder %s24, 0
      %p234 = por %p232, %p233
      %p235 = scmp.ne.s32.totalorder %s223, %s224
      %p236 = scmp.eq.s32.totalorder %s25, 1
      %p237 = por %p235, %p236
      %p239 = scmp.ne.s32.totalorder %s224, %s238
      %p240 = scmp.eq.s32.totalorder %s25, 0
      %p241 = por %p239, %p240
      %s242 = ssub.s32 %s19, %s26
      %p243 = scmp.eq.s32.totalorder %s242, 0
      %s245 = sadd.s32 %s244, 1
      %s246 = scalar_select %p243, %s244, %s245
      %p249 = pneg %p243
      %p250 = scmp.eq.s32.totalorder %s19, 1
      %p251 = por %p249, %p250
      %p252 = scmp.ne.s32.totalorder %s244, %s247
      %p253 = scmp.eq.s32.totalorder %s19, 0
      %p254 = por %p252, %p253
      %p255 = scmp.ne.s32.totalorder %s244, %s247
      %p256 = scmp.eq.s32.totalorder %s24, 1
      %p257 = por %p255, %p256
      %p258 = scmp.ne.s32.totalorder %s247, %s248
      %p259 = scmp.eq.s32.totalorder %s24, 0
      %p260 = por %p258, %p259
      %p261 = scmp.ne.s32.totalorder %s247, %s248
      %p262 = scmp.eq.s32.totalorder %s25, 1
      %p263 = por %p261, %p262
      %p265 = scmp.ne.s32.totalorder %s248, %s264
      %p266 = scmp.eq.s32.totalorder %s25, 0
      %p267 = por %p265, %p266
      %p268 = scmp.le.s32.totalorder 1, %s19
      %p269 = scmp.lt.s32.totalorder %s19, 3
      %p270 = pnand %p268, %p269
      %p271 = pneg %p270
      // Predicated region
      $region9: #{resblock_forward.1} parent=5 // pred_check
        _
      $region10: #{resblock_forward.1} parent=5 // pred_check_branch
        %273 = sbr.rel (%p270) target = $region12
      $region11: #{resblock_forward.1} parent=5 // pred_region
        %s274 = ssub.s32 %s19, 1
        // Predicated region
        $region13: #{resblock_forward.1} parent=11 // pred_check
          %p275 = pneg %p66
        $region14: #{resblock_forward.1} parent=11 // pred_check_branch
          %277 = sbr.rel (%p275) target = $region16
        $region15: #{resblock_forward.1} parent=11 // pred_region
          _
        $region16: #{resblock_forward.1} parent=11 // pred_fallthru
          _
        // Predicated region
        $region17: #{resblock_forward.1} parent=11 // pred_check
          %p278 = pneg %p87
        $region18: #{resblock_forward.1} parent=11 // pred_check_branch
          %280 = sbr.rel (%p278) target = $region20
        $region19: #{resblock_forward.1} parent=11 // pred_region
          _
        $region20: #{resblock_forward.1} parent=11 // pred_fallthru
          _
        // Predicated region
        $region21: #{resblock_forward.1} parent=11 // pred_check
          %p281 = pneg %p108
        $region22: #{resblock_forward.1} parent=11 // pred_check_branch
          %283 = sbr.rel (%p281) target = $region24
        $region23: #{resblock_forward.1} parent=11 // pred_region
          _
        $region24: #{resblock_forward.1} parent=11 // pred_fallthru
          _
        // Predicated region
        $region25: #{resblock_forward.1} parent=11 // pred_check
          %p284 = pneg %p129
        $region26: #{resblock_forward.1} parent=11 // pred_check_branch
          %286 = sbr.rel (%p284) target = $region28
        $region27: #{resblock_forward.1} parent=11 // pred_region
          _
        $region28: #{resblock_forward.1} parent=11 // pred_fallthru
          _
        // Predicated region
        $region29: #{resblock_forward.1} parent=11 // pred_check
          %p287 = pneg %p150
        $region30: #{resblock_forward.1} parent=11 // pred_check_branch
          %289 = sbr.rel (%p287) target = $region32
        $region31: #{resblock_forward.1} parent=11 // pred_region
          _
        $region32: #{resblock_forward.1} parent=11 // pred_fallthru
          _
        // Predicated region
        $region33: #{resblock_forward.1} parent=11 // pred_check
          %p290 = pneg %p171
        $region34: #{resblock_forward.1} parent=11 // pred_check_branch
          %292 = sbr.rel (%p290) target = $region36
        $region35: #{resblock_forward.1} parent=11 // pred_region
          _
        $region36: #{resblock_forward.1} parent=11 // pred_fallthru
          _
        // Predicated region
        $region37: #{resblock_forward.1} parent=11 // pred_check
          %p293 = pneg %p192
        $region38: #{resblock_forward.1} parent=11 // pred_check_branch
          %295 = sbr.rel (%p293) target = $region40
        $region39: #{resblock_forward.1} parent=11 // pred_region
          _
        $region40: #{resblock_forward.1} parent=11 // pred_fallthru
          _
        // Predicated region
        $region41: #{resblock_forward.1} parent=11 // pred_check
          %p296 = pneg %p213
        $region42: #{resblock_forward.1} parent=11 // pred_check_branch
          %298 = sbr.rel (%p296) target = $region44
        $region43: #{resblock_forward.1} parent=11 // pred_region
          _
        $region44: #{resblock_forward.1} parent=11 // pred_fallthru
          _
        // Predicated region
        $region45: #{resblock_forward.1} parent=11 // pred_check
          %p299 = pneg %p234
        $region46: #{resblock_forward.1} parent=11 // pred_check_branch
          %301 = sbr.rel (%p299) target = $region48
        $region47: #{resblock_forward.1} parent=11 // pred_region
          _
        $region48: #{resblock_forward.1} parent=11 // pred_fallthru
          _
      $region12: #{resblock_forward.1} parent=5 // pred_fallthru
        _
      %p302 = scmp.lt.s32.totalorder %s19, 2
      // Predicated region
      $region49: #{resblock_forward.1} parent=5 // pred_check
        %p303 = pneg %p302
      $region50: #{resblock_forward.1} parent=5 // pred_check_branch
        %305 = sbr.rel (%p303) target = $region52
      $region51: #{resblock_forward.1} parent=5 // pred_region
        // Predicated region
        $region53: #{resblock_forward.1} parent=51 // pred_check
          %p306 = pneg %p39
        $region54: #{resblock_forward.1} parent=51 // pred_check_branch
          %308 = sbr.rel (%p306) target = $region56
        $region55: #{resblock_forward.1} parent=51 // pred_region
          %p309 = scmp.lt.s32.totalorder %s19, 1
          %s310 = scalar_select %p309, %s19, 1
          %s311 = smul.addr %s310, 32
          %s312 = smul.addr %s311, 4
          %s313 = scalar_lea.vmem %s0, %s312
        $region56: #{resblock_forward.1} parent=51 // pred_fallthru
          _
      $region52: #{resblock_forward.1} parent=5 // pred_fallthru
        _
      %p314 = scmp.le.s32.totalorder 1, %s19
      %p315 = scmp.lt.s32.totalorder %s19, 3
      %p316 = pnand %p314, %p315
      %p317 = pneg %p316
      // Predicated region
      $region57: #{resblock_forward.1} parent=5 // pred_check
        _
      $region58: #{resblock_forward.1} parent=5 // pred_check_branch
        %319 = sbr.rel (%p316) target = $region60
      $region59: #{resblock_forward.1} parent=5 // pred_region
        %s320 = ssub.s32 %s19, 1
        %p321 = scmp.lt.s32.totalorder %s24, 1
        %s322 = scalar_select %p321, %s24, 1
        %s323 = smul.addr %s322, 32
        %s324 = smul.addr %s323, 4
        %s325 = scalar_lea.vmem %s0, %s324
        %p326 = pneg %p45
        %p327 = pneg %p42
        %p328 = pneg %p66
        %p329 = pneg %p63
        %p330 = pneg %p87
        %p331 = pneg %p84
        %p332 = pneg %p108
        %p333 = pneg %p105
        %p334 = pneg %p129
        %p335 = pneg %p126
        %p336 = pneg %p150
        %p337 = pneg %p147
        %p338 = pneg %p171
        %p339 = pneg %p168
        %p340 = pneg %p192
        %p341 = pneg %p189
        %p342 = pneg %p213
        %p343 = pneg %p210
        %p344 = pneg %p234
        %p345 = pneg %p231
        %p346 = pneg %p260
        %p347 = pneg %p257
        %s348 = sand.u32 %s247, 1
        %s349 = scalar_lea.sflag [#allocation4], %s348
        %s350 = sand.u32 %s247, 1
        %s351 = smul.addr %s350, 256
        %s352 = scalar_lea.vmem [#allocation3], %s351
        %p353 = scmp.lt.s32.totalorder %s24, 1
        %s354 = scalar_select %p353, %s24, 1
        %s355 = smul.addr %s354, 32
        %s356 = smul.addr %s355, 4
        %s357 = scalar_lea.vmem %s0, %s356
        %v359 = vld [vmem:[%s357] sm:$0xf]
        %v360 = vld [vmem:[%s357 + $0x4] sm:$0xf]
        %v361 = vld [vmem:[%s357 + $0x8] sm:$0xf]
        %v362 = vld [vmem:[%s357 + $0xc] sm:$0xf]
        %v363 = vld [vmem:[%s357 + $0x10] sm:$0xf]
        %v364 = vld [vmem:[%s357 + $0x14] sm:$0xf]
        %v365 = vld [vmem:[%s357 + $0x18] sm:$0xf]
        %v366 = vld [vmem:[%s357 + $0x1c] sm:$0xf]
        %v367 = vld [vmem:[%s357 + $0x20] sm:$0xf]
        %v368 = vld [vmem:[%s357 + $0x24] sm:$0xf]
        %v369 = vld [vmem:[%s357 + $0x28] sm:$0xf]
        %v370 = vld [vmem:[%s357 + $0x2c] sm:$0xf]
        %v371 = vld [vmem:[%s357 + $0x30] sm:$0xf]
        %v372 = vld [vmem:[%s357 + $0x34] sm:$0xf]
        %v373 = vld [vmem:[%s357 + $0x38] sm:$0xf]
        %v374 = vld [vmem:[%s357 + $0x3c] sm:$0xf]
        %v375 = vld [vmem:[%s357 + $0x40] sm:$0xf]
        %v376 = vld [vmem:[%s357 + $0x44] sm:$0xf]
        %v377 = vld [vmem:[%s357 + $0x48] sm:$0xf]
        %v378 = vld [vmem:[%s357 + $0x4c] sm:$0xf]
        %v379 = vld [vmem:[%s357 + $0x50] sm:$0xf]
        %v380 = vld [vmem:[%s357 + $0x54] sm:$0xf]
        %v381 = vld [vmem:[%s357 + $0x58] sm:$0xf]
        %v382 = vld [vmem:[%s357 + $0x5c] sm:$0xf]
        %v383 = vld [vmem:[%s357 + $0x60] sm:$0xf]
        %v384 = vld [vmem:[%s357 + $0x64] sm:$0xf]
        %v385 = vld [vmem:[%s357 + $0x68] sm:$0xf]
        %v386 = vld [vmem:[%s357 + $0x6c] sm:$0xf]
        %v387 = vld [vmem:[%s357 + $0x70] sm:$0xf]
        %v388 = vld [vmem:[%s357 + $0x74] sm:$0xf]
        %v389 = vld [vmem:[%s357 + $0x78] sm:$0xf]
        %v390 = vld [vmem:[%s357 + $0x7c] sm:$0xf]
        %v391 = vld [vmem:[%s1] sm:$0xff]
        %v392 = vld [vmem:[%s1 + $0x8] sm:$0xff]
        %v393 = vld [vmem:[%s1 + $0x10] sm:$0xff]
        %v394 = vld [vmem:[%s1 + $0x18] sm:$0xff]
        %v395 = vld [vmem:[%s1 + $0x20] sm:$0xff]
        %v396 = vld [vmem:[%s1 + $0x28] sm:$0xff]
        %v397 = vld [vmem:[%s1 + $0x30] sm:$0xff]
        %v398 = vld [vmem:[%s1 + $0x38] sm:$0xff]
        %v399 = vld [vmem:[%s1 + $0x40] sm:$0xff]
        %v400 = vld [vmem:[%s1 + $0x48] sm:$0xff]
        %v401 = vld [vmem:[%s1 + $0x50] sm:$0xff]
        %v402 = vld [vmem:[%s1 + $0x58] sm:$0xff]
        %v403 = vld [vmem:[%s1 + $0x60] sm:$0xff]
        %v404 = vld [vmem:[%s1 + $0x68] sm:$0xff]
        %v405 = vld [vmem:[%s1 + $0x70] sm:$0xff]
        %v406 = vld [vmem:[%s1 + $0x78] sm:$0xff]
        %v407 = vld [vmem:[%s2] sm:$0x3]
        %v409 = vlaneseq
        %v410 = vshrl.u32 %v409, 7
        %v411 = vsub.s32 0, %v410
        %v412 = vrot.slane %v407, %v411
        %v413 = vlaneseq
        %v414 = vshrl.u32 %v413, 7
        %v415 = vsub.s32 1, %v414
        %v416 = vrot.slane %v407, %v415
        %v451 = vunpack.c.l.b16 %v359
        %v452 = vunpack.c.l.b16 %v360
        %v453 = vunpack.c.l.b16 %v361
        %v454 = vunpack.c.l.b16 %v362
        %v455 = vunpack.c.l.b16 %v363
        %v456 = vunpack.c.l.b16 %v364
        %v457 = vunpack.c.l.b16 %v365
        %v458 = vunpack.c.l.b16 %v366
        %v459 = vunpack.c.l.b16 %v367
        %v460 = vunpack.c.l.b16 %v368
        %v461 = vunpack.c.l.b16 %v369
        %v462 = vunpack.c.l.b16 %v370
        %v463 = vunpack.c.l.b16 %v371
        %v464 = vunpack.c.l.b16 %v372
        %v465 = vunpack.c.l.b16 %v373
        %v466 = vunpack.c.l.b16 %v374
        %v467 = vunpack.c.l.b16 %v375
        %v468 = vunpack.c.l.b16 %v376
        %v469 = vunpack.c.l.b16 %v377
        %v470 = vunpack.c.l.b16 %v378
        %v471 = vunpack.c.l.b16 %v379
        %v472 = vunpack.c.l.b16 %v380
        %v473 = vunpack.c.l.b16 %v381
        %v474 = vunpack.c.l.b16 %v382
        %v475 = vunpack.c.l.b16 %v383
        %v476 = vunpack.c.l.b16 %v384
        %v477 = vunpack.c.l.b16 %v385
        %v478 = vunpack.c.l.b16 %v386
        %v479 = vunpack.c.l.b16 %v387
        %v480 = vunpack.c.l.b16 %v388
        %v481 = vunpack.c.l.b16 %v389
        %v482 = vunpack.c.l.b16 %v390
        %v483 = vpack.c.b16 %v452, %v451
        %v484 = vpack.c.b16 %v454, %v453
        %v485 = vpack.c.b16 %v456, %v455
        %v486 = vpack.c.b16 %v458, %v457
        %v487 = vpack.c.b16 %v460, %v459
        %v488 = vpack.c.b16 %v462, %v461
        %v489 = vpack.c.b16 %v464, %v463
        %v490 = vpack.c.b16 %v466, %v465
        %v491 = vpack.c.b16 %v468, %v467
        %v492 = vpack.c.b16 %v470, %v469
        %v493 = vpack.c.b16 %v472, %v471
        %v494 = vpack.c.b16 %v474, %v473
        %v495 = vpack.c.b16 %v476, %v475
        %v496 = vpack.c.b16 %v478, %v477
        %v497 = vpack.c.b16 %v480, %v479
        %v498 = vpack.c.b16 %v482, %v481
        %v531 = vunpack.c.l.b16 %v391
        %v532 = vunpack.c.h.b16 %v391
        %v533 = vunpack.c.l.b16 %v392
        %v534 = vunpack.c.h.b16 %v392
        %v535 = vunpack.c.l.b16 %v393
        %v536 = vunpack.c.h.b16 %v393
        %v537 = vunpack.c.l.b16 %v394
        %v538 = vunpack.c.h.b16 %v394
        %v539 = vunpack.c.l.b16 %v395
        %v540 = vunpack.c.h.b16 %v395
        %v541 = vunpack.c.l.b16 %v396
        %v542 = vunpack.c.h.b16 %v396
        %v543 = vunpack.c.l.b16 %v397
        %v544 = vunpack.c.h.b16 %v397
        %v545 = vunpack.c.l.b16 %v398
        %v546 = vunpack.c.h.b16 %v398
        %v547 = vunpack.c.l.b16 %v399
        %v548 = vunpack.c.h.b16 %v399
        %v549 = vunpack.c.l.b16 %v400
        %v550 = vunpack.c.h.b16 %v400
        %v551 = vunpack.c.l.b16 %v401
        %v552 = vunpack.c.h.b16 %v401
        %v553 = vunpack.c.l.b16 %v402
        %v554 = vunpack.c.h.b16 %v402
        %v555 = vunpack.c.l.b16 %v403
        %v556 = vunpack.c.h.b16 %v403
        %v557 = vunpack.c.l.b16 %v404
        %v558 = vunpack.c.h.b16 %v404
        %v559 = vunpack.c.l.b16 %v405
        %v560 = vunpack.c.h.b16 %v405
        %v561 = vunpack.c.l.b16 %v406
        %v562 = vunpack.c.h.b16 %v406
        %v563 = vpack.c.b16 %v533, %v531
        %v564 = vpack.c.b16 %v534, %v532
        %v565 = vpack.c.b16 %v537, %v535
        %v566 = vpack.c.b16 %v538, %v536
        %v567 = vpack.c.b16 %v541, %v539
        %v568 = vpack.c.b16 %v542, %v540
        %v569 = vpack.c.b16 %v545, %v543
        %v570 = vpack.c.b16 %v546, %v544
        %v571 = vpack.c.b16 %v549, %v547
        %v572 = vpack.c.b16 %v550, %v548
        %v573 = vpack.c.b16 %v553, %v551
        %v574 = vpack.c.b16 %v554, %v552
        %v575 = vpack.c.b16 %v557, %v555
        %v576 = vpack.c.b16 %v558, %v556
        %v577 = vpack.c.b16 %v561, %v559
        %v578 = vpack.c.b16 %v562, %v560
        %595 = vmatprep.subr.bf16.mxu0 %v564
        %596 = vmatpush1.bf16.msra.mxu0 %v563
        %597 = vmatprep.subr.bf16.mxu0 %v566
        %598 = vmatpush1.bf16.msra.mxu0 %v565
        %599 = vmatprep.subr.bf16.mxu0 %v568
        %600 = vmatpush1.bf16.msra.mxu0 %v567
        %601 = vmatprep.subr.bf16.mxu0 %v570
        %602 = vmatpush1.bf16.msra.mxu0 %v569
        %603 = vmatprep.subr.bf16.mxu0 %v572
        %604 = vmatpush1.bf16.msra.mxu0 %v571
        %605 = vmatprep.subr.bf16.mxu0 %v574
        %606 = vmatpush1.bf16.msra.mxu0 %v573
        %607 = vmatprep.subr.bf16.mxu0 %v576
        %608 = vmatpush1.bf16.msra.mxu0 %v575
        %609 = vmatprep.subr.bf16.mxu0 %v578
        %610 = vmatpush1.bf16.msra.mxu0 %v577
        %611 = vmatprep.subr.bf16.mxu0 0
        %612 = vmatpush1.bf16.msra.mxu0 0
        %613 = vmatprep.subr.bf16.mxu0 0
        %614 = vmatpush1.bf16.msra.mxu0 0
        %615 = vmatprep.subr.bf16.mxu0 0
        %616 = vmatpush1.bf16.msra.mxu0 0
        %617 = vmatprep.subr.bf16.mxu0 0
        %618 = vmatpush1.bf16.msra.mxu0 0
        %619 = vmatprep.subr.bf16.mxu0 0
        %620 = vmatpush1.bf16.msra.mxu0 0
        %621 = vmatprep.subr.bf16.mxu0 0
        %622 = vmatpush1.bf16.msra.mxu0 0
        %623 = vmatprep.subr.bf16.mxu0 0
        %624 = vmatpush1.bf16.msra.mxu0 0
        %625 = vmatprep.subr.bf16.mxu0 0
        %626 = vmatpush1.bf16.msra.mxu0 0
        %627 = vmatprep.mubr.bf16.mxu0 0
        %628 = vmatmul.mubr.bf16.gmra.mrb[0].mxu0 %v483
        %v629 = vpop.f32.mrb[0].mxu0
        %v630 = vadd.f32 %v412, %v629
        %v631 = vpop.f32.mrb[0].mxu0
        %v632 = vadd.f32 %v416, %v631
        %v633 = vpop.f32.mrb[0].mxu0
        %v634 = vadd.f32 %v412, %v633
        %v635 = vpop.f32.mrb[0].mxu0
        %v636 = vadd.f32 %v416, %v635
        %637 = vmatprep.mubr.bf16.mxu0 0
        %638 = vmatmul.mubr.bf16.gmra.mrb[0].mxu0 %v484
        %v639 = vpop.f32.mrb[0].mxu0
        %v640 = vadd.f32 %v412, %v639
        %v641 = vpop.f32.mrb[0].mxu0
        %v642 = vadd.f32 %v416, %v641
        %v643 = vpop.f32.mrb[0].mxu0
        %v644 = vadd.f32 %v412, %v643
        %v645 = vpop.f32.mrb[0].mxu0
        %v646 = vadd.f32 %v416, %v645
        %647 = vmatprep.mubr.bf16.mxu0 0
        %648 = vmatmul.mubr.bf16.gmra.mrb[0].mxu0 %v485
        %v649 = vpop.f32.mrb[0].mxu0
        %v650 = vadd.f32 %v412, %v649
        %v651 = vpop.f32.mrb[0].mxu0
        %v652 = vadd.f32 %v416, %v651
        %v653 = vpop.f32.mrb[0].mxu0
        %v654 = vadd.f32 %v412, %v653
        %v655 = vpop.f32.mrb[0].mxu0
        %v656 = vadd.f32 %v416, %v655
        %657 = vmatprep.mubr.bf16.mxu0 0
        %658 = vmatmul.mubr.bf16.gmra.mrb[0].mxu0 %v486
        %v659 = vpop.f32.mrb[0].mxu0
        %v660 = vadd.f32 %v412, %v659
        %v661 = vpop.f32.mrb[0].mxu0
        %v662 = vadd.f32 %v416, %v661
        %v663 = vpop.f32.mrb[0].mxu0
        %v664 = vadd.f32 %v412, %v663
        %v665 = vpop.f32.mrb[0].mxu0
        %v666 = vadd.f32 %v416, %v665
        %667 = vmatprep.mubr.bf16.mxu0 0
        %668 = vmatmul.mubr.bf16.gmra.mrb[0].mxu0 %v487
        %v669 = vpop.f32.mrb[0].mxu0
        %v670 = vadd.f32 %v412, %v669
        %v671 = vpop.f32.mrb[0].mxu0
        %v672 = vadd.f32 %v416, %v671
        %v673 = vpop.f32.mrb[0].mxu0
        %v674 = vadd.f32 %v412, %v673
        %v675 = vpop.f32.mrb[0].mxu0
        %v676 = vadd.f32 %v416, %v675
        %677 = vmatprep.mubr.bf16.mxu0 0
        %678 = vmatmul.mubr.bf16.gmra.mrb[0].mxu0 %v488
        %v679 = vpop.f32.mrb[0].mxu0
        %v680 = vadd.f32 %v412, %v679
        %v681 = vpop.f32.mrb[0].mxu0
        %v682 = vadd.f32 %v416, %v681
        %v683 = vpop.f32.mrb[0].mxu0
        %v684 = vadd.f32 %v412, %v683
        %v685 = vpop.f32.mrb[0].mxu0
        %v686 = vadd.f32 %v416, %v685
        %687 = vmatprep.mubr.bf16.mxu0 0
        %688 = vmatmul.mubr.bf16.gmra.mrb[0].mxu0 %v489
        %v689 = vpop.f32.mrb[0].mxu0
        %v690 = vadd.f32 %v412, %v689
        %v691 = vpop.f32.mrb[0].mxu0
        %v692 = vadd.f32 %v416, %v691
        %v693 = vpop.f32.mrb[0].mxu0
        %v694 = vadd.f32 %v412, %v693
        %v695 = vpop.f32.mrb[0].mxu0
        %v696 = vadd.f32 %v416, %v695
        %697 = vmatprep.mubr.bf16.mxu0 0
        %698 = vmatmul.mubr.bf16.gmra.mrb[0].mxu0 %v490
        %v699 = vpop.f32.mrb[0].mxu0
        %v700 = vadd.f32 %v412, %v699
        %v701 = vpop.f32.mrb[0].mxu0
        %v702 = vadd.f32 %v416, %v701
        %v703 = vpop.f32.mrb[0].mxu0
        %v704 = vadd.f32 %v412, %v703
        %v705 = vpop.f32.mrb[0].mxu0
        %v706 = vadd.f32 %v416, %v705
        %707 = vmatprep.mubr.bf16.mxu0 0
        %708 = vmatmul.mubr.bf16.gmra.mrb[0].mxu0 %v491
        %v709 = vpop.f32.mrb[0].mxu0
        %v710 = vadd.f32 %v412, %v709
        %v711 = vpop.f32.mrb[0].mxu0
        %v712 = vadd.f32 %v416, %v711
        %v713 = vpop.f32.mrb[0].mxu0
        %v714 = vadd.f32 %v412, %v713
        %v715 = vpop.f32.mrb[0].mxu0
        %v716 = vadd.f32 %v416, %v715
        %717 = vmatprep.mubr.bf16.mxu0 0
        %718 = vmatmul.mubr.bf16.gmra.mrb[0].mxu0 %v492
        %v719 = vpop.f32.mrb[0].mxu0
        %v720 = vadd.f32 %v412, %v719
        %v721 = vpop.f32.mrb[0].mxu0
        %v722 = vadd.f32 %v416, %v721
        %v723 = vpop.f32.mrb[0].mxu0
        %v724 = vadd.f32 %v412, %v723
        %v725 = vpop.f32.mrb[0].mxu0
        %v726 = vadd.f32 %v416, %v725
        %727 = vmatprep.mubr.bf16.mxu0 0
        %728 = vmatmul.mubr.bf16.gmra.mrb[0].mxu0 %v493
        %v729 = vpop.f32.mrb[0].mxu0
        %v730 = vadd.f32 %v412, %v729
        %v731 = vpop.f32.mrb[0].mxu0
        %v732 = vadd.f32 %v416, %v731
        %v733 = vpop.f32.mrb[0].mxu0
        %v734 = vadd.f32 %v412, %v733
        %v735 = vpop.f32.mrb[0].mxu0
        %v736 = vadd.f32 %v416, %v735
        %737 = vmatprep.mubr.bf16.mxu0 0
        %738 = vmatmul.mubr.bf16.gmra.mrb[0].mxu0 %v494
        %v739 = vpop.f32.mrb[0].mxu0
        %v740 = vadd.f32 %v412, %v739
        %v741 = vpop.f32.mrb[0].mxu0
        %v742 = vadd.f32 %v416, %v741
        %v743 = vpop.f32.mrb[0].mxu0
        %v744 = vadd.f32 %v412, %v743
        %v745 = vpop.f32.mrb[0].mxu0
        %v746 = vadd.f32 %v416, %v745
        %747 = vmatprep.mubr.bf16.mxu0 0
        %748 = vmatmul.mubr.bf16.gmra.mrb[0].mxu0 %v495
        %v749 = vpop.f32.mrb[0].mxu0
        %v750 = vadd.f32 %v412, %v749
        %v751 = vpop.f32.mrb[0].mxu0
        %v752 = vadd.f32 %v416, %v751
        %v753 = vpop.f32.mrb[0].mxu0
        %v754 = vadd.f32 %v412, %v753
        %v755 = vpop.f32.mrb[0].mxu0
        %v756 = vadd.f32 %v416, %v755
        %757 = vmatprep.mubr.bf16.mxu0 0
        %758 = vmatmul.mubr.bf16.gmra.mrb[0].mxu0 %v496
        %v759 = vpop.f32.mrb[0].mxu0
        %v760 = vadd.f32 %v412, %v759
        %v761 = vpop.f32.mrb[0].mxu0
        %v762 = vadd.f32 %v416, %v761
        %v763 = vpop.f32.mrb[0].mxu0
        %v764 = vadd.f32 %v412, %v763
        %v765 = vpop.f32.mrb[0].mxu0
        %v766 = vadd.f32 %v416, %v765
        %767 = vmatprep.mubr.bf16.mxu0 0
        %768 = vmatmul.mubr.bf16.gmra.mrb[0].mxu0 %v497
        %v769 = vpop.f32.mrb[0].mxu0
        %v770 = vadd.f32 %v412, %v769
        %v771 = vpop.f32.mrb[0].mxu0
        %v772 = vadd.f32 %v416, %v771
        %v773 = vpop.f32.mrb[0].mxu0
        %v774 = vadd.f32 %v412, %v773
        %v775 = vpop.f32.mrb[0].mxu0
        %v776 = vadd.f32 %v416, %v775
        %777 = vmatprep.mubr.bf16.mxu0 0
        %778 = vmatmul.mubr.bf16.gmra.mrb[0].mxu0 %v498
        %v779 = vpop.f32.mrb[0].mxu0
        %v780 = vadd.f32 %v412, %v779
        %v781 = vpop.f32.mrb[0].mxu0
        %v782 = vadd.f32 %v416, %v781
        %v783 = vpop.f32.mrb[0].mxu0
        %v784 = vadd.f32 %v412, %v783
        %v785 = vpop.f32.mrb[0].mxu0
        %v786 = vadd.f32 %v416, %v785
        %787 = vdwg.mxu0
        %v788 = vmax.f32 %v630, 0.0
        %v789 = vmax.f32 %v634, 0.0
        %v790 = vmax.f32 %v640, 0.0
        %v791 = vmax.f32 %v644, 0.0
        %v792 = vmax.f32 %v650, 0.0
        %v793 = vmax.f32 %v654, 0.0
        %v794 = vmax.f32 %v660, 0.0
        %v795 = vmax.f32 %v664, 0.0
        %v796 = vmax.f32 %v670, 0.0
        %v797 = vmax.f32 %v674, 0.0
        %v798 = vmax.f32 %v680, 0.0
        %v799 = vmax.f32 %v684, 0.0
        %v800 = vmax.f32 %v690, 0.0
        %v801 = vmax.f32 %v694, 0.0
        %v802 = vmax.f32 %v700, 0.0
        %v803 = vmax.f32 %v704, 0.0
        %v804 = vmax.f32 %v710, 0.0
        %v805 = vmax.f32 %v714, 0.0
        %v806 = vmax.f32 %v720, 0.0
        %v807 = vmax.f32 %v724, 0.0
        %v808 = vmax.f32 %v730, 0.0
        %v809 = vmax.f32 %v734, 0.0
        %v810 = vmax.f32 %v740, 0.0
        %v811 = vmax.f32 %v744, 0.0
        %v812 = vmax.f32 %v750, 0.0
        %v813 = vmax.f32 %v754, 0.0
        %v814 = vmax.f32 %v760, 0.0
        %v815 = vmax.f32 %v764, 0.0
        %v816 = vmax.f32 %v770, 0.0
        %v817 = vmax.f32 %v774, 0.0
        %v818 = vmax.f32 %v780, 0.0
        %v819 = vmax.f32 %v784, 0.0
        %v820 = vld [vmem:[%s3] sm:$0x1]
        %v822 = vlaneseq
        %v823 = vshrl.u32 %v822, 7
        %v824 = vsub.s32 0, %v823
        %v825 = vrot.slane %v820, %v824
        %v827 = vadd.f32 %v788, %v825
        %v828 = vadd.f32 %v789, %v825
        %v829 = vadd.f32 %v790, %v825
        %v830 = vadd.f32 %v791, %v825
        %v831 = vadd.f32 %v792, %v825
        %v832 = vadd.f32 %v793, %v825
        %v833 = vadd.f32 %v794, %v825
        %v834 = vadd.f32 %v795, %v825
        %v835 = vadd.f32 %v796, %v825
        %v836 = vadd.f32 %v797, %v825
        %v837 = vadd.f32 %v798, %v825
        %v838 = vadd.f32 %v799, %v825
        %v839 = vadd.f32 %v800, %v825
        %v840 = vadd.f32 %v801, %v825
        %v841 = vadd.f32 %v802, %v825
        %v842 = vadd.f32 %v803, %v825
        %v843 = vadd.f32 %v804, %v825
        %v844 = vadd.f32 %v805, %v825
        %v845 = vadd.f32 %v806, %v825
        %v846 = vadd.f32 %v807, %v825
        %v847 = vadd.f32 %v808, %v825
        %v848 = vadd.f32 %v809, %v825
        %v849 = vadd.f32 %v810, %v825
        %v850 = vadd.f32 %v811, %v825
        %v851 = vadd.f32 %v812, %v825
        %v852 = vadd.f32 %v813, %v825
        %v853 = vadd.f32 %v814, %v825
        %v854 = vadd.f32 %v815, %v825
        %v855 = vadd.f32 %v816, %v825
        %v856 = vadd.f32 %v817, %v825
        %v857 = vadd.f32 %v818, %v825
        %v858 = vadd.f32 %v819, %v825
        %859 = vst [vmem:[#allocation2] sm:$0xf] 0
        %860 = vst [vmem:[#allocation2 + $0x4] sm:$0xf] 0
        %861 = vst [vmem:[#allocation2 + $0x8] sm:$0x1] 0
        %s862 = scalar_lea.vmem [#allocation2], 204
        %863 = vst [vmem:[%s862] sm:$0xf] 0
        %864 = vst [vmem:[%s862 + $0x4] sm:$0xf] 0
        %865 = vst [vmem:[%s862 + $0x8] sm:$0x1] 0
        %s866 = scalar_lea.vmem [#allocation2], 12
        %vm867 = vcmask 1040384
        %vm868 = vsmask.f32 256
        %vm869 = vmand %vm867, %vm868
        %v870 = vld [vmem:[%s866] sm:$0x1]
        %v871 = vsel %vm869, 0, %v870
        %872 = vst [vmem:[%s866] sm:$0x1] %v871
        %v873 = vld [vmem:[%s866 + $0xc] sm:$0x1]
        %v874 = vsel %vm869, 0, %v873
        %875 = vst [vmem:[%s866 + $0xc] sm:$0x1] %v874
        %v876 = vld [vmem:[%s866 + $0x18] sm:$0x1]
        %v877 = vsel %vm869, 0, %v876
        %878 = vst [vmem:[%s866 + $0x18] sm:$0x1] %v877
        %v879 = vld [vmem:[%s866 + $0x24] sm:$0x1]
        %v880 = vsel %vm869, 0, %v879
        %881 = vst [vmem:[%s866 + $0x24] sm:$0x1] %v880
        %v882 = vld [vmem:[%s866 + $0x30] sm:$0x1]
        %v883 = vsel %vm869, 0, %v882
        %884 = vst [vmem:[%s866 + $0x30] sm:$0x1] %v883
        %v885 = vld [vmem:[%s866 + $0x3c] sm:$0x1]
        %v886 = vsel %vm869, 0, %v885
        %887 = vst [vmem:[%s866 + $0x3c] sm:$0x1] %v886
        %v888 = vld [vmem:[%s866 + $0x48] sm:$0x1]
        %v889 = vsel %vm869, 0, %v888
        %890 = vst [vmem:[%s866 + $0x48] sm:$0x1] %v889
        %v891 = vld [vmem:[%s866 + $0x54] sm:$0x1]
        %v892 = vsel %vm869, 0, %v891
        %893 = vst [vmem:[%s866 + $0x54] sm:$0x1] %v892
        %v894 = vld [vmem:[%s866 + $0x60] sm:$0x1]
        %v895 = vsel %vm869, 0, %v894
        %896 = vst [vmem:[%s866 + $0x60] sm:$0x1] %v895
        %v897 = vld [vmem:[%s866 + $0x6c] sm:$0x1]
        %v898 = vsel %vm869, 0, %v897
        %899 = vst [vmem:[%s866 + $0x6c] sm:$0x1] %v898
        %v900 = vld [vmem:[%s866 + $0x78] sm:$0x1]
        %v901 = vsel %vm869, 0, %v900
        %902 = vst [vmem:[%s866 + $0x78] sm:$0x1] %v901
        %v903 = vld [vmem:[%s866 + $0x84] sm:$0x1]
        %v904 = vsel %vm869, 0, %v903
        %905 = vst [vmem:[%s866 + $0x84] sm:$0x1] %v904
        %v906 = vld [vmem:[%s866 + $0x90] sm:$0x1]
        %v907 = vsel %vm869, 0, %v906
        %908 = vst [vmem:[%s866 + $0x90] sm:$0x1] %v907
        %v909 = vld [vmem:[%s866 + $0x9c] sm:$0x1]
        %v910 = vsel %vm869, 0, %v909
        %911 = vst [vmem:[%s866 + $0x9c] sm:$0x1] %v910
        %v912 = vld [vmem:[%s866 + $0xa8] sm:$0x1]
        %v913 = vsel %vm869, 0, %v912
        %914 = vst [vmem:[%s866 + $0xa8] sm:$0x1] %v913
        %v915 = vld [vmem:[%s866 + $0xb4] sm:$0x1]
        %v916 = vsel %vm869, 0, %v915
        %917 = vst [vmem:[%s866 + $0xb4] sm:$0x1] %v916
        %vm918 = vsmask.f32 7938
        %vm919 = vmand %vm867, %vm918
        %v920 = vld [vmem:[%s866 + $0x8] sm:$0x1]
        %v921 = vsel %vm919, 0, %v920
        %922 = vst [vmem:[%s866 + $0x8] sm:$0x1] %v921
        %v923 = vld [vmem:[%s866 + $0x14] sm:$0x1]
        %v924 = vsel %vm919, 0, %v923
        %925 = vst [vmem:[%s866 + $0x14] sm:$0x1] %v924
        %v926 = vld [vmem:[%s866 + $0x20] sm:$0x1]
        %v927 = vsel %vm919, 0, %v926
        %928 = vst [vmem:[%s866 + $0x20] sm:$0x1] %v927
        %v929 = vld [vmem:[%s866 + $0x2c] sm:$0x1]
        %v930 = vsel %vm919, 0, %v929
        %931 = vst [vmem:[%s866 + $0x2c] sm:$0x1] %v930
        %v932 = vld [vmem:[%s866 + $0x38] sm:$0x1]
        %v933 = vsel %vm919, 0, %v932
        %934 = vst [vmem:[%s866 + $0x38] sm:$0x1] %v933
        %v935 = vld [vmem:[%s866 + $0x44] sm:$0x1]
        %v936 = vsel %vm919, 0, %v935
        %937 = vst [vmem:[%s866 + $0x44] sm:$0x1] %v936
        %v938 = vld [vmem:[%s866 + $0x50] sm:$0x1]
        %v939 = vsel %vm919, 0, %v938
        %940 = vst [vmem:[%s866 + $0x50] sm:$0x1] %v939
        %v941 = vld [vmem:[%s866 + $0x5c] sm:$0x1]
        %v942 = vsel %vm919, 0, %v941
        %943 = vst [vmem:[%s866 + $0x5c] sm:$0x1] %v942
        %v944 = vld [vmem:[%s866 + $0x68] sm:$0x1]
        %v945 = vsel %vm919, 0, %v944
        %946 = vst [vmem:[%s866 + $0x68] sm:$0x1] %v945
        %v947 = vld [vmem:[%s866 + $0x74] sm:$0x1]
        %v948 = vsel %vm919, 0, %v947
        %949 = vst [vmem:[%s866 + $0x74] sm:$0x1] %v948
        %v950 = vld [vmem:[%s866 + $0x80] sm:$0x1]
        %v951 = vsel %vm919, 0, %v950
        %952 = vst [vmem:[%s866 + $0x80] sm:$0x1] %v951
        %v953 = vld [vmem:[%s866 + $0x8c] sm:$0x1]
        %v954 = vsel %vm919, 0, %v953
        %955 = vst [vmem:[%s866 + $0x8c] sm:$0x1] %v954
        %v956 = vld [vmem:[%s866 + $0x98] sm:$0x1]
        %v957 = vsel %vm919, 0, %v956
        %958 = vst [vmem:[%s866 + $0x98] sm:$0x1] %v957
        %v959 = vld [vmem:[%s866 + $0xa4] sm:$0x1]
        %v960 = vsel %vm919, 0, %v959
        %961 = vst [vmem:[%s866 + $0xa4] sm:$0x1] %v960
        %v962 = vld [vmem:[%s866 + $0xb0] sm:$0x1]
        %v963 = vsel %vm919, 0, %v962
        %964 = vst [vmem:[%s866 + $0xb0] sm:$0x1] %v963
        %v965 = vld [vmem:[%s866 + $0xbc] sm:$0x1]
        %v966 = vsel %vm919, 0, %v965
        %967 = vst [vmem:[%s866 + $0xbc] sm:$0x1] %v966
        %v968 = vpack.c.bf16 %v828, %v827
        %v969 = vpack.c.bf16 %v830, %v829
        %v970 = vpack.c.bf16 %v832, %v831
        %v971 = vpack.c.bf16 %v834, %v833
        %v972 = vpack.c.bf16 %v836, %v835
        %v973 = vpack.c.bf16 %v838, %v837
        %v974 = vpack.c.bf16 %v840, %v839
        %v975 = vpack.c.bf16 %v842, %v841
        %v976 = vpack.c.bf16 %v844, %v843
        %v977 = vpack.c.bf16 %v846, %v845
        %v978 = vpack.c.bf16 %v848, %v847
        %v979 = vpack.c.bf16 %v850, %v849
        %v980 = vpack.c.bf16 %v852, %v851
        %v981 = vpack.c.bf16 %v854, %v853
        %v982 = vpack.c.bf16 %v856, %v855
        %v983 = vpack.c.bf16 %v858, %v857
        %v1000 = vunpack.c.l.b16 %v968
        %v1001 = vunpack.c.h.b16 %v968
        %v1002 = vunpack.c.l.b16 %v969
        %v1003 = vunpack.c.h.b16 %v969
        %v1004 = vunpack.c.l.b16 %v970
        %v1005 = vunpack.c.h.b16 %v970
        %v1006 = vunpack.c.l.b16 %v971
        %v1007 = vunpack.c.h.b16 %v971
        %v1008 = vunpack.c.l.b16 %v972
        %v1009 = vunpack.c.h.b16 %v972
        %v1010 = vunpack.c.l.b16 %v973
        %v1011 = vunpack.c.h.b16 %v973
        %v1012 = vunpack.c.l.b16 %v974
        %v1013 = vunpack.c.h.b16 %v974
        %v1014 = vunpack.c.l.b16 %v975
        %v1015 = vunpack.c.h.b16 %v975
        %v1016 = vunpack.c.l.b16 %v976
        %v1017 = vunpack.c.h.b16 %v976
        %v1018 = vunpack.c.l.b16 %v977
        %v1019 = vunpack.c.h.b16 %v977
        %v1020 = vunpack.c.l.b16 %v978
        %v1021 = vunpack.c.h.b16 %v978
        %v1022 = vunpack.c.l.b16 %v979
        %v1023 = vunpack.c.h.b16 %v979
        %v1024 = vunpack.c.l.b16 %v980
        %v1025 = vunpack.c.h.b16 %v980
        %v1026 = vunpack.c.l.b16 %v981
        %v1027 = vunpack.c.h.b16 %v981
        %v1028 = vunpack.c.l.b16 %v982
        %v1029 = vunpack.c.h.b16 %v982
        %v1030 = vunpack.c.l.b16 %v983
        %v1031 = vunpack.c.h.b16 %v983
        %v1032 = vpack.c.b16 %v1000, %v1000
        %v1033 = vpack.c.b16 %v1001, %v1001
        %v1034 = vpack.c.b16 %v1002, %v1002
        %v1035 = vpack.c.b16 %v1003, %v1003
        %v1036 = vpack.c.b16 %v1004, %v1004
        %v1037 = vpack.c.b16 %v1005, %v1005
        %v1038 = vpack.c.b16 %v1006, %v1006
        %v1039 = vpack.c.b16 %v1007, %v1007
        %v1040 = vpack.c.b16 %v1008, %v1008
        %v1041 = vpack.c.b16 %v1009, %v1009
        %v1042 = vpack.c.b16 %v1010, %v1010
        %v1043 = vpack.c.b16 %v1011, %v1011
        %v1044 = vpack.c.b16 %v1012, %v1012
        %v1045 = vpack.c.b16 %v1013, %v1013
        %v1046 = vpack.c.b16 %v1014, %v1014
        %v1047 = vpack.c.b16 %v1015, %v1015
        %v1048 = vpack.c.b16 %v1016, %v1016
        %v1049 = vpack.c.b16 %v1017, %v1017
        %v1050 = vpack.c.b16 %v1018, %v1018
        %v1051 = vpack.c.b16 %v1019, %v1019
        %v1052 = vpack.c.b16 %v1020, %v1020
        %v1053 = vpack.c.b16 %v1021, %v1021
        %v1054 = vpack.c.b16 %v1022, %v1022
        %v1055 = vpack.c.b16 %v1023, %v1023
        %v1056 = vpack.c.b16 %v1024, %v1024
        %v1057 = vpack.c.b16 %v1025, %v1025
        %v1058 = vpack.c.b16 %v1026, %v1026
        %v1059 = vpack.c.b16 %v1027, %v1027
        %v1060 = vpack.c.b16 %v1028, %v1028
        %v1061 = vpack.c.b16 %v1029, %v1029
        %v1062 = vpack.c.b16 %v1030, %v1030
        %v1063 = vpack.c.b16 %v1031, %v1031
        %vm1064 = vsmask.f32 4368
        %vm1065 = vmor %vm868, %vm1064
        %v1067 = vshrl.u32 %v1032, 16
        %v1069 = vrot.slane %v1067, 7
        %v1070 = vshll.u32 %v1032, 16
        %v1072 = vor.u32 %v1069, %v1070
        %v1073 = vrot.slane %v1069, 4
        %v1075 = vshrl.u32 %v1033, 16
        %v1077 = vrot.slane %v1075, 7
        %v1078 = vshll.u32 %v1033, 16
        %v1080 = vor.u32 %v1077, %v1078
        %v1081 = vsel %vm1065, %v1073, %v1080
        %v1082 = vrot.slane %v1077, 4
        %v1084 = vshrl.u32 %v1034, 16
        %v1086 = vrot.slane %v1084, 7
        %v1087 = vshll.u32 %v1034, 16
        %v1089 = vor.u32 %v1086, %v1087
        %v1090 = vrot.slane %v1086, 4
        %v1092 = vshrl.u32 %v1035, 16
        %v1094 = vrot.slane %v1092, 7
        %v1095 = vshll.u32 %v1035, 16
        %v1097 = vor.u32 %v1094, %v1095
        %v1098 = vsel %vm1065, %v1090, %v1097
        %v1099 = vrot.slane %v1094, 4
        %v1101 = vshrl.u32 %v1036, 16
        %v1103 = vrot.slane %v1101, 7
        %v1104 = vshll.u32 %v1036, 16
        %v1106 = vor.u32 %v1103, %v1104
        %v1107 = vrot.slane %v1103, 4
        %v1109 = vshrl.u32 %v1037, 16
        %v1111 = vrot.slane %v1109, 7
        %v1112 = vshll.u32 %v1037, 16
        %v1114 = vor.u32 %v1111, %v1112
        %v1115 = vsel %vm1065, %v1107, %v1114
        %v1116 = vrot.slane %v1111, 4
        %v1118 = vshrl.u32 %v1038, 16
        %v1120 = vrot.slane %v1118, 7
        %v1121 = vshll.u32 %v1038, 16
        %v1123 = vor.u32 %v1120, %v1121
        %v1124 = vrot.slane %v1120, 4
        %v1126 = vshrl.u32 %v1039, 16
        %v1128 = vrot.slane %v1126, 7
        %v1129 = vshll.u32 %v1039, 16
        %v1131 = vor.u32 %v1128, %v1129
        %v1132 = vsel %vm1065, %v1124, %v1131
        %v1133 = vrot.slane %v1128, 4
        %v1135 = vshrl.u32 %v1040, 16
        %v1137 = vrot.slane %v1135, 7
        %v1138 = vshll.u32 %v1040, 16
        %v1140 = vor.u32 %v1137, %v1138
        %v1141 = vrot.slane %v1137, 4
        %v1143 = vshrl.u32 %v1041, 16
        %v1145 = vrot.slane %v1143, 7
        %v1146 = vshll.u32 %v1041, 16
        %v1148 = vor.u32 %v1145, %v1146
        %v1149 = vsel %vm1065, %v1141, %v1148
        %v1150 = vrot.slane %v1145, 4
        %v1152 = vshrl.u32 %v1042, 16
        %v1154 = vrot.slane %v1152, 7
        %v1155 = vshll.u32 %v1042, 16
        %v1157 = vor.u32 %v1154, %v1155
        %v1158 = vrot.slane %v1154, 4
        %v1160 = vshrl.u32 %v1043, 16
        %v1162 = vrot.slane %v1160, 7
        %v1163 = vshll.u32 %v1043, 16
        %v1165 = vor.u32 %v1162, %v1163
        %v1166 = vsel %vm1065, %v1158, %v1165
        %v1167 = vrot.slane %v1162, 4
        %v1169 = vshrl.u32 %v1044, 16
        %v1171 = vrot.slane %v1169, 7
        %v1172 = vshll.u32 %v1044, 16
        %v1174 = vor.u32 %v1171, %v1172
        %v1175 = vrot.slane %v1171, 4
        %v1177 = vshrl.u32 %v1045, 16
        %v1179 = vrot.slane %v1177, 7
        %v1180 = vshll.u32 %v1045, 16
        %v1182 = vor.u32 %v1179, %v1180
        %v1183 = vsel %vm1065, %v1175, %v1182
        %v1184 = vrot.slane %v1179, 4
        %v1186 = vshrl.u32 %v1046, 16
        %v1188 = vrot.slane %v1186, 7
        %v1189 = vshll.u32 %v1046, 16
        %v1191 = vor.u32 %v1188, %v1189
        %v1192 = vrot.slane %v1188, 4
        %v1194 = vshrl.u32 %v1047, 16
        %v1196 = vrot.slane %v1194, 7
        %v1197 = vshll.u32 %v1047, 16
        %v1199 = vor.u32 %v1196, %v1197
        %v1200 = vsel %vm1065, %v1192, %v1199
        %v1201 = vrot.slane %v1196, 4
        %v1203 = vshrl.u32 %v1048, 16
        %v1205 = vrot.slane %v1203, 7
        %v1206 = vshll.u32 %v1048, 16
        %v1208 = vor.u32 %v1205, %v1206
        %v1209 = vrot.slane %v1205, 4
        %v1211 = vshrl.u32 %v1049, 16
        %v1213 = vrot.slane %v1211, 7
        %v1214 = vshll.u32 %v1049, 16
        %v1216 = vor.u32 %v1213, %v1214
        %v1217 = vsel %vm1065, %v1209, %v1216
        %v1218 = vrot.slane %v1213, 4
        %v1220 = vshrl.u32 %v1050, 16
        %v1222 = vrot.slane %v1220, 7
        %v1223 = vshll.u32 %v1050, 16
        %v1225 = vor.u32 %v1222, %v1223
        %v1226 = vrot.slane %v1222, 4
        %v1228 = vshrl.u32 %v1051, 16
        %v1230 = vrot.slane %v1228, 7
        %v1231 = vshll.u32 %v1051, 16
        %v1233 = vor.u32 %v1230, %v1231
        %v1234 = vsel %vm1065, %v1226, %v1233
        %v1235 = vrot.slane %v1230, 4
        %v1237 = vshrl.u32 %v1052, 16
        %v1239 = vrot.slane %v1237, 7
        %v1240 = vshll.u32 %v1052, 16
        %v1242 = vor.u32 %v1239, %v1240
        %v1243 = vrot.slane %v1239, 4
        %v1245 = vshrl.u32 %v1053, 16
        %v1247 = vrot.slane %v1245, 7
        %v1248 = vshll.u32 %v1053, 16
        %v1250 = vor.u32 %v1247, %v1248
        %v1251 = vsel %vm1065, %v1243, %v1250
        %v1252 = vrot.slane %v1247, 4
        %v1254 = vshrl.u32 %v1054, 16
        %v1256 = vrot.slane %v1254, 7
        %v1257 = vshll.u32 %v1054, 16
        %v1259 = vor.u32 %v1256, %v1257
        %v1260 = vrot.slane %v1256, 4
        %v1262 = vshrl.u32 %v1055, 16
        %v1264 = vrot.slane %v1262, 7
        %v1265 = vshll.u32 %v1055, 16
        %v1267 = vor.u32 %v1264, %v1265
        %v1268 = vsel %vm1065, %v1260, %v1267
        %v1269 = vrot.slane %v1264, 4
        %v1271 = vshrl.u32 %v1056, 16
        %v1273 = vrot.slane %v1271, 7
        %v1274 = vshll.u32 %v1056, 16
        %v1276 = vor.u32 %v1273, %v1274
        %v1277 = vrot.slane %v1273, 4
        %v1279 = vshrl.u32 %v1057, 16
        %v1281 = vrot.slane %v1279, 7
        %v1282 = vshll.u32 %v1057, 16
        %v1284 = vor.u32 %v1281, %v1282
        %v1285 = vsel %vm1065, %v1277, %v1284
        %v1286 = vrot.slane %v1281, 4
        %v1288 = vshrl.u32 %v1058, 16
        %v1290 = vrot.slane %v1288, 7
        %v1291 = vshll.u32 %v1058, 16
        %v1293 = vor.u32 %v1290, %v1291
        %v1294 = vrot.slane %v1290, 4
        %v1296 = vshrl.u32 %v1059, 16
        %v1298 = vrot.slane %v1296, 7
        %v1299 = vshll.u32 %v1059, 16
        %v1301 = vor.u32 %v1298, %v1299
        %v1302 = vsel %vm1065, %v1294, %v1301
        %v1303 = vrot.slane %v1298, 4
        %v1305 = vshrl.u32 %v1060, 16
        %v1307 = vrot.slane %v1305, 7
        %v1308 = vshll.u32 %v1060, 16
        %v1310 = vor.u32 %v1307, %v1308
        %v1311 = vrot.slane %v1307, 4
        %v1313 = vshrl.u32 %v1061, 16
        %v1315 = vrot.slane %v1313, 7
        %v1316 = vshll.u32 %v1061, 16
        %v1318 = vor.u32 %v1315, %v1316
        %v1319 = vsel %vm1065, %v1311, %v1318
        %v1320 = vrot.slane %v1315, 4
        %v1322 = vshrl.u32 %v1062, 16
        %v1324 = vrot.slane %v1322, 7
        %v1325 = vshll.u32 %v1062, 16
        %v1327 = vor.u32 %v1324, %v1325
        %v1328 = vrot.slane %v1324, 4
        %v1330 = vshrl.u32 %v1063, 16
        %v1332 = vrot.slane %v1330, 7
        %v1333 = vshll.u32 %v1063, 16
        %v1335 = vor.u32 %v1332, %v1333
        %v1336 = vsel %vm1065, %v1328, %v1335
        %v1337 = vrot.slane %v1332, 4
        %vm1386 = vcmask 1043456
        %vm1387 = vmand %vm1386, %vm918
        %v1388 = vld [vmem:[%s866] sm:$0xf]
        %v1389 = vsel %vm1387, %v1072, %v1388
        %1390 = vst [vmem:[%s866] sm:$0xf] %v1389
        %1391 = vst [vmem:[%s866 + $0x4] sm:$0xf] %v1081
        %v1392 = vld [vmem:[%s866 + $0x8] sm:$0x1]
        %v1393 = vsel %vm869, %v1082, %v1392
        %1394 = vst [vmem:[%s866 + $0x8] sm:$0x1] %v1393
        %v1395 = vld [vmem:[%s866 + $0xc] sm:$0xf]
        %v1396 = vsel %vm1387, %v1089, %v1395
        %1397 = vst [vmem:[%s866 + $0xc] sm:$0xf] %v1396
        %1398 = vst [vmem:[%s866 + $0x10] sm:$0xf] %v1098
        %v1399 = vld [vmem:[%s866 + $0x14] sm:$0x1]
        %v1400 = vsel %vm869, %v1099, %v1399
        %1401 = vst [vmem:[%s866 + $0x14] sm:$0x1] %v1400
        %v1402 = vld [vmem:[%s866 + $0x18] sm:$0xf]
        %v1403 = vsel %vm1387, %v1106, %v1402
        %1404 = vst [vmem:[%s866 + $0x18] sm:$0xf] %v1403
        %1405 = vst [vmem:[%s866 + $0x1c] sm:$0xf] %v1115
        %v1406 = vld [vmem:[%s866 + $0x20] sm:$0x1]
        %v1407 = vsel %vm869, %v1116, %v1406
        %1408 = vst [vmem:[%s866 + $0x20] sm:$0x1] %v1407
        %v1409 = vld [vmem:[%s866 + $0x24] sm:$0xf]
        %v1410 = vsel %vm1387, %v1123, %v1409
        %1411 = vst [vmem:[%s866 + $0x24] sm:$0xf] %v1410
        %1412 = vst [vmem:[%s866 + $0x28] sm:$0xf] %v1132
        %v1413 = vld [vmem:[%s866 + $0x2c] sm:$0x1]
        %v1414 = vsel %vm869, %v1133, %v1413
        %1415 = vst [vmem:[%s866 + $0x2c] sm:$0x1] %v1414
        %v1416 = vld [vmem:[%s866 + $0x30] sm:$0xf]
        %v1417 = vsel %vm1387, %v1140, %v1416
        %1418 = vst [vmem:[%s866 + $0x30] sm:$0xf] %v1417
        %1419 = vst [vmem:[%s866 + $0x34] sm:$0xf] %v1149
        %v1420 = vld [vmem:[%s866 + $0x38] sm:$0x1]
        %v1421 = vsel %vm869, %v1150, %v1420
        %1422 = vst [vmem:[%s866 + $0x38] sm:$0x1] %v1421
        %v1423 = vld [vmem:[%s866 + $0x3c] sm:$0xf]
        %v1424 = vsel %vm1387, %v1157, %v1423
        %1425 = vst [vmem:[%s866 + $0x3c] sm:$0xf] %v1424
        %1426 = vst [vmem:[%s866 + $0x40] sm:$0xf] %v1166
        %v1427 = vld [vmem:[%s866 + $0x44] sm:$0x1]
        %v1428 = vsel %vm869, %v1167, %v1427
        %1429 = vst [vmem:[%s866 + $0x44] sm:$0x1] %v1428
        %v1430 = vld [vmem:[%s866 + $0x48] sm:$0xf]
        %v1431 = vsel %vm1387, %v1174, %v1430
        %1432 = vst [vmem:[%s866 + $0x48] sm:$0xf] %v1431
        %1433 = vst [vmem:[%s866 + $0x4c] sm:$0xf] %v1183
        %v1434 = vld [vmem:[%s866 + $0x50] sm:$0x1]
        %v1435 = vsel %vm869, %v1184, %v1434
        %1436 = vst [vmem:[%s866 + $0x50] sm:$0x1] %v1435
        %v1437 = vld [vmem:[%s866 + $0x54] sm:$0xf]
        %v1438 = vsel %vm1387, %v1191, %v1437
        %1439 = vst [vmem:[%s866 + $0x54] sm:$0xf] %v1438
        %1440 = vst [vmem:[%s866 + $0x58] sm:$0xf] %v1200
        %v1441 = vld [vmem:[%s866 + $0x5c] sm:$0x1]
        %v1442 = vsel %vm869, %v1201, %v1441
        %1443 = vst [vmem:[%s866 + $0x5c] sm:$0x1] %v1442
        %v1444 = vld [vmem:[%s866 + $0x60] sm:$0xf]
        %v1445 = vsel %vm1387, %v1208, %v1444
        %1446 = vst [vmem:[%s866 + $0x60] sm:$0xf] %v1445
        %1447 = vst [vmem:[%s866 + $0x64] sm:$0xf] %v1217
        %v1448 = vld [vmem:[%s866 + $0x68] sm:$0x1]
        %v1449 = vsel %vm869, %v1218, %v1448
        %1450 = vst [vmem:[%s866 + $0x68] sm:$0x1] %v1449
        %v1451 = vld [vmem:[%s866 + $0x6c] sm:$0xf]
        %v1452 = vsel %vm1387, %v1225, %v1451
        %1453 = vst [vmem:[%s866 + $0x6c] sm:$0xf] %v1452
        %1454 = vst [vmem:[%s866 + $0x70] sm:$0xf] %v1234
        %v1455 = vld [vmem:[%s866 + $0x74] sm:$0x1]
        %v1456 = vsel %vm869, %v1235, %v1455
        %1457 = vst [vmem:[%s866 + $0x74] sm:$0x1] %v1456
        %v1458 = vld [vmem:[%s866 + $0x78] sm:$0xf]
        %v1459 = vsel %vm1387, %v1242, %v1458
        %1460 = vst [vmem:[%s866 + $0x78] sm:$0xf] %v1459
        %1461 = vst [vmem:[%s866 + $0x7c] sm:$0xf] %v1251
        %v1462 = vld [vmem:[%s866 + $0x80] sm:$0x1]
        %v1463 = vsel %vm869, %v1252, %v1462
        %1464 = vst [vmem:[%s866 + $0x80] sm:$0x1] %v1463
        %v1465 = vld [vmem:[%s866 + $0x84] sm:$0xf]
        %v1466 = vsel %vm1387, %v1259, %v1465
        %1467 = vst [vmem:[%s866 + $0x84] sm:$0xf] %v1466
        %1468 = vst [vmem:[%s866 + $0x88] sm:$0xf] %v1268
        %v1469 = vld [vmem:[%s866 + $0x8c] sm:$0x1]
        %v1470 = vsel %vm869, %v1269, %v1469
        %1471 = vst [vmem:[%s866 + $0x8c] sm:$0x1] %v1470
        %v1472 = vld [vmem:[%s866 + $0x90] sm:$0xf]
        %v1473 = vsel %vm1387, %v1276, %v1472
        %1474 = vst [vmem:[%s866 + $0x90] sm:$0xf] %v1473
        %1475 = vst [vmem:[%s866 + $0x94] sm:$0xf] %v1285
        %v1476 = vld [vmem:[%s866 + $0x98] sm:$0x1]
        %v1477 = vsel %vm869, %v1286, %v1476
        %1478 = vst [vmem:[%s866 + $0x98] sm:$0x1] %v1477
        %v1479 = vld [vmem:[%s866 + $0x9c] sm:$0xf]
        %v1480 = vsel %vm1387, %v1293, %v1479
        %1481 = vst [vmem:[%s866 + $0x9c] sm:$0xf] %v1480
        %1482 = vst [vmem:[%s866 + $0xa0] sm:$0xf] %v1302
        %v1483 = vld [vmem:[%s866 + $0xa4] sm:$0x1]
        %v1484 = vsel %vm869, %v1303, %v1483
        %1485 = vst [vmem:[%s866 + $0xa4] sm:$0x1] %v1484
        %v1486 = vld [vmem:[%s866 + $0xa8] sm:$0xf]
        %v1487 = vsel %vm1387, %v1310, %v1486
        %1488 = vst [vmem:[%s866 + $0xa8] sm:$0xf] %v1487
        %1489 = vst [vmem:[%s866 + $0xac] sm:$0xf] %v1319
        %v1490 = vld [vmem:[%s866 + $0xb0] sm:$0x1]
        %v1491 = vsel %vm869, %v1320, %v1490
        %1492 = vst [vmem:[%s866 + $0xb0] sm:$0x1] %v1491
        %v1493 = vld [vmem:[%s866 + $0xb4] sm:$0xf]
        %v1494 = vsel %vm1387, %v1327, %v1493
        %1495 = vst [vmem:[%s866 + $0xb4] sm:$0xf] %v1494
        %1496 = vst [vmem:[%s866 + $0xb8] sm:$0xf] %v1336
        %v1497 = vld [vmem:[%s866 + $0xbc] sm:$0x1]
        %v1498 = vsel %vm869, %v1337, %v1497
        %1499 = vst [vmem:[%s866 + $0xbc] sm:$0x1] %v1498
        %v1500 = vld [vmem:[#allocation2] sm:$0xf]
        %v1501 = vld [vmem:[#allocation2 + $0x4] sm:$0xf]
        %v1502 = vld [vmem:[#allocation2 + $0xc] sm:$0xf]
        %v1503 = vld [vmem:[#allocation2 + $0x10] sm:$0xf]
        %v1504 = vld [vmem:[#allocation2 + $0x18] sm:$0xf]
        %v1505 = vld [vmem:[#allocation2 + $0x1c] sm:$0xf]
        %v1506 = vld [vmem:[#allocation2 + $0x24] sm:$0xf]
        %v1507 = vld [vmem:[#allocation2 + $0x28] sm:$0xf]
        %v1508 = vld [vmem:[#allocation2 + $0x30] sm:$0xf]
        %v1509 = vld [vmem:[#allocation2 + $0x34] sm:$0xf]
        %v1510 = vld [vmem:[#allocation2 + $0x3c] sm:$0xf]
        %v1511 = vld [vmem:[#allocation2 + $0x40] sm:$0xf]
        %v1512 = vld [vmem:[#allocation2 + $0x48] sm:$0xf]
        %v1513 = vld [vmem:[#allocation2 + $0x4c] sm:$0xf]
        %v1514 = vld [vmem:[#allocation2 + $0x54] sm:$0xf]
        %v1515 = vld [vmem:[#allocation2 + $0x58] sm:$0xf]
        %v1516 = vld [vmem:[#allocation2 + $0x60] sm:$0xf]
        %v1517 = vld [vmem:[#allocation2 + $0x64] sm:$0xf]
        %v1518 = vld [vmem:[#allocation2 + $0x6c] sm:$0xf]
        %v1519 = vld [vmem:[#allocation2 + $0x70] sm:$0xf]
        %v1520 = vld [vmem:[#allocation2 + $0x78] sm:$0xf]
        %v1521 = vld [vmem:[#allocation2 + $0x7c] sm:$0xf]
        %v1522 = vld [vmem:[#allocation2 + $0x84] sm:$0xf]
        %v1523 = vld [vmem:[#allocation2 + $0x88] sm:$0xf]
        %v1524 = vld [vmem:[#allocation2 + $0x90] sm:$0xf]
        %v1525 = vld [vmem:[#allocation2 + $0x94] sm:$0xf]
        %v1526 = vld [vmem:[#allocation2 + $0x9c] sm:$0xf]
        %v1527 = vld [vmem:[#allocation2 + $0xa0] sm:$0xf]
        %v1528 = vld [vmem:[#allocation2 + $0xa8] sm:$0xf]
        %v1529 = vld [vmem:[#allocation2 + $0xac] sm:$0xf]
        %v1530 = vld [vmem:[#allocation2 + $0xb4] sm:$0xf]
        %v1531 = vld [vmem:[#allocation2 + $0xb8] sm:$0xf]
        %v1532 = vld [vmem:[%s4] sm:$0xf]
        %v1533 = vld [vmem:[%s4 + $0x4] sm:$0xf]
        %v1534 = vld [vmem:[%s4 + $0x8] sm:$0xf]
        %v1535 = vld [vmem:[%s4 + $0xc] sm:$0xf]
        %v1536 = vld [vmem:[%s4 + $0x10] sm:$0xf]
        %v1537 = vld [vmem:[%s4 + $0x14] sm:$0xf]
        %v1538 = vld [vmem:[%s4 + $0x18] sm:$0xf]
        %v1539 = vld [vmem:[%s4 + $0x1c] sm:$0xf]
        %v1540 = vld [vmem:[%s4 + $0x20] sm:$0xf]
        %v1541 = vld [vmem:[%s4 + $0x24] sm:$0xf]
        %v1542 = vld [vmem:[%s4 + $0x28] sm:$0xf]
        %v1543 = vld [vmem:[%s4 + $0x2c] sm:$0xf]
        %v1544 = vld [vmem:[%s4 + $0x30] sm:$0xf]
        %v1545 = vld [vmem:[%s4 + $0x34] sm:$0xf]
        %v1546 = vld [vmem:[%s4 + $0x38] sm:$0xf]
        %v1547 = vld [vmem:[%s4 + $0x3c] sm:$0xf]
        %v1548 = vld [vmem:[#allocation2 + $0x8] sm:$0x1]
        %v1549 = vld [vmem:[#allocation2 + $0x14] sm:$0x1]
        %v1550 = vld [vmem:[#allocation2 + $0x20] sm:$0x1]
        %v1551 = vld [vmem:[#allocation2 + $0x2c] sm:$0x1]
        %v1552 = vld [vmem:[#allocation2 + $0x38] sm:$0x1]
        %v1553 = vld [vmem:[#allocation2 + $0x44] sm:$0x1]
        %v1554 = vld [vmem:[#allocation2 + $0x50] sm:$0x1]
        %v1555 = vld [vmem:[#allocation2 + $0x5c] sm:$0x1]
        %v1556 = vld [vmem:[#allocation2 + $0x68] sm:$0x1]
        %v1557 = vld [vmem:[#allocation2 + $0x74] sm:$0x1]
        %v1558 = vld [vmem:[#allocation2 + $0x80] sm:$0x1]
        %v1559 = vld [vmem:[#allocation2 + $0x8c] sm:$0x1]
        %v1560 = vld [vmem:[#allocation2 + $0x98] sm:$0x1]
        %v1561 = vld [vmem:[#allocation2 + $0xa4] sm:$0x1]
        %v1562 = vld [vmem:[#allocation2 + $0xb0] sm:$0x1]
        %v1563 = vld [vmem:[#allocation2 + $0xbc] sm:$0x1]
        %vm1564 = vsmask.f32 3328
        %vm1565 = vsmask.f32 7440
        %vm1566 = vmor %vm1564, %vm1565
        %v1568 = vshrl.u32 %v1500, 16
        %v1570 = vrot.slane %v1568, 4
        %v1571 = vshll.u32 %v1500, 16
        %v1573 = vrot.slane %v1571, 5
        %v1574 = vor.u32 %v1570, %v1573
        %v1575 = vrot.slane %v1574, 4
        %v1577 = vshll.u32 %v1501, 16
        %v1579 = vrot.slane %v1577, 5
        %v1580 = vsel %vm1566, %v1575, %v1579
        %v1581 = vshrl.u32 %v1501, 16
        %v1583 = vrot.slane %v1581, 4
        %v1584 = vor.u32 %v1583, %v1579
        %v1585 = vrot.slane %v1584, 4
        %v1587 = vshll.u32 %v1548, 16
        %v1589 = vrot.slane %v1587, 5
        %v1590 = vsel %vm1566, %v1585, %v1589
        %v1592 = vshrl.u32 %v1502, 16
        %v1594 = vrot.slane %v1592, 4
        %v1595 = vshll.u32 %v1502, 16
        %v1597 = vrot.slane %v1595, 5
        %v1598 = vor.u32 %v1594, %v1597
        %v1599 = vrot.slane %v1598, 4
        %v1601 = vshll.u32 %v1503, 16
        %v1603 = vrot.slane %v1601, 5
        %v1604 = vsel %vm1566, %v1599, %v1603
        %v1605 = vshrl.u32 %v1503, 16
        %v1607 = vrot.slane %v1605, 4
        %v1608 = vor.u32 %v1607, %v1603
        %v1609 = vrot.slane %v1608, 4
        %v1611 = vshll.u32 %v1549, 16
        %v1613 = vrot.slane %v1611, 5
        %v1614 = vsel %vm1566, %v1609, %v1613
        %v1616 = vshrl.u32 %v1504, 16
        %v1618 = vrot.slane %v1616, 4
        %v1619 = vshll.u32 %v1504, 16
        %v1621 = vrot.slane %v1619, 5
        %v1622 = vor.u32 %v1618, %v1621
        %v1623 = vrot.slane %v1622, 4
        %v1625 = vshll.u32 %v1505, 16
        %v1627 = vrot.slane %v1625, 5
        %v1628 = vsel %vm1566, %v1623, %v1627
        %v1629 = vshrl.u32 %v1505, 16
        %v1631 = vrot.slane %v1629, 4
        %v1632 = vor.u32 %v1631, %v1627
        %v1633 = vrot.slane %v1632, 4
        %v1635 = vshll.u32 %v1550, 16
        %v1637 = vrot.slane %v1635, 5
        %v1638 = vsel %vm1566, %v1633, %v1637
        %v1640 = vshrl.u32 %v1506, 16
        %v1642 = vrot.slane %v1640, 4
        %v1643 = vshll.u32 %v1506, 16
        %v1645 = vrot.slane %v1643, 5
        %v1646 = vor.u32 %v1642, %v1645
        %v1647 = vrot.slane %v1646, 4
        %v1649 = vshll.u32 %v1507, 16
        %v1651 = vrot.slane %v1649, 5
        %v1652 = vsel %vm1566, %v1647, %v1651
        %v1653 = vshrl.u32 %v1507, 16
        %v1655 = vrot.slane %v1653, 4
        %v1656 = vor.u32 %v1655, %v1651
        %v1657 = vrot.slane %v1656, 4
        %v1659 = vshll.u32 %v1551, 16
        %v1661 = vrot.slane %v1659, 5
        %v1662 = vsel %vm1566, %v1657, %v1661
        %v1664 = vshrl.u32 %v1508, 16
        %v1666 = vrot.slane %v1664, 4
        %v1667 = vshll.u32 %v1508, 16
        %v1669 = vrot.slane %v1667, 5
        %v1670 = vor.u32 %v1666, %v1669
        %v1671 = vrot.slane %v1670, 4
        %v1673 = vshll.u32 %v1509, 16
        %v1675 = vrot.slane %v1673, 5
        %v1676 = vsel %vm1566, %v1671, %v1675
        %v1677 = vshrl.u32 %v1509, 16
        %v1679 = vrot.slane %v1677, 4
        %v1680 = vor.u32 %v1679, %v1675
        %v1681 = vrot.slane %v1680, 4
        %v1683 = vshll.u32 %v1552, 16
        %v1685 = vrot.slane %v1683, 5
        %v1686 = vsel %vm1566, %v1681, %v1685
        %v1688 = vshrl.u32 %v1510, 16
        %v1690 = vrot.slane %v1688, 4
        %v1691 = vshll.u32 %v1510, 16
        %v1693 = vrot.slane %v1691, 5
        %v1694 = vor.u32 %v1690, %v1693
        %v1695 = vrot.slane %v1694, 4
        %v1697 = vshll.u32 %v1511, 16
        %v1699 = vrot.slane %v1697, 5
        %v1700 = vsel %vm1566, %v1695, %v1699
        %v1701 = vshrl.u32 %v1511, 16
        %v1703 = vrot.slane %v1701, 4
        %v1704 = vor.u32 %v1703, %v1699
        %v1705 = vrot.slane %v1704, 4
        %v1707 = vshll.u32 %v1553, 16
        %v1709 = vrot.slane %v1707, 5
        %v1710 = vsel %vm1566, %v1705, %v1709
        %v1712 = vshrl.u32 %v1512, 16
        %v1714 = vrot.slane %v1712, 4
        %v1715 = vshll.u32 %v1512, 16
        %v1717 = vrot.slane %v1715, 5
        %v1718 = vor.u32 %v1714, %v1717
        %v1719 = vrot.slane %v1718, 4
        %v1721 = vshll.u32 %v1513, 16
        %v1723 = vrot.slane %v1721, 5
        %v1724 = vsel %vm1566, %v1719, %v1723
        %v1725 = vshrl.u32 %v1513, 16
        %v1727 = vrot.slane %v1725, 4
        %v1728 = vor.u32 %v1727, %v1723
        %v1729 = vrot.slane %v1728, 4
        %v1731 = vshll.u32 %v1554, 16
        %v1733 = vrot.slane %v1731, 5
        %v1734 = vsel %vm1566, %v1729, %v1733
        %v1736 = vshrl.u32 %v1514, 16
        %v1738 = vrot.slane %v1736, 4
        %v1739 = vshll.u32 %v1514, 16
        %v1741 = vrot.slane %v1739, 5
        %v1742 = vor.u32 %v1738, %v1741
        %v1743 = vrot.slane %v1742, 4
        %v1745 = vshll.u32 %v1515, 16
        %v1747 = vrot.slane %v1745, 5
        %v1748 = vsel %vm1566, %v1743, %v1747
        %v1749 = vshrl.u32 %v1515, 16
        %v1751 = vrot.slane %v1749, 4
        %v1752 = vor.u32 %v1751, %v1747
        %v1753 = vrot.slane %v1752, 4
        %v1755 = vshll.u32 %v1555, 16
        %v1757 = vrot.slane %v1755, 5
        %v1758 = vsel %vm1566, %v1753, %v1757
        %v1760 = vshrl.u32 %v1516, 16
        %v1762 = vrot.slane %v1760, 4
        %v1763 = vshll.u32 %v1516, 16
        %v1765 = vrot.slane %v1763, 5
        %v1766 = vor.u32 %v1762, %v1765
        %v1767 = vrot.slane %v1766, 4
        %v1769 = vshll.u32 %v1517, 16
        %v1771 = vrot.slane %v1769, 5
        %v1772 = vsel %vm1566, %v1767, %v1771
        %v1773 = vshrl.u32 %v1517, 16
        %v1775 = vrot.slane %v1773, 4
        %v1776 = vor.u32 %v1775, %v1771
        %v1777 = vrot.slane %v1776, 4
        %v1779 = vshll.u32 %v1556, 16
        %v1781 = vrot.slane %v1779, 5
        %v1782 = vsel %vm1566, %v1777, %v1781
        %v1784 = vshrl.u32 %v1518, 16
        %v1786 = vrot.slane %v1784, 4
        %v1787 = vshll.u32 %v1518, 16
        %v1789 = vrot.slane %v1787, 5
        %v1790 = vor.u32 %v1786, %v1789
        %v1791 = vrot.slane %v1790, 4
        %v1793 = vshll.u32 %v1519, 16
        %v1795 = vrot.slane %v1793, 5
        %v1796 = vsel %vm1566, %v1791, %v1795
        %v1797 = vshrl.u32 %v1519, 16
        %v1799 = vrot.slane %v1797, 4
        %v1800 = vor.u32 %v1799, %v1795
        %v1801 = vrot.slane %v1800, 4
        %v1803 = vshll.u32 %v1557, 16
        %v1805 = vrot.slane %v1803, 5
        %v1806 = vsel %vm1566, %v1801, %v1805
        %v1808 = vshrl.u32 %v1520, 16
        %v1810 = vrot.slane %v1808, 4
        %v1811 = vshll.u32 %v1520, 16
        %v1813 = vrot.slane %v1811, 5
        %v1814 = vor.u32 %v1810, %v1813
        %v1815 = vrot.slane %v1814, 4
        %v1817 = vshll.u32 %v1521, 16
        %v1819 = vrot.slane %v1817, 5
        %v1820 = vsel %vm1566, %v1815, %v1819
        %v1821 = vshrl.u32 %v1521, 16
        %v1823 = vrot.slane %v1821, 4
        %v1824 = vor.u32 %v1823, %v1819
        %v1825 = vrot.slane %v1824, 4
        %v1827 = vshll.u32 %v1558, 16
        %v1829 = vrot.slane %v1827, 5
        %v1830 = vsel %vm1566, %v1825, %v1829
        %v1832 = vshrl.u32 %v1522, 16
        %v1834 = vrot.slane %v1832, 4
        %v1835 = vshll.u32 %v1522, 16
        %v1837 = vrot.slane %v1835, 5
        %v1838 = vor.u32 %v1834, %v1837
        %v1839 = vrot.slane %v1838, 4
        %v1841 = vshll.u32 %v1523, 16
        %v1843 = vrot.slane %v1841, 5
        %v1844 = vsel %vm1566, %v1839, %v1843
        %v1845 = vshrl.u32 %v1523, 16
        %v1847 = vrot.slane %v1845, 4
        %v1848 = vor.u32 %v1847, %v1843
        %v1849 = vrot.slane %v1848, 4
        %v1851 = vshll.u32 %v1559, 16
        %v1853 = vrot.slane %v1851, 5
        %v1854 = vsel %vm1566, %v1849, %v1853
        %v1856 = vshrl.u32 %v1524, 16
        %v1858 = vrot.slane %v1856, 4
        %v1859 = vshll.u32 %v1524, 16
        %v1861 = vrot.slane %v1859, 5
        %v1862 = vor.u32 %v1858, %v1861
        %v1863 = vrot.slane %v1862, 4
        %v1865 = vshll.u32 %v1525, 16
        %v1867 = vrot.slane %v1865, 5
        %v1868 = vsel %vm1566, %v1863, %v1867
        %v1869 = vshrl.u32 %v1525, 16
        %v1871 = vrot.slane %v1869, 4
        %v1872 = vor.u32 %v1871, %v1867
        %v1873 = vrot.slane %v1872, 4
        %v1875 = vshll.u32 %v1560, 16
        %v1877 = vrot.slane %v1875, 5
        %v1878 = vsel %vm1566, %v1873, %v1877
        %v1880 = vshrl.u32 %v1526, 16
        %v1882 = vrot.slane %v1880, 4
        %v1883 = vshll.u32 %v1526, 16
        %v1885 = vrot.slane %v1883, 5
        %v1886 = vor.u32 %v1882, %v1885
        %v1887 = vrot.slane %v1886, 4
        %v1889 = vshll.u32 %v1527, 16
        %v1891 = vrot.slane %v1889, 5
        %v1892 = vsel %vm1566, %v1887, %v1891
        %v1893 = vshrl.u32 %v1527, 16
        %v1895 = vrot.slane %v1893, 4
        %v1896 = vor.u32 %v1895, %v1891
        %v1897 = vrot.slane %v1896, 4
        %v1899 = vshll.u32 %v1561, 16
        %v1901 = vrot.slane %v1899, 5
        %v1902 = vsel %vm1566, %v1897, %v1901
        %v1904 = vshrl.u32 %v1528, 16
        %v1906 = vrot.slane %v1904, 4
        %v1907 = vshll.u32 %v1528, 16
        %v1909 = vrot.slane %v1907, 5
        %v1910 = vor.u32 %v1906, %v1909
        %v1911 = vrot.slane %v1910, 4
        %v1913 = vshll.u32 %v1529, 16
        %v1915 = vrot.slane %v1913, 5
        %v1916 = vsel %vm1566, %v1911, %v1915
        %v1917 = vshrl.u32 %v1529, 16
        %v1919 = vrot.slane %v1917, 4
        %v1920 = vor.u32 %v1919, %v1915
        %v1921 = vrot.slane %v1920, 4
        %v1923 = vshll.u32 %v1562, 16
        %v1925 = vrot.slane %v1923, 5
        %v1926 = vsel %vm1566, %v1921, %v1925
        %v1928 = vshrl.u32 %v1530, 16
        %v1930 = vrot.slane %v1928, 4
        %v1931 = vshll.u32 %v1530, 16
        %v1933 = vrot.slane %v1931, 5
        %v1934 = vor.u32 %v1930, %v1933
        %v1935 = vrot.slane %v1934, 4
        %v1937 = vshll.u32 %v1531, 16
        %v1939 = vrot.slane %v1937, 5
        %v1940 = vsel %vm1566, %v1935, %v1939
        %v1941 = vshrl.u32 %v1531, 16
        %v1943 = vrot.slane %v1941, 4
        %v1944 = vor.u32 %v1943, %v1939
        %v1945 = vrot.slane %v1944, 4
        %v1947 = vshll.u32 %v1563, 16
        %v1949 = vrot.slane %v1947, 5
        %v1950 = vsel %vm1566, %v1945, %v1949
        %v1951 = vld [vmem:[%s4 + $0x40] sm:$0xf]
        %v1952 = vld [vmem:[%s4 + $0x44] sm:$0xf]
        %v1953 = vld [vmem:[%s4 + $0x48] sm:$0xf]
        %v1954 = vld [vmem:[%s4 + $0x4c] sm:$0xf]
        %v1955 = vld [vmem:[%s4 + $0x50] sm:$0xf]
        %v1956 = vld [vmem:[%s4 + $0x54] sm:$0xf]
        %v1957 = vld [vmem:[%s4 + $0x58] sm:$0xf]
        %v1958 = vld [vmem:[%s4 + $0x5c] sm:$0xf]
        %v1959 = vld [vmem:[%s4 + $0x60] sm:$0xf]
        %v1960 = vld [vmem:[%s4 + $0x64] sm:$0xf]
        %v1961 = vld [vmem:[%s4 + $0x68] sm:$0xf]
        %v1962 = vld [vmem:[%s4 + $0x6c] sm:$0xf]
        %v1963 = vld [vmem:[%s4 + $0x70] sm:$0xf]
        %v1964 = vld [vmem:[%s4 + $0x74] sm:$0xf]
        %v1965 = vld [vmem:[%s4 + $0x78] sm:$0xf]
        %v1966 = vld [vmem:[%s4 + $0x7c] sm:$0xf]
        %v1967 = vunpack.c.l.b16 %v1580
        %v1968 = vunpack.c.l.b16 %v1590
        %v1969 = vunpack.c.l.b16 %v1604
        %v1970 = vunpack.c.l.b16 %v1614
        %v1971 = vunpack.c.l.b16 %v1628
        %v1972 = vunpack.c.l.b16 %v1638
        %v1973 = vunpack.c.l.b16 %v1652
        %v1974 = vunpack.c.l.b16 %v1662
        %v1975 = vunpack.c.l.b16 %v1676
        %v1976 = vunpack.c.l.b16 %v1686
        %v1977 = vunpack.c.l.b16 %v1700
        %v1978 = vunpack.c.l.b16 %v1710
        %v1979 = vunpack.c.l.b16 %v1724
        %v1980 = vunpack.c.l.b16 %v1734
        %v1981 = vunpack.c.l.b16 %v1748
        %v1982 = vunpack.c.l.b16 %v1758
        %v1983 = vunpack.c.l.b16 %v1772
        %v1984 = vunpack.c.l.b16 %v1782
        %v1985 = vunpack.c.l.b16 %v1796
        %v1986 = vunpack.c.l.b16 %v1806
        %v1987 = vunpack.c.l.b16 %v1820
        %v1988 = vunpack.c.l.b16 %v1830
        %v1989 = vunpack.c.l.b16 %v1844
        %v1990 = vunpack.c.l.b16 %v1854
        %v1991 = vunpack.c.l.b16 %v1868
        %v1992 = vunpack.c.l.b16 %v1878
        %v1993 = vunpack.c.l.b16 %v1892
        %v1994 = vunpack.c.l.b16 %v1902
        %v1995 = vunpack.c.l.b16 %v1916
        %v1996 = vunpack.c.l.b16 %v1926
        %v1997 = vunpack.c.l.b16 %v1940
        %v1998 = vunpack.c.l.b16 %v1950
        %v1999 = vpack.c.b16 %v1968, %v1967
        %v2000 = vpack.c.b16 %v1970, %v1969
        %v2001 = vpack.c.b16 %v1972, %v1971
        %v2002 = vpack.c.b16 %v1974, %v1973
        %v2003 = vpack.c.b16 %v1976, %v1975
        %v2004 = vpack.c.b16 %v1978, %v1977
        %v2005 = vpack.c.b16 %v1980, %v1979
        %v2006 = vpack.c.b16 %v1982, %v1981
        %v2007 = vpack.c.b16 %v1984, %v1983
        %v2008 = vpack.c.b16 %v1986, %v1985
        %v2009 = vpack.c.b16 %v1988, %v1987
        %v2010 = vpack.c.b16 %v1990, %v1989
        %v2011 = vpack.c.b16 %v1992, %v1991
        %v2012 = vpack.c.b16 %v1994, %v1993
        %v2013 = vpack.c.b16 %v1996, %v1995
        %v2014 = vpack.c.b16 %v1998, %v1997
        %v2047 = vunpack.c.l.b16 %v1951
        %v2048 = vunpack.c.l.b16 %v1952
        %v2049 = vunpack.c.l.b16 %v1953
        %v2050 = vunpack.c.l.b16 %v1954
        %v2051 = vunpack.c.l.b16 %v1955
        %v2052 = vunpack.c.l.b16 %v1956
        %v2053 = vunpack.c.l.b16 %v1957
        %v2054 = vunpack.c.l.b16 %v1958
        %v2055 = vunpack.c.l.b16 %v1959
        %v2056 = vunpack.c.l.b16 %v1960
        %v2057 = vunpack.c.l.b16 %v1961
        %v2058 = vunpack.c.l.b16 %v1962
        %v2059 = vunpack.c.l.b16 %v1963
        %v2060 = vunpack.c.l.b16 %v1964
        %v2061 = vunpack.c.l.b16 %v1965
        %v2062 = vunpack.c.l.b16 %v1966
        %v2063 = vpack.c.b16 %v2048, %v2047
        %v2064 = vpack.c.b16 %v2050, %v2049
        %v2065 = vpack.c.b16 %v2052, %v2051
        %v2066 = vpack.c.b16 %v2054, %v2053
        %v2067 = vpack.c.b16 %v2056, %v2055
        %v2068 = vpack.c.b16 %v2058, %v2057
        %v2069 = vpack.c.b16 %v2060, %v2059
        %v2070 = vpack.c.b16 %v2062, %v2061
        %2079 = vmatprep.subr.bf16.mxu0 0
        %2080 = vmatpush1.bf16.msra.mxu0 %v2063
        %2081 = vmatprep.subr.bf16.mxu0 0
        %2082 = vmatpush1.bf16.msra.mxu0 %v2064
        %2083 = vmatprep.subr.bf16.mxu0 0
        %2084 = vmatpush1.bf16.msra.mxu0 %v2065
        %2085 = vmatprep.subr.bf16.mxu0 0
        %2086 = vmatpush1.bf16.msra.mxu0 %v2066
        %2087 = vmatprep.subr.bf16.mxu0 0
        %2088 = vmatpush1.bf16.msra.mxu0 %v2067
        %2089 = vmatprep.subr.bf16.mxu0 0
        %2090 = vmatpush1.bf16.msra.mxu0 %v2068
        %2091 = vmatprep.subr.bf16.mxu0 0
        %2092 = vmatpush1.bf16.msra.mxu0 %v2069
        %2093 = vmatprep.subr.bf16.mxu0 0
        %2094 = vmatpush1.bf16.msra.mxu0 %v2070
        %2095 = vmatprep.subr.bf16.mxu0 0
        %2096 = vmatpush1.bf16.msra.mxu0 0
        %2097 = vmatprep.subr.bf16.mxu0 0
        %2098 = vmatpush1.bf16.msra.mxu0 0
        %2099 = vmatprep.subr.bf16.mxu0 0
        %2100 = vmatpush1.bf16.msra.mxu0 0
        %2101 = vmatprep.subr.bf16.mxu0 0
        %2102 = vmatpush1.bf16.msra.mxu0 0
        %2103 = vmatprep.subr.bf16.mxu0 0
        %2104 = vmatpush1.bf16.msra.mxu0 0
        %2105 = vmatprep.subr.bf16.mxu0 0
        %2106 = vmatpush1.bf16.msra.mxu0 0
        %2107 = vmatprep.subr.bf16.mxu0 0
        %2108 = vmatpush1.bf16.msra.mxu0 0
        %2109 = vmatprep.subr.bf16.mxu0 0
        %2110 = vmatpush1.bf16.msra.mxu0 0
        %2111 = vmatprep.mubr.bf16.mxu0 0
        %2112 = vmatmul.mubr.bf16.gmra.mrb[0].mxu0 %v1999
        %v2113 = vpop.f32.mrb[0].mxu0
        %v2114 = vadd.f32 0.0, %v2113
        %v2115 = vpop.f32.mrb[0].mxu0
        %v2116 = vpop.f32.mrb[0].mxu0
        %v2117 = vadd.f32 0.0, %v2116
        %v2118 = vpop.f32.mrb[0].mxu0
        %2119 = vmatprep.mubr.bf16.mxu0 0
        %2120 = vmatmul.mubr.bf16.gmra.mrb[0].mxu0 %v2000
        %v2121 = vpop.f32.mrb[0].mxu0
        %v2122 = vadd.f32 0.0, %v2121
        %v2123 = vpop.f32.mrb[0].mxu0
        %v2124 = vpop.f32.mrb[0].mxu0
        %v2125 = vadd.f32 0.0, %v2124
        %v2126 = vpop.f32.mrb[0].mxu0
        %2127 = vmatprep.mubr.bf16.mxu0 0
        %2128 = vmatmul.mubr.bf16.gmra.mrb[0].mxu0 %v2001
        %v2129 = vpop.f32.mrb[0].mxu0
        %v2130 = vadd.f32 0.0, %v2129
        %v2131 = vpop.f32.mrb[0].mxu0
        %v2132 = vpop.f32.mrb[0].mxu0
        %v2133 = vadd.f32 0.0, %v2132
        %v2134 = vpop.f32.mrb[0].mxu0
        %2135 = vmatprep.mubr.bf16.mxu0 0
        %2136 = vmatmul.mubr.bf16.gmra.mrb[0].mxu0 %v2002
        %v2137 = vpop.f32.mrb[0].mxu0
        %v2138 = vadd.f32 0.0, %v2137
        %v2139 = vpop.f32.mrb[0].mxu0
        %v2140 = vpop.f32.mrb[0].mxu0
        %v2141 = vadd.f32 0.0, %v2140
        %v2142 = vpop.f32.mrb[0].mxu0
        %2143 = vmatprep.mubr.bf16.mxu0 0
        %2144 = vmatmul.mubr.bf16.gmra.mrb[0].mxu0 %v2003
        %v2145 = vpop.f32.mrb[0].mxu0
        %v2146 = vadd.f32 0.0, %v2145
        %v2147 = vpop.f32.mrb[0].mxu0
        %v2148 = vpop.f32.mrb[0].mxu0
        %v2149 = vadd.f32 0.0, %v2148
        %v2150 = vpop.f32.mrb[0].mxu0
        %2151 = vmatprep.mubr.bf16.mxu0 0
        %2152 = vmatmul.mubr.bf16.gmra.mrb[0].mxu0 %v2004
        %v2153 = vpop.f32.mrb[0].mxu0
        %v2154 = vadd.f32 0.0, %v2153
        %v2155 = vpop.f32.mrb[0].mxu0
        %v2156 = vpop.f32.mrb[0].mxu0
        %v2157 = vadd.f32 0.0, %v2156
        %v2158 = vpop.f32.mrb[0].mxu0
        %2159 = vmatprep.mubr.bf16.mxu0 0
        %2160 = vmatmul.mubr.bf16.gmra.mrb[0].mxu0 %v2005
        %v2161 = vpop.f32.mrb[0].mxu0
        %v2162 = vadd.f32 0.0, %v2161
        %v2163 = vpop.f32.mrb[0].mxu0
        %v2164 = vpop.f32.mrb[0].mxu0
        %v2165 = vadd.f32 0.0, %v2164
        %v2166 = vpop.f32.mrb[0].mxu0
        %2167 = vmatprep.mubr.bf16.mxu0 0
        %2168 = vmatmul.mubr.bf16.gmra.mrb[0].mxu0 %v2006
        %v2169 = vpop.f32.mrb[0].mxu0
        %v2170 = vadd.f32 0.0, %v2169
        %v2171 = vpop.f32.mrb[0].mxu0
        %v2172 = vpop.f32.mrb[0].mxu0
        %v2173 = vadd.f32 0.0, %v2172
        %v2174 = vpop.f32.mrb[0].mxu0
        %2175 = vmatprep.mubr.bf16.mxu0 0
        %2176 = vmatmul.mubr.bf16.gmra.mrb[0].mxu0 %v2007
        %v2177 = vpop.f32.mrb[0].mxu0
        %v2178 = vadd.f32 0.0, %v2177
        %v2179 = vpop.f32.mrb[0].mxu0
        %v2180 = vpop.f32.mrb[0].mxu0
        %v2181 = vadd.f32 0.0, %v2180
        %v2182 = vpop.f32.mrb[0].mxu0
        %2183 = vmatprep.mubr.bf16.mxu0 0
        %2184 = vmatmul.mubr.bf16.gmra.mrb[0].mxu0 %v2008
        %v2185 = vpop.f32.mrb[0].mxu0
        %v2186 = vadd.f32 0.0, %v2185
        %v2187 = vpop.f32.mrb[0].mxu0
        %v2188 = vpop.f32.mrb[0].mxu0
        %v2189 = vadd.f32 0.0, %v2188
        %v2190 = vpop.f32.mrb[0].mxu0
        %2191 = vmatprep.mubr.bf16.mxu0 0
        %2192 = vmatmul.mubr.bf16.gmra.mrb[0].mxu0 %v2009
        %v2193 = vpop.f32.mrb[0].mxu0
        %v2194 = vadd.f32 0.0, %v2193
        %v2195 = vpop.f32.mrb[0].mxu0
        %v2196 = vpop.f32.mrb[0].mxu0
        %v2197 = vadd.f32 0.0, %v2196
        %v2198 = vpop.f32.mrb[0].mxu0
        %2199 = vmatprep.mubr.bf16.mxu0 0
        %2200 = vmatmul.mubr.bf16.gmra.mrb[0].mxu0 %v2010
        %v2201 = vpop.f32.mrb[0].mxu0
        %v2202 = vadd.f32 0.0, %v2201
        %v2203 = vpop.f32.mrb[0].mxu0
        %v2204 = vpop.f32.mrb[0].mxu0
        %v2205 = vadd.f32 0.0, %v2204
        %v2206 = vpop.f32.mrb[0].mxu0
        %2207 = vmatprep.mubr.bf16.mxu0 0
        %2208 = vmatmul.mubr.bf16.gmra.mrb[0].mxu0 %v2011
        %v2209 = vpop.f32.mrb[0].mxu0
        %v2210 = vadd.f32 0.0, %v2209
        %v2211 = vpop.f32.mrb[0].mxu0
        %v2212 = vpop.f32.mrb[0].mxu0
        %v2213 = vadd.f32 0.0, %v2212
        %v2214 = vpop.f32.mrb[0].mxu0
        %2215 = vmatprep.mubr.bf16.mxu0 0
        %2216 = vmatmul.mubr.bf16.gmra.mrb[0].mxu0 %v2012
        %v2217 = vpop.f32.mrb[0].mxu0
        %v2218 = vadd.f32 0.0, %v2217
        %v2219 = vpop.f32.mrb[0].mxu0
        %v2220 = vpop.f32.mrb[0].mxu0
        %v2221 = vadd.f32 0.0, %v2220
        %v2222 = vpop.f32.mrb[0].mxu0
        %2223 = vmatprep.mubr.bf16.mxu0 0
        %2224 = vmatmul.mubr.bf16.gmra.mrb[0].mxu0 %v2013
        %v2225 = vpop.f32.mrb[0].mxu0
        %v2226 = vadd.f32 0.0, %v2225
        %v2227 = vpop.f32.mrb[0].mxu0
        %v2228 = vpop.f32.mrb[0].mxu0
        %v2229 = vadd.f32 0.0, %v2228
        %v2230 = vpop.f32.mrb[0].mxu0
        %2231 = vmatprep.mubr.bf16.mxu0 0
        %2232 = vmatmul.mubr.bf16.gmra.mrb[0].mxu0 %v2014
        %v2233 = vpop.f32.mrb[0].mxu0
        %v2234 = vadd.f32 0.0, %v2233
        %v2235 = vpop.f32.mrb[0].mxu0
        %v2236 = vpop.f32.mrb[0].mxu0
        %v2237 = vadd.f32 0.0, %v2236
        %v2238 = vpop.f32.mrb[0].mxu0
        %2239 = vdwg.mxu0
        %v2272 = vunpack.c.l.b16 %v1500
        %v2273 = vunpack.c.l.b16 %v1501
        %v2274 = vunpack.c.l.b16 %v1502
        %v2275 = vunpack.c.l.b16 %v1503
        %v2276 = vunpack.c.l.b16 %v1504
        %v2277 = vunpack.c.l.b16 %v1505
        %v2278 = vunpack.c.l.b16 %v1506
        %v2279 = vunpack.c.l.b16 %v1507
        %v2280 = vunpack.c.l.b16 %v1508
        %v2281 = vunpack.c.l.b16 %v1509
        %v2282 = vunpack.c.l.b16 %v1510
        %v2283 = vunpack.c.l.b16 %v1511
        %v2284 = vunpack.c.l.b16 %v1512
        %v2285 = vunpack.c.l.b16 %v1513
        %v2286 = vunpack.c.l.b16 %v1514
        %v2287 = vunpack.c.l.b16 %v1515
        %v2288 = vunpack.c.l.b16 %v1516
        %v2289 = vunpack.c.l.b16 %v1517
        %v2290 = vunpack.c.l.b16 %v1518
        %v2291 = vunpack.c.l.b16 %v1519
        %v2292 = vunpack.c.l.b16 %v1520
        %v2293 = vunpack.c.l.b16 %v1521
        %v2294 = vunpack.c.l.b16 %v1522
        %v2295 = vunpack.c.l.b16 %v1523
        %v2296 = vunpack.c.l.b16 %v1524
        %v2297 = vunpack.c.l.b16 %v1525
        %v2298 = vunpack.c.l.b16 %v1526
        %v2299 = vunpack.c.l.b16 %v1527
        %v2300 = vunpack.c.l.b16 %v1528
        %v2301 = vunpack.c.l.b16 %v1529
        %v2302 = vunpack.c.l.b16 %v1530
        %v2303 = vunpack.c.l.b16 %v1531
        %v2304 = vpack.c.b16 %v2273, %v2272
        %v2305 = vpack.c.b16 %v2275, %v2274
        %v2306 = vpack.c.b16 %v2277, %v2276
        %v2307 = vpack.c.b16 %v2279, %v2278
        %v2308 = vpack.c.b16 %v2281, %v2280
        %v2309 = vpack.c.b16 %v2283, %v2282
        %v2310 = vpack.c.b16 %v2285, %v2284
        %v2311 = vpack.c.b16 %v2287, %v2286
        %v2312 = vpack.c.b16 %v2289, %v2288
        %v2313 = vpack.c.b16 %v2291, %v2290
        %v2314 = vpack.c.b16 %v2293, %v2292
        %v2315 = vpack.c.b16 %v2295, %v2294
        %v2316 = vpack.c.b16 %v2297, %v2296
        %v2317 = vpack.c.b16 %v2299, %v2298
        %v2318 = vpack.c.b16 %v2301, %v2300
        %v2319 = vpack.c.b16 %v2303, %v2302
        %v2352 = vunpack.c.l.b16 %v1532
        %v2353 = vunpack.c.l.b16 %v1533
        %v2354 = vunpack.c.l.b16 %v1534
        %v2355 = vunpack.c.l.b16 %v1535
        %v2356 = vunpack.c.l.b16 %v1536
        %v2357 = vunpack.c.l.b16 %v1537
        %v2358 = vunpack.c.l.b16 %v1538
        %v2359 = vunpack.c.l.b16 %v1539
        %v2360 = vunpack.c.l.b16 %v1540
        %v2361 = vunpack.c.l.b16 %v1541
        %v2362 = vunpack.c.l.b16 %v1542
        %v2363 = vunpack.c.l.b16 %v1543
        %v2364 = vunpack.c.l.b16 %v1544
        %v2365 = vunpack.c.l.b16 %v1545
        %v2366 = vunpack.c.l.b16 %v1546
        %v2367 = vunpack.c.l.b16 %v1547
        %v2368 = vpack.c.b16 %v2353, %v2352
        %v2369 = vpack.c.b16 %v2355, %v2354
        %v2370 = vpack.c.b16 %v2357, %v2356
        %v2371 = vpack.c.b16 %v2359, %v2358
        %v2372 = vpack.c.b16 %v2361, %v2360
        %v2373 = vpack.c.b16 %v2363, %v2362
        %v2374 = vpack.c.b16 %v2365, %v2364
        %v2375 = vpack.c.b16 %v2367, %v2366
        %2384 = vmatprep.subr.bf16.mxu0 0
        %2385 = vmatpush1.bf16.msra.mxu0 %v2368
        %2386 = vmatprep.subr.bf16.mxu0 0
        %2387 = vmatpush1.bf16.msra.mxu0 %v2369
        %2388 = vmatprep.subr.bf16.mxu0 0
        %2389 = vmatpush1.bf16.msra.mxu0 %v2370
        %2390 = vmatprep.subr.bf16.mxu0 0
        %2391 = vmatpush1.bf16.msra.mxu0 %v2371
        %2392 = vmatprep.subr.bf16.mxu0 0
        %2393 = vmatpush1.bf16.msra.mxu0 %v2372
        %2394 = vmatprep.subr.bf16.mxu0 0
        %2395 = vmatpush1.bf16.msra.mxu0 %v2373
        %2396 = vmatprep.subr.bf16.mxu0 0
        %2397 = vmatpush1.bf16.msra.mxu0 %v2374
        %2398 = vmatprep.subr.bf16.mxu0 0
        %2399 = vmatpush1.bf16.msra.mxu0 %v2375
        %2400 = vmatprep.subr.bf16.mxu0 0
        %2401 = vmatpush1.bf16.msra.mxu0 0
        %2402 = vmatprep.subr.bf16.mxu0 0
        %2403 = vmatpush1.bf16.msra.mxu0 0
        %2404 = vmatprep.subr.bf16.mxu0 0
        %2405 = vmatpush1.bf16.msra.mxu0 0
        %2406 = vmatprep.subr.bf16.mxu0 0
        %2407 = vmatpush1.bf16.msra.mxu0 0
        %2408 = vmatprep.subr.bf16.mxu0 0
        %2409 = vmatpush1.bf16.msra.mxu0 0
        %2410 = vmatprep.subr.bf16.mxu0 0
        %2411 = vmatpush1.bf16.msra.mxu0 0
        %2412 = vmatprep.subr.bf16.mxu0 0
        %2413 = vmatpush1.bf16.msra.mxu0 0
        %2414 = vmatprep.subr.bf16.mxu0 0
        %2415 = vmatpush1.bf16.msra.mxu0 0
        %2416 = vmatprep.mubr.bf16.mxu0 0
        %2417 = vmatmul.mubr.bf16.gmra.mrb[0].mxu0 %v2304
        %v2418 = vpop.f32.mrb[0].mxu0
        %v2419 = vadd.f32 %v2114, %v2418
        %v2420 = vpop.f32.mrb[0].mxu0
        %v2421 = vpop.f32.mrb[0].mxu0
        %v2422 = vadd.f32 %v2117, %v2421
        %v2423 = vpop.f32.mrb[0].mxu0
        %2424 = vmatprep.mubr.bf16.mxu0 0
        %2425 = vmatmul.mubr.bf16.gmra.mrb[0].mxu0 %v2305
        %v2426 = vpop.f32.mrb[0].mxu0
        %v2427 = vadd.f32 %v2122, %v2426
        %v2428 = vpop.f32.mrb[0].mxu0
        %v2429 = vpop.f32.mrb[0].mxu0
        %v2430 = vadd.f32 %v2125, %v2429
        %v2431 = vpop.f32.mrb[0].mxu0
        %2432 = vmatprep.mubr.bf16.mxu0 0
        %2433 = vmatmul.mubr.bf16.gmra.mrb[0].mxu0 %v2306
        %v2434 = vpop.f32.mrb[0].mxu0
        %v2435 = vadd.f32 %v2130, %v2434
        %v2436 = vpop.f32.mrb[0].mxu0
        %v2437 = vpop.f32.mrb[0].mxu0
        %v2438 = vadd.f32 %v2133, %v2437
        %v2439 = vpop.f32.mrb[0].mxu0
        %2440 = vmatprep.mubr.bf16.mxu0 0
        %2441 = vmatmul.mubr.bf16.gmra.mrb[0].mxu0 %v2307
        %v2442 = vpop.f32.mrb[0].mxu0
        %v2443 = vadd.f32 %v2138, %v2442
        %v2444 = vpop.f32.mrb[0].mxu0
        %v2445 = vpop.f32.mrb[0].mxu0
        %v2446 = vadd.f32 %v2141, %v2445
        %v2447 = vpop.f32.mrb[0].mxu0
        %2448 = vmatprep.mubr.bf16.mxu0 0
        %2449 = vmatmul.mubr.bf16.gmra.mrb[0].mxu0 %v2308
        %v2450 = vpop.f32.mrb[0].mxu0
        %v2451 = vadd.f32 %v2146, %v2450
        %v2452 = vpop.f32.mrb[0].mxu0
        %v2453 = vpop.f32.mrb[0].mxu0
        %v2454 = vadd.f32 %v2149, %v2453
        %v2455 = vpop.f32.mrb[0].mxu0
        %2456 = vmatprep.mubr.bf16.mxu0 0
        %2457 = vmatmul.mubr.bf16.gmra.mrb[0].mxu0 %v2309
        %v2458 = vpop.f32.mrb[0].mxu0
        %v2459 = vadd.f32 %v2154, %v2458
        %v2460 = vpop.f32.mrb[0].mxu0
        %v2461 = vpop.f32.mrb[0].mxu0
        %v2462 = vadd.f32 %v2157, %v2461
        %v2463 = vpop.f32.mrb[0].mxu0
        %2464 = vmatprep.mubr.bf16.mxu0 0
        %2465 = vmatmul.mubr.bf16.gmra.mrb[0].mxu0 %v2310
        %v2466 = vpop.f32.mrb[0].mxu0
        %v2467 = vadd.f32 %v2162, %v2466
        %v2468 = vpop.f32.mrb[0].mxu0
        %v2469 = vpop.f32.mrb[0].mxu0
        %v2470 = vadd.f32 %v2165, %v2469
        %v2471 = vpop.f32.mrb[0].mxu0
        %2472 = vmatprep.mubr.bf16.mxu0 0
        %2473 = vmatmul.mubr.bf16.gmra.mrb[0].mxu0 %v2311
        %v2474 = vpop.f32.mrb[0].mxu0
        %v2475 = vadd.f32 %v2170, %v2474
        %v2476 = vpop.f32.mrb[0].mxu0
        %v2477 = vpop.f32.mrb[0].mxu0
        %v2478 = vadd.f32 %v2173, %v2477
        %v2479 = vpop.f32.mrb[0].mxu0
        %2480 = vmatprep.mubr.bf16.mxu0 0
        %2481 = vmatmul.mubr.bf16.gmra.mrb[0].mxu0 %v2312
        %v2482 = vpop.f32.mrb[0].mxu0
        %v2483 = vadd.f32 %v2178, %v2482
        %v2484 = vpop.f32.mrb[0].mxu0
        %v2485 = vpop.f32.mrb[0].mxu0
        %v2486 = vadd.f32 %v2181, %v2485
        %v2487 = vpop.f32.mrb[0].mxu0
        %2488 = vmatprep.mubr.bf16.mxu0 0
        %2489 = vmatmul.mubr.bf16.gmra.mrb[0].mxu0 %v2313
        %v2490 = vpop.f32.mrb[0].mxu0
        %v2491 = vadd.f32 %v2186, %v2490
        %v2492 = vpop.f32.mrb[0].mxu0
        %v2493 = vpop.f32.mrb[0].mxu0
        %v2494 = vadd.f32 %v2189, %v2493
        %v2495 = vpop.f32.mrb[0].mxu0
        %2496 = vmatprep.mubr.bf16.mxu0 0
        %2497 = vmatmul.mubr.bf16.gmra.mrb[0].mxu0 %v2314
        %v2498 = vpop.f32.mrb[0].mxu0
        %v2499 = vadd.f32 %v2194, %v2498
        %v2500 = vpop.f32.mrb[0].mxu0
        %v2501 = vpop.f32.mrb[0].mxu0
        %v2502 = vadd.f32 %v2197, %v2501
        %v2503 = vpop.f32.mrb[0].mxu0
        %2504 = vmatprep.mubr.bf16.mxu0 0
        %2505 = vmatmul.mubr.bf16.gmra.mrb[0].mxu0 %v2315
        %v2506 = vpop.f32.mrb[0].mxu0
        %v2507 = vadd.f32 %v2202, %v2506
        %v2508 = vpop.f32.mrb[0].mxu0
        %v2509 = vpop.f32.mrb[0].mxu0
        %v2510 = vadd.f32 %v2205, %v2509
        %v2511 = vpop.f32.mrb[0].mxu0
        %2512 = vmatprep.mubr.bf16.mxu0 0
        %2513 = vmatmul.mubr.bf16.gmra.mrb[0].mxu0 %v2316
        %v2514 = vpop.f32.mrb[0].mxu0
        %v2515 = vadd.f32 %v2210, %v2514
        %v2516 = vpop.f32.mrb[0].mxu0
        %v2517 = vpop.f32.mrb[0].mxu0
        %v2518 = vadd.f32 %v2213, %v2517
        %v2519 = vpop.f32.mrb[0].mxu0
        %2520 = vmatprep.mubr.bf16.mxu0 0
        %2521 = vmatmul.mubr.bf16.gmra.mrb[0].mxu0 %v2317
        %v2522 = vpop.f32.mrb[0].mxu0
        %v2523 = vadd.f32 %v2218, %v2522
        %v2524 = vpop.f32.mrb[0].mxu0
        %v2525 = vpop.f32.mrb[0].mxu0
        %v2526 = vadd.f32 %v2221, %v2525
        %v2527 = vpop.f32.mrb[0].mxu0
        %2528 = vmatprep.mubr.bf16.mxu0 0
        %2529 = vmatmul.mubr.bf16.gmra.mrb[0].mxu0 %v2318
        %v2530 = vpop.f32.mrb[0].mxu0
        %v2531 = vadd.f32 %v2226, %v2530
        %v2532 = vpop.f32.mrb[0].mxu0
        %v2533 = vpop.f32.mrb[0].mxu0
        %v2534 = vadd.f32 %v2229, %v2533
        %v2535 = vpop.f32.mrb[0].mxu0
        %2536 = vmatprep.mubr.bf16.mxu0 0
        %2537 = vmatmul.mubr.bf16.gmra.mrb[0].mxu0 %v2319
        %v2538 = vpop.f32.mrb[0].mxu0
        %v2539 = vadd.f32 %v2234, %v2538
        %v2540 = vpop.f32.mrb[0].mxu0
        %v2541 = vpop.f32.mrb[0].mxu0
        %v2542 = vadd.f32 %v2237, %v2541
        %v2543 = vpop.f32.mrb[0].mxu0
        %2544 = vdwg.mxu0
        %v2545 = vld [vmem:[#allocation2] sm:$0xe]
        %v2546 = vld [vmem:[#allocation2 + $0xc] sm:$0xe]
        %v2547 = vld [vmem:[#allocation2 + $0x18] sm:$0xe]
        %v2548 = vld [vmem:[#allocation2 + $0x24] sm:$0xe]
        %v2549 = vld [vmem:[#allocation2 + $0x30] sm:$0xe]
        %v2550 = vld [vmem:[#allocation2 + $0x3c] sm:$0xe]
        %v2551 = vld [vmem:[#allocation2 + $0x48] sm:$0xe]
        %v2552 = vld [vmem:[#allocation2 + $0x54] sm:$0xe]
        %v2553 = vld [vmem:[#allocation2 + $0x60] sm:$0xe]
        %v2554 = vld [vmem:[#allocation2 + $0x6c] sm:$0xe]
        %v2555 = vld [vmem:[#allocation2 + $0x78] sm:$0xe]
        %v2556 = vld [vmem:[#allocation2 + $0x84] sm:$0xe]
        %v2557 = vld [vmem:[#allocation2 + $0x90] sm:$0xe]
        %v2558 = vld [vmem:[#allocation2 + $0x9c] sm:$0xe]
        %v2559 = vld [vmem:[#allocation2 + $0xa8] sm:$0xe]
        %v2560 = vld [vmem:[#allocation2 + $0xb4] sm:$0xe]
        %vm2593 = vcmask 1042432
        %vm2594 = vcmask 1046532
        %vm2595 = vmor %vm2593, %vm2594
        %v2596 = vrot.slane %v2545, 5
        %v2597 = vrot.slane %v2596, 4
        %v2598 = vrot.slane %v1501, 5
        %v2599 = vsel %vm2595, %v2597, %v2598
        %v2600 = vrot.slane %v2598, 4
        %v2601 = vrot.slane %v1548, 5
        %v2602 = vsel %vm2595, %v2600, %v2601
        %v2603 = vrot.slane %v2546, 5
        %v2604 = vrot.slane %v2603, 4
        %v2605 = vrot.slane %v1503, 5
        %v2606 = vsel %vm2595, %v2604, %v2605
        %v2607 = vrot.slane %v2605, 4
        %v2608 = vrot.slane %v1549, 5
        %v2609 = vsel %vm2595, %v2607, %v2608
        %v2610 = vrot.slane %v2547, 5
        %v2611 = vrot.slane %v2610, 4
        %v2612 = vrot.slane %v1505, 5
        %v2613 = vsel %vm2595, %v2611, %v2612
        %v2614 = vrot.slane %v2612, 4
        %v2615 = vrot.slane %v1550, 5
        %v2616 = vsel %vm2595, %v2614, %v2615
        %v2617 = vrot.slane %v2548, 5
        %v2618 = vrot.slane %v2617, 4
        %v2619 = vrot.slane %v1507, 5
        %v2620 = vsel %vm2595, %v2618, %v2619
        %v2621 = vrot.slane %v2619, 4
        %v2622 = vrot.slane %v1551, 5
        %v2623 = vsel %vm2595, %v2621, %v2622
        %v2624 = vrot.slane %v2549, 5
        %v2625 = vrot.slane %v2624, 4
        %v2626 = vrot.slane %v1509, 5
        %v2627 = vsel %vm2595, %v2625, %v2626
        %v2628 = vrot.slane %v2626, 4
        %v2629 = vrot.slane %v1552, 5
        %v2630 = vsel %vm2595, %v2628, %v2629
        %v2631 = vrot.slane %v2550, 5
        %v2632 = vrot.slane %v2631, 4
        %v2633 = vrot.slane %v1511, 5
        %v2634 = vsel %vm2595, %v2632, %v2633
        %v2635 = vrot.slane %v2633, 4
        %v2636 = vrot.slane %v1553, 5
        %v2637 = vsel %vm2595, %v2635, %v2636
        %v2638 = vrot.slane %v2551, 5
        %v2639 = vrot.slane %v2638, 4
        %v2640 = vrot.slane %v1513, 5
        %v2641 = vsel %vm2595, %v2639, %v2640
        %v2642 = vrot.slane %v2640, 4
        %v2643 = vrot.slane %v1554, 5
        %v2644 = vsel %vm2595, %v2642, %v2643
        %v2645 = vrot.slane %v2552, 5
        %v2646 = vrot.slane %v2645, 4
        %v2647 = vrot.slane %v1515, 5
        %v2648 = vsel %vm2595, %v2646, %v2647
        %v2649 = vrot.slane %v2647, 4
        %v2650 = vrot.slane %v1555, 5
        %v2651 = vsel %vm2595, %v2649, %v2650
        %v2652 = vrot.slane %v2553, 5
        %v2653 = vrot.slane %v2652, 4
        %v2654 = vrot.slane %v1517, 5
        %v2655 = vsel %vm2595, %v2653, %v2654
        %v2656 = vrot.slane %v2654, 4
        %v2657 = vrot.slane %v1556, 5
        %v2658 = vsel %vm2595, %v2656, %v2657
        %v2659 = vrot.slane %v2554, 5
        %v2660 = vrot.slane %v2659, 4
        %v2661 = vrot.slane %v1519, 5
        %v2662 = vsel %vm2595, %v2660, %v2661
        %v2663 = vrot.slane %v2661, 4
        %v2664 = vrot.slane %v1557, 5
        %v2665 = vsel %vm2595, %v2663, %v2664
        %v2666 = vrot.slane %v2555, 5
        %v2667 = vrot.slane %v2666, 4
        %v2668 = vrot.slane %v1521, 5
        %v2669 = vsel %vm2595, %v2667, %v2668
        %v2670 = vrot.slane %v2668, 4
        %v2671 = vrot.slane %v1558, 5
        %v2672 = vsel %vm2595, %v2670, %v2671
        %v2673 = vrot.slane %v2556, 5
        %v2674 = vrot.slane %v2673, 4
        %v2675 = vrot.slane %v1523, 5
        %v2676 = vsel %vm2595, %v2674, %v2675
        %v2677 = vrot.slane %v2675, 4
        %v2678 = vrot.slane %v1559, 5
        %v2679 = vsel %vm2595, %v2677, %v2678
        %v2680 = vrot.slane %v2557, 5
        %v2681 = vrot.slane %v2680, 4
        %v2682 = vrot.slane %v1525, 5
        %v2683 = vsel %vm2595, %v2681, %v2682
        %v2684 = vrot.slane %v2682, 4
        %v2685 = vrot.slane %v1560, 5
        %v2686 = vsel %vm2595, %v2684, %v2685
        %v2687 = vrot.slane %v2558, 5
        %v2688 = vrot.slane %v2687, 4
        %v2689 = vrot.slane %v1527, 5
        %v2690 = vsel %vm2595, %v2688, %v2689
        %v2691 = vrot.slane %v2689, 4
        %v2692 = vrot.slane %v1561, 5
        %v2693 = vsel %vm2595, %v2691, %v2692
        %v2694 = vrot.slane %v2559, 5
        %v2695 = vrot.slane %v2694, 4
        %v2696 = vrot.slane %v1529, 5
        %v2697 = vsel %vm2595, %v2695, %v2696
        %v2698 = vrot.slane %v2696, 4
        %v2699 = vrot.slane %v1562, 5
        %v2700 = vsel %vm2595, %v2698, %v2699
        %v2701 = vrot.slane %v2560, 5
        %v2702 = vrot.slane %v2701, 4
        %v2703 = vrot.slane %v1531, 5
        %v2704 = vsel %vm2595, %v2702, %v2703
        %v2705 = vrot.slane %v2703, 4
        %v2706 = vrot.slane %v1563, 5
        %v2707 = vsel %vm2595, %v2705, %v2706
        %v2708 = vld [vmem:[%s4 + $0x80] sm:$0xf]
        %v2709 = vld [vmem:[%s4 + $0x84] sm:$0xf]
        %v2710 = vld [vmem:[%s4 + $0x88] sm:$0xf]
        %v2711 = vld [vmem:[%s4 + $0x8c] sm:$0xf]
        %v2712 = vld [vmem:[%s4 + $0x90] sm:$0xf]
        %v2713 = vld [vmem:[%s4 + $0x94] sm:$0xf]
        %v2714 = vld [vmem:[%s4 + $0x98] sm:$0xf]
        %v2715 = vld [vmem:[%s4 + $0x9c] sm:$0xf]
        %v2716 = vld [vmem:[%s4 + $0xa0] sm:$0xf]
        %v2717 = vld [vmem:[%s4 + $0xa4] sm:$0xf]
        %v2718 = vld [vmem:[%s4 + $0xa8] sm:$0xf]
        %v2719 = vld [vmem:[%s4 + $0xac] sm:$0xf]
        %v2720 = vld [vmem:[%s4 + $0xb0] sm:$0xf]
        %v2721 = vld [vmem:[%s4 + $0xb4] sm:$0xf]
        %v2722 = vld [vmem:[%s4 + $0xb8] sm:$0xf]
        %v2723 = vld [vmem:[%s4 + $0xbc] sm:$0xf]
        %v2724 = vunpack.c.l.b16 %v2599
        %v2725 = vunpack.c.l.b16 %v2602
        %v2726 = vunpack.c.l.b16 %v2606
        %v2727 = vunpack.c.l.b16 %v2609
        %v2728 = vunpack.c.l.b16 %v2613
        %v2729 = vunpack.c.l.b16 %v2616
        %v2730 = vunpack.c.l.b16 %v2620
        %v2731 = vunpack.c.l.b16 %v2623
        %v2732 = vunpack.c.l.b16 %v2627
        %v2733 = vunpack.c.l.b16 %v2630
        %v2734 = vunpack.c.l.b16 %v2634
        %v2735 = vunpack.c.l.b16 %v2637
        %v2736 = vunpack.c.l.b16 %v2641
        %v2737 = vunpack.c.l.b16 %v2644
        %v2738 = vunpack.c.l.b16 %v2648
        %v2739 = vunpack.c.l.b16 %v2651
        %v2740 = vunpack.c.l.b16 %v2655
        %v2741 = vunpack.c.l.b16 %v2658
        %v2742 = vunpack.c.l.b16 %v2662
        %v2743 = vunpack.c.l.b16 %v2665
        %v2744 = vunpack.c.l.b16 %v2669
        %v2745 = vunpack.c.l.b16 %v2672
        %v2746 = vunpack.c.l.b16 %v2676
        %v2747 = vunpack.c.l.b16 %v2679
        %v2748 = vunpack.c.l.b16 %v2683
        %v2749 = vunpack.c.l.b16 %v2686
        %v2750 = vunpack.c.l.b16 %v2690
        %v2751 = vunpack.c.l.b16 %v2693
        %v2752 = vunpack.c.l.b16 %v2697
        %v2753 = vunpack.c.l.b16 %v2700
        %v2754 = vunpack.c.l.b16 %v2704
        %v2755 = vunpack.c.l.b16 %v2707
        %v2756 = vpack.c.b16 %v2725, %v2724
        %v2757 = vpack.c.b16 %v2727, %v2726
        %v2758 = vpack.c.b16 %v2729, %v2728
        %v2759 = vpack.c.b16 %v2731, %v2730
        %v2760 = vpack.c.b16 %v2733, %v2732
        %v2761 = vpack.c.b16 %v2735, %v2734
        %v2762 = vpack.c.b16 %v2737, %v2736
        %v2763 = vpack.c.b16 %v2739, %v2738
        %v2764 = vpack.c.b16 %v2741, %v2740
        %v2765 = vpack.c.b16 %v2743, %v2742
        %v2766 = vpack.c.b16 %v2745, %v2744
        %v2767 = vpack.c.b16 %v2747, %v2746
        %v2768 = vpack.c.b16 %v2749, %v2748
        %v2769 = vpack.c.b16 %v2751, %v2750
        %v2770 = vpack.c.b16 %v2753, %v2752
        %v2771 = vpack.c.b16 %v2755, %v2754
        %v2804 = vunpack.c.l.b16 %v2708
        %v2805 = vunpack.c.l.b16 %v2709
        %v2806 = vunpack.c.l.b16 %v2710
        %v2807 = vunpack.c.l.b16 %v2711
        %v2808 = vunpack.c.l.b16 %v2712
        %v2809 = vunpack.c.l.b16 %v2713
        %v2810 = vunpack.c.l.b16 %v2714
        %v2811 = vunpack.c.l.b16 %v2715
        %v2812 = vunpack.c.l.b16 %v2716
        %v2813 = vunpack.c.l.b16 %v2717
        %v2814 = vunpack.c.l.b16 %v2718
        %v2815 = vunpack.c.l.b16 %v2719
        %v2816 = vunpack.c.l.b16 %v2720
        %v2817 = vunpack.c.l.b16 %v2721
        %v2818 = vunpack.c.l.b16 %v2722
        %v2819 = vunpack.c.l.b16 %v2723
        %v2820 = vpack.c.b16 %v2805, %v2804
        %v2821 = vpack.c.b16 %v2807, %v2806
        %v2822 = vpack.c.b16 %v2809, %v2808
        %v2823 = vpack.c.b16 %v2811, %v2810
        %v2824 = vpack.c.b16 %v2813, %v2812
        %v2825 = vpack.c.b16 %v2815, %v2814
        %v2826 = vpack.c.b16 %v2817, %v2816
        %v2827 = vpack.c.b16 %v2819, %v2818
        %2836 = vmatprep.subr.bf16.mxu0 0
        %2837 = vmatpush1.bf16.msra.mxu0 %v2820
        %2838 = vmatprep.subr.bf16.mxu0 0
        %2839 = vmatpush1.bf16.msra.mxu0 %v2821
        %2840 = vmatprep.subr.bf16.mxu0 0
        %2841 = vmatpush1.bf16.msra.mxu0 %v2822
        %2842 = vmatprep.subr.bf16.mxu0 0
        %2843 = vmatpush1.bf16.msra.mxu0 %v2823
        %2844 = vmatprep.subr.bf16.mxu0 0
        %2845 = vmatpush1.bf16.msra.mxu0 %v2824
        %2846 = vmatprep.subr.bf16.mxu0 0
        %2847 = vmatpush1.bf16.msra.mxu0 %v2825
        %2848 = vmatprep.subr.bf16.mxu0 0
        %2849 = vmatpush1.bf16.msra.mxu0 %v2826
        %2850 = vmatprep.subr.bf16.mxu0 0
        %2851 = vmatpush1.bf16.msra.mxu0 %v2827
        %2852 = vmatprep.subr.bf16.mxu0 0
        %2853 = vmatpush1.bf16.msra.mxu0 0
        %2854 = vmatprep.subr.bf16.mxu0 0
        %2855 = vmatpush1.bf16.msra.mxu0 0
        %2856 = vmatprep.subr.bf16.mxu0 0
        %2857 = vmatpush1.bf16.msra.mxu0 0
        %2858 = vmatprep.subr.bf16.mxu0 0
        %2859 = vmatpush1.bf16.msra.mxu0 0
        %2860 = vmatprep.subr.bf16.mxu0 0
        %2861 = vmatpush1.bf16.msra.mxu0 0
        %2862 = vmatprep.subr.bf16.mxu0 0
        %2863 = vmatpush1.bf16.msra.mxu0 0
        %2864 = vmatprep.subr.bf16.mxu0 0
        %2865 = vmatpush1.bf16.msra.mxu0 0
        %2866 = vmatprep.subr.bf16.mxu0 0
        %2867 = vmatpush1.bf16.msra.mxu0 0
        %2868 = vmatprep.mubr.bf16.mxu0 0
        %2869 = vmatmul.mubr.bf16.gmra.mrb[0].mxu0 %v2756
        %v2870 = vpop.f32.mrb[0].mxu0
        %v2871 = vadd.f32 0.0, %v2870
        %v2872 = vpop.f32.mrb[0].mxu0
        %v2873 = vpop.f32.mrb[0].mxu0
        %v2874 = vadd.f32 0.0, %v2873
        %v2875 = vpop.f32.mrb[0].mxu0
        %2876 = vmatprep.mubr.bf16.mxu0 0
        %2877 = vmatmul.mubr.bf16.gmra.mrb[0].mxu0 %v2757
        %v2878 = vpop.f32.mrb[0].mxu0
        %v2879 = vadd.f32 0.0, %v2878
        %v2880 = vpop.f32.mrb[0].mxu0
        %v2881 = vpop.f32.mrb[0].mxu0
        %v2882 = vadd.f32 0.0, %v2881
        %v2883 = vpop.f32.mrb[0].mxu0
        %2884 = vmatprep.mubr.bf16.mxu0 0
        %2885 = vmatmul.mubr.bf16.gmra.mrb[0].mxu0 %v2758
        %v2886 = vpop.f32.mrb[0].mxu0
        %v2887 = vadd.f32 0.0, %v2886
        %v2888 = vpop.f32.mrb[0].mxu0
        %v2889 = vpop.f32.mrb[0].mxu0
        %v2890 = vadd.f32 0.0, %v2889
        %v2891 = vpop.f32.mrb[0].mxu0
        %2892 = vmatprep.mubr.bf16.mxu0 0
        %2893 = vmatmul.mubr.bf16.gmra.mrb[0].mxu0 %v2759
        %v2894 = vpop.f32.mrb[0].mxu0
        %v2895 = vadd.f32 0.0, %v2894
        %v2896 = vpop.f32.mrb[0].mxu0
        %v2897 = vpop.f32.mrb[0].mxu0
        %v2898 = vadd.f32 0.0, %v2897
        %v2899 = vpop.f32.mrb[0].mxu0
        %2900 = vmatprep.mubr.bf16.mxu0 0
        %2901 = vmatmul.mubr.bf16.gmra.mrb[0].mxu0 %v2760
        %v2902 = vpop.f32.mrb[0].mxu0
        %v2903 = vadd.f32 0.0, %v2902
        %v2904 = vpop.f32.mrb[0].mxu0
        %v2905 = vpop.f32.mrb[0].mxu0
        %v2906 = vadd.f32 0.0, %v2905
        %v2907 = vpop.f32.mrb[0].mxu0
        %2908 = vmatprep.mubr.bf16.mxu0 0
        %2909 = vmatmul.mubr.bf16.gmra.mrb[0].mxu0 %v2761
        %v2910 = vpop.f32.mrb[0].mxu0
        %v2911 = vadd.f32 0.0, %v2910
        %v2912 = vpop.f32.mrb[0].mxu0
        %v2913 = vpop.f32.mrb[0].mxu0
        %v2914 = vadd.f32 0.0, %v2913
        %v2915 = vpop.f32.mrb[0].mxu0
        %2916 = vmatprep.mubr.bf16.mxu0 0
        %2917 = vmatmul.mubr.bf16.gmra.mrb[0].mxu0 %v2762
        %v2918 = vpop.f32.mrb[0].mxu0
        %v2919 = vadd.f32 0.0, %v2918
        %v2920 = vpop.f32.mrb[0].mxu0
        %v2921 = vpop.f32.mrb[0].mxu0
        %v2922 = vadd.f32 0.0, %v2921
        %v2923 = vpop.f32.mrb[0].mxu0
        %2924 = vmatprep.mubr.bf16.mxu0 0
        %2925 = vmatmul.mubr.bf16.gmra.mrb[0].mxu0 %v2763
        %v2926 = vpop.f32.mrb[0].mxu0
        %v2927 = vadd.f32 0.0, %v2926
        %v2928 = vpop.f32.mrb[0].mxu0
        %v2929 = vpop.f32.mrb[0].mxu0
        %v2930 = vadd.f32 0.0, %v2929
        %v2931 = vpop.f32.mrb[0].mxu0
        %2932 = vmatprep.mubr.bf16.mxu0 0
        %2933 = vmatmul.mubr.bf16.gmra.mrb[0].mxu0 %v2764
        %v2934 = vpop.f32.mrb[0].mxu0
        %v2935 = vadd.f32 0.0, %v2934
        %v2936 = vpop.f32.mrb[0].mxu0
        %v2937 = vpop.f32.mrb[0].mxu0
        %v2938 = vadd.f32 0.0, %v2937
        %v2939 = vpop.f32.mrb[0].mxu0
        %2940 = vmatprep.mubr.bf16.mxu0 0
        %2941 = vmatmul.mubr.bf16.gmra.mrb[0].mxu0 %v2765
        %v2942 = vpop.f32.mrb[0].mxu0
        %v2943 = vadd.f32 0.0, %v2942
        %v2944 = vpop.f32.mrb[0].mxu0
        %v2945 = vpop.f32.mrb[0].mxu0
        %v2946 = vadd.f32 0.0, %v2945
        %v2947 = vpop.f32.mrb[0].mxu0
        %2948 = vmatprep.mubr.bf16.mxu0 0
        %2949 = vmatmul.mubr.bf16.gmra.mrb[0].mxu0 %v2766
        %v2950 = vpop.f32.mrb[0].mxu0
        %v2951 = vadd.f32 0.0, %v2950
        %v2952 = vpop.f32.mrb[0].mxu0
        %v2953 = vpop.f32.mrb[0].mxu0
        %v2954 = vadd.f32 0.0, %v2953
        %v2955 = vpop.f32.mrb[0].mxu0
        %2956 = vmatprep.mubr.bf16.mxu0 0
        %2957 = vmatmul.mubr.bf16.gmra.mrb[0].mxu0 %v2767
        %v2958 = vpop.f32.mrb[0].mxu0
        %v2959 = vadd.f32 0.0, %v2958
        %v2960 = vpop.f32.mrb[0].mxu0
        %v2961 = vpop.f32.mrb[0].mxu0
        %v2962 = vadd.f32 0.0, %v2961
        %v2963 = vpop.f32.mrb[0].mxu0
        %2964 = vmatprep.mubr.bf16.mxu0 0
        %2965 = vmatmul.mubr.bf16.gmra.mrb[0].mxu0 %v2768
        %v2966 = vpop.f32.mrb[0].mxu0
        %v2967 = vadd.f32 0.0, %v2966
        %v2968 = vpop.f32.mrb[0].mxu0
        %v2969 = vpop.f32.mrb[0].mxu0
        %v2970 = vadd.f32 0.0, %v2969
        %v2971 = vpop.f32.mrb[0].mxu0
        %2972 = vmatprep.mubr.bf16.mxu0 0
        %2973 = vmatmul.mubr.bf16.gmra.mrb[0].mxu0 %v2769
        %v2974 = vpop.f32.mrb[0].mxu0
        %v2975 = vadd.f32 0.0, %v2974
        %v2976 = vpop.f32.mrb[0].mxu0
        %v2977 = vpop.f32.mrb[0].mxu0
        %v2978 = vadd.f32 0.0, %v2977
        %v2979 = vpop.f32.mrb[0].mxu0
        %2980 = vmatprep.mubr.bf16.mxu0 0
        %2981 = vmatmul.mubr.bf16.gmra.mrb[0].mxu0 %v2770
        %v2982 = vpop.f32.mrb[0].mxu0
        %v2983 = vadd.f32 0.0, %v2982
        %v2984 = vpop.f32.mrb[0].mxu0
        %v2985 = vpop.f32.mrb[0].mxu0
        %v2986 = vadd.f32 0.0, %v2985
        %v2987 = vpop.f32.mrb[0].mxu0
        %2988 = vmatprep.mubr.bf16.mxu0 0
        %2989 = vmatmul.mubr.bf16.gmra.mrb[0].mxu0 %v2771
        %v2990 = vpop.f32.mrb[0].mxu0
        %v2991 = vadd.f32 0.0, %v2990
        %v2992 = vpop.f32.mrb[0].mxu0
        %v2993 = vpop.f32.mrb[0].mxu0
        %v2994 = vadd.f32 0.0, %v2993
        %v2995 = vpop.f32.mrb[0].mxu0
        %2996 = vdwg.mxu0
        %v2997 = vadd.f32 %v2419, %v2871
        %v2998 = vadd.f32 %v2422, %v2874
        %v2999 = vadd.f32 %v2427, %v2879
        %v3000 = vadd.f32 %v2430, %v2882
        %v3001 = vadd.f32 %v2435, %v2887
        %v3002 = vadd.f32 %v2438, %v2890
        %v3003 = vadd.f32 %v2443, %v2895
        %v3004 = vadd.f32 %v2446, %v2898
        %v3005 = vadd.f32 %v2451, %v2903
        %v3006 = vadd.f32 %v2454, %v2906
        %v3007 = vadd.f32 %v2459, %v2911
        %v3008 = vadd.f32 %v2462, %v2914
        %v3009 = vadd.f32 %v2467, %v2919
        %v3010 = vadd.f32 %v2470, %v2922
        %v3011 = vadd.f32 %v2475, %v2927
        %v3012 = vadd.f32 %v2478, %v2930
        %v3013 = vadd.f32 %v2483, %v2935
        %v3014 = vadd.f32 %v2486, %v2938
        %v3015 = vadd.f32 %v2491, %v2943
        %v3016 = vadd.f32 %v2494, %v2946
        %v3017 = vadd.f32 %v2499, %v2951
        %v3018 = vadd.f32 %v2502, %v2954
        %v3019 = vadd.f32 %v2507, %v2959
        %v3020 = vadd.f32 %v2510, %v2962
        %v3021 = vadd.f32 %v2515, %v2967
        %v3022 = vadd.f32 %v2518, %v2970
        %v3023 = vadd.f32 %v2523, %v2975
        %v3024 = vadd.f32 %v2526, %v2978
        %v3025 = vadd.f32 %v2531, %v2983
        %v3026 = vadd.f32 %v2534, %v2986
        %v3027 = vadd.f32 %v2539, %v2991
        %v3028 = vadd.f32 %v2542, %v2994
        %v3029 = vld [vmem:[%s866] sm:$0xf]
        %v3030 = vld [vmem:[%s866 + $0x4] sm:$0xf]
        %v3031 = vld [vmem:[%s866 + $0xc] sm:$0xf]
        %v3032 = vld [vmem:[%s866 + $0x10] sm:$0xf]
        %v3033 = vld [vmem:[%s866 + $0x18] sm:$0xf]
        %v3034 = vld [vmem:[%s866 + $0x1c] sm:$0xf]
        %v3035 = vld [vmem:[%s866 + $0x24] sm:$0xf]
        %v3036 = vld [vmem:[%s866 + $0x28] sm:$0xf]
        %v3037 = vld [vmem:[%s866 + $0x30] sm:$0xf]
        %v3038 = vld [vmem:[%s866 + $0x34] sm:$0xf]
        %v3039 = vld [vmem:[%s866 + $0x3c] sm:$0xf]
        %v3040 = vld [vmem:[%s866 + $0x40] sm:$0xf]
        %v3041 = vld [vmem:[%s866 + $0x48] sm:$0xf]
        %v3042 = vld [vmem:[%s866 + $0x4c] sm:$0xf]
        %v3043 = vld [vmem:[%s866 + $0x54] sm:$0xf]
        %v3044 = vld [vmem:[%s866 + $0x58] sm:$0xf]
        %v3045 = vld [vmem:[%s866 + $0x60] sm:$0xf]
        %v3046 = vld [vmem:[%s866 + $0x64] sm:$0xf]
        %v3047 = vld [vmem:[%s866 + $0x6c] sm:$0xf]
        %v3048 = vld [vmem:[%s866 + $0x70] sm:$0xf]
        %v3049 = vld [vmem:[%s866 + $0x78] sm:$0xf]
        %v3050 = vld [vmem:[%s866 + $0x7c] sm:$0xf]
        %v3051 = vld [vmem:[%s866 + $0x84] sm:$0xf]
        %v3052 = vld [vmem:[%s866 + $0x88] sm:$0xf]
        %v3053 = vld [vmem:[%s866 + $0x90] sm:$0xf]
        %v3054 = vld [vmem:[%s866 + $0x94] sm:$0xf]
        %v3055 = vld [vmem:[%s866 + $0x9c] sm:$0xf]
        %v3056 = vld [vmem:[%s866 + $0xa0] sm:$0xf]
        %v3057 = vld [vmem:[%s866 + $0xa8] sm:$0xf]
        %v3058 = vld [vmem:[%s866 + $0xac] sm:$0xf]
        %v3059 = vld [vmem:[%s866 + $0xb4] sm:$0xf]
        %v3060 = vld [vmem:[%s866 + $0xb8] sm:$0xf]
        %v3061 = vld [vmem:[%s4 + $0xc0] sm:$0xf]
        %v3062 = vld [vmem:[%s4 + $0xc4] sm:$0xf]
        %v3063 = vld [vmem:[%s4 + $0xc8] sm:$0xf]
        %v3064 = vld [vmem:[%s4 + $0xcc] sm:$0xf]
        %v3065 = vld [vmem:[%s4 + $0xd0] sm:$0xf]
        %v3066 = vld [vmem:[%s4 + $0xd4] sm:$0xf]
        %v3067 = vld [vmem:[%s4 + $0xd8] sm:$0xf]
        %v3068 = vld [vmem:[%s4 + $0xdc] sm:$0xf]
        %v3069 = vld [vmem:[%s4 + $0xe0] sm:$0xf]
        %v3070 = vld [vmem:[%s4 + $0xe4] sm:$0xf]
        %v3071 = vld [vmem:[%s4 + $0xe8] sm:$0xf]
        %v3072 = vld [vmem:[%s4 + $0xec] sm:$0xf]
        %v3073 = vld [vmem:[%s4 + $0xf0] sm:$0xf]
        %v3074 = vld [vmem:[%s4 + $0xf4] sm:$0xf]
        %v3075 = vld [vmem:[%s4 + $0xf8] sm:$0xf]
        %v3076 = vld [vmem:[%s4 + $0xfc] sm:$0xf]
        %v3109 = vunpack.c.l.b16 %v3029
        %v3110 = vunpack.c.l.b16 %v3030
        %v3111 = vunpack.c.l.b16 %v3031
        %v3112 = vunpack.c.l.b16 %v3032
        %v3113 = vunpack.c.l.b16 %v3033
        %v3114 = vunpack.c.l.b16 %v3034
        %v3115 = vunpack.c.l.b16 %v3035
        %v3116 = vunpack.c.l.b16 %v3036
        %v3117 = vunpack.c.l.b16 %v3037
        %v3118 = vunpack.c.l.b16 %v3038
        %v3119 = vunpack.c.l.b16 %v3039
        %v3120 = vunpack.c.l.b16 %v3040
        %v3121 = vunpack.c.l.b16 %v3041
        %v3122 = vunpack.c.l.b16 %v3042
        %v3123 = vunpack.c.l.b16 %v3043
        %v3124 = vunpack.c.l.b16 %v3044
        %v3125 = vunpack.c.l.b16 %v3045
        %v3126 = vunpack.c.l.b16 %v3046
        %v3127 = vunpack.c.l.b16 %v3047
        %v3128 = vunpack.c.l.b16 %v3048
        %v3129 = vunpack.c.l.b16 %v3049
        %v3130 = vunpack.c.l.b16 %v3050
        %v3131 = vunpack.c.l.b16 %v3051
        %v3132 = vunpack.c.l.b16 %v3052
        %v3133 = vunpack.c.l.b16 %v3053
        %v3134 = vunpack.c.l.b16 %v3054
        %v3135 = vunpack.c.l.b16 %v3055
        %v3136 = vunpack.c.l.b16 %v3056
        %v3137 = vunpack.c.l.b16 %v3057
        %v3138 = vunpack.c.l.b16 %v3058
        %v3139 = vunpack.c.l.b16 %v3059
        %v3140 = vunpack.c.l.b16 %v3060
        %v3141 = vpack.c.b16 %v3110, %v3109
        %v3142 = vpack.c.b16 %v3112, %v3111
        %v3143 = vpack.c.b16 %v3114, %v3113
        %v3144 = vpack.c.b16 %v3116, %v3115
        %v3145 = vpack.c.b16 %v3118, %v3117
        %v3146 = vpack.c.b16 %v3120, %v3119
        %v3147 = vpack.c.b16 %v3122, %v3121
        %v3148 = vpack.c.b16 %v3124, %v3123
        %v3149 = vpack.c.b16 %v3126, %v3125
        %v3150 = vpack.c.b16 %v3128, %v3127
        %v3151 = vpack.c.b16 %v3130, %v3129
        %v3152 = vpack.c.b16 %v3132, %v3131
        %v3153 = vpack.c.b16 %v3134, %v3133
        %v3154 = vpack.c.b16 %v3136, %v3135
        %v3155 = vpack.c.b16 %v3138, %v3137
        %v3156 = vpack.c.b16 %v3140, %v3139
        %v3189 = vunpack.c.l.b16 %v3061
        %v3190 = vunpack.c.l.b16 %v3062
        %v3191 = vunpack.c.l.b16 %v3063
        %v3192 = vunpack.c.l.b16 %v3064
        %v3193 = vunpack.c.l.b16 %v3065
        %v3194 = vunpack.c.l.b16 %v3066
        %v3195 = vunpack.c.l.b16 %v3067
        %v3196 = vunpack.c.l.b16 %v3068
        %v3197 = vunpack.c.l.b16 %v3069
        %v3198 = vunpack.c.l.b16 %v3070
        %v3199 = vunpack.c.l.b16 %v3071
        %v3200 = vunpack.c.l.b16 %v3072
        %v3201 = vunpack.c.l.b16 %v3073
        %v3202 = vunpack.c.l.b16 %v3074
        %v3203 = vunpack.c.l.b16 %v3075
        %v3204 = vunpack.c.l.b16 %v3076
        %v3205 = vpack.c.b16 %v3190, %v3189
        %v3206 = vpack.c.b16 %v3192, %v3191
        %v3207 = vpack.c.b16 %v3194, %v3193
        %v3208 = vpack.c.b16 %v3196, %v3195
        %v3209 = vpack.c.b16 %v3198, %v3197
        %v3210 = vpack.c.b16 %v3200, %v3199
        %v3211 = vpack.c.b16 %v3202, %v3201
        %v3212 = vpack.c.b16 %v3204, %v3203
        %3221 = vmatprep.subr.bf16.mxu0 0
        %3222 = vmatpush1.bf16.msra.mxu0 %v3205
        %3223 = vmatprep.subr.bf16.mxu0 0
        %3224 = vmatpush1.bf16.msra.mxu0 %v3206
        %3225 = vmatprep.subr.bf16.mxu0 0
        %3226 = vmatpush1.bf16.msra.mxu0 %v3207
        %3227 = vmatprep.subr.bf16.mxu0 0
        %3228 = vmatpush1.bf16.msra.mxu0 %v3208
        %3229 = vmatprep.subr.bf16.mxu0 0
        %3230 = vmatpush1.bf16.msra.mxu0 %v3209
        %3231 = vmatprep.subr.bf16.mxu0 0
        %3232 = vmatpush1.bf16.msra.mxu0 %v3210
        %3233 = vmatprep.subr.bf16.mxu0 0
        %3234 = vmatpush1.bf16.msra.mxu0 %v3211
        %3235 = vmatprep.subr.bf16.mxu0 0
        %3236 = vmatpush1.bf16.msra.mxu0 %v3212
        %3237 = vmatprep.subr.bf16.mxu0 0
        %3238 = vmatpush1.bf16.msra.mxu0 0
        %3239 = vmatprep.subr.bf16.mxu0 0
        %3240 = vmatpush1.bf16.msra.mxu0 0
        %3241 = vmatprep.subr.bf16.mxu0 0
        %3242 = vmatpush1.bf16.msra.mxu0 0
        %3243 = vmatprep.subr.bf16.mxu0 0
        %3244 = vmatpush1.bf16.msra.mxu0 0
        %3245 = vmatprep.subr.bf16.mxu0 0
        %3246 = vmatpush1.bf16.msra.mxu0 0
        %3247 = vmatprep.subr.bf16.mxu0 0
        %3248 = vmatpush1.bf16.msra.mxu0 0
        %3249 = vmatprep.subr.bf16.mxu0 0
        %3250 = vmatpush1.bf16.msra.mxu0 0
        %3251 = vmatprep.subr.bf16.mxu0 0
        %3252 = vmatpush1.bf16.msra.mxu0 0
        %3253 = vmatprep.mubr.bf16.mxu0 0
        %3254 = vmatmul.mubr.bf16.gmra.mrb[0].mxu0 %v3141
        %v3255 = vpop.f32.mrb[0].mxu0
        %v3256 = vadd.f32 0.0, %v3255
        %v3257 = vpop.f32.mrb[0].mxu0
        %v3258 = vpop.f32.mrb[0].mxu0
        %v3259 = vadd.f32 0.0, %v3258
        %v3260 = vpop.f32.mrb[0].mxu0
        %3261 = vmatprep.mubr.bf16.mxu0 0
        %3262 = vmatmul.mubr.bf16.gmra.mrb[0].mxu0 %v3142
        %v3263 = vpop.f32.mrb[0].mxu0
        %v3264 = vadd.f32 0.0, %v3263
        %v3265 = vpop.f32.mrb[0].mxu0
        %v3266 = vpop.f32.mrb[0].mxu0
        %v3267 = vadd.f32 0.0, %v3266
        %v3268 = vpop.f32.mrb[0].mxu0
        %3269 = vmatprep.mubr.bf16.mxu0 0
        %3270 = vmatmul.mubr.bf16.gmra.mrb[0].mxu0 %v3143
        %v3271 = vpop.f32.mrb[0].mxu0
        %v3272 = vadd.f32 0.0, %v3271
        %v3273 = vpop.f32.mrb[0].mxu0
        %v3274 = vpop.f32.mrb[0].mxu0
        %v3275 = vadd.f32 0.0, %v3274
        %v3276 = vpop.f32.mrb[0].mxu0
        %3277 = vmatprep.mubr.bf16.mxu0 0
        %3278 = vmatmul.mubr.bf16.gmra.mrb[0].mxu0 %v3144
        %v3279 = vpop.f32.mrb[0].mxu0
        %v3280 = vadd.f32 0.0, %v3279
        %v3281 = vpop.f32.mrb[0].mxu0
        %v3282 = vpop.f32.mrb[0].mxu0
        %v3283 = vadd.f32 0.0, %v3282
        %v3284 = vpop.f32.mrb[0].mxu0
        %3285 = vmatprep.mubr.bf16.mxu0 0
        %3286 = vmatmul.mubr.bf16.gmra.mrb[0].mxu0 %v3145
        %v3287 = vpop.f32.mrb[0].mxu0
        %v3288 = vadd.f32 0.0, %v3287
        %v3289 = vpop.f32.mrb[0].mxu0
        %v3290 = vpop.f32.mrb[0].mxu0
        %v3291 = vadd.f32 0.0, %v3290
        %v3292 = vpop.f32.mrb[0].mxu0
        %3293 = vmatprep.mubr.bf16.mxu0 0
        %3294 = vmatmul.mubr.bf16.gmra.mrb[0].mxu0 %v3146
        %v3295 = vpop.f32.mrb[0].mxu0
        %v3296 = vadd.f32 0.0, %v3295
        %v3297 = vpop.f32.mrb[0].mxu0
        %v3298 = vpop.f32.mrb[0].mxu0
        %v3299 = vadd.f32 0.0, %v3298
        %v3300 = vpop.f32.mrb[0].mxu0
        %3301 = vmatprep.mubr.bf16.mxu0 0
        %3302 = vmatmul.mubr.bf16.gmra.mrb[0].mxu0 %v3147
        %v3303 = vpop.f32.mrb[0].mxu0
        %v3304 = vadd.f32 0.0, %v3303
        %v3305 = vpop.f32.mrb[0].mxu0
        %v3306 = vpop.f32.mrb[0].mxu0
        %v3307 = vadd.f32 0.0, %v3306
        %v3308 = vpop.f32.mrb[0].mxu0
        %3309 = vmatprep.mubr.bf16.mxu0 0
        %3310 = vmatmul.mubr.bf16.gmra.mrb[0].mxu0 %v3148
        %v3311 = vpop.f32.mrb[0].mxu0
        %v3312 = vadd.f32 0.0, %v3311
        %v3313 = vpop.f32.mrb[0].mxu0
        %v3314 = vpop.f32.mrb[0].mxu0
        %v3315 = vadd.f32 0.0, %v3314
        %v3316 = vpop.f32.mrb[0].mxu0
        %3317 = vmatprep.mubr.bf16.mxu0 0
        %3318 = vmatmul.mubr.bf16.gmra.mrb[0].mxu0 %v3149
        %v3319 = vpop.f32.mrb[0].mxu0
        %v3320 = vadd.f32 0.0, %v3319
        %v3321 = vpop.f32.mrb[0].mxu0
        %v3322 = vpop.f32.mrb[0].mxu0
        %v3323 = vadd.f32 0.0, %v3322
        %v3324 = vpop.f32.mrb[0].mxu0
        %3325 = vmatprep.mubr.bf16.mxu0 0
        %3326 = vmatmul.mubr.bf16.gmra.mrb[0].mxu0 %v3150
        %v3327 = vpop.f32.mrb[0].mxu0
        %v3328 = vadd.f32 0.0, %v3327
        %v3329 = vpop.f32.mrb[0].mxu0
        %v3330 = vpop.f32.mrb[0].mxu0
        %v3331 = vadd.f32 0.0, %v3330
        %v3332 = vpop.f32.mrb[0].mxu0
        %3333 = vmatprep.mubr.bf16.mxu0 0
        %3334 = vmatmul.mubr.bf16.gmra.mrb[0].mxu0 %v3151
        %v3335 = vpop.f32.mrb[0].mxu0
        %v3336 = vadd.f32 0.0, %v3335
        %v3337 = vpop.f32.mrb[0].mxu0
        %v3338 = vpop.f32.mrb[0].mxu0
        %v3339 = vadd.f32 0.0, %v3338
        %v3340 = vpop.f32.mrb[0].mxu0
        %3341 = vmatprep.mubr.bf16.mxu0 0
        %3342 = vmatmul.mubr.bf16.gmra.mrb[0].mxu0 %v3152
        %v3343 = vpop.f32.mrb[0].mxu0
        %v3344 = vadd.f32 0.0, %v3343
        %v3345 = vpop.f32.mrb[0].mxu0
        %v3346 = vpop.f32.mrb[0].mxu0
        %v3347 = vadd.f32 0.0, %v3346
        %v3348 = vpop.f32.mrb[0].mxu0
        %3349 = vmatprep.mubr.bf16.mxu0 0
        %3350 = vmatmul.mubr.bf16.gmra.mrb[0].mxu0 %v3153
        %v3351 = vpop.f32.mrb[0].mxu0
        %v3352 = vadd.f32 0.0, %v3351
        %v3353 = vpop.f32.mrb[0].mxu0
        %v3354 = vpop.f32.mrb[0].mxu0
        %v3355 = vadd.f32 0.0, %v3354
        %v3356 = vpop.f32.mrb[0].mxu0
        %3357 = vmatprep.mubr.bf16.mxu0 0
        %3358 = vmatmul.mubr.bf16.gmra.mrb[0].mxu0 %v3154
        %v3359 = vpop.f32.mrb[0].mxu0
        %v3360 = vadd.f32 0.0, %v3359
        %v3361 = vpop.f32.mrb[0].mxu0
        %v3362 = vpop.f32.mrb[0].mxu0
        %v3363 = vadd.f32 0.0, %v3362
        %v3364 = vpop.f32.mrb[0].mxu0
        %3365 = vmatprep.mubr.bf16.mxu0 0
        %3366 = vmatmul.mubr.bf16.gmra.mrb[0].mxu0 %v3155
        %v3367 = vpop.f32.mrb[0].mxu0
        %v3368 = vadd.f32 0.0, %v3367
        %v3369 = vpop.f32.mrb[0].mxu0
        %v3370 = vpop.f32.mrb[0].mxu0
        %v3371 = vadd.f32 0.0, %v3370
        %v3372 = vpop.f32.mrb[0].mxu0
        %3373 = vmatprep.mubr.bf16.mxu0 0
        %3374 = vmatmul.mubr.bf16.gmra.mrb[0].mxu0 %v3156
        %v3375 = vpop.f32.mrb[0].mxu0
        %v3376 = vadd.f32 0.0, %v3375
        %v3377 = vpop.f32.mrb[0].mxu0
        %v3378 = vpop.f32.mrb[0].mxu0
        %v3379 = vadd.f32 0.0, %v3378
        %v3380 = vpop.f32.mrb[0].mxu0
        %3381 = vdwg.mxu0
        %v3382 = vadd.f32 %v2997, %v3256
        %v3383 = vadd.f32 %v2998, %v3259
        %v3384 = vadd.f32 %v2999, %v3264
        %v3385 = vadd.f32 %v3000, %v3267
        %v3386 = vadd.f32 %v3001, %v3272
        %v3387 = vadd.f32 %v3002, %v3275
        %v3388 = vadd.f32 %v3003, %v3280
        %v3389 = vadd.f32 %v3004, %v3283
        %v3390 = vadd.f32 %v3005, %v3288
        %v3391 = vadd.f32 %v3006, %v3291
        %v3392 = vadd.f32 %v3007, %v3296
        %v3393 = vadd.f32 %v3008, %v3299
        %v3394 = vadd.f32 %v3009, %v3304
        %v3395 = vadd.f32 %v3010, %v3307
        %v3396 = vadd.f32 %v3011, %v3312
        %v3397 = vadd.f32 %v3012, %v3315
        %v3398 = vadd.f32 %v3013, %v3320
        %v3399 = vadd.f32 %v3014, %v3323
        %v3400 = vadd.f32 %v3015, %v3328
        %v3401 = vadd.f32 %v3016, %v3331
        %v3402 = vadd.f32 %v3017, %v3336
        %v3403 = vadd.f32 %v3018, %v3339
        %v3404 = vadd.f32 %v3019, %v3344
        %v3405 = vadd.f32 %v3020, %v3347
        %v3406 = vadd.f32 %v3021, %v3352
        %v3407 = vadd.f32 %v3022, %v3355
        %v3408 = vadd.f32 %v3023, %v3360
        %v3409 = vadd.f32 %v3024, %v3363
        %v3410 = vadd.f32 %v3025, %v3368
        %v3411 = vadd.f32 %v3026, %v3371
        %v3412 = vadd.f32 %v3027, %v3376
        %v3413 = vadd.f32 %v3028, %v3379
        %v3414 = vld [vmem:[%s866] sm:$0xf]
        %v3415 = vld [vmem:[%s866 + $0x4] sm:$0xf]
        %v3416 = vld [vmem:[%s866 + $0x8] sm:$0x1]
        %v3417 = vld [vmem:[%s866 + $0xc] sm:$0xf]
        %v3418 = vld [vmem:[%s866 + $0x10] sm:$0xf]
        %v3419 = vld [vmem:[%s866 + $0x14] sm:$0x1]
        %v3420 = vld [vmem:[%s866 + $0x18] sm:$0xf]
        %v3421 = vld [vmem:[%s866 + $0x1c] sm:$0xf]
        %v3422 = vld [vmem:[%s866 + $0x20] sm:$0x1]
        %v3423 = vld [vmem:[%s866 + $0x24] sm:$0xf]
        %v3424 = vld [vmem:[%s866 + $0x28] sm:$0xf]
        %v3425 = vld [vmem:[%s866 + $0x2c] sm:$0x1]
        %v3426 = vld [vmem:[%s866 + $0x30] sm:$0xf]
        %v3427 = vld [vmem:[%s866 + $0x34] sm:$0xf]
        %v3428 = vld [vmem:[%s866 + $0x38] sm:$0x1]
        %v3429 = vld [vmem:[%s866 + $0x3c] sm:$0xf]
        %v3430 = vld [vmem:[%s866 + $0x40] sm:$0xf]
        %v3431 = vld [vmem:[%s866 + $0x44] sm:$0x1]
        %v3432 = vld [vmem:[%s866 + $0x48] sm:$0xf]
        %v3433 = vld [vmem:[%s866 + $0x4c] sm:$0xf]
        %v3434 = vld [vmem:[%s866 + $0x50] sm:$0x1]
        %v3435 = vld [vmem:[%s866 + $0x54] sm:$0xf]
        %v3436 = vld [vmem:[%s866 + $0x58] sm:$0xf]
        %v3437 = vld [vmem:[%s866 + $0x5c] sm:$0x1]
        %v3438 = vld [vmem:[%s866 + $0x60] sm:$0xf]
        %v3439 = vld [vmem:[%s866 + $0x64] sm:$0xf]
        %v3440 = vld [vmem:[%s866 + $0x68] sm:$0x1]
        %v3441 = vld [vmem:[%s866 + $0x6c] sm:$0xf]
        %v3442 = vld [vmem:[%s866 + $0x70] sm:$0xf]
        %v3443 = vld [vmem:[%s866 + $0x74] sm:$0x1]
        %v3444 = vld [vmem:[%s866 + $0x78] sm:$0xf]
        %v3445 = vld [vmem:[%s866 + $0x7c] sm:$0xf]
        %v3446 = vld [vmem:[%s866 + $0x80] sm:$0x1]
        %v3447 = vld [vmem:[%s866 + $0x84] sm:$0xf]
        %v3448 = vld [vmem:[%s866 + $0x88] sm:$0xf]
        %v3449 = vld [vmem:[%s866 + $0x8c] sm:$0x1]
        %v3450 = vld [vmem:[%s866 + $0x90] sm:$0xf]
        %v3451 = vld [vmem:[%s866 + $0x94] sm:$0xf]
        %v3452 = vld [vmem:[%s866 + $0x98] sm:$0x1]
        %v3453 = vld [vmem:[%s866 + $0x9c] sm:$0xf]
        %v3454 = vld [vmem:[%s866 + $0xa0] sm:$0xf]
        %v3455 = vld [vmem:[%s866 + $0xa4] sm:$0x1]
        %v3456 = vld [vmem:[%s866 + $0xa8] sm:$0xf]
        %v3457 = vld [vmem:[%s866 + $0xac] sm:$0xf]
        %v3458 = vld [vmem:[%s866 + $0xb0] sm:$0x1]
        %v3459 = vld [vmem:[%s866 + $0xb4] sm:$0xf]
        %v3460 = vld [vmem:[%s866 + $0xb8] sm:$0xf]
        %v3461 = vld [vmem:[%s866 + $0xbc] sm:$0x1]
        %v3463 = vshrl.u32 %v3414, 16
        %v3465 = vrot.slane %v3463, 4
        %v3466 = vshll.u32 %v3414, 16
        %v3468 = vrot.slane %v3466, 5
        %v3469 = vor.u32 %v3465, %v3468
        %v3470 = vrot.slane %v3469, 4
        %v3472 = vshll.u32 %v3415, 16
        %v3474 = vrot.slane %v3472, 5
        %v3475 = vsel %vm1566, %v3470, %v3474
        %v3476 = vshrl.u32 %v3415, 16
        %v3478 = vrot.slane %v3476, 4
        %v3479 = vor.u32 %v3478, %v3474
        %v3480 = vrot.slane %v3479, 4
        %v3482 = vshll.u32 %v3416, 16
        %v3484 = vrot.slane %v3482, 5
        %v3485 = vsel %vm1566, %v3480, %v3484
        %v3487 = vshrl.u32 %v3417, 16
        %v3489 = vrot.slane %v3487, 4
        %v3490 = vshll.u32 %v3417, 16
        %v3492 = vrot.slane %v3490, 5
        %v3493 = vor.u32 %v3489, %v3492
        %v3494 = vrot.slane %v3493, 4
        %v3496 = vshll.u32 %v3418, 16
        %v3498 = vrot.slane %v3496, 5
        %v3499 = vsel %vm1566, %v3494, %v3498
        %v3500 = vshrl.u32 %v3418, 16
        %v3502 = vrot.slane %v3500, 4
        %v3503 = vor.u32 %v3502, %v3498
        %v3504 = vrot.slane %v3503, 4
        %v3506 = vshll.u32 %v3419, 16
        %v3508 = vrot.slane %v3506, 5
        %v3509 = vsel %vm1566, %v3504, %v3508
        %v3511 = vshrl.u32 %v3420, 16
        %v3513 = vrot.slane %v3511, 4
        %v3514 = vshll.u32 %v3420, 16
        %v3516 = vrot.slane %v3514, 5
        %v3517 = vor.u32 %v3513, %v3516
        %v3518 = vrot.slane %v3517, 4
        %v3520 = vshll.u32 %v3421, 16
        %v3522 = vrot.slane %v3520, 5
        %v3523 = vsel %vm1566, %v3518, %v3522
        %v3524 = vshrl.u32 %v3421, 16
        %v3526 = vrot.slane %v3524, 4
        %v3527 = vor.u32 %v3526, %v3522
        %v3528 = vrot.slane %v3527, 4
        %v3530 = vshll.u32 %v3422, 16
        %v3532 = vrot.slane %v3530, 5
        %v3533 = vsel %vm1566, %v3528, %v3532
        %v3535 = vshrl.u32 %v3423, 16
        %v3537 = vrot.slane %v3535, 4
        %v3538 = vshll.u32 %v3423, 16
        %v3540 = vrot.slane %v3538, 5
        %v3541 = vor.u32 %v3537, %v3540
        %v3542 = vrot.slane %v3541, 4
        %v3544 = vshll.u32 %v3424, 16
        %v3546 = vrot.slane %v3544, 5
        %v3547 = vsel %vm1566, %v3542, %v3546
        %v3548 = vshrl.u32 %v3424, 16
        %v3550 = vrot.slane %v3548, 4
        %v3551 = vor.u32 %v3550, %v3546
        %v3552 = vrot.slane %v3551, 4
        %v3554 = vshll.u32 %v3425, 16
        %v3556 = vrot.slane %v3554, 5
        %v3557 = vsel %vm1566, %v3552, %v3556
        %v3559 = vshrl.u32 %v3426, 16
        %v3561 = vrot.slane %v3559, 4
        %v3562 = vshll.u32 %v3426, 16
        %v3564 = vrot.slane %v3562, 5
        %v3565 = vor.u32 %v3561, %v3564
        %v3566 = vrot.slane %v3565, 4
        %v3568 = vshll.u32 %v3427, 16
        %v3570 = vrot.slane %v3568, 5
        %v3571 = vsel %vm1566, %v3566, %v3570
        %v3572 = vshrl.u32 %v3427, 16
        %v3574 = vrot.slane %v3572, 4
        %v3575 = vor.u32 %v3574, %v3570
        %v3576 = vrot.slane %v3575, 4
        %v3578 = vshll.u32 %v3428, 16
        %v3580 = vrot.slane %v3578, 5
        %v3581 = vsel %vm1566, %v3576, %v3580
        %v3583 = vshrl.u32 %v3429, 16
        %v3585 = vrot.slane %v3583, 4
        %v3586 = vshll.u32 %v3429, 16
        %v3588 = vrot.slane %v3586, 5
        %v3589 = vor.u32 %v3585, %v3588
        %v3590 = vrot.slane %v3589, 4
        %v3592 = vshll.u32 %v3430, 16
        %v3594 = vrot.slane %v3592, 5
        %v3595 = vsel %vm1566, %v3590, %v3594
        %v3596 = vshrl.u32 %v3430, 16
        %v3598 = vrot.slane %v3596, 4
        %v3599 = vor.u32 %v3598, %v3594
        %v3600 = vrot.slane %v3599, 4
        %v3602 = vshll.u32 %v3431, 16
        %v3604 = vrot.slane %v3602, 5
        %v3605 = vsel %vm1566, %v3600, %v3604
        %v3607 = vshrl.u32 %v3432, 16
        %v3609 = vrot.slane %v3607, 4
        %v3610 = vshll.u32 %v3432, 16
        %v3612 = vrot.slane %v3610, 5
        %v3613 = vor.u32 %v3609, %v3612
        %v3614 = vrot.slane %v3613, 4
        %v3616 = vshll.u32 %v3433, 16
        %v3618 = vrot.slane %v3616, 5
        %v3619 = vsel %vm1566, %v3614, %v3618
        %v3620 = vshrl.u32 %v3433, 16
        %v3622 = vrot.slane %v3620, 4
        %v3623 = vor.u32 %v3622, %v3618
        %v3624 = vrot.slane %v3623, 4
        %v3626 = vshll.u32 %v3434, 16
        %v3628 = vrot.slane %v3626, 5
        %v3629 = vsel %vm1566, %v3624, %v3628
        %v3631 = vshrl.u32 %v3435, 16
        %v3633 = vrot.slane %v3631, 4
        %v3634 = vshll.u32 %v3435, 16
        %v3636 = vrot.slane %v3634, 5
        %v3637 = vor.u32 %v3633, %v3636
        %v3638 = vrot.slane %v3637, 4
        %v3640 = vshll.u32 %v3436, 16
        %v3642 = vrot.slane %v3640, 5
        %v3643 = vsel %vm1566, %v3638, %v3642
        %v3644 = vshrl.u32 %v3436, 16
        %v3646 = vrot.slane %v3644, 4
        %v3647 = vor.u32 %v3646, %v3642
        %v3648 = vrot.slane %v3647, 4
        %v3650 = vshll.u32 %v3437, 16
        %v3652 = vrot.slane %v3650, 5
        %v3653 = vsel %vm1566, %v3648, %v3652
        %v3655 = vshrl.u32 %v3438, 16
        %v3657 = vrot.slane %v3655, 4
        %v3658 = vshll.u32 %v3438, 16
        %v3660 = vrot.slane %v3658, 5
        %v3661 = vor.u32 %v3657, %v3660
        %v3662 = vrot.slane %v3661, 4
        %v3664 = vshll.u32 %v3439, 16
        %v3666 = vrot.slane %v3664, 5
        %v3667 = vsel %vm1566, %v3662, %v3666
        %v3668 = vshrl.u32 %v3439, 16
        %v3670 = vrot.slane %v3668, 4
        %v3671 = vor.u32 %v3670, %v3666
        %v3672 = vrot.slane %v3671, 4
        %v3674 = vshll.u32 %v3440, 16
        %v3676 = vrot.slane %v3674, 5
        %v3677 = vsel %vm1566, %v3672, %v3676
        %v3679 = vshrl.u32 %v3441, 16
        %v3681 = vrot.slane %v3679, 4
        %v3682 = vshll.u32 %v3441, 16
        %v3684 = vrot.slane %v3682, 5
        %v3685 = vor.u32 %v3681, %v3684
        %v3686 = vrot.slane %v3685, 4
        %v3688 = vshll.u32 %v3442, 16
        %v3690 = vrot.slane %v3688, 5
        %v3691 = vsel %vm1566, %v3686, %v3690
        %v3692 = vshrl.u32 %v3442, 16
        %v3694 = vrot.slane %v3692, 4
        %v3695 = vor.u32 %v3694, %v3690
        %v3696 = vrot.slane %v3695, 4
        %v3698 = vshll.u32 %v3443, 16
        %v3700 = vrot.slane %v3698, 5
        %v3701 = vsel %vm1566, %v3696, %v3700
        %v3703 = vshrl.u32 %v3444, 16
        %v3705 = vrot.slane %v3703, 4
        %v3706 = vshll.u32 %v3444, 16
        %v3708 = vrot.slane %v3706, 5
        %v3709 = vor.u32 %v3705, %v3708
        %v3710 = vrot.slane %v3709, 4
        %v3712 = vshll.u32 %v3445, 16
        %v3714 = vrot.slane %v3712, 5
        %v3715 = vsel %vm1566, %v3710, %v3714
        %v3716 = vshrl.u32 %v3445, 16
        %v3718 = vrot.slane %v3716, 4
        %v3719 = vor.u32 %v3718, %v3714
        %v3720 = vrot.slane %v3719, 4
        %v3722 = vshll.u32 %v3446, 16
        %v3724 = vrot.slane %v3722, 5
        %v3725 = vsel %vm1566, %v3720, %v3724
        %v3727 = vshrl.u32 %v3447, 16
        %v3729 = vrot.slane %v3727, 4
        %v3730 = vshll.u32 %v3447, 16
        %v3732 = vrot.slane %v3730, 5
        %v3733 = vor.u32 %v3729, %v3732
        %v3734 = vrot.slane %v3733, 4
        %v3736 = vshll.u32 %v3448, 16
        %v3738 = vrot.slane %v3736, 5
        %v3739 = vsel %vm1566, %v3734, %v3738
        %v3740 = vshrl.u32 %v3448, 16
        %v3742 = vrot.slane %v3740, 4
        %v3743 = vor.u32 %v3742, %v3738
        %v3744 = vrot.slane %v3743, 4
        %v3746 = vshll.u32 %v3449, 16
        %v3748 = vrot.slane %v3746, 5
        %v3749 = vsel %vm1566, %v3744, %v3748
        %v3751 = vshrl.u32 %v3450, 16
        %v3753 = vrot.slane %v3751, 4
        %v3754 = vshll.u32 %v3450, 16
        %v3756 = vrot.slane %v3754, 5
        %v3757 = vor.u32 %v3753, %v3756
        %v3758 = vrot.slane %v3757, 4
        %v3760 = vshll.u32 %v3451, 16
        %v3762 = vrot.slane %v3760, 5
        %v3763 = vsel %vm1566, %v3758, %v3762
        %v3764 = vshrl.u32 %v3451, 16
        %v3766 = vrot.slane %v3764, 4
        %v3767 = vor.u32 %v3766, %v3762
        %v3768 = vrot.slane %v3767, 4
        %v3770 = vshll.u32 %v3452, 16
        %v3772 = vrot.slane %v3770, 5
        %v3773 = vsel %vm1566, %v3768, %v3772
        %v3775 = vshrl.u32 %v3453, 16
        %v3777 = vrot.slane %v3775, 4
        %v3778 = vshll.u32 %v3453, 16
        %v3780 = vrot.slane %v3778, 5
        %v3781 = vor.u32 %v3777, %v3780
        %v3782 = vrot.slane %v3781, 4
        %v3784 = vshll.u32 %v3454, 16
        %v3786 = vrot.slane %v3784, 5
        %v3787 = vsel %vm1566, %v3782, %v3786
        %v3788 = vshrl.u32 %v3454, 16
        %v3790 = vrot.slane %v3788, 4
        %v3791 = vor.u32 %v3790, %v3786
        %v3792 = vrot.slane %v3791, 4
        %v3794 = vshll.u32 %v3455, 16
        %v3796 = vrot.slane %v3794, 5
        %v3797 = vsel %vm1566, %v3792, %v3796
        %v3799 = vshrl.u32 %v3456, 16
        %v3801 = vrot.slane %v3799, 4
        %v3802 = vshll.u32 %v3456, 16
        %v3804 = vrot.slane %v3802, 5
        %v3805 = vor.u32 %v3801, %v3804
        %v3806 = vrot.slane %v3805, 4
        %v3808 = vshll.u32 %v3457, 16
        %v3810 = vrot.slane %v3808, 5
        %v3811 = vsel %vm1566, %v3806, %v3810
        %v3812 = vshrl.u32 %v3457, 16
        %v3814 = vrot.slane %v3812, 4
        %v3815 = vor.u32 %v3814, %v3810
        %v3816 = vrot.slane %v3815, 4
        %v3818 = vshll.u32 %v3458, 16
        %v3820 = vrot.slane %v3818, 5
        %v3821 = vsel %vm1566, %v3816, %v3820
        %v3823 = vshrl.u32 %v3459, 16
        %v3825 = vrot.slane %v3823, 4
        %v3826 = vshll.u32 %v3459, 16
        %v3828 = vrot.slane %v3826, 5
        %v3829 = vor.u32 %v3825, %v3828
        %v3830 = vrot.slane %v3829, 4
        %v3832 = vshll.u32 %v3460, 16
        %v3834 = vrot.slane %v3832, 5
        %v3835 = vsel %vm1566, %v3830, %v3834
        %v3836 = vshrl.u32 %v3460, 16
        %v3838 = vrot.slane %v3836, 4
        %v3839 = vor.u32 %v3838, %v3834
        %v3840 = vrot.slane %v3839, 4
        %v3842 = vshll.u32 %v3461, 16
        %v3844 = vrot.slane %v3842, 5
        %v3845 = vsel %vm1566, %v3840, %v3844
        %v3846 = vld [vmem:[%s4 + $0x100] sm:$0xf]
        %v3847 = vld [vmem:[%s4 + $0x104] sm:$0xf]
        %v3848 = vld [vmem:[%s4 + $0x108] sm:$0xf]
        %v3849 = vld [vmem:[%s4 + $0x10c] sm:$0xf]
        %v3850 = vld [vmem:[%s4 + $0x110] sm:$0xf]
        %v3851 = vld [vmem:[%s4 + $0x114] sm:$0xf]
        %v3852 = vld [vmem:[%s4 + $0x118] sm:$0xf]
        %v3853 = vld [vmem:[%s4 + $0x11c] sm:$0xf]
        %v3854 = vld [vmem:[%s4 + $0x120] sm:$0xf]
        %v3855 = vld [vmem:[%s4 + $0x124] sm:$0xf]
        %v3856 = vld [vmem:[%s4 + $0x128] sm:$0xf]
        %v3857 = vld [vmem:[%s4 + $0x12c] sm:$0xf]
        %v3858 = vld [vmem:[%s4 + $0x130] sm:$0xf]
        %v3859 = vld [vmem:[%s4 + $0x134] sm:$0xf]
        %v3860 = vld [vmem:[%s4 + $0x138] sm:$0xf]
        %v3861 = vld [vmem:[%s4 + $0x13c] sm:$0xf]
        %v3862 = vunpack.c.l.b16 %v3475
        %v3863 = vunpack.c.l.b16 %v3485
        %v3864 = vunpack.c.l.b16 %v3499
        %v3865 = vunpack.c.l.b16 %v3509
        %v3866 = vunpack.c.l.b16 %v3523
        %v3867 = vunpack.c.l.b16 %v3533
        %v3868 = vunpack.c.l.b16 %v3547
        %v3869 = vunpack.c.l.b16 %v3557
        %v3870 = vunpack.c.l.b16 %v3571
        %v3871 = vunpack.c.l.b16 %v3581
        %v3872 = vunpack.c.l.b16 %v3595
        %v3873 = vunpack.c.l.b16 %v3605
        %v3874 = vunpack.c.l.b16 %v3619
        %v3875 = vunpack.c.l.b16 %v3629
        %v3876 = vunpack.c.l.b16 %v3643
        %v3877 = vunpack.c.l.b16 %v3653
        %v3878 = vunpack.c.l.b16 %v3667
        %v3879 = vunpack.c.l.b16 %v3677
        %v3880 = vunpack.c.l.b16 %v3691
        %v3881 = vunpack.c.l.b16 %v3701
        %v3882 = vunpack.c.l.b16 %v3715
        %v3883 = vunpack.c.l.b16 %v3725
        %v3884 = vunpack.c.l.b16 %v3739
        %v3885 = vunpack.c.l.b16 %v3749
        %v3886 = vunpack.c.l.b16 %v3763
        %v3887 = vunpack.c.l.b16 %v3773
        %v3888 = vunpack.c.l.b16 %v3787
        %v3889 = vunpack.c.l.b16 %v3797
        %v3890 = vunpack.c.l.b16 %v3811
        %v3891 = vunpack.c.l.b16 %v3821
        %v3892 = vunpack.c.l.b16 %v3835
        %v3893 = vunpack.c.l.b16 %v3845
        %v3894 = vpack.c.b16 %v3863, %v3862
        %v3895 = vpack.c.b16 %v3865, %v3864
        %v3896 = vpack.c.b16 %v3867, %v3866
        %v3897 = vpack.c.b16 %v3869, %v3868
        %v3898 = vpack.c.b16 %v3871, %v3870
        %v3899 = vpack.c.b16 %v3873, %v3872
        %v3900 = vpack.c.b16 %v3875, %v3874
        %v3901 = vpack.c.b16 %v3877, %v3876
        %v3902 = vpack.c.b16 %v3879, %v3878
        %v3903 = vpack.c.b16 %v3881, %v3880
        %v3904 = vpack.c.b16 %v3883, %v3882
        %v3905 = vpack.c.b16 %v3885, %v3884
        %v3906 = vpack.c.b16 %v3887, %v3886
        %v3907 = vpack.c.b16 %v3889, %v3888
        %v3908 = vpack.c.b16 %v3891, %v3890
        %v3909 = vpack.c.b16 %v3893, %v3892
        %v3942 = vunpack.c.l.b16 %v3846
        %v3943 = vunpack.c.l.b16 %v3847
        %v3944 = vunpack.c.l.b16 %v3848
        %v3945 = vunpack.c.l.b16 %v3849
        %v3946 = vunpack.c.l.b16 %v3850
        %v3947 = vunpack.c.l.b16 %v3851
        %v3948 = vunpack.c.l.b16 %v3852
        %v3949 = vunpack.c.l.b16 %v3853
        %v3950 = vunpack.c.l.b16 %v3854
        %v3951 = vunpack.c.l.b16 %v3855
        %v3952 = vunpack.c.l.b16 %v3856
        %v3953 = vunpack.c.l.b16 %v3857
        %v3954 = vunpack.c.l.b16 %v3858
        %v3955 = vunpack.c.l.b16 %v3859
        %v3956 = vunpack.c.l.b16 %v3860
        %v3957 = vunpack.c.l.b16 %v3861
        %v3958 = vpack.c.b16 %v3943, %v3942
        %v3959 = vpack.c.b16 %v3945, %v3944
        %v3960 = vpack.c.b16 %v3947, %v3946
        %v3961 = vpack.c.b16 %v3949, %v3948
        %v3962 = vpack.c.b16 %v3951, %v3950
        %v3963 = vpack.c.b16 %v3953, %v3952
        %v3964 = vpack.c.b16 %v3955, %v3954
        %v3965 = vpack.c.b16 %v3957, %v3956
        %3974 = vmatprep.subr.bf16.mxu0 0
        %3975 = vmatpush1.bf16.msra.mxu0 %v3958
        %3976 = vmatprep.subr.bf16.mxu0 0
        %3977 = vmatpush1.bf16.msra.mxu0 %v3959
        %3978 = vmatprep.subr.bf16.mxu0 0
        %3979 = vmatpush1.bf16.msra.mxu0 %v3960
        %3980 = vmatprep.subr.bf16.mxu0 0
        %3981 = vmatpush1.bf16.msra.mxu0 %v3961
        %3982 = vmatprep.subr.bf16.mxu0 0
        %3983 = vmatpush1.bf16.msra.mxu0 %v3962
        %3984 = vmatprep.subr.bf16.mxu0 0
        %3985 = vmatpush1.bf16.msra.mxu0 %v3963
        %3986 = vmatprep.subr.bf16.mxu0 0
        %3987 = vmatpush1.bf16.msra.mxu0 %v3964
        %3988 = vmatprep.subr.bf16.mxu0 0
        %3989 = vmatpush1.bf16.msra.mxu0 %v3965
        %3990 = vmatprep.subr.bf16.mxu0 0
        %3991 = vmatpush1.bf16.msra.mxu0 0
        %3992 = vmatprep.subr.bf16.mxu0 0
        %3993 = vmatpush1.bf16.msra.mxu0 0
        %3994 = vmatprep.subr.bf16.mxu0 0
        %3995 = vmatpush1.bf16.msra.mxu0 0
        %3996 = vmatprep.subr.bf16.mxu0 0
        %3997 = vmatpush1.bf16.msra.mxu0 0
        %3998 = vmatprep.subr.bf16.mxu0 0
        %3999 = vmatpush1.bf16.msra.mxu0 0
        %4000 = vmatprep.subr.bf16.mxu0 0
        %4001 = vmatpush1.bf16.msra.mxu0 0
        %4002 = vmatprep.subr.bf16.mxu0 0
        %4003 = vmatpush1.bf16.msra.mxu0 0
        %4004 = vmatprep.subr.bf16.mxu0 0
        %4005 = vmatpush1.bf16.msra.mxu0 0
        %4006 = vmatprep.mubr.bf16.mxu0 0
        %4007 = vmatmul.mubr.bf16.gmra.mrb[0].mxu0 %v3894
        %v4008 = vpop.f32.mrb[0].mxu0
        %v4009 = vadd.f32 0.0, %v4008
        %v4010 = vpop.f32.mrb[0].mxu0
        %v4011 = vpop.f32.mrb[0].mxu0
        %v4012 = vadd.f32 0.0, %v4011
        %v4013 = vpop.f32.mrb[0].mxu0
        %4014 = vmatprep.mubr.bf16.mxu0 0
        %4015 = vmatmul.mubr.bf16.gmra.mrb[0].mxu0 %v3895
        %v4016 = vpop.f32.mrb[0].mxu0
        %v4017 = vadd.f32 0.0, %v4016
        %v4018 = vpop.f32.mrb[0].mxu0
        %v4019 = vpop.f32.mrb[0].mxu0
        %v4020 = vadd.f32 0.0, %v4019
        %v4021 = vpop.f32.mrb[0].mxu0
        %4022 = vmatprep.mubr.bf16.mxu0 0
        %4023 = vmatmul.mubr.bf16.gmra.mrb[0].mxu0 %v3896
        %v4024 = vpop.f32.mrb[0].mxu0
        %v4025 = vadd.f32 0.0, %v4024
        %v4026 = vpop.f32.mrb[0].mxu0
        %v4027 = vpop.f32.mrb[0].mxu0
        %v4028 = vadd.f32 0.0, %v4027
        %v4029 = vpop.f32.mrb[0].mxu0
        %4030 = vmatprep.mubr.bf16.mxu0 0
        %4031 = vmatmul.mubr.bf16.gmra.mrb[0].mxu0 %v3897
        %v4032 = vpop.f32.mrb[0].mxu0
        %v4033 = vadd.f32 0.0, %v4032
        %v4034 = vpop.f32.mrb[0].mxu0
        %v4035 = vpop.f32.mrb[0].mxu0
        %v4036 = vadd.f32 0.0, %v4035
        %v4037 = vpop.f32.mrb[0].mxu0
        %4038 = vmatprep.mubr.bf16.mxu0 0
        %4039 = vmatmul.mubr.bf16.gmra.mrb[0].mxu0 %v3898
        %v4040 = vpop.f32.mrb[0].mxu0
        %v4041 = vadd.f32 0.0, %v4040
        %v4042 = vpop.f32.mrb[0].mxu0
        %v4043 = vpop.f32.mrb[0].mxu0
        %v4044 = vadd.f32 0.0, %v4043
        %v4045 = vpop.f32.mrb[0].mxu0
        %4046 = vmatprep.mubr.bf16.mxu0 0
        %4047 = vmatmul.mubr.bf16.gmra.mrb[0].mxu0 %v3899
        %v4048 = vpop.f32.mrb[0].mxu0
        %v4049 = vadd.f32 0.0, %v4048
        %v4050 = vpop.f32.mrb[0].mxu0
        %v4051 = vpop.f32.mrb[0].mxu0
        %v4052 = vadd.f32 0.0, %v4051
        %v4053 = vpop.f32.mrb[0].mxu0
        %4054 = vmatprep.mubr.bf16.mxu0 0
        %4055 = vmatmul.mubr.bf16.gmra.mrb[0].mxu0 %v3900
        %v4056 = vpop.f32.mrb[0].mxu0
        %v4057 = vadd.f32 0.0, %v4056
        %v4058 = vpop.f32.mrb[0].mxu0
        %v4059 = vpop.f32.mrb[0].mxu0
        %v4060 = vadd.f32 0.0, %v4059
        %v4061 = vpop.f32.mrb[0].mxu0
        %4062 = vmatprep.mubr.bf16.mxu0 0
        %4063 = vmatmul.mubr.bf16.gmra.mrb[0].mxu0 %v3901
        %v4064 = vpop.f32.mrb[0].mxu0
        %v4065 = vadd.f32 0.0, %v4064
        %v4066 = vpop.f32.mrb[0].mxu0
        %v4067 = vpop.f32.mrb[0].mxu0
        %v4068 = vadd.f32 0.0, %v4067
        %v4069 = vpop.f32.mrb[0].mxu0
        %4070 = vmatprep.mubr.bf16.mxu0 0
        %4071 = vmatmul.mubr.bf16.gmra.mrb[0].mxu0 %v3902
        %v4072 = vpop.f32.mrb[0].mxu0
        %v4073 = vadd.f32 0.0, %v4072
        %v4074 = vpop.f32.mrb[0].mxu0
        %v4075 = vpop.f32.mrb[0].mxu0
        %v4076 = vadd.f32 0.0, %v4075
        %v4077 = vpop.f32.mrb[0].mxu0
        %4078 = vmatprep.mubr.bf16.mxu0 0
        %4079 = vmatmul.mubr.bf16.gmra.mrb[0].mxu0 %v3903
        %v4080 = vpop.f32.mrb[0].mxu0
        %v4081 = vadd.f32 0.0, %v4080
        %v4082 = vpop.f32.mrb[0].mxu0
        %v4083 = vpop.f32.mrb[0].mxu0
        %v4084 = vadd.f32 0.0, %v4083
        %v4085 = vpop.f32.mrb[0].mxu0
        %4086 = vmatprep.mubr.bf16.mxu0 0
        %4087 = vmatmul.mubr.bf16.gmra.mrb[0].mxu0 %v3904
        %v4088 = vpop.f32.mrb[0].mxu0
        %v4089 = vadd.f32 0.0, %v4088
        %v4090 = vpop.f32.mrb[0].mxu0
        %v4091 = vpop.f32.mrb[0].mxu0
        %v4092 = vadd.f32 0.0, %v4091
        %v4093 = vpop.f32.mrb[0].mxu0
        %4094 = vmatprep.mubr.bf16.mxu0 0
        %4095 = vmatmul.mubr.bf16.gmra.mrb[0].mxu0 %v3905
        %v4096 = vpop.f32.mrb[0].mxu0
        %v4097 = vadd.f32 0.0, %v4096
        %v4098 = vpop.f32.mrb[0].mxu0
        %v4099 = vpop.f32.mrb[0].mxu0
        %v4100 = vadd.f32 0.0, %v4099
        %v4101 = vpop.f32.mrb[0].mxu0
        %4102 = vmatprep.mubr.bf16.mxu0 0
        %4103 = vmatmul.mubr.bf16.gmra.mrb[0].mxu0 %v3906
        %v4104 = vpop.f32.mrb[0].mxu0
        %v4105 = vadd.f32 0.0, %v4104
        %v4106 = vpop.f32.mrb[0].mxu0
        %v4107 = vpop.f32.mrb[0].mxu0
        %v4108 = vadd.f32 0.0, %v4107
        %v4109 = vpop.f32.mrb[0].mxu0
        %4110 = vmatprep.mubr.bf16.mxu0 0
        %4111 = vmatmul.mubr.bf16.gmra.mrb[0].mxu0 %v3907
        %v4112 = vpop.f32.mrb[0].mxu0
        %v4113 = vadd.f32 0.0, %v4112
        %v4114 = vpop.f32.mrb[0].mxu0
        %v4115 = vpop.f32.mrb[0].mxu0
        %v4116 = vadd.f32 0.0, %v4115
        %v4117 = vpop.f32.mrb[0].mxu0
        %4118 = vmatprep.mubr.bf16.mxu0 0
        %4119 = vmatmul.mubr.bf16.gmra.mrb[0].mxu0 %v3908
        %v4120 = vpop.f32.mrb[0].mxu0
        %v4121 = vadd.f32 0.0, %v4120
        %v4122 = vpop.f32.mrb[0].mxu0
        %v4123 = vpop.f32.mrb[0].mxu0
        %v4124 = vadd.f32 0.0, %v4123
        %v4125 = vpop.f32.mrb[0].mxu0
        %4126 = vmatprep.mubr.bf16.mxu0 0
        %4127 = vmatmul.mubr.bf16.gmra.mrb[0].mxu0 %v3909
        %v4128 = vpop.f32.mrb[0].mxu0
        %v4129 = vadd.f32 0.0, %v4128
        %v4130 = vpop.f32.mrb[0].mxu0
        %v4131 = vpop.f32.mrb[0].mxu0
        %v4132 = vadd.f32 0.0, %v4131
        %v4133 = vpop.f32.mrb[0].mxu0
        %4134 = vdwg.mxu0
        %v4135 = vadd.f32 %v3382, %v4009
        %v4136 = vadd.f32 %v3383, %v4012
        %v4137 = vadd.f32 %v3384, %v4017
        %v4138 = vadd.f32 %v3385, %v4020
        %v4139 = vadd.f32 %v3386, %v4025
        %v4140 = vadd.f32 %v3387, %v4028
        %v4141 = vadd.f32 %v3388, %v4033
        %v4142 = vadd.f32 %v3389, %v4036
        %v4143 = vadd.f32 %v3390, %v4041
        %v4144 = vadd.f32 %v3391, %v4044
        %v4145 = vadd.f32 %v3392, %v4049
        %v4146 = vadd.f32 %v3393, %v4052
        %v4147 = vadd.f32 %v3394, %v4057
        %v4148 = vadd.f32 %v3395, %v4060
        %v4149 = vadd.f32 %v3396, %v4065
        %v4150 = vadd.f32 %v3397, %v4068
        %v4151 = vadd.f32 %v3398, %v4073
        %v4152 = vadd.f32 %v3399, %v4076
        %v4153 = vadd.f32 %v3400, %v4081
        %v4154 = vadd.f32 %v3401, %v4084
        %v4155 = vadd.f32 %v3402, %v4089
        %v4156 = vadd.f32 %v3403, %v4092
        %v4157 = vadd.f32 %v3404, %v4097
        %v4158 = vadd.f32 %v3405, %v4100
        %v4159 = vadd.f32 %v3406, %v4105
        %v4160 = vadd.f32 %v3407, %v4108
        %v4161 = vadd.f32 %v3408, %v4113
        %v4162 = vadd.f32 %v3409, %v4116
        %v4163 = vadd.f32 %v3410, %v4121
        %v4164 = vadd.f32 %v3411, %v4124
        %v4165 = vadd.f32 %v3412, %v4129
        %v4166 = vadd.f32 %v3413, %v4132
        %v4167 = vld [vmem:[%s866] sm:$0xe]
        %v4168 = vld [vmem:[%s866 + $0xc] sm:$0xe]
        %v4169 = vld [vmem:[%s866 + $0x18] sm:$0xe]
        %v4170 = vld [vmem:[%s866 + $0x24] sm:$0xe]
        %v4171 = vld [vmem:[%s866 + $0x30] sm:$0xe]
        %v4172 = vld [vmem:[%s866 + $0x3c] sm:$0xe]
        %v4173 = vld [vmem:[%s866 + $0x48] sm:$0xe]
        %v4174 = vld [vmem:[%s866 + $0x54] sm:$0xe]
        %v4175 = vld [vmem:[%s866 + $0x60] sm:$0xe]
        %v4176 = vld [vmem:[%s866 + $0x6c] sm:$0xe]
        %v4177 = vld [vmem:[%s866 + $0x78] sm:$0xe]
        %v4178 = vld [vmem:[%s866 + $0x84] sm:$0xe]
        %v4179 = vld [vmem:[%s866 + $0x90] sm:$0xe]
        %v4180 = vld [vmem:[%s866 + $0x9c] sm:$0xe]
        %v4181 = vld [vmem:[%s866 + $0xa8] sm:$0xe]
        %v4182 = vld [vmem:[%s866 + $0xb4] sm:$0xe]
        %v4231 = vrot.slane %v4167, 5
        %v4232 = vrot.slane %v4231, 4
        %v4233 = vrot.slane %v3415, 5
        %v4234 = vsel %vm2595, %v4232, %v4233
        %v4235 = vrot.slane %v4233, 4
        %v4236 = vrot.slane %v3416, 5
        %v4237 = vsel %vm2595, %v4235, %v4236
        %v4238 = vrot.slane %v4168, 5
        %v4239 = vrot.slane %v4238, 4
        %v4240 = vrot.slane %v3418, 5
        %v4241 = vsel %vm2595, %v4239, %v4240
        %v4242 = vrot.slane %v4240, 4
        %v4243 = vrot.slane %v3419, 5
        %v4244 = vsel %vm2595, %v4242, %v4243
        %v4245 = vrot.slane %v4169, 5
        %v4246 = vrot.slane %v4245, 4
        %v4247 = vrot.slane %v3421, 5
        %v4248 = vsel %vm2595, %v4246, %v4247
        %v4249 = vrot.slane %v4247, 4
        %v4250 = vrot.slane %v3422, 5
        %v4251 = vsel %vm2595, %v4249, %v4250
        %v4252 = vrot.slane %v4170, 5
        %v4253 = vrot.slane %v4252, 4
        %v4254 = vrot.slane %v3424, 5
        %v4255 = vsel %vm2595, %v4253, %v4254
        %v4256 = vrot.slane %v4254, 4
        %v4257 = vrot.slane %v3425, 5
        %v4258 = vsel %vm2595, %v4256, %v4257
        %v4259 = vrot.slane %v4171, 5
        %v4260 = vrot.slane %v4259, 4
        %v4261 = vrot.slane %v3427, 5
        %v4262 = vsel %vm2595, %v4260, %v4261
        %v4263 = vrot.slane %v4261, 4
        %v4264 = vrot.slane %v3428, 5
        %v4265 = vsel %vm2595, %v4263, %v4264
        %v4266 = vrot.slane %v4172, 5
        %v4267 = vrot.slane %v4266, 4
        %v4268 = vrot.slane %v3430, 5
        %v4269 = vsel %vm2595, %v4267, %v4268
        %v4270 = vrot.slane %v4268, 4
        %v4271 = vrot.slane %v3431, 5
        %v4272 = vsel %vm2595, %v4270, %v4271
        %v4273 = vrot.slane %v4173, 5
        %v4274 = vrot.slane %v4273, 4
        %v4275 = vrot.slane %v3433, 5
        %v4276 = vsel %vm2595, %v4274, %v4275
        %v4277 = vrot.slane %v4275, 4
        %v4278 = vrot.slane %v3434, 5
        %v4279 = vsel %vm2595, %v4277, %v4278
        %v4280 = vrot.slane %v4174, 5
        %v4281 = vrot.slane %v4280, 4
        %v4282 = vrot.slane %v3436, 5
        %v4283 = vsel %vm2595, %v4281, %v4282
        %v4284 = vrot.slane %v4282, 4
        %v4285 = vrot.slane %v3437, 5
        %v4286 = vsel %vm2595, %v4284, %v4285
        %v4287 = vrot.slane %v4175, 5
        %v4288 = vrot.slane %v4287, 4
        %v4289 = vrot.slane %v3439, 5
        %v4290 = vsel %vm2595, %v4288, %v4289
        %v4291 = vrot.slane %v4289, 4
        %v4292 = vrot.slane %v3440, 5
        %v4293 = vsel %vm2595, %v4291, %v4292
        %v4294 = vrot.slane %v4176, 5
        %v4295 = vrot.slane %v4294, 4
        %v4296 = vrot.slane %v3442, 5
        %v4297 = vsel %vm2595, %v4295, %v4296
        %v4298 = vrot.slane %v4296, 4
        %v4299 = vrot.slane %v3443, 5
        %v4300 = vsel %vm2595, %v4298, %v4299
        %v4301 = vrot.slane %v4177, 5
        %v4302 = vrot.slane %v4301, 4
        %v4303 = vrot.slane %v3445, 5
        %v4304 = vsel %vm2595, %v4302, %v4303
        %v4305 = vrot.slane %v4303, 4
        %v4306 = vrot.slane %v3446, 5
        %v4307 = vsel %vm2595, %v4305, %v4306
        %v4308 = vrot.slane %v4178, 5
        %v4309 = vrot.slane %v4308, 4
        %v4310 = vrot.slane %v3448, 5
        %v4311 = vsel %vm2595, %v4309, %v4310
        %v4312 = vrot.slane %v4310, 4
        %v4313 = vrot.slane %v3449, 5
        %v4314 = vsel %vm2595, %v4312, %v4313
        %v4315 = vrot.slane %v4179, 5
        %v4316 = vrot.slane %v4315, 4
        %v4317 = vrot.slane %v3451, 5
        %v4318 = vsel %vm2595, %v4316, %v4317
        %v4319 = vrot.slane %v4317, 4
        %v4320 = vrot.slane %v3452, 5
        %v4321 = vsel %vm2595, %v4319, %v4320
        %v4322 = vrot.slane %v4180, 5
        %v4323 = vrot.slane %v4322, 4
        %v4324 = vrot.slane %v3454, 5
        %v4325 = vsel %vm2595, %v4323, %v4324
        %v4326 = vrot.slane %v4324, 4
        %v4327 = vrot.slane %v3455, 5
        %v4328 = vsel %vm2595, %v4326, %v4327
        %v4329 = vrot.slane %v4181, 5
        %v4330 = vrot.slane %v4329, 4
        %v4331 = vrot.slane %v3457, 5
        %v4332 = vsel %vm2595, %v4330, %v4331
        %v4333 = vrot.slane %v4331, 4
        %v4334 = vrot.slane %v3458, 5
        %v4335 = vsel %vm2595, %v4333, %v4334
        %v4336 = vrot.slane %v4182, 5
        %v4337 = vrot.slane %v4336, 4
        %v4338 = vrot.slane %v3460, 5
        %v4339 = vsel %vm2595, %v4337, %v4338
        %v4340 = vrot.slane %v4338, 4
        %v4341 = vrot.slane %v3461, 5
        %v4342 = vsel %vm2595, %v4340, %v4341
        %v4343 = vld [vmem:[%s4 + $0x140] sm:$0xf]
        %v4344 = vld [vmem:[%s4 + $0x144] sm:$0xf]
        %v4345 = vld [vmem:[%s4 + $0x148] sm:$0xf]
        %v4346 = vld [vmem:[%s4 + $0x14c] sm:$0xf]
        %v4347 = vld [vmem:[%s4 + $0x150] sm:$0xf]
        %v4348 = vld [vmem:[%s4 + $0x154] sm:$0xf]
        %v4349 = vld [vmem:[%s4 + $0x158] sm:$0xf]
        %v4350 = vld [vmem:[%s4 + $0x15c] sm:$0xf]
        %v4351 = vld [vmem:[%s4 + $0x160] sm:$0xf]
        %v4352 = vld [vmem:[%s4 + $0x164] sm:$0xf]
        %v4353 = vld [vmem:[%s4 + $0x168] sm:$0xf]
        %v4354 = vld [vmem:[%s4 + $0x16c] sm:$0xf]
        %v4355 = vld [vmem:[%s4 + $0x170] sm:$0xf]
        %v4356 = vld [vmem:[%s4 + $0x174] sm:$0xf]
        %v4357 = vld [vmem:[%s4 + $0x178] sm:$0xf]
        %v4358 = vld [vmem:[%s4 + $0x17c] sm:$0xf]
        %v4359 = vunpack.c.l.b16 %v4234
        %v4360 = vunpack.c.l.b16 %v4237
        %v4361 = vunpack.c.l.b16 %v4241
        %v4362 = vunpack.c.l.b16 %v4244
        %v4363 = vunpack.c.l.b16 %v4248
        %v4364 = vunpack.c.l.b16 %v4251
        %v4365 = vunpack.c.l.b16 %v4255
        %v4366 = vunpack.c.l.b16 %v4258
        %v4367 = vunpack.c.l.b16 %v4262
        %v4368 = vunpack.c.l.b16 %v4265
        %v4369 = vunpack.c.l.b16 %v4269
        %v4370 = vunpack.c.l.b16 %v4272
        %v4371 = vunpack.c.l.b16 %v4276
        %v4372 = vunpack.c.l.b16 %v4279
        %v4373 = vunpack.c.l.b16 %v4283
        %v4374 = vunpack.c.l.b16 %v4286
        %v4375 = vunpack.c.l.b16 %v4290
        %v4376 = vunpack.c.l.b16 %v4293
        %v4377 = vunpack.c.l.b16 %v4297
        %v4378 = vunpack.c.l.b16 %v4300
        %v4379 = vunpack.c.l.b16 %v4304
        %v4380 = vunpack.c.l.b16 %v4307
        %v4381 = vunpack.c.l.b16 %v4311
        %v4382 = vunpack.c.l.b16 %v4314
        %v4383 = vunpack.c.l.b16 %v4318
        %v4384 = vunpack.c.l.b16 %v4321
        %v4385 = vunpack.c.l.b16 %v4325
        %v4386 = vunpack.c.l.b16 %v4328
        %v4387 = vunpack.c.l.b16 %v4332
        %v4388 = vunpack.c.l.b16 %v4335
        %v4389 = vunpack.c.l.b16 %v4339
        %v4390 = vunpack.c.l.b16 %v4342
        %v4391 = vpack.c.b16 %v4360, %v4359
        %v4392 = vpack.c.b16 %v4362, %v4361
        %v4393 = vpack.c.b16 %v4364, %v4363
        %v4394 = vpack.c.b16 %v4366, %v4365
        %v4395 = vpack.c.b16 %v4368, %v4367
        %v4396 = vpack.c.b16 %v4370, %v4369
        %v4397 = vpack.c.b16 %v4372, %v4371
        %v4398 = vpack.c.b16 %v4374, %v4373
        %v4399 = vpack.c.b16 %v4376, %v4375
        %v4400 = vpack.c.b16 %v4378, %v4377
        %v4401 = vpack.c.b16 %v4380, %v4379
        %v4402 = vpack.c.b16 %v4382, %v4381
        %v4403 = vpack.c.b16 %v4384, %v4383
        %v4404 = vpack.c.b16 %v4386, %v4385
        %v4405 = vpack.c.b16 %v4388, %v4387
        %v4406 = vpack.c.b16 %v4390, %v4389
        %v4439 = vunpack.c.l.b16 %v4343
        %v4440 = vunpack.c.l.b16 %v4344
        %v4441 = vunpack.c.l.b16 %v4345
        %v4442 = vunpack.c.l.b16 %v4346
        %v4443 = vunpack.c.l.b16 %v4347
        %v4444 = vunpack.c.l.b16 %v4348
        %v4445 = vunpack.c.l.b16 %v4349
        %v4446 = vunpack.c.l.b16 %v4350
        %v4447 = vunpack.c.l.b16 %v4351
        %v4448 = vunpack.c.l.b16 %v4352
        %v4449 = vunpack.c.l.b16 %v4353
        %v4450 = vunpack.c.l.b16 %v4354
        %v4451 = vunpack.c.l.b16 %v4355
        %v4452 = vunpack.c.l.b16 %v4356
        %v4453 = vunpack.c.l.b16 %v4357
        %v4454 = vunpack.c.l.b16 %v4358
        %v4455 = vpack.c.b16 %v4440, %v4439
        %v4456 = vpack.c.b16 %v4442, %v4441
        %v4457 = vpack.c.b16 %v4444, %v4443
        %v4458 = vpack.c.b16 %v4446, %v4445
        %v4459 = vpack.c.b16 %v4448, %v4447
        %v4460 = vpack.c.b16 %v4450, %v4449
        %v4461 = vpack.c.b16 %v4452, %v4451
        %v4462 = vpack.c.b16 %v4454, %v4453
        %4471 = vmatprep.subr.bf16.mxu0 0
        %4472 = vmatpush1.bf16.msra.mxu0 %v4455
        %4473 = vmatprep.subr.bf16.mxu0 0
        %4474 = vmatpush1.bf16.msra.mxu0 %v4456
        %4475 = vmatprep.subr.bf16.mxu0 0
        %4476 = vmatpush1.bf16.msra.mxu0 %v4457
        %4477 = vmatprep.subr.bf16.mxu0 0
        %4478 = vmatpush1.bf16.msra.mxu0 %v4458
        %4479 = vmatprep.subr.bf16.mxu0 0
        %4480 = vmatpush1.bf16.msra.mxu0 %v4459
        %4481 = vmatprep.subr.bf16.mxu0 0
        %4482 = vmatpush1.bf16.msra.mxu0 %v4460
        %4483 = vmatprep.subr.bf16.mxu0 0
        %4484 = vmatpush1.bf16.msra.mxu0 %v4461
        %4485 = vmatprep.subr.bf16.mxu0 0
        %4486 = vmatpush1.bf16.msra.mxu0 %v4462
        %4487 = vmatprep.subr.bf16.mxu0 0
        %4488 = vmatpush1.bf16.msra.mxu0 0
        %4489 = vmatprep.subr.bf16.mxu0 0
        %4490 = vmatpush1.bf16.msra.mxu0 0
        %4491 = vmatprep.subr.bf16.mxu0 0
        %4492 = vmatpush1.bf16.msra.mxu0 0
        %4493 = vmatprep.subr.bf16.mxu0 0
        %4494 = vmatpush1.bf16.msra.mxu0 0
        %4495 = vmatprep.subr.bf16.mxu0 0
        %4496 = vmatpush1.bf16.msra.mxu0 0
        %4497 = vmatprep.subr.bf16.mxu0 0
        %4498 = vmatpush1.bf16.msra.mxu0 0
        %4499 = vmatprep.subr.bf16.mxu0 0
        %4500 = vmatpush1.bf16.msra.mxu0 0
        %4501 = vmatprep.subr.bf16.mxu0 0
        %4502 = vmatpush1.bf16.msra.mxu0 0
        %4503 = vmatprep.mubr.bf16.mxu0 0
        %4504 = vmatmul.mubr.bf16.gmra.mrb[0].mxu0 %v4391
        %v4505 = vpop.f32.mrb[0].mxu0
        %v4506 = vadd.f32 0.0, %v4505
        %v4507 = vpop.f32.mrb[0].mxu0
        %v4508 = vpop.f32.mrb[0].mxu0
        %v4509 = vadd.f32 0.0, %v4508
        %v4510 = vpop.f32.mrb[0].mxu0
        %4511 = vmatprep.mubr.bf16.mxu0 0
        %4512 = vmatmul.mubr.bf16.gmra.mrb[0].mxu0 %v4392
        %v4513 = vpop.f32.mrb[0].mxu0
        %v4514 = vadd.f32 0.0, %v4513
        %v4515 = vpop.f32.mrb[0].mxu0
        %v4516 = vpop.f32.mrb[0].mxu0
        %v4517 = vadd.f32 0.0, %v4516
        %v4518 = vpop.f32.mrb[0].mxu0
        %4519 = vmatprep.mubr.bf16.mxu0 0
        %4520 = vmatmul.mubr.bf16.gmra.mrb[0].mxu0 %v4393
        %v4521 = vpop.f32.mrb[0].mxu0
        %v4522 = vadd.f32 0.0, %v4521
        %v4523 = vpop.f32.mrb[0].mxu0
        %v4524 = vpop.f32.mrb[0].mxu0
        %v4525 = vadd.f32 0.0, %v4524
        %v4526 = vpop.f32.mrb[0].mxu0
        %4527 = vmatprep.mubr.bf16.mxu0 0
        %4528 = vmatmul.mubr.bf16.gmra.mrb[0].mxu0 %v4394
        %v4529 = vpop.f32.mrb[0].mxu0
        %v4530 = vadd.f32 0.0, %v4529
        %v4531 = vpop.f32.mrb[0].mxu0
        %v4532 = vpop.f32.mrb[0].mxu0
        %v4533 = vadd.f32 0.0, %v4532
        %v4534 = vpop.f32.mrb[0].mxu0
        %4535 = vmatprep.mubr.bf16.mxu0 0
        %4536 = vmatmul.mubr.bf16.gmra.mrb[0].mxu0 %v4395
        %v4537 = vpop.f32.mrb[0].mxu0
        %v4538 = vadd.f32 0.0, %v4537
        %v4539 = vpop.f32.mrb[0].mxu0
        %v4540 = vpop.f32.mrb[0].mxu0
        %v4541 = vadd.f32 0.0, %v4540
        %v4542 = vpop.f32.mrb[0].mxu0
        %4543 = vmatprep.mubr.bf16.mxu0 0
        %4544 = vmatmul.mubr.bf16.gmra.mrb[0].mxu0 %v4396
        %v4545 = vpop.f32.mrb[0].mxu0
        %v4546 = vadd.f32 0.0, %v4545
        %v4547 = vpop.f32.mrb[0].mxu0
        %v4548 = vpop.f32.mrb[0].mxu0
        %v4549 = vadd.f32 0.0, %v4548
        %v4550 = vpop.f32.mrb[0].mxu0
        %4551 = vmatprep.mubr.bf16.mxu0 0
        %4552 = vmatmul.mubr.bf16.gmra.mrb[0].mxu0 %v4397
        %v4553 = vpop.f32.mrb[0].mxu0
        %v4554 = vadd.f32 0.0, %v4553
        %v4555 = vpop.f32.mrb[0].mxu0
        %v4556 = vpop.f32.mrb[0].mxu0
        %v4557 = vadd.f32 0.0, %v4556
        %v4558 = vpop.f32.mrb[0].mxu0
        %4559 = vmatprep.mubr.bf16.mxu0 0
        %4560 = vmatmul.mubr.bf16.gmra.mrb[0].mxu0 %v4398
        %v4561 = vpop.f32.mrb[0].mxu0
        %v4562 = vadd.f32 0.0, %v4561
        %v4563 = vpop.f32.mrb[0].mxu0
        %v4564 = vpop.f32.mrb[0].mxu0
        %v4565 = vadd.f32 0.0, %v4564
        %v4566 = vpop.f32.mrb[0].mxu0
        %4567 = vmatprep.mubr.bf16.mxu0 0
        %4568 = vmatmul.mubr.bf16.gmra.mrb[0].mxu0 %v4399
        %v4569 = vpop.f32.mrb[0].mxu0
        %v4570 = vadd.f32 0.0, %v4569
        %v4571 = vpop.f32.mrb[0].mxu0
        %v4572 = vpop.f32.mrb[0].mxu0
        %v4573 = vadd.f32 0.0, %v4572
        %v4574 = vpop.f32.mrb[0].mxu0
        %4575 = vmatprep.mubr.bf16.mxu0 0
        %4576 = vmatmul.mubr.bf16.gmra.mrb[0].mxu0 %v4400
        %v4577 = vpop.f32.mrb[0].mxu0
        %v4578 = vadd.f32 0.0, %v4577
        %v4579 = vpop.f32.mrb[0].mxu0
        %v4580 = vpop.f32.mrb[0].mxu0
        %v4581 = vadd.f32 0.0, %v4580
        %v4582 = vpop.f32.mrb[0].mxu0
        %4583 = vmatprep.mubr.bf16.mxu0 0
        %4584 = vmatmul.mubr.bf16.gmra.mrb[0].mxu0 %v4401
        %v4585 = vpop.f32.mrb[0].mxu0
        %v4586 = vadd.f32 0.0, %v4585
        %v4587 = vpop.f32.mrb[0].mxu0
        %v4588 = vpop.f32.mrb[0].mxu0
        %v4589 = vadd.f32 0.0, %v4588
        %v4590 = vpop.f32.mrb[0].mxu0
        %4591 = vmatprep.mubr.bf16.mxu0 0
        %4592 = vmatmul.mubr.bf16.gmra.mrb[0].mxu0 %v4402
        %v4593 = vpop.f32.mrb[0].mxu0
        %v4594 = vadd.f32 0.0, %v4593
        %v4595 = vpop.f32.mrb[0].mxu0
        %v4596 = vpop.f32.mrb[0].mxu0
        %v4597 = vadd.f32 0.0, %v4596
        %v4598 = vpop.f32.mrb[0].mxu0
        %4599 = vmatprep.mubr.bf16.mxu0 0
        %4600 = vmatmul.mubr.bf16.gmra.mrb[0].mxu0 %v4403
        %v4601 = vpop.f32.mrb[0].mxu0
        %v4602 = vadd.f32 0.0, %v4601
        %v4603 = vpop.f32.mrb[0].mxu0
        %v4604 = vpop.f32.mrb[0].mxu0
        %v4605 = vadd.f32 0.0, %v4604
        %v4606 = vpop.f32.mrb[0].mxu0
        %4607 = vmatprep.mubr.bf16.mxu0 0
        %4608 = vmatmul.mubr.bf16.gmra.mrb[0].mxu0 %v4404
        %v4609 = vpop.f32.mrb[0].mxu0
        %v4610 = vadd.f32 0.0, %v4609
        %v4611 = vpop.f32.mrb[0].mxu0
        %v4612 = vpop.f32.mrb[0].mxu0
        %v4613 = vadd.f32 0.0, %v4612
        %v4614 = vpop.f32.mrb[0].mxu0
        %4615 = vmatprep.mubr.bf16.mxu0 0
        %4616 = vmatmul.mubr.bf16.gmra.mrb[0].mxu0 %v4405
        %v4617 = vpop.f32.mrb[0].mxu0
        %v4618 = vadd.f32 0.0, %v4617
        %v4619 = vpop.f32.mrb[0].mxu0
        %v4620 = vpop.f32.mrb[0].mxu0
        %v4621 = vadd.f32 0.0, %v4620
        %v4622 = vpop.f32.mrb[0].mxu0
        %4623 = vmatprep.mubr.bf16.mxu0 0
        %4624 = vmatmul.mubr.bf16.gmra.mrb[0].mxu0 %v4406
        %v4625 = vpop.f32.mrb[0].mxu0
        %v4626 = vadd.f32 0.0, %v4625
        %v4627 = vpop.f32.mrb[0].mxu0
        %v4628 = vpop.f32.mrb[0].mxu0
        %v4629 = vadd.f32 0.0, %v4628
        %v4630 = vpop.f32.mrb[0].mxu0
        %4631 = vdwg.mxu0
        %v4632 = vadd.f32 %v4135, %v4506
        %v4633 = vadd.f32 %v4136, %v4509
        %v4634 = vadd.f32 %v4137, %v4514
        %v4635 = vadd.f32 %v4138, %v4517
        %v4636 = vadd.f32 %v4139, %v4522
        %v4637 = vadd.f32 %v4140, %v4525
        %v4638 = vadd.f32 %v4141, %v4530
        %v4639 = vadd.f32 %v4142, %v4533
        %v4640 = vadd.f32 %v4143, %v4538
        %v4641 = vadd.f32 %v4144, %v4541
        %v4642 = vadd.f32 %v4145, %v4546
        %v4643 = vadd.f32 %v4146, %v4549
        %v4644 = vadd.f32 %v4147, %v4554
        %v4645 = vadd.f32 %v4148, %v4557
        %v4646 = vadd.f32 %v4149, %v4562
        %v4647 = vadd.f32 %v4150, %v4565
        %v4648 = vadd.f32 %v4151, %v4570
        %v4649 = vadd.f32 %v4152, %v4573
        %v4650 = vadd.f32 %v4153, %v4578
        %v4651 = vadd.f32 %v4154, %v4581
        %v4652 = vadd.f32 %v4155, %v4586
        %v4653 = vadd.f32 %v4156, %v4589
        %v4654 = vadd.f32 %v4157, %v4594
        %v4655 = vadd.f32 %v4158, %v4597
        %v4656 = vadd.f32 %v4159, %v4602
        %v4657 = vadd.f32 %v4160, %v4605
        %v4658 = vadd.f32 %v4161, %v4610
        %v4659 = vadd.f32 %v4162, %v4613
        %v4660 = vadd.f32 %v4163, %v4618
        %v4661 = vadd.f32 %v4164, %v4621
        %v4662 = vadd.f32 %v4165, %v4626
        %v4663 = vadd.f32 %v4166, %v4629
        %s4664 = scalar_lea.vmem [#allocation2], 24
        %v4665 = vld [vmem:[%s4664] sm:$0xf]
        %v4666 = vld [vmem:[%s4664 + $0x4] sm:$0xf]
        %v4667 = vld [vmem:[%s4664 + $0xc] sm:$0xf]
        %v4668 = vld [vmem:[%s4664 + $0x10] sm:$0xf]
        %v4669 = vld [vmem:[%s4664 + $0x18] sm:$0xf]
        %v4670 = vld [vmem:[%s4664 + $0x1c] sm:$0xf]
        %v4671 = vld [vmem:[%s4664 + $0x24] sm:$0xf]
        %v4672 = vld [vmem:[%s4664 + $0x28] sm:$0xf]
        %v4673 = vld [vmem:[%s4664 + $0x30] sm:$0xf]
        %v4674 = vld [vmem:[%s4664 + $0x34] sm:$0xf]
        %v4675 = vld [vmem:[%s4664 + $0x3c] sm:$0xf]
        %v4676 = vld [vmem:[%s4664 + $0x40] sm:$0xf]
        %v4677 = vld [vmem:[%s4664 + $0x48] sm:$0xf]
        %v4678 = vld [vmem:[%s4664 + $0x4c] sm:$0xf]
        %v4679 = vld [vmem:[%s4664 + $0x54] sm:$0xf]
        %v4680 = vld [vmem:[%s4664 + $0x58] sm:$0xf]
        %v4681 = vld [vmem:[%s4664 + $0x60] sm:$0xf]
        %v4682 = vld [vmem:[%s4664 + $0x64] sm:$0xf]
        %v4683 = vld [vmem:[%s4664 + $0x6c] sm:$0xf]
        %v4684 = vld [vmem:[%s4664 + $0x70] sm:$0xf]
        %v4685 = vld [vmem:[%s4664 + $0x78] sm:$0xf]
        %v4686 = vld [vmem:[%s4664 + $0x7c] sm:$0xf]
        %v4687 = vld [vmem:[%s4664 + $0x84] sm:$0xf]
        %v4688 = vld [vmem:[%s4664 + $0x88] sm:$0xf]
        %v4689 = vld [vmem:[%s4664 + $0x90] sm:$0xf]
        %v4690 = vld [vmem:[%s4664 + $0x94] sm:$0xf]
        %v4691 = vld [vmem:[%s4664 + $0x9c] sm:$0xf]
        %v4692 = vld [vmem:[%s4664 + $0xa0] sm:$0xf]
        %v4693 = vld [vmem:[%s4664 + $0xa8] sm:$0xf]
        %v4694 = vld [vmem:[%s4664 + $0xac] sm:$0xf]
        %v4695 = vld [vmem:[%s4664 + $0xb4] sm:$0xf]
        %v4696 = vld [vmem:[%s4664 + $0xb8] sm:$0xf]
        %v4697 = vld [vmem:[%s4 + $0x180] sm:$0xf]
        %v4698 = vld [vmem:[%s4 + $0x184] sm:$0xf]
        %v4699 = vld [vmem:[%s4 + $0x188] sm:$0xf]
        %v4700 = vld [vmem:[%s4 + $0x18c] sm:$0xf]
        %v4701 = vld [vmem:[%s4 + $0x190] sm:$0xf]
        %v4702 = vld [vmem:[%s4 + $0x194] sm:$0xf]
        %v4703 = vld [vmem:[%s4 + $0x198] sm:$0xf]
        %v4704 = vld [vmem:[%s4 + $0x19c] sm:$0xf]
        %v4705 = vld [vmem:[%s4 + $0x1a0] sm:$0xf]
        %v4706 = vld [vmem:[%s4 + $0x1a4] sm:$0xf]
        %v4707 = vld [vmem:[%s4 + $0x1a8] sm:$0xf]
        %v4708 = vld [vmem:[%s4 + $0x1ac] sm:$0xf]
        %v4709 = vld [vmem:[%s4 + $0x1b0] sm:$0xf]
        %v4710 = vld [vmem:[%s4 + $0x1b4] sm:$0xf]
        %v4711 = vld [vmem:[%s4 + $0x1b8] sm:$0xf]
        %v4712 = vld [vmem:[%s4 + $0x1bc] sm:$0xf]
        %v4745 = vunpack.c.l.b16 %v4665
        %v4746 = vunpack.c.l.b16 %v4666
        %v4747 = vunpack.c.l.b16 %v4667
        %v4748 = vunpack.c.l.b16 %v4668
        %v4749 = vunpack.c.l.b16 %v4669
        %v4750 = vunpack.c.l.b16 %v4670
        %v4751 = vunpack.c.l.b16 %v4671
        %v4752 = vunpack.c.l.b16 %v4672
        %v4753 = vunpack.c.l.b16 %v4673
        %v4754 = vunpack.c.l.b16 %v4674
        %v4755 = vunpack.c.l.b16 %v4675
        %v4756 = vunpack.c.l.b16 %v4676
        %v4757 = vunpack.c.l.b16 %v4677
        %v4758 = vunpack.c.l.b16 %v4678
        %v4759 = vunpack.c.l.b16 %v4679
        %v4760 = vunpack.c.l.b16 %v4680
        %v4761 = vunpack.c.l.b16 %v4681
        %v4762 = vunpack.c.l.b16 %v4682
        %v4763 = vunpack.c.l.b16 %v4683
        %v4764 = vunpack.c.l.b16 %v4684
        %v4765 = vunpack.c.l.b16 %v4685
        %v4766 = vunpack.c.l.b16 %v4686
        %v4767 = vunpack.c.l.b16 %v4687
        %v4768 = vunpack.c.l.b16 %v4688
        %v4769 = vunpack.c.l.b16 %v4689
        %v4770 = vunpack.c.l.b16 %v4690
        %v4771 = vunpack.c.l.b16 %v4691
        %v4772 = vunpack.c.l.b16 %v4692
        %v4773 = vunpack.c.l.b16 %v4693
        %v4774 = vunpack.c.l.b16 %v4694
        %v4775 = vunpack.c.l.b16 %v4695
        %v4776 = vunpack.c.l.b16 %v4696
        %v4777 = vpack.c.b16 %v4746, %v4745
        %v4778 = vpack.c.b16 %v4748, %v4747
        %v4779 = vpack.c.b16 %v4750, %v4749
        %v4780 = vpack.c.b16 %v4752, %v4751
        %v4781 = vpack.c.b16 %v4754, %v4753
        %v4782 = vpack.c.b16 %v4756, %v4755
        %v4783 = vpack.c.b16 %v4758, %v4757
        %v4784 = vpack.c.b16 %v4760, %v4759
        %v4785 = vpack.c.b16 %v4762, %v4761
        %v4786 = vpack.c.b16 %v4764, %v4763
        %v4787 = vpack.c.b16 %v4766, %v4765
        %v4788 = vpack.c.b16 %v4768, %v4767
        %v4789 = vpack.c.b16 %v4770, %v4769
        %v4790 = vpack.c.b16 %v4772, %v4771
        %v4791 = vpack.c.b16 %v4774, %v4773
        %v4792 = vpack.c.b16 %v4776, %v4775
        %v4825 = vunpack.c.l.b16 %v4697
        %v4826 = vunpack.c.l.b16 %v4698
        %v4827 = vunpack.c.l.b16 %v4699
        %v4828 = vunpack.c.l.b16 %v4700
        %v4829 = vunpack.c.l.b16 %v4701
        %v4830 = vunpack.c.l.b16 %v4702
        %v4831 = vunpack.c.l.b16 %v4703
        %v4832 = vunpack.c.l.b16 %v4704
        %v4833 = vunpack.c.l.b16 %v4705
        %v4834 = vunpack.c.l.b16 %v4706
        %v4835 = vunpack.c.l.b16 %v4707
        %v4836 = vunpack.c.l.b16 %v4708
        %v4837 = vunpack.c.l.b16 %v4709
        %v4838 = vunpack.c.l.b16 %v4710
        %v4839 = vunpack.c.l.b16 %v4711
        %v4840 = vunpack.c.l.b16 %v4712
        %v4841 = vpack.c.b16 %v4826, %v4825
        %v4842 = vpack.c.b16 %v4828, %v4827
        %v4843 = vpack.c.b16 %v4830, %v4829
        %v4844 = vpack.c.b16 %v4832, %v4831
        %v4845 = vpack.c.b16 %v4834, %v4833
        %v4846 = vpack.c.b16 %v4836, %v4835
        %v4847 = vpack.c.b16 %v4838, %v4837
        %v4848 = vpack.c.b16 %v4840, %v4839
        %4857 = vmatprep.subr.bf16.mxu0 0
        %4858 = vmatpush1.bf16.msra.mxu0 %v4841
        %4859 = vmatprep.subr.bf16.mxu0 0
        %4860 = vmatpush1.bf16.msra.mxu0 %v4842
        %4861 = vmatprep.subr.bf16.mxu0 0
        %4862 = vmatpush1.bf16.msra.mxu0 %v4843
        %4863 = vmatprep.subr.bf16.mxu0 0
        %4864 = vmatpush1.bf16.msra.mxu0 %v4844
        %4865 = vmatprep.subr.bf16.mxu0 0
        %4866 = vmatpush1.bf16.msra.mxu0 %v4845
        %4867 = vmatprep.subr.bf16.mxu0 0
        %4868 = vmatpush1.bf16.msra.mxu0 %v4846
        %4869 = vmatprep.subr.bf16.mxu0 0
        %4870 = vmatpush1.bf16.msra.mxu0 %v4847
        %4871 = vmatprep.subr.bf16.mxu0 0
        %4872 = vmatpush1.bf16.msra.mxu0 %v4848
        %4873 = vmatprep.subr.bf16.mxu0 0
        %4874 = vmatpush1.bf16.msra.mxu0 0
        %4875 = vmatprep.subr.bf16.mxu0 0
        %4876 = vmatpush1.bf16.msra.mxu0 0
        %4877 = vmatprep.subr.bf16.mxu0 0
        %4878 = vmatpush1.bf16.msra.mxu0 0
        %4879 = vmatprep.subr.bf16.mxu0 0
        %4880 = vmatpush1.bf16.msra.mxu0 0
        %4881 = vmatprep.subr.bf16.mxu0 0
        %4882 = vmatpush1.bf16.msra.mxu0 0
        %4883 = vmatprep.subr.bf16.mxu0 0
        %4884 = vmatpush1.bf16.msra.mxu0 0
        %4885 = vmatprep.subr.bf16.mxu0 0
        %4886 = vmatpush1.bf16.msra.mxu0 0
        %4887 = vmatprep.subr.bf16.mxu0 0
        %4888 = vmatpush1.bf16.msra.mxu0 0
        %4889 = vmatprep.mubr.bf16.mxu0 0
        %4890 = vmatmul.mubr.bf16.gmra.mrb[0].mxu0 %v4777
        %v4891 = vpop.f32.mrb[0].mxu0
        %v4892 = vadd.f32 0.0, %v4891
        %v4893 = vpop.f32.mrb[0].mxu0
        %v4894 = vpop.f32.mrb[0].mxu0
        %v4895 = vadd.f32 0.0, %v4894
        %v4896 = vpop.f32.mrb[0].mxu0
        %4897 = vmatprep.mubr.bf16.mxu0 0
        %4898 = vmatmul.mubr.bf16.gmra.mrb[0].mxu0 %v4778
        %v4899 = vpop.f32.mrb[0].mxu0
        %v4900 = vadd.f32 0.0, %v4899
        %v4901 = vpop.f32.mrb[0].mxu0
        %v4902 = vpop.f32.mrb[0].mxu0
        %v4903 = vadd.f32 0.0, %v4902
        %v4904 = vpop.f32.mrb[0].mxu0
        %4905 = vmatprep.mubr.bf16.mxu0 0
        %4906 = vmatmul.mubr.bf16.gmra.mrb[0].mxu0 %v4779
        %v4907 = vpop.f32.mrb[0].mxu0
        %v4908 = vadd.f32 0.0, %v4907
        %v4909 = vpop.f32.mrb[0].mxu0
        %v4910 = vpop.f32.mrb[0].mxu0
        %v4911 = vadd.f32 0.0, %v4910
        %v4912 = vpop.f32.mrb[0].mxu0
        %4913 = vmatprep.mubr.bf16.mxu0 0
        %4914 = vmatmul.mubr.bf16.gmra.mrb[0].mxu0 %v4780
        %v4915 = vpop.f32.mrb[0].mxu0
        %v4916 = vadd.f32 0.0, %v4915
        %v4917 = vpop.f32.mrb[0].mxu0
        %v4918 = vpop.f32.mrb[0].mxu0
        %v4919 = vadd.f32 0.0, %v4918
        %v4920 = vpop.f32.mrb[0].mxu0
        %4921 = vmatprep.mubr.bf16.mxu0 0
        %4922 = vmatmul.mubr.bf16.gmra.mrb[0].mxu0 %v4781
        %v4923 = vpop.f32.mrb[0].mxu0
        %v4924 = vadd.f32 0.0, %v4923
        %v4925 = vpop.f32.mrb[0].mxu0
        %v4926 = vpop.f32.mrb[0].mxu0
        %v4927 = vadd.f32 0.0, %v4926
        %v4928 = vpop.f32.mrb[0].mxu0
        %4929 = vmatprep.mubr.bf16.mxu0 0
        %4930 = vmatmul.mubr.bf16.gmra.mrb[0].mxu0 %v4782
        %v4931 = vpop.f32.mrb[0].mxu0
        %v4932 = vadd.f32 0.0, %v4931
        %v4933 = vpop.f32.mrb[0].mxu0
        %v4934 = vpop.f32.mrb[0].mxu0
        %v4935 = vadd.f32 0.0, %v4934
        %v4936 = vpop.f32.mrb[0].mxu0
        %4937 = vmatprep.mubr.bf16.mxu0 0
        %4938 = vmatmul.mubr.bf16.gmra.mrb[0].mxu0 %v4783
        %v4939 = vpop.f32.mrb[0].mxu0
        %v4940 = vadd.f32 0.0, %v4939
        %v4941 = vpop.f32.mrb[0].mxu0
        %v4942 = vpop.f32.mrb[0].mxu0
        %v4943 = vadd.f32 0.0, %v4942
        %v4944 = vpop.f32.mrb[0].mxu0
        %4945 = vmatprep.mubr.bf16.mxu0 0
        %4946 = vmatmul.mubr.bf16.gmra.mrb[0].mxu0 %v4784
        %v4947 = vpop.f32.mrb[0].mxu0
        %v4948 = vadd.f32 0.0, %v4947
        %v4949 = vpop.f32.mrb[0].mxu0
        %v4950 = vpop.f32.mrb[0].mxu0
        %v4951 = vadd.f32 0.0, %v4950
        %v4952 = vpop.f32.mrb[0].mxu0
        %4953 = vmatprep.mubr.bf16.mxu0 0
        %4954 = vmatmul.mubr.bf16.gmra.mrb[0].mxu0 %v4785
        %v4955 = vpop.f32.mrb[0].mxu0
        %v4956 = vadd.f32 0.0, %v4955
        %v4957 = vpop.f32.mrb[0].mxu0
        %v4958 = vpop.f32.mrb[0].mxu0
        %v4959 = vadd.f32 0.0, %v4958
        %v4960 = vpop.f32.mrb[0].mxu0
        %4961 = vmatprep.mubr.bf16.mxu0 0
        %4962 = vmatmul.mubr.bf16.gmra.mrb[0].mxu0 %v4786
        %v4963 = vpop.f32.mrb[0].mxu0
        %v4964 = vadd.f32 0.0, %v4963
        %v4965 = vpop.f32.mrb[0].mxu0
        %v4966 = vpop.f32.mrb[0].mxu0
        %v4967 = vadd.f32 0.0, %v4966
        %v4968 = vpop.f32.mrb[0].mxu0
        %4969 = vmatprep.mubr.bf16.mxu0 0
        %4970 = vmatmul.mubr.bf16.gmra.mrb[0].mxu0 %v4787
        %v4971 = vpop.f32.mrb[0].mxu0
        %v4972 = vadd.f32 0.0, %v4971
        %v4973 = vpop.f32.mrb[0].mxu0
        %v4974 = vpop.f32.mrb[0].mxu0
        %v4975 = vadd.f32 0.0, %v4974
        %v4976 = vpop.f32.mrb[0].mxu0
        %4977 = vmatprep.mubr.bf16.mxu0 0
        %4978 = vmatmul.mubr.bf16.gmra.mrb[0].mxu0 %v4788
        %v4979 = vpop.f32.mrb[0].mxu0
        %v4980 = vadd.f32 0.0, %v4979
        %v4981 = vpop.f32.mrb[0].mxu0
        %v4982 = vpop.f32.mrb[0].mxu0
        %v4983 = vadd.f32 0.0, %v4982
        %v4984 = vpop.f32.mrb[0].mxu0
        %4985 = vmatprep.mubr.bf16.mxu0 0
        %4986 = vmatmul.mubr.bf16.gmra.mrb[0].mxu0 %v4789
        %v4987 = vpop.f32.mrb[0].mxu0
        %v4988 = vadd.f32 0.0, %v4987
        %v4989 = vpop.f32.mrb[0].mxu0
        %v4990 = vpop.f32.mrb[0].mxu0
        %v4991 = vadd.f32 0.0, %v4990
        %v4992 = vpop.f32.mrb[0].mxu0
        %4993 = vmatprep.mubr.bf16.mxu0 0
        %4994 = vmatmul.mubr.bf16.gmra.mrb[0].mxu0 %v4790
        %v4995 = vpop.f32.mrb[0].mxu0
        %v4996 = vadd.f32 0.0, %v4995
        %v4997 = vpop.f32.mrb[0].mxu0
        %v4998 = vpop.f32.mrb[0].mxu0
        %v4999 = vadd.f32 0.0, %v4998
        %v5000 = vpop.f32.mrb[0].mxu0
        %5001 = vmatprep.mubr.bf16.mxu0 0
        %5002 = vmatmul.mubr.bf16.gmra.mrb[0].mxu0 %v4791
        %v5003 = vpop.f32.mrb[0].mxu0
        %v5004 = vadd.f32 0.0, %v5003
        %v5005 = vpop.f32.mrb[0].mxu0
        %v5006 = vpop.f32.mrb[0].mxu0
        %v5007 = vadd.f32 0.0, %v5006
        %v5008 = vpop.f32.mrb[0].mxu0
        %5009 = vmatprep.mubr.bf16.mxu0 0
        %5010 = vmatmul.mubr.bf16.gmra.mrb[0].mxu0 %v4792
        %v5011 = vpop.f32.mrb[0].mxu0
        %v5012 = vadd.f32 0.0, %v5011
        %v5013 = vpop.f32.mrb[0].mxu0
        %v5014 = vpop.f32.mrb[0].mxu0
        %v5015 = vadd.f32 0.0, %v5014
        %v5016 = vpop.f32.mrb[0].mxu0
        %5017 = vdwg.mxu0
        %v5018 = vadd.f32 %v4632, %v4892
        %v5019 = vadd.f32 %v4633, %v4895
        %v5020 = vadd.f32 %v4634, %v4900
        %v5021 = vadd.f32 %v4635, %v4903
        %v5022 = vadd.f32 %v4636, %v4908
        %v5023 = vadd.f32 %v4637, %v4911
        %v5024 = vadd.f32 %v4638, %v4916
        %v5025 = vadd.f32 %v4639, %v4919
        %v5026 = vadd.f32 %v4640, %v4924
        %v5027 = vadd.f32 %v4641, %v4927
        %v5028 = vadd.f32 %v4642, %v4932
        %v5029 = vadd.f32 %v4643, %v4935
        %v5030 = vadd.f32 %v4644, %v4940
        %v5031 = vadd.f32 %v4645, %v4943
        %v5032 = vadd.f32 %v4646, %v4948
        %v5033 = vadd.f32 %v4647, %v4951
        %v5034 = vadd.f32 %v4648, %v4956
        %v5035 = vadd.f32 %v4649, %v4959
        %v5036 = vadd.f32 %v4650, %v4964
        %v5037 = vadd.f32 %v4651, %v4967
        %v5038 = vadd.f32 %v4652, %v4972
        %v5039 = vadd.f32 %v4653, %v4975
        %v5040 = vadd.f32 %v4654, %v4980
        %v5041 = vadd.f32 %v4655, %v4983
        %v5042 = vadd.f32 %v4656, %v4988
        %v5043 = vadd.f32 %v4657, %v4991
        %v5044 = vadd.f32 %v4658, %v4996
        %v5045 = vadd.f32 %v4659, %v4999
        %v5046 = vadd.f32 %v4660, %v5004
        %v5047 = vadd.f32 %v4661, %v5007
        %v5048 = vadd.f32 %v4662, %v5012
        %v5049 = vadd.f32 %v4663, %v5015
        %v5050 = vld [vmem:[%s4664] sm:$0xf]
        %v5051 = vld [vmem:[%s4664 + $0x4] sm:$0xf]
        %v5052 = vld [vmem:[%s4664 + $0x8] sm:$0x1]
        %v5053 = vld [vmem:[%s4664 + $0xc] sm:$0xf]
        %v5054 = vld [vmem:[%s4664 + $0x10] sm:$0xf]
        %v5055 = vld [vmem:[%s4664 + $0x14] sm:$0x1]
        %v5056 = vld [vmem:[%s4664 + $0x18] sm:$0xf]
        %v5057 = vld [vmem:[%s4664 + $0x1c] sm:$0xf]
        %v5058 = vld [vmem:[%s4664 + $0x20] sm:$0x1]
        %v5059 = vld [vmem:[%s4664 + $0x24] sm:$0xf]
        %v5060 = vld [vmem:[%s4664 + $0x28] sm:$0xf]
        %v5061 = vld [vmem:[%s4664 + $0x2c] sm:$0x1]
        %v5062 = vld [vmem:[%s4664 + $0x30] sm:$0xf]
        %v5063 = vld [vmem:[%s4664 + $0x34] sm:$0xf]
        %v5064 = vld [vmem:[%s4664 + $0x38] sm:$0x1]
        %v5065 = vld [vmem:[%s4664 + $0x3c] sm:$0xf]
        %v5066 = vld [vmem:[%s4664 + $0x40] sm:$0xf]
        %v5067 = vld [vmem:[%s4664 + $0x44] sm:$0x1]
        %v5068 = vld [vmem:[%s4664 + $0x48] sm:$0xf]
        %v5069 = vld [vmem:[%s4664 + $0x4c] sm:$0xf]
        %v5070 = vld [vmem:[%s4664 + $0x50] sm:$0x1]
        %v5071 = vld [vmem:[%s4664 + $0x54] sm:$0xf]
        %v5072 = vld [vmem:[%s4664 + $0x58] sm:$0xf]
        %v5073 = vld [vmem:[%s4664 + $0x5c] sm:$0x1]
        %v5074 = vld [vmem:[%s4664 + $0x60] sm:$0xf]
        %v5075 = vld [vmem:[%s4664 + $0x64] sm:$0xf]
        %v5076 = vld [vmem:[%s4664 + $0x68] sm:$0x1]
        %v5077 = vld [vmem:[%s4664 + $0x6c] sm:$0xf]
        %v5078 = vld [vmem:[%s4664 + $0x70] sm:$0xf]
        %v5079 = vld [vmem:[%s4664 + $0x74] sm:$0x1]
        %v5080 = vld [vmem:[%s4664 + $0x78] sm:$0xf]
        %v5081 = vld [vmem:[%s4664 + $0x7c] sm:$0xf]
        %v5082 = vld [vmem:[%s4664 + $0x80] sm:$0x1]
        %v5083 = vld [vmem:[%s4664 + $0x84] sm:$0xf]
        %v5084 = vld [vmem:[%s4664 + $0x88] sm:$0xf]
        %v5085 = vld [vmem:[%s4664 + $0x8c] sm:$0x1]
        %v5086 = vld [vmem:[%s4664 + $0x90] sm:$0xf]
        %v5087 = vld [vmem:[%s4664 + $0x94] sm:$0xf]
        %v5088 = vld [vmem:[%s4664 + $0x98] sm:$0x1]
        %v5089 = vld [vmem:[%s4664 + $0x9c] sm:$0xf]
        %v5090 = vld [vmem:[%s4664 + $0xa0] sm:$0xf]
        %v5091 = vld [vmem:[%s4664 + $0xa4] sm:$0x1]
        %v5092 = vld [vmem:[%s4664 + $0xa8] sm:$0xf]
        %v5093 = vld [vmem:[%s4664 + $0xac] sm:$0xf]
        %v5094 = vld [vmem:[%s4664 + $0xb0] sm:$0x1]
        %v5095 = vld [vmem:[%s4664 + $0xb4] sm:$0xf]
        %v5096 = vld [vmem:[%s4664 + $0xb8] sm:$0xf]
        %v5097 = vld [vmem:[%s4664 + $0xbc] sm:$0x1]
        %v5099 = vshrl.u32 %v5050, 16
        %v5101 = vrot.slane %v5099, 4
        %v5102 = vshll.u32 %v5050, 16
        %v5104 = vrot.slane %v5102, 5
        %v5105 = vor.u32 %v5101, %v5104
        %v5106 = vrot.slane %v5105, 4
        %v5108 = vshll.u32 %v5051, 16
        %v5110 = vrot.slane %v5108, 5
        %v5111 = vsel %vm1566, %v5106, %v5110
        %v5112 = vshrl.u32 %v5051, 16
        %v5114 = vrot.slane %v5112, 4
        %v5115 = vor.u32 %v5114, %v5110
        %v5116 = vrot.slane %v5115, 4
        %v5118 = vshll.u32 %v5052, 16
        %v5120 = vrot.slane %v5118, 5
        %v5121 = vsel %vm1566, %v5116, %v5120
        %v5123 = vshrl.u32 %v5053, 16
        %v5125 = vrot.slane %v5123, 4
        %v5126 = vshll.u32 %v5053, 16
        %v5128 = vrot.slane %v5126, 5
        %v5129 = vor.u32 %v5125, %v5128
        %v5130 = vrot.slane %v5129, 4
        %v5132 = vshll.u32 %v5054, 16
        %v5134 = vrot.slane %v5132, 5
        %v5135 = vsel %vm1566, %v5130, %v5134
        %v5136 = vshrl.u32 %v5054, 16
        %v5138 = vrot.slane %v5136, 4
        %v5139 = vor.u32 %v5138, %v5134
        %v5140 = vrot.slane %v5139, 4
        %v5142 = vshll.u32 %v5055, 16
        %v5144 = vrot.slane %v5142, 5
        %v5145 = vsel %vm1566, %v5140, %v5144
        %v5147 = vshrl.u32 %v5056, 16
        %v5149 = vrot.slane %v5147, 4
        %v5150 = vshll.u32 %v5056, 16
        %v5152 = vrot.slane %v5150, 5
        %v5153 = vor.u32 %v5149, %v5152
        %v5154 = vrot.slane %v5153, 4
        %v5156 = vshll.u32 %v5057, 16
        %v5158 = vrot.slane %v5156, 5
        %v5159 = vsel %vm1566, %v5154, %v5158
        %v5160 = vshrl.u32 %v5057, 16
        %v5162 = vrot.slane %v5160, 4
        %v5163 = vor.u32 %v5162, %v5158
        %v5164 = vrot.slane %v5163, 4
        %v5166 = vshll.u32 %v5058, 16
        %v5168 = vrot.slane %v5166, 5
        %v5169 = vsel %vm1566, %v5164, %v5168
        %v5171 = vshrl.u32 %v5059, 16
        %v5173 = vrot.slane %v5171, 4
        %v5174 = vshll.u32 %v5059, 16
        %v5176 = vrot.slane %v5174, 5
        %v5177 = vor.u32 %v5173, %v5176
        %v5178 = vrot.slane %v5177, 4
        %v5180 = vshll.u32 %v5060, 16
        %v5182 = vrot.slane %v5180, 5
        %v5183 = vsel %vm1566, %v5178, %v5182
        %v5184 = vshrl.u32 %v5060, 16
        %v5186 = vrot.slane %v5184, 4
        %v5187 = vor.u32 %v5186, %v5182
        %v5188 = vrot.slane %v5187, 4
        %v5190 = vshll.u32 %v5061, 16
        %v5192 = vrot.slane %v5190, 5
        %v5193 = vsel %vm1566, %v5188, %v5192
        %v5195 = vshrl.u32 %v5062, 16
        %v5197 = vrot.slane %v5195, 4
        %v5198 = vshll.u32 %v5062, 16
        %v5200 = vrot.slane %v5198, 5
        %v5201 = vor.u32 %v5197, %v5200
        %v5202 = vrot.slane %v5201, 4
        %v5204 = vshll.u32 %v5063, 16
        %v5206 = vrot.slane %v5204, 5
        %v5207 = vsel %vm1566, %v5202, %v5206
        %v5208 = vshrl.u32 %v5063, 16
        %v5210 = vrot.slane %v5208, 4
        %v5211 = vor.u32 %v5210, %v5206
        %v5212 = vrot.slane %v5211, 4
        %v5214 = vshll.u32 %v5064, 16
        %v5216 = vrot.slane %v5214, 5
        %v5217 = vsel %vm1566, %v5212, %v5216
        %v5219 = vshrl.u32 %v5065, 16
        %v5221 = vrot.slane %v5219, 4
        %v5222 = vshll.u32 %v5065, 16
        %v5224 = vrot.slane %v5222, 5
        %v5225 = vor.u32 %v5221, %v5224
        %v5226 = vrot.slane %v5225, 4
        %v5228 = vshll.u32 %v5066, 16
        %v5230 = vrot.slane %v5228, 5
        %v5231 = vsel %vm1566, %v5226, %v5230
        %v5232 = vshrl.u32 %v5066, 16
        %v5234 = vrot.slane %v5232, 4
        %v5235 = vor.u32 %v5234, %v5230
        %v5236 = vrot.slane %v5235, 4
        %v5238 = vshll.u32 %v5067, 16
        %v5240 = vrot.slane %v5238, 5
        %v5241 = vsel %vm1566, %v5236, %v5240
        %v5243 = vshrl.u32 %v5068, 16
        %v5245 = vrot.slane %v5243, 4
        %v5246 = vshll.u32 %v5068, 16
        %v5248 = vrot.slane %v5246, 5
        %v5249 = vor.u32 %v5245, %v5248
        %v5250 = vrot.slane %v5249, 4
        %v5252 = vshll.u32 %v5069, 16
        %v5254 = vrot.slane %v5252, 5
        %v5255 = vsel %vm1566, %v5250, %v5254
        %v5256 = vshrl.u32 %v5069, 16
        %v5258 = vrot.slane %v5256, 4
        %v5259 = vor.u32 %v5258, %v5254
        %v5260 = vrot.slane %v5259, 4
        %v5262 = vshll.u32 %v5070, 16
        %v5264 = vrot.slane %v5262, 5
        %v5265 = vsel %vm1566, %v5260, %v5264
        %v5267 = vshrl.u32 %v5071, 16
        %v5269 = vrot.slane %v5267, 4
        %v5270 = vshll.u32 %v5071, 16
        %v5272 = vrot.slane %v5270, 5
        %v5273 = vor.u32 %v5269, %v5272
        %v5274 = vrot.slane %v5273, 4
        %v5276 = vshll.u32 %v5072, 16
        %v5278 = vrot.slane %v5276, 5
        %v5279 = vsel %vm1566, %v5274, %v5278
        %v5280 = vshrl.u32 %v5072, 16
        %v5282 = vrot.slane %v5280, 4
        %v5283 = vor.u32 %v5282, %v5278
        %v5284 = vrot.slane %v5283, 4
        %v5286 = vshll.u32 %v5073, 16
        %v5288 = vrot.slane %v5286, 5
        %v5289 = vsel %vm1566, %v5284, %v5288
        %v5291 = vshrl.u32 %v5074, 16
        %v5293 = vrot.slane %v5291, 4
        %v5294 = vshll.u32 %v5074, 16
        %v5296 = vrot.slane %v5294, 5
        %v5297 = vor.u32 %v5293, %v5296
        %v5298 = vrot.slane %v5297, 4
        %v5300 = vshll.u32 %v5075, 16
        %v5302 = vrot.slane %v5300, 5
        %v5303 = vsel %vm1566, %v5298, %v5302
        %v5304 = vshrl.u32 %v5075, 16
        %v5306 = vrot.slane %v5304, 4
        %v5307 = vor.u32 %v5306, %v5302
        %v5308 = vrot.slane %v5307, 4
        %v5310 = vshll.u32 %v5076, 16
        %v5312 = vrot.slane %v5310, 5
        %v5313 = vsel %vm1566, %v5308, %v5312
        %v5315 = vshrl.u32 %v5077, 16
        %v5317 = vrot.slane %v5315, 4
        %v5318 = vshll.u32 %v5077, 16
        %v5320 = vrot.slane %v5318, 5
        %v5321 = vor.u32 %v5317, %v5320
        %v5322 = vrot.slane %v5321, 4
        %v5324 = vshll.u32 %v5078, 16
        %v5326 = vrot.slane %v5324, 5
        %v5327 = vsel %vm1566, %v5322, %v5326
        %v5328 = vshrl.u32 %v5078, 16
        %v5330 = vrot.slane %v5328, 4
        %v5331 = vor.u32 %v5330, %v5326
        %v5332 = vrot.slane %v5331, 4
        %v5334 = vshll.u32 %v5079, 16
        %v5336 = vrot.slane %v5334, 5
        %v5337 = vsel %vm1566, %v5332, %v5336
        %v5339 = vshrl.u32 %v5080, 16
        %v5341 = vrot.slane %v5339, 4
        %v5342 = vshll.u32 %v5080, 16
        %v5344 = vrot.slane %v5342, 5
        %v5345 = vor.u32 %v5341, %v5344
        %v5346 = vrot.slane %v5345, 4
        %v5348 = vshll.u32 %v5081, 16
        %v5350 = vrot.slane %v5348, 5
        %v5351 = vsel %vm1566, %v5346, %v5350
        %v5352 = vshrl.u32 %v5081, 16
        %v5354 = vrot.slane %v5352, 4
        %v5355 = vor.u32 %v5354, %v5350
        %v5356 = vrot.slane %v5355, 4
        %v5358 = vshll.u32 %v5082, 16
        %v5360 = vrot.slane %v5358, 5
        %v5361 = vsel %vm1566, %v5356, %v5360
        %v5363 = vshrl.u32 %v5083, 16
        %v5365 = vrot.slane %v5363, 4
        %v5366 = vshll.u32 %v5083, 16
        %v5368 = vrot.slane %v5366, 5
        %v5369 = vor.u32 %v5365, %v5368
        %v5370 = vrot.slane %v5369, 4
        %v5372 = vshll.u32 %v5084, 16
        %v5374 = vrot.slane %v5372, 5
        %v5375 = vsel %vm1566, %v5370, %v5374
        %v5376 = vshrl.u32 %v5084, 16
        %v5378 = vrot.slane %v5376, 4
        %v5379 = vor.u32 %v5378, %v5374
        %v5380 = vrot.slane %v5379, 4
        %v5382 = vshll.u32 %v5085, 16
        %v5384 = vrot.slane %v5382, 5
        %v5385 = vsel %vm1566, %v5380, %v5384
        %v5387 = vshrl.u32 %v5086, 16
        %v5389 = vrot.slane %v5387, 4
        %v5390 = vshll.u32 %v5086, 16
        %v5392 = vrot.slane %v5390, 5
        %v5393 = vor.u32 %v5389, %v5392
        %v5394 = vrot.slane %v5393, 4
        %v5396 = vshll.u32 %v5087, 16
        %v5398 = vrot.slane %v5396, 5
        %v5399 = vsel %vm1566, %v5394, %v5398
        %v5400 = vshrl.u32 %v5087, 16
        %v5402 = vrot.slane %v5400, 4
        %v5403 = vor.u32 %v5402, %v5398
        %v5404 = vrot.slane %v5403, 4
        %v5406 = vshll.u32 %v5088, 16
        %v5408 = vrot.slane %v5406, 5
        %v5409 = vsel %vm1566, %v5404, %v5408
        %v5411 = vshrl.u32 %v5089, 16
        %v5413 = vrot.slane %v5411, 4
        %v5414 = vshll.u32 %v5089, 16
        %v5416 = vrot.slane %v5414, 5
        %v5417 = vor.u32 %v5413, %v5416
        %v5418 = vrot.slane %v5417, 4
        %v5420 = vshll.u32 %v5090, 16
        %v5422 = vrot.slane %v5420, 5
        %v5423 = vsel %vm1566, %v5418, %v5422
        %v5424 = vshrl.u32 %v5090, 16
        %v5426 = vrot.slane %v5424, 4
        %v5427 = vor.u32 %v5426, %v5422
        %v5428 = vrot.slane %v5427, 4
        %v5430 = vshll.u32 %v5091, 16
        %v5432 = vrot.slane %v5430, 5
        %v5433 = vsel %vm1566, %v5428, %v5432
        %v5435 = vshrl.u32 %v5092, 16
        %v5437 = vrot.slane %v5435, 4
        %v5438 = vshll.u32 %v5092, 16
        %v5440 = vrot.slane %v5438, 5
        %v5441 = vor.u32 %v5437, %v5440
        %v5442 = vrot.slane %v5441, 4
        %v5444 = vshll.u32 %v5093, 16
        %v5446 = vrot.slane %v5444, 5
        %v5447 = vsel %vm1566, %v5442, %v5446
        %v5448 = vshrl.u32 %v5093, 16
        %v5450 = vrot.slane %v5448, 4
        %v5451 = vor.u32 %v5450, %v5446
        %v5452 = vrot.slane %v5451, 4
        %v5454 = vshll.u32 %v5094, 16
        %v5456 = vrot.slane %v5454, 5
        %v5457 = vsel %vm1566, %v5452, %v5456
        %v5459 = vshrl.u32 %v5095, 16
        %v5461 = vrot.slane %v5459, 4
        %v5462 = vshll.u32 %v5095, 16
        %v5464 = vrot.slane %v5462, 5
        %v5465 = vor.u32 %v5461, %v5464
        %v5466 = vrot.slane %v5465, 4
        %v5468 = vshll.u32 %v5096, 16
        %v5470 = vrot.slane %v5468, 5
        %v5471 = vsel %vm1566, %v5466, %v5470
        %v5472 = vshrl.u32 %v5096, 16
        %v5474 = vrot.slane %v5472, 4
        %v5475 = vor.u32 %v5474, %v5470
        %v5476 = vrot.slane %v5475, 4
        %v5478 = vshll.u32 %v5097, 16
        %v5480 = vrot.slane %v5478, 5
        %v5481 = vsel %vm1566, %v5476, %v5480
        %v5482 = vld [vmem:[%s4 + $0x1c0] sm:$0xf]
        %v5483 = vld [vmem:[%s4 + $0x1c4] sm:$0xf]
        %v5484 = vld [vmem:[%s4 + $0x1c8] sm:$0xf]
        %v5485 = vld [vmem:[%s4 + $0x1cc] sm:$0xf]
        %v5486 = vld [vmem:[%s4 + $0x1d0] sm:$0xf]
        %v5487 = vld [vmem:[%s4 + $0x1d4] sm:$0xf]
        %v5488 = vld [vmem:[%s4 + $0x1d8] sm:$0xf]
        %v5489 = vld [vmem:[%s4 + $0x1dc] sm:$0xf]
        %v5490 = vld [vmem:[%s4 + $0x1e0] sm:$0xf]
        %v5491 = vld [vmem:[%s4 + $0x1e4] sm:$0xf]
        %v5492 = vld [vmem:[%s4 + $0x1e8] sm:$0xf]
        %v5493 = vld [vmem:[%s4 + $0x1ec] sm:$0xf]
        %v5494 = vld [vmem:[%s4 + $0x1f0] sm:$0xf]
        %v5495 = vld [vmem:[%s4 + $0x1f4] sm:$0xf]
        %v5496 = vld [vmem:[%s4 + $0x1f8] sm:$0xf]
        %v5497 = vld [vmem:[%s4 + $0x1fc] sm:$0xf]
        %v5498 = vunpack.c.l.b16 %v5111
        %v5499 = vunpack.c.l.b16 %v5121
        %v5500 = vunpack.c.l.b16 %v5135
        %v5501 = vunpack.c.l.b16 %v5145
        %v5502 = vunpack.c.l.b16 %v5159
        %v5503 = vunpack.c.l.b16 %v5169
        %v5504 = vunpack.c.l.b16 %v5183
        %v5505 = vunpack.c.l.b16 %v5193
        %v5506 = vunpack.c.l.b16 %v5207
        %v5507 = vunpack.c.l.b16 %v5217
        %v5508 = vunpack.c.l.b16 %v5231
        %v5509 = vunpack.c.l.b16 %v5241
        %v5510 = vunpack.c.l.b16 %v5255
        %v5511 = vunpack.c.l.b16 %v5265
        %v5512 = vunpack.c.l.b16 %v5279
        %v5513 = vunpack.c.l.b16 %v5289
        %v5514 = vunpack.c.l.b16 %v5303
        %v5515 = vunpack.c.l.b16 %v5313
        %v5516 = vunpack.c.l.b16 %v5327
        %v5517 = vunpack.c.l.b16 %v5337
        %v5518 = vunpack.c.l.b16 %v5351
        %v5519 = vunpack.c.l.b16 %v5361
        %v5520 = vunpack.c.l.b16 %v5375
        %v5521 = vunpack.c.l.b16 %v5385
        %v5522 = vunpack.c.l.b16 %v5399
        %v5523 = vunpack.c.l.b16 %v5409
        %v5524 = vunpack.c.l.b16 %v5423
        %v5525 = vunpack.c.l.b16 %v5433
        %v5526 = vunpack.c.l.b16 %v5447
        %v5527 = vunpack.c.l.b16 %v5457
        %v5528 = vunpack.c.l.b16 %v5471
        %v5529 = vunpack.c.l.b16 %v5481
        %v5530 = vpack.c.b16 %v5499, %v5498
        %v5531 = vpack.c.b16 %v5501, %v5500
        %v5532 = vpack.c.b16 %v5503, %v5502
        %v5533 = vpack.c.b16 %v5505, %v5504
        %v5534 = vpack.c.b16 %v5507, %v5506
        %v5535 = vpack.c.b16 %v5509, %v5508
        %v5536 = vpack.c.b16 %v5511, %v5510
        %v5537 = vpack.c.b16 %v5513, %v5512
        %v5538 = vpack.c.b16 %v5515, %v5514
        %v5539 = vpack.c.b16 %v5517, %v5516
        %v5540 = vpack.c.b16 %v5519, %v5518
        %v5541 = vpack.c.b16 %v5521, %v5520
        %v5542 = vpack.c.b16 %v5523, %v5522
        %v5543 = vpack.c.b16 %v5525, %v5524
        %v5544 = vpack.c.b16 %v5527, %v5526
        %v5545 = vpack.c.b16 %v5529, %v5528
        %v5578 = vunpack.c.l.b16 %v5482
        %v5579 = vunpack.c.l.b16 %v5483
        %v5580 = vunpack.c.l.b16 %v5484
        %v5581 = vunpack.c.l.b16 %v5485
        %v5582 = vunpack.c.l.b16 %v5486
        %v5583 = vunpack.c.l.b16 %v5487
        %v5584 = vunpack.c.l.b16 %v5488
        %v5585 = vunpack.c.l.b16 %v5489
        %v5586 = vunpack.c.l.b16 %v5490
        %v5587 = vunpack.c.l.b16 %v5491
        %v5588 = vunpack.c.l.b16 %v5492
        %v5589 = vunpack.c.l.b16 %v5493
        %v5590 = vunpack.c.l.b16 %v5494
        %v5591 = vunpack.c.l.b16 %v5495
        %v5592 = vunpack.c.l.b16 %v5496
        %v5593 = vunpack.c.l.b16 %v5497
        %v5594 = vpack.c.b16 %v5579, %v5578
        %v5595 = vpack.c.b16 %v5581, %v5580
        %v5596 = vpack.c.b16 %v5583, %v5582
        %v5597 = vpack.c.b16 %v5585, %v5584
        %v5598 = vpack.c.b16 %v5587, %v5586
        %v5599 = vpack.c.b16 %v5589, %v5588
        %v5600 = vpack.c.b16 %v5591, %v5590
        %v5601 = vpack.c.b16 %v5593, %v5592
        %5610 = vmatprep.subr.bf16.mxu0 0
        %5611 = vmatpush1.bf16.msra.mxu0 %v5594
        %5612 = vmatprep.subr.bf16.mxu0 0
        %5613 = vmatpush1.bf16.msra.mxu0 %v5595
        %5614 = vmatprep.subr.bf16.mxu0 0
        %5615 = vmatpush1.bf16.msra.mxu0 %v5596
        %5616 = vmatprep.subr.bf16.mxu0 0
        %5617 = vmatpush1.bf16.msra.mxu0 %v5597
        %5618 = vmatprep.subr.bf16.mxu0 0
        %5619 = vmatpush1.bf16.msra.mxu0 %v5598
        %5620 = vmatprep.subr.bf16.mxu0 0
        %5621 = vmatpush1.bf16.msra.mxu0 %v5599
        %5622 = vmatprep.subr.bf16.mxu0 0
        %5623 = vmatpush1.bf16.msra.mxu0 %v5600
        %5624 = vmatprep.subr.bf16.mxu0 0
        %5625 = vmatpush1.bf16.msra.mxu0 %v5601
        %5626 = vmatprep.subr.bf16.mxu0 0
        %5627 = vmatpush1.bf16.msra.mxu0 0
        %5628 = vmatprep.subr.bf16.mxu0 0
        %5629 = vmatpush1.bf16.msra.mxu0 0
        %5630 = vmatprep.subr.bf16.mxu0 0
        %5631 = vmatpush1.bf16.msra.mxu0 0
        %5632 = vmatprep.subr.bf16.mxu0 0
        %5633 = vmatpush1.bf16.msra.mxu0 0
        %5634 = vmatprep.subr.bf16.mxu0 0
        %5635 = vmatpush1.bf16.msra.mxu0 0
        %5636 = vmatprep.subr.bf16.mxu0 0
        %5637 = vmatpush1.bf16.msra.mxu0 0
        %5638 = vmatprep.subr.bf16.mxu0 0
        %5639 = vmatpush1.bf16.msra.mxu0 0
        %5640 = vmatprep.subr.bf16.mxu0 0
        %5641 = vmatpush1.bf16.msra.mxu0 0
        %5642 = vmatprep.mubr.bf16.mxu0 0
        %5643 = vmatmul.mubr.bf16.gmra.mrb[0].mxu0 %v5530
        %v5644 = vpop.f32.mrb[0].mxu0
        %v5645 = vadd.f32 0.0, %v5644
        %v5646 = vpop.f32.mrb[0].mxu0
        %v5647 = vpop.f32.mrb[0].mxu0
        %v5648 = vadd.f32 0.0, %v5647
        %v5649 = vpop.f32.mrb[0].mxu0
        %5650 = vmatprep.mubr.bf16.mxu0 0
        %5651 = vmatmul.mubr.bf16.gmra.mrb[0].mxu0 %v5531
        %v5652 = vpop.f32.mrb[0].mxu0
        %v5653 = vadd.f32 0.0, %v5652
        %v5654 = vpop.f32.mrb[0].mxu0
        %v5655 = vpop.f32.mrb[0].mxu0
        %v5656 = vadd.f32 0.0, %v5655
        %v5657 = vpop.f32.mrb[0].mxu0
        %5658 = vmatprep.mubr.bf16.mxu0 0
        %5659 = vmatmul.mubr.bf16.gmra.mrb[0].mxu0 %v5532
        %v5660 = vpop.f32.mrb[0].mxu0
        %v5661 = vadd.f32 0.0, %v5660
        %v5662 = vpop.f32.mrb[0].mxu0
        %v5663 = vpop.f32.mrb[0].mxu0
        %v5664 = vadd.f32 0.0, %v5663
        %v5665 = vpop.f32.mrb[0].mxu0
        %5666 = vmatprep.mubr.bf16.mxu0 0
        %5667 = vmatmul.mubr.bf16.gmra.mrb[0].mxu0 %v5533
        %v5668 = vpop.f32.mrb[0].mxu0
        %v5669 = vadd.f32 0.0, %v5668
        %v5670 = vpop.f32.mrb[0].mxu0
        %v5671 = vpop.f32.mrb[0].mxu0
        %v5672 = vadd.f32 0.0, %v5671
        %v5673 = vpop.f32.mrb[0].mxu0
        %5674 = vmatprep.mubr.bf16.mxu0 0
        %5675 = vmatmul.mubr.bf16.gmra.mrb[0].mxu0 %v5534
        %v5676 = vpop.f32.mrb[0].mxu0
        %v5677 = vadd.f32 0.0, %v5676
        %v5678 = vpop.f32.mrb[0].mxu0
        %v5679 = vpop.f32.mrb[0].mxu0
        %v5680 = vadd.f32 0.0, %v5679
        %v5681 = vpop.f32.mrb[0].mxu0
        %5682 = vmatprep.mubr.bf16.mxu0 0
        %5683 = vmatmul.mubr.bf16.gmra.mrb[0].mxu0 %v5535
        %v5684 = vpop.f32.mrb[0].mxu0
        %v5685 = vadd.f32 0.0, %v5684
        %v5686 = vpop.f32.mrb[0].mxu0
        %v5687 = vpop.f32.mrb[0].mxu0
        %v5688 = vadd.f32 0.0, %v5687
        %v5689 = vpop.f32.mrb[0].mxu0
        %5690 = vmatprep.mubr.bf16.mxu0 0
        %5691 = vmatmul.mubr.bf16.gmra.mrb[0].mxu0 %v5536
        %v5692 = vpop.f32.mrb[0].mxu0
        %v5693 = vadd.f32 0.0, %v5692
        %v5694 = vpop.f32.mrb[0].mxu0
        %v5695 = vpop.f32.mrb[0].mxu0
        %v5696 = vadd.f32 0.0, %v5695
        %v5697 = vpop.f32.mrb[0].mxu0
        %5698 = vmatprep.mubr.bf16.mxu0 0
        %5699 = vmatmul.mubr.bf16.gmra.mrb[0].mxu0 %v5537
        %v5700 = vpop.f32.mrb[0].mxu0
        %v5701 = vadd.f32 0.0, %v5700
        %v5702 = vpop.f32.mrb[0].mxu0
        %v5703 = vpop.f32.mrb[0].mxu0
        %v5704 = vadd.f32 0.0, %v5703
        %v5705 = vpop.f32.mrb[0].mxu0
        %5706 = vmatprep.mubr.bf16.mxu0 0
        %5707 = vmatmul.mubr.bf16.gmra.mrb[0].mxu0 %v5538
        %v5708 = vpop.f32.mrb[0].mxu0
        %v5709 = vadd.f32 0.0, %v5708
        %v5710 = vpop.f32.mrb[0].mxu0
        %v5711 = vpop.f32.mrb[0].mxu0
        %v5712 = vadd.f32 0.0, %v5711
        %v5713 = vpop.f32.mrb[0].mxu0
        %5714 = vmatprep.mubr.bf16.mxu0 0
        %5715 = vmatmul.mubr.bf16.gmra.mrb[0].mxu0 %v5539
        %v5716 = vpop.f32.mrb[0].mxu0
        %v5717 = vadd.f32 0.0, %v5716
        %v5718 = vpop.f32.mrb[0].mxu0
        %v5719 = vpop.f32.mrb[0].mxu0
        %v5720 = vadd.f32 0.0, %v5719
        %v5721 = vpop.f32.mrb[0].mxu0
        %5722 = vmatprep.mubr.bf16.mxu0 0
        %5723 = vmatmul.mubr.bf16.gmra.mrb[0].mxu0 %v5540
        %v5724 = vpop.f32.mrb[0].mxu0
        %v5725 = vadd.f32 0.0, %v5724
        %v5726 = vpop.f32.mrb[0].mxu0
        %v5727 = vpop.f32.mrb[0].mxu0
        %v5728 = vadd.f32 0.0, %v5727
        %v5729 = vpop.f32.mrb[0].mxu0
        %5730 = vmatprep.mubr.bf16.mxu0 0
        %5731 = vmatmul.mubr.bf16.gmra.mrb[0].mxu0 %v5541
        %v5732 = vpop.f32.mrb[0].mxu0
        %v5733 = vadd.f32 0.0, %v5732
        %v5734 = vpop.f32.mrb[0].mxu0
        %v5735 = vpop.f32.mrb[0].mxu0
        %v5736 = vadd.f32 0.0, %v5735
        %v5737 = vpop.f32.mrb[0].mxu0
        %5738 = vmatprep.mubr.bf16.mxu0 0
        %5739 = vmatmul.mubr.bf16.gmra.mrb[0].mxu0 %v5542
        %v5740 = vpop.f32.mrb[0].mxu0
        %v5741 = vadd.f32 0.0, %v5740
        %v5742 = vpop.f32.mrb[0].mxu0
        %v5743 = vpop.f32.mrb[0].mxu0
        %v5744 = vadd.f32 0.0, %v5743
        %v5745 = vpop.f32.mrb[0].mxu0
        %5746 = vmatprep.mubr.bf16.mxu0 0
        %5747 = vmatmul.mubr.bf16.gmra.mrb[0].mxu0 %v5543
        %v5748 = vpop.f32.mrb[0].mxu0
        %v5749 = vadd.f32 0.0, %v5748
        %v5750 = vpop.f32.mrb[0].mxu0
        %v5751 = vpop.f32.mrb[0].mxu0
        %v5752 = vadd.f32 0.0, %v5751
        %v5753 = vpop.f32.mrb[0].mxu0
        %5754 = vmatprep.mubr.bf16.mxu0 0
        %5755 = vmatmul.mubr.bf16.gmra.mrb[0].mxu0 %v5544
        %v5756 = vpop.f32.mrb[0].mxu0
        %v5757 = vadd.f32 0.0, %v5756
        %v5758 = vpop.f32.mrb[0].mxu0
        %v5759 = vpop.f32.mrb[0].mxu0
        %v5760 = vadd.f32 0.0, %v5759
        %v5761 = vpop.f32.mrb[0].mxu0
        %5762 = vmatprep.mubr.bf16.mxu0 0
        %5763 = vmatmul.mubr.bf16.gmra.mrb[0].mxu0 %v5545
        %v5764 = vpop.f32.mrb[0].mxu0
        %v5765 = vadd.f32 0.0, %v5764
        %v5766 = vpop.f32.mrb[0].mxu0
        %v5767 = vpop.f32.mrb[0].mxu0
        %v5768 = vadd.f32 0.0, %v5767
        %v5769 = vpop.f32.mrb[0].mxu0
        %5770 = vdwg.mxu0
        %v5771 = vadd.f32 %v5018, %v5645
        %v5772 = vadd.f32 %v5019, %v5648
        %v5773 = vadd.f32 %v5020, %v5653
        %v5774 = vadd.f32 %v5021, %v5656
        %v5775 = vadd.f32 %v5022, %v5661
        %v5776 = vadd.f32 %v5023, %v5664
        %v5777 = vadd.f32 %v5024, %v5669
        %v5778 = vadd.f32 %v5025, %v5672
        %v5779 = vadd.f32 %v5026, %v5677
        %v5780 = vadd.f32 %v5027, %v5680
        %v5781 = vadd.f32 %v5028, %v5685
        %v5782 = vadd.f32 %v5029, %v5688
        %v5783 = vadd.f32 %v5030, %v5693
        %v5784 = vadd.f32 %v5031, %v5696
        %v5785 = vadd.f32 %v5032, %v5701
        %v5786 = vadd.f32 %v5033, %v5704
        %v5787 = vadd.f32 %v5034, %v5709
        %v5788 = vadd.f32 %v5035, %v5712
        %v5789 = vadd.f32 %v5036, %v5717
        %v5790 = vadd.f32 %v5037, %v5720
        %v5791 = vadd.f32 %v5038, %v5725
        %v5792 = vadd.f32 %v5039, %v5728
        %v5793 = vadd.f32 %v5040, %v5733
        %v5794 = vadd.f32 %v5041, %v5736
        %v5795 = vadd.f32 %v5042, %v5741
        %v5796 = vadd.f32 %v5043, %v5744
        %v5797 = vadd.f32 %v5044, %v5749
        %v5798 = vadd.f32 %v5045, %v5752
        %v5799 = vadd.f32 %v5046, %v5757
        %v5800 = vadd.f32 %v5047, %v5760
        %v5801 = vadd.f32 %v5048, %v5765
        %v5802 = vadd.f32 %v5049, %v5768
        %v5803 = vld [vmem:[%s4664] sm:$0xe]
        %v5804 = vld [vmem:[%s4664 + $0xc] sm:$0xe]
        %v5805 = vld [vmem:[%s4664 + $0x18] sm:$0xe]
        %v5806 = vld [vmem:[%s4664 + $0x24] sm:$0xe]
        %v5807 = vld [vmem:[%s4664 + $0x30] sm:$0xe]
        %v5808 = vld [vmem:[%s4664 + $0x3c] sm:$0xe]
        %v5809 = vld [vmem:[%s4664 + $0x48] sm:$0xe]
        %v5810 = vld [vmem:[%s4664 + $0x54] sm:$0xe]
        %v5811 = vld [vmem:[%s4664 + $0x60] sm:$0xe]
        %v5812 = vld [vmem:[%s4664 + $0x6c] sm:$0xe]
        %v5813 = vld [vmem:[%s4664 + $0x78] sm:$0xe]
        %v5814 = vld [vmem:[%s4664 + $0x84] sm:$0xe]
        %v5815 = vld [vmem:[%s4664 + $0x90] sm:$0xe]
        %v5816 = vld [vmem:[%s4664 + $0x9c] sm:$0xe]
        %v5817 = vld [vmem:[%s4664 + $0xa8] sm:$0xe]
        %v5818 = vld [vmem:[%s4664 + $0xb4] sm:$0xe]
        %v5867 = vrot.slane %v5803, 5
        %v5868 = vrot.slane %v5867, 4
        %v5869 = vrot.slane %v5051, 5
        %v5870 = vsel %vm2595, %v5868, %v5869
        %v5871 = vrot.slane %v5869, 4
        %v5872 = vrot.slane %v5052, 5
        %v5873 = vsel %vm2595, %v5871, %v5872
        %v5874 = vrot.slane %v5804, 5
        %v5875 = vrot.slane %v5874, 4
        %v5876 = vrot.slane %v5054, 5
        %v5877 = vsel %vm2595, %v5875, %v5876
        %v5878 = vrot.slane %v5876, 4
        %v5879 = vrot.slane %v5055, 5
        %v5880 = vsel %vm2595, %v5878, %v5879
        %v5881 = vrot.slane %v5805, 5
        %v5882 = vrot.slane %v5881, 4
        %v5883 = vrot.slane %v5057, 5
        %v5884 = vsel %vm2595, %v5882, %v5883
        %v5885 = vrot.slane %v5883, 4
        %v5886 = vrot.slane %v5058, 5
        %v5887 = vsel %vm2595, %v5885, %v5886
        %v5888 = vrot.slane %v5806, 5
        %v5889 = vrot.slane %v5888, 4
        %v5890 = vrot.slane %v5060, 5
        %v5891 = vsel %vm2595, %v5889, %v5890
        %v5892 = vrot.slane %v5890, 4
        %v5893 = vrot.slane %v5061, 5
        %v5894 = vsel %vm2595, %v5892, %v5893
        %v5895 = vrot.slane %v5807, 5
        %v5896 = vrot.slane %v5895, 4
        %v5897 = vrot.slane %v5063, 5
        %v5898 = vsel %vm2595, %v5896, %v5897
        %v5899 = vrot.slane %v5897, 4
        %v5900 = vrot.slane %v5064, 5
        %v5901 = vsel %vm2595, %v5899, %v5900
        %v5902 = vrot.slane %v5808, 5
        %v5903 = vrot.slane %v5902, 4
        %v5904 = vrot.slane %v5066, 5
        %v5905 = vsel %vm2595, %v5903, %v5904
        %v5906 = vrot.slane %v5904, 4
        %v5907 = vrot.slane %v5067, 5
        %v5908 = vsel %vm2595, %v5906, %v5907
        %v5909 = vrot.slane %v5809, 5
        %v5910 = vrot.slane %v5909, 4
        %v5911 = vrot.slane %v5069, 5
        %v5912 = vsel %vm2595, %v5910, %v5911
        %v5913 = vrot.slane %v5911, 4
        %v5914 = vrot.slane %v5070, 5
        %v5915 = vsel %vm2595, %v5913, %v5914
        %v5916 = vrot.slane %v5810, 5
        %v5917 = vrot.slane %v5916, 4
        %v5918 = vrot.slane %v5072, 5
        %v5919 = vsel %vm2595, %v5917, %v5918
        %v5920 = vrot.slane %v5918, 4
        %v5921 = vrot.slane %v5073, 5
        %v5922 = vsel %vm2595, %v5920, %v5921
        %v5923 = vrot.slane %v5811, 5
        %v5924 = vrot.slane %v5923, 4
        %v5925 = vrot.slane %v5075, 5
        %v5926 = vsel %vm2595, %v5924, %v5925
        %v5927 = vrot.slane %v5925, 4
        %v5928 = vrot.slane %v5076, 5
        %v5929 = vsel %vm2595, %v5927, %v5928
        %v5930 = vrot.slane %v5812, 5
        %v5931 = vrot.slane %v5930, 4
        %v5932 = vrot.slane %v5078, 5
        %v5933 = vsel %vm2595, %v5931, %v5932
        %v5934 = vrot.slane %v5932, 4
        %v5935 = vrot.slane %v5079, 5
        %v5936 = vsel %vm2595, %v5934, %v5935
        %v5937 = vrot.slane %v5813, 5
        %v5938 = vrot.slane %v5937, 4
        %v5939 = vrot.slane %v5081, 5
        %v5940 = vsel %vm2595, %v5938, %v5939
        %v5941 = vrot.slane %v5939, 4
        %v5942 = vrot.slane %v5082, 5
        %v5943 = vsel %vm2595, %v5941, %v5942
        %v5944 = vrot.slane %v5814, 5
        %v5945 = vrot.slane %v5944, 4
        %v5946 = vrot.slane %v5084, 5
        %v5947 = vsel %vm2595, %v5945, %v5946
        %v5948 = vrot.slane %v5946, 4
        %v5949 = vrot.slane %v5085, 5
        %v5950 = vsel %vm2595, %v5948, %v5949
        %v5951 = vrot.slane %v5815, 5
        %v5952 = vrot.slane %v5951, 4
        %v5953 = vrot.slane %v5087, 5
        %v5954 = vsel %vm2595, %v5952, %v5953
        %v5955 = vrot.slane %v5953, 4
        %v5956 = vrot.slane %v5088, 5
        %v5957 = vsel %vm2595, %v5955, %v5956
        %v5958 = vrot.slane %v5816, 5
        %v5959 = vrot.slane %v5958, 4
        %v5960 = vrot.slane %v5090, 5
        %v5961 = vsel %vm2595, %v5959, %v5960
        %v5962 = vrot.slane %v5960, 4
        %v5963 = vrot.slane %v5091, 5
        %v5964 = vsel %vm2595, %v5962, %v5963
        %v5965 = vrot.slane %v5817, 5
        %v5966 = vrot.slane %v5965, 4
        %v5967 = vrot.slane %v5093, 5
        %v5968 = vsel %vm2595, %v5966, %v5967
        %v5969 = vrot.slane %v5967, 4
        %v5970 = vrot.slane %v5094, 5
        %v5971 = vsel %vm2595, %v5969, %v5970
        %v5972 = vrot.slane %v5818, 5
        %v5973 = vrot.slane %v5972, 4
        %v5974 = vrot.slane %v5096, 5
        %v5975 = vsel %vm2595, %v5973, %v5974
        %v5976 = vrot.slane %v5974, 4
        %v5977 = vrot.slane %v5097, 5
        %v5978 = vsel %vm2595, %v5976, %v5977
        %v5979 = vld [vmem:[%s4 + $0x200] sm:$0xf]
        %v5980 = vld [vmem:[%s4 + $0x204] sm:$0xf]
        %v5981 = vld [vmem:[%s4 + $0x208] sm:$0xf]
        %v5982 = vld [vmem:[%s4 + $0x20c] sm:$0xf]
        %v5983 = vld [vmem:[%s4 + $0x210] sm:$0xf]
        %v5984 = vld [vmem:[%s4 + $0x214] sm:$0xf]
        %v5985 = vld [vmem:[%s4 + $0x218] sm:$0xf]
        %v5986 = vld [vmem:[%s4 + $0x21c] sm:$0xf]
        %v5987 = vld [vmem:[%s4 + $0x220] sm:$0xf]
        %v5988 = vld [vmem:[%s4 + $0x224] sm:$0xf]
        %v5989 = vld [vmem:[%s4 + $0x228] sm:$0xf]
        %v5990 = vld [vmem:[%s4 + $0x22c] sm:$0xf]
        %v5991 = vld [vmem:[%s4 + $0x230] sm:$0xf]
        %v5992 = vld [vmem:[%s4 + $0x234] sm:$0xf]
        %v5993 = vld [vmem:[%s4 + $0x238] sm:$0xf]
        %v5994 = vld [vmem:[%s4 + $0x23c] sm:$0xf]
        %v5995 = vunpack.c.l.b16 %v5870
        %v5996 = vunpack.c.l.b16 %v5873
        %v5997 = vunpack.c.l.b16 %v5877
        %v5998 = vunpack.c.l.b16 %v5880
        %v5999 = vunpack.c.l.b16 %v5884
        %v6000 = vunpack.c.l.b16 %v5887
        %v6001 = vunpack.c.l.b16 %v5891
        %v6002 = vunpack.c.l.b16 %v5894
        %v6003 = vunpack.c.l.b16 %v5898
        %v6004 = vunpack.c.l.b16 %v5901
        %v6005 = vunpack.c.l.b16 %v5905
        %v6006 = vunpack.c.l.b16 %v5908
        %v6007 = vunpack.c.l.b16 %v5912
        %v6008 = vunpack.c.l.b16 %v5915
        %v6009 = vunpack.c.l.b16 %v5919
        %v6010 = vunpack.c.l.b16 %v5922
        %v6011 = vunpack.c.l.b16 %v5926
        %v6012 = vunpack.c.l.b16 %v5929
        %v6013 = vunpack.c.l.b16 %v5933
        %v6014 = vunpack.c.l.b16 %v5936
        %v6015 = vunpack.c.l.b16 %v5940
        %v6016 = vunpack.c.l.b16 %v5943
        %v6017 = vunpack.c.l.b16 %v5947
        %v6018 = vunpack.c.l.b16 %v5950
        %v6019 = vunpack.c.l.b16 %v5954
        %v6020 = vunpack.c.l.b16 %v5957
        %v6021 = vunpack.c.l.b16 %v5961
        %v6022 = vunpack.c.l.b16 %v5964
        %v6023 = vunpack.c.l.b16 %v5968
        %v6024 = vunpack.c.l.b16 %v5971
        %v6025 = vunpack.c.l.b16 %v5975
        %v6026 = vunpack.c.l.b16 %v5978
        %v6027 = vpack.c.b16 %v5996, %v5995
        %v6028 = vpack.c.b16 %v5998, %v5997
        %v6029 = vpack.c.b16 %v6000, %v5999
        %v6030 = vpack.c.b16 %v6002, %v6001
        %v6031 = vpack.c.b16 %v6004, %v6003
        %v6032 = vpack.c.b16 %v6006, %v6005
        %v6033 = vpack.c.b16 %v6008, %v6007
        %v6034 = vpack.c.b16 %v6010, %v6009
        %v6035 = vpack.c.b16 %v6012, %v6011
        %v6036 = vpack.c.b16 %v6014, %v6013
        %v6037 = vpack.c.b16 %v6016, %v6015
        %v6038 = vpack.c.b16 %v6018, %v6017
        %v6039 = vpack.c.b16 %v6020, %v6019
        %v6040 = vpack.c.b16 %v6022, %v6021
        %v6041 = vpack.c.b16 %v6024, %v6023
        %v6042 = vpack.c.b16 %v6026, %v6025
        %v6075 = vunpack.c.l.b16 %v5979
        %v6076 = vunpack.c.l.b16 %v5980
        %v6077 = vunpack.c.l.b16 %v5981
        %v6078 = vunpack.c.l.b16 %v5982
        %v6079 = vunpack.c.l.b16 %v5983
        %v6080 = vunpack.c.l.b16 %v5984
        %v6081 = vunpack.c.l.b16 %v5985
        %v6082 = vunpack.c.l.b16 %v5986
        %v6083 = vunpack.c.l.b16 %v5987
        %v6084 = vunpack.c.l.b16 %v5988
        %v6085 = vunpack.c.l.b16 %v5989
        %v6086 = vunpack.c.l.b16 %v5990
        %v6087 = vunpack.c.l.b16 %v5991
        %v6088 = vunpack.c.l.b16 %v5992
        %v6089 = vunpack.c.l.b16 %v5993
        %v6090 = vunpack.c.l.b16 %v5994
        %v6091 = vpack.c.b16 %v6076, %v6075
        %v6092 = vpack.c.b16 %v6078, %v6077
        %v6093 = vpack.c.b16 %v6080, %v6079
        %v6094 = vpack.c.b16 %v6082, %v6081
        %v6095 = vpack.c.b16 %v6084, %v6083
        %v6096 = vpack.c.b16 %v6086, %v6085
        %v6097 = vpack.c.b16 %v6088, %v6087
        %v6098 = vpack.c.b16 %v6090, %v6089
        %6107 = vmatprep.subr.bf16.mxu0 0
        %6108 = vmatpush1.bf16.msra.mxu0 %v6091
        %6109 = vmatprep.subr.bf16.mxu0 0
        %6110 = vmatpush1.bf16.msra.mxu0 %v6092
        %6111 = vmatprep.subr.bf16.mxu0 0
        %6112 = vmatpush1.bf16.msra.mxu0 %v6093
        %6113 = vmatprep.subr.bf16.mxu0 0
        %6114 = vmatpush1.bf16.msra.mxu0 %v6094
        %6115 = vmatprep.subr.bf16.mxu0 0
        %6116 = vmatpush1.bf16.msra.mxu0 %v6095
        %6117 = vmatprep.subr.bf16.mxu0 0
        %6118 = vmatpush1.bf16.msra.mxu0 %v6096
        %6119 = vmatprep.subr.bf16.mxu0 0
        %6120 = vmatpush1.bf16.msra.mxu0 %v6097
        %6121 = vmatprep.subr.bf16.mxu0 0
        %6122 = vmatpush1.bf16.msra.mxu0 %v6098
        %6123 = vmatprep.subr.bf16.mxu0 0
        %6124 = vmatpush1.bf16.msra.mxu0 0
        %6125 = vmatprep.subr.bf16.mxu0 0
        %6126 = vmatpush1.bf16.msra.mxu0 0
        %6127 = vmatprep.subr.bf16.mxu0 0
        %6128 = vmatpush1.bf16.msra.mxu0 0
        %6129 = vmatprep.subr.bf16.mxu0 0
        %6130 = vmatpush1.bf16.msra.mxu0 0
        %6131 = vmatprep.subr.bf16.mxu0 0
        %6132 = vmatpush1.bf16.msra.mxu0 0
        %6133 = vmatprep.subr.bf16.mxu0 0
        %6134 = vmatpush1.bf16.msra.mxu0 0
        %6135 = vmatprep.subr.bf16.mxu0 0
        %6136 = vmatpush1.bf16.msra.mxu0 0
        %6137 = vmatprep.subr.bf16.mxu0 0
        %6138 = vmatpush1.bf16.msra.mxu0 0
        %6139 = vmatprep.mubr.bf16.mxu0 0
        %6140 = vmatmul.mubr.bf16.gmra.mrb[0].mxu0 %v6027
        %v6141 = vpop.f32.mrb[0].mxu0
        %v6142 = vadd.f32 0.0, %v6141
        %v6143 = vpop.f32.mrb[0].mxu0
        %v6144 = vpop.f32.mrb[0].mxu0
        %v6145 = vadd.f32 0.0, %v6144
        %v6146 = vpop.f32.mrb[0].mxu0
        %6147 = vmatprep.mubr.bf16.mxu0 0
        %6148 = vmatmul.mubr.bf16.gmra.mrb[0].mxu0 %v6028
        %v6149 = vpop.f32.mrb[0].mxu0
        %v6150 = vadd.f32 0.0, %v6149
        %v6151 = vpop.f32.mrb[0].mxu0
        %v6152 = vpop.f32.mrb[0].mxu0
        %v6153 = vadd.f32 0.0, %v6152
        %v6154 = vpop.f32.mrb[0].mxu0
        %6155 = vmatprep.mubr.bf16.mxu0 0
        %6156 = vmatmul.mubr.bf16.gmra.mrb[0].mxu0 %v6029
        %v6157 = vpop.f32.mrb[0].mxu0
        %v6158 = vadd.f32 0.0, %v6157
        %v6159 = vpop.f32.mrb[0].mxu0
        %v6160 = vpop.f32.mrb[0].mxu0
        %v6161 = vadd.f32 0.0, %v6160
        %v6162 = vpop.f32.mrb[0].mxu0
        %6163 = vmatprep.mubr.bf16.mxu0 0
        %6164 = vmatmul.mubr.bf16.gmra.mrb[0].mxu0 %v6030
        %v6165 = vpop.f32.mrb[0].mxu0
        %v6166 = vadd.f32 0.0, %v6165
        %v6167 = vpop.f32.mrb[0].mxu0
        %v6168 = vpop.f32.mrb[0].mxu0
        %v6169 = vadd.f32 0.0, %v6168
        %v6170 = vpop.f32.mrb[0].mxu0
        %6171 = vmatprep.mubr.bf16.mxu0 0
        %6172 = vmatmul.mubr.bf16.gmra.mrb[0].mxu0 %v6031
        %v6173 = vpop.f32.mrb[0].mxu0
        %v6174 = vadd.f32 0.0, %v6173
        %v6175 = vpop.f32.mrb[0].mxu0
        %v6176 = vpop.f32.mrb[0].mxu0
        %v6177 = vadd.f32 0.0, %v6176
        %v6178 = vpop.f32.mrb[0].mxu0
        %6179 = vmatprep.mubr.bf16.mxu0 0
        %6180 = vmatmul.mubr.bf16.gmra.mrb[0].mxu0 %v6032
        %v6181 = vpop.f32.mrb[0].mxu0
        %v6182 = vadd.f32 0.0, %v6181
        %v6183 = vpop.f32.mrb[0].mxu0
        %v6184 = vpop.f32.mrb[0].mxu0
        %v6185 = vadd.f32 0.0, %v6184
        %v6186 = vpop.f32.mrb[0].mxu0
        %6187 = vmatprep.mubr.bf16.mxu0 0
        %6188 = vmatmul.mubr.bf16.gmra.mrb[0].mxu0 %v6033
        %v6189 = vpop.f32.mrb[0].mxu0
        %v6190 = vadd.f32 0.0, %v6189
        %v6191 = vpop.f32.mrb[0].mxu0
        %v6192 = vpop.f32.mrb[0].mxu0
        %v6193 = vadd.f32 0.0, %v6192
        %v6194 = vpop.f32.mrb[0].mxu0
        %6195 = vmatprep.mubr.bf16.mxu0 0
        %6196 = vmatmul.mubr.bf16.gmra.mrb[0].mxu0 %v6034
        %v6197 = vpop.f32.mrb[0].mxu0
        %v6198 = vadd.f32 0.0, %v6197
        %v6199 = vpop.f32.mrb[0].mxu0
        %v6200 = vpop.f32.mrb[0].mxu0
        %v6201 = vadd.f32 0.0, %v6200
        %v6202 = vpop.f32.mrb[0].mxu0
        %6203 = vmatprep.mubr.bf16.mxu0 0
        %6204 = vmatmul.mubr.bf16.gmra.mrb[0].mxu0 %v6035
        %v6205 = vpop.f32.mrb[0].mxu0
        %v6206 = vadd.f32 0.0, %v6205
        %v6207 = vpop.f32.mrb[0].mxu0
        %v6208 = vpop.f32.mrb[0].mxu0
        %v6209 = vadd.f32 0.0, %v6208
        %v6210 = vpop.f32.mrb[0].mxu0
        %6211 = vmatprep.mubr.bf16.mxu0 0
        %6212 = vmatmul.mubr.bf16.gmra.mrb[0].mxu0 %v6036
        %v6213 = vpop.f32.mrb[0].mxu0
        %v6214 = vadd.f32 0.0, %v6213
        %v6215 = vpop.f32.mrb[0].mxu0
        %v6216 = vpop.f32.mrb[0].mxu0
        %v6217 = vadd.f32 0.0, %v6216
        %v6218 = vpop.f32.mrb[0].mxu0
        %6219 = vmatprep.mubr.bf16.mxu0 0
        %6220 = vmatmul.mubr.bf16.gmra.mrb[0].mxu0 %v6037
        %v6221 = vpop.f32.mrb[0].mxu0
        %v6222 = vadd.f32 0.0, %v6221
        %v6223 = vpop.f32.mrb[0].mxu0
        %v6224 = vpop.f32.mrb[0].mxu0
        %v6225 = vadd.f32 0.0, %v6224
        %v6226 = vpop.f32.mrb[0].mxu0
        %6227 = vmatprep.mubr.bf16.mxu0 0
        %6228 = vmatmul.mubr.bf16.gmra.mrb[0].mxu0 %v6038
        %v6229 = vpop.f32.mrb[0].mxu0
        %v6230 = vadd.f32 0.0, %v6229
        %v6231 = vpop.f32.mrb[0].mxu0
        %v6232 = vpop.f32.mrb[0].mxu0
        %v6233 = vadd.f32 0.0, %v6232
        %v6234 = vpop.f32.mrb[0].mxu0
        %6235 = vmatprep.mubr.bf16.mxu0 0
        %6236 = vmatmul.mubr.bf16.gmra.mrb[0].mxu0 %v6039
        %v6237 = vpop.f32.mrb[0].mxu0
        %v6238 = vadd.f32 0.0, %v6237
        %v6239 = vpop.f32.mrb[0].mxu0
        %v6240 = vpop.f32.mrb[0].mxu0
        %v6241 = vadd.f32 0.0, %v6240
        %v6242 = vpop.f32.mrb[0].mxu0
        %6243 = vmatprep.mubr.bf16.mxu0 0
        %6244 = vmatmul.mubr.bf16.gmra.mrb[0].mxu0 %v6040
        %v6245 = vpop.f32.mrb[0].mxu0
        %v6246 = vadd.f32 0.0, %v6245
        %v6247 = vpop.f32.mrb[0].mxu0
        %v6248 = vpop.f32.mrb[0].mxu0
        %v6249 = vadd.f32 0.0, %v6248
        %v6250 = vpop.f32.mrb[0].mxu0
        %6251 = vmatprep.mubr.bf16.mxu0 0
        %6252 = vmatmul.mubr.bf16.gmra.mrb[0].mxu0 %v6041
        %v6253 = vpop.f32.mrb[0].mxu0
        %v6254 = vadd.f32 0.0, %v6253
        %v6255 = vpop.f32.mrb[0].mxu0
        %v6256 = vpop.f32.mrb[0].mxu0
        %v6257 = vadd.f32 0.0, %v6256
        %v6258 = vpop.f32.mrb[0].mxu0
        %6259 = vmatprep.mubr.bf16.mxu0 0
        %6260 = vmatmul.mubr.bf16.gmra.mrb[0].mxu0 %v6042
        %v6261 = vpop.f32.mrb[0].mxu0
        %v6262 = vadd.f32 0.0, %v6261
        %v6263 = vpop.f32.mrb[0].mxu0
        %v6264 = vpop.f32.mrb[0].mxu0
        %v6265 = vadd.f32 0.0, %v6264
        %v6266 = vpop.f32.mrb[0].mxu0
        %6267 = vdwg.mxu0
        %v6268 = vadd.f32 %v5771, %v6142
        %v6269 = vadd.f32 %v5772, %v6145
        %v6270 = vadd.f32 %v5773, %v6150
        %v6271 = vadd.f32 %v5774, %v6153
        %v6272 = vadd.f32 %v5775, %v6158
        %v6273 = vadd.f32 %v5776, %v6161
        %v6274 = vadd.f32 %v5777, %v6166
        %v6275 = vadd.f32 %v5778, %v6169
        %v6276 = vadd.f32 %v5779, %v6174
        %v6277 = vadd.f32 %v5780, %v6177
        %v6278 = vadd.f32 %v5781, %v6182
        %v6279 = vadd.f32 %v5782, %v6185
        %v6280 = vadd.f32 %v5783, %v6190
        %v6281 = vadd.f32 %v5784, %v6193
        %v6282 = vadd.f32 %v5785, %v6198
        %v6283 = vadd.f32 %v5786, %v6201
        %v6284 = vadd.f32 %v5787, %v6206
        %v6285 = vadd.f32 %v5788, %v6209
        %v6286 = vadd.f32 %v5789, %v6214
        %v6287 = vadd.f32 %v5790, %v6217
        %v6288 = vadd.f32 %v5791, %v6222
        %v6289 = vadd.f32 %v5792, %v6225
        %v6290 = vadd.f32 %v5793, %v6230
        %v6291 = vadd.f32 %v5794, %v6233
        %v6292 = vadd.f32 %v5795, %v6238
        %v6293 = vadd.f32 %v5796, %v6241
        %v6294 = vadd.f32 %v5797, %v6246
        %v6295 = vadd.f32 %v5798, %v6249
        %v6296 = vadd.f32 %v5799, %v6254
        %v6297 = vadd.f32 %v5800, %v6257
        %v6298 = vadd.f32 %v5801, %v6262
        %v6299 = vadd.f32 %v5802, %v6265
        %v6300 = vld [vmem:[%s5] sm:$0x1]
        %v6302 = vlaneseq
        %v6303 = vshrl.u32 %v6302, 7
        %v6304 = vsub.s32 0, %v6303
        %v6305 = vrot.slane %v6300, %v6304
        %v6307 = vadd.f32 %v6268, %v6305
        %v6308 = vadd.f32 %v6269, %v6305
        %v6309 = vadd.f32 %v6270, %v6305
        %v6310 = vadd.f32 %v6271, %v6305
        %v6311 = vadd.f32 %v6272, %v6305
        %v6312 = vadd.f32 %v6273, %v6305
        %v6313 = vadd.f32 %v6274, %v6305
        %v6314 = vadd.f32 %v6275, %v6305
        %v6315 = vadd.f32 %v6276, %v6305
        %v6316 = vadd.f32 %v6277, %v6305
        %v6317 = vadd.f32 %v6278, %v6305
        %v6318 = vadd.f32 %v6279, %v6305
        %v6319 = vadd.f32 %v6280, %v6305
        %v6320 = vadd.f32 %v6281, %v6305
        %v6321 = vadd.f32 %v6282, %v6305
        %v6322 = vadd.f32 %v6283, %v6305
        %v6323 = vadd.f32 %v6284, %v6305
        %v6324 = vadd.f32 %v6285, %v6305
        %v6325 = vadd.f32 %v6286, %v6305
        %v6326 = vadd.f32 %v6287, %v6305
        %v6327 = vadd.f32 %v6288, %v6305
        %v6328 = vadd.f32 %v6289, %v6305
        %v6329 = vadd.f32 %v6290, %v6305
        %v6330 = vadd.f32 %v6291, %v6305
        %v6331 = vadd.f32 %v6292, %v6305
        %v6332 = vadd.f32 %v6293, %v6305
        %v6333 = vadd.f32 %v6294, %v6305
        %v6334 = vadd.f32 %v6295, %v6305
        %v6335 = vadd.f32 %v6296, %v6305
        %v6336 = vadd.f32 %v6297, %v6305
        %v6337 = vadd.f32 %v6298, %v6305
        %v6338 = vadd.f32 %v6299, %v6305
        %v6339 = vmax.f32 %v6307, 0.0
        %v6340 = vmax.f32 %v6308, 0.0
        %v6341 = vmax.f32 %v6309, 0.0
        %v6342 = vmax.f32 %v6310, 0.0
        %v6343 = vmax.f32 %v6311, 0.0
        %v6344 = vmax.f32 %v6312, 0.0
        %v6345 = vmax.f32 %v6313, 0.0
        %v6346 = vmax.f32 %v6314, 0.0
        %v6347 = vmax.f32 %v6315, 0.0
        %v6348 = vmax.f32 %v6316, 0.0
        %v6349 = vmax.f32 %v6317, 0.0
        %v6350 = vmax.f32 %v6318, 0.0
        %v6351 = vmax.f32 %v6319, 0.0
        %v6352 = vmax.f32 %v6320, 0.0
        %v6353 = vmax.f32 %v6321, 0.0
        %v6354 = vmax.f32 %v6322, 0.0
        %v6355 = vmax.f32 %v6323, 0.0
        %v6356 = vmax.f32 %v6324, 0.0
        %v6357 = vmax.f32 %v6325, 0.0
        %v6358 = vmax.f32 %v6326, 0.0
        %v6359 = vmax.f32 %v6327, 0.0
        %v6360 = vmax.f32 %v6328, 0.0
        %v6361 = vmax.f32 %v6329, 0.0
        %v6362 = vmax.f32 %v6330, 0.0
        %v6363 = vmax.f32 %v6331, 0.0
        %v6364 = vmax.f32 %v6332, 0.0
        %v6365 = vmax.f32 %v6333, 0.0
        %v6366 = vmax.f32 %v6334, 0.0
        %v6367 = vmax.f32 %v6335, 0.0
        %v6368 = vmax.f32 %v6336, 0.0
        %v6369 = vmax.f32 %v6337, 0.0
        %v6370 = vmax.f32 %v6338, 0.0
        %v6371 = vld [vmem:[%s6] sm:$0x1]
        %v6373 = vlaneseq
        %v6374 = vshrl.u32 %v6373, 7
        %v6375 = vsub.s32 0, %v6374
        %v6376 = vrot.slane %v6371, %v6375
        %v6378 = vadd.f32 %v6339, %v6376
        %v6379 = vadd.f32 %v6340, %v6376
        %v6380 = vadd.f32 %v6341, %v6376
        %v6381 = vadd.f32 %v6342, %v6376
        %v6382 = vadd.f32 %v6343, %v6376
        %v6383 = vadd.f32 %v6344, %v6376
        %v6384 = vadd.f32 %v6345, %v6376
        %v6385 = vadd.f32 %v6346, %v6376
        %v6386 = vadd.f32 %v6347, %v6376
        %v6387 = vadd.f32 %v6348, %v6376
        %v6388 = vadd.f32 %v6349, %v6376
        %v6389 = vadd.f32 %v6350, %v6376
        %v6390 = vadd.f32 %v6351, %v6376
        %v6391 = vadd.f32 %v6352, %v6376
        %v6392 = vadd.f32 %v6353, %v6376
        %v6393 = vadd.f32 %v6354, %v6376
        %v6394 = vadd.f32 %v6355, %v6376
        %v6395 = vadd.f32 %v6356, %v6376
        %v6396 = vadd.f32 %v6357, %v6376
        %v6397 = vadd.f32 %v6358, %v6376
        %v6398 = vadd.f32 %v6359, %v6376
        %v6399 = vadd.f32 %v6360, %v6376
        %v6400 = vadd.f32 %v6361, %v6376
        %v6401 = vadd.f32 %v6362, %v6376
        %v6402 = vadd.f32 %v6363, %v6376
        %v6403 = vadd.f32 %v6364, %v6376
        %v6404 = vadd.f32 %v6365, %v6376
        %v6405 = vadd.f32 %v6366, %v6376
        %v6406 = vadd.f32 %v6367, %v6376
        %v6407 = vadd.f32 %v6368, %v6376
        %v6408 = vadd.f32 %v6369, %v6376
        %v6409 = vadd.f32 %v6370, %v6376
        %v6410 = vpack.c.bf16 %v6379, %v6378
        %v6411 = vpack.c.bf16 %v6381, %v6380
        %v6412 = vpack.c.bf16 %v6383, %v6382
        %v6413 = vpack.c.bf16 %v6385, %v6384
        %v6414 = vpack.c.bf16 %v6387, %v6386
        %v6415 = vpack.c.bf16 %v6389, %v6388
        %v6416 = vpack.c.bf16 %v6391, %v6390
        %v6417 = vpack.c.bf16 %v6393, %v6392
        %v6418 = vpack.c.bf16 %v6395, %v6394
        %v6419 = vpack.c.bf16 %v6397, %v6396
        %v6420 = vpack.c.bf16 %v6399, %v6398
        %v6421 = vpack.c.bf16 %v6401, %v6400
        %v6422 = vpack.c.bf16 %v6403, %v6402
        %v6423 = vpack.c.bf16 %v6405, %v6404
        %v6424 = vpack.c.bf16 %v6407, %v6406
        %v6425 = vpack.c.bf16 %v6409, %v6408
        %v6442 = vunpack.c.l.b16 %v6410
        %v6443 = vunpack.c.h.b16 %v6410
        %v6444 = vunpack.c.l.b16 %v6411
        %v6445 = vunpack.c.h.b16 %v6411
        %v6446 = vunpack.c.l.b16 %v6412
        %v6447 = vunpack.c.h.b16 %v6412
        %v6448 = vunpack.c.l.b16 %v6413
        %v6449 = vunpack.c.h.b16 %v6413
        %v6450 = vunpack.c.l.b16 %v6414
        %v6451 = vunpack.c.h.b16 %v6414
        %v6452 = vunpack.c.l.b16 %v6415
        %v6453 = vunpack.c.h.b16 %v6415
        %v6454 = vunpack.c.l.b16 %v6416
        %v6455 = vunpack.c.h.b16 %v6416
        %v6456 = vunpack.c.l.b16 %v6417
        %v6457 = vunpack.c.h.b16 %v6417
        %v6458 = vunpack.c.l.b16 %v6418
        %v6459 = vunpack.c.h.b16 %v6418
        %v6460 = vunpack.c.l.b16 %v6419
        %v6461 = vunpack.c.h.b16 %v6419
        %v6462 = vunpack.c.l.b16 %v6420
        %v6463 = vunpack.c.h.b16 %v6420
        %v6464 = vunpack.c.l.b16 %v6421
        %v6465 = vunpack.c.h.b16 %v6421
        %v6466 = vunpack.c.l.b16 %v6422
        %v6467 = vunpack.c.h.b16 %v6422
        %v6468 = vunpack.c.l.b16 %v6423
        %v6469 = vunpack.c.h.b16 %v6423
        %v6470 = vunpack.c.l.b16 %v6424
        %v6471 = vunpack.c.h.b16 %v6424
        %v6472 = vunpack.c.l.b16 %v6425
        %v6473 = vunpack.c.h.b16 %v6425
        %v6474 = vpack.c.b16 %v6442, %v6442
        %v6475 = vpack.c.b16 %v6443, %v6443
        %v6476 = vpack.c.b16 %v6444, %v6444
        %v6477 = vpack.c.b16 %v6445, %v6445
        %v6478 = vpack.c.b16 %v6446, %v6446
        %v6479 = vpack.c.b16 %v6447, %v6447
        %v6480 = vpack.c.b16 %v6448, %v6448
        %v6481 = vpack.c.b16 %v6449, %v6449
        %v6482 = vpack.c.b16 %v6450, %v6450
        %v6483 = vpack.c.b16 %v6451, %v6451
        %v6484 = vpack.c.b16 %v6452, %v6452
        %v6485 = vpack.c.b16 %v6453, %v6453
        %v6486 = vpack.c.b16 %v6454, %v6454
        %v6487 = vpack.c.b16 %v6455, %v6455
        %v6488 = vpack.c.b16 %v6456, %v6456
        %v6489 = vpack.c.b16 %v6457, %v6457
        %v6490 = vpack.c.b16 %v6458, %v6458
        %v6491 = vpack.c.b16 %v6459, %v6459
        %v6492 = vpack.c.b16 %v6460, %v6460
        %v6493 = vpack.c.b16 %v6461, %v6461
        %v6494 = vpack.c.b16 %v6462, %v6462
        %v6495 = vpack.c.b16 %v6463, %v6463
        %v6496 = vpack.c.b16 %v6464, %v6464
        %v6497 = vpack.c.b16 %v6465, %v6465
        %v6498 = vpack.c.b16 %v6466, %v6466
        %v6499 = vpack.c.b16 %v6467, %v6467
        %v6500 = vpack.c.b16 %v6468, %v6468
        %v6501 = vpack.c.b16 %v6469, %v6469
        %v6502 = vpack.c.b16 %v6470, %v6470
        %v6503 = vpack.c.b16 %v6471, %v6471
        %v6504 = vpack.c.b16 %v6472, %v6472
        %v6505 = vpack.c.b16 %v6473, %v6473
        %v6507 = vshrl.u32 %v6474, 16
        %v6509 = vrot.slane %v6507, 7
        %v6510 = vshll.u32 %v6474, 16
        %v6512 = vor.u32 %v6509, %v6510
        %v6513 = vrot.slane %v6509, 4
        %v6515 = vshrl.u32 %v6475, 16
        %v6517 = vrot.slane %v6515, 7
        %v6518 = vshll.u32 %v6475, 16
        %v6520 = vor.u32 %v6517, %v6518
        %v6521 = vsel %vm1065, %v6513, %v6520
        %v6522 = vrot.slane %v6517, 4
        %v6524 = vshrl.u32 %v6476, 16
        %v6526 = vrot.slane %v6524, 7
        %v6527 = vshll.u32 %v6476, 16
        %v6529 = vor.u32 %v6526, %v6527
        %v6530 = vrot.slane %v6526, 4
        %v6532 = vshrl.u32 %v6477, 16
        %v6534 = vrot.slane %v6532, 7
        %v6535 = vshll.u32 %v6477, 16
        %v6537 = vor.u32 %v6534, %v6535
        %v6538 = vsel %vm1065, %v6530, %v6537
        %v6539 = vrot.slane %v6534, 4
        %v6541 = vshrl.u32 %v6478, 16
        %v6543 = vrot.slane %v6541, 7
        %v6544 = vshll.u32 %v6478, 16
        %v6546 = vor.u32 %v6543, %v6544
        %v6547 = vrot.slane %v6543, 4
        %v6549 = vshrl.u32 %v6479, 16
        %v6551 = vrot.slane %v6549, 7
        %v6552 = vshll.u32 %v6479, 16
        %v6554 = vor.u32 %v6551, %v6552
        %v6555 = vsel %vm1065, %v6547, %v6554
        %v6556 = vrot.slane %v6551, 4
        %v6558 = vshrl.u32 %v6480, 16
        %v6560 = vrot.slane %v6558, 7
        %v6561 = vshll.u32 %v6480, 16
        %v6563 = vor.u32 %v6560, %v6561
        %v6564 = vrot.slane %v6560, 4
        %v6566 = vshrl.u32 %v6481, 16
        %v6568 = vrot.slane %v6566, 7
        %v6569 = vshll.u32 %v6481, 16
        %v6571 = vor.u32 %v6568, %v6569
        %v6572 = vsel %vm1065, %v6564, %v6571
        %v6573 = vrot.slane %v6568, 4
        %v6575 = vshrl.u32 %v6482, 16
        %v6577 = vrot.slane %v6575, 7
        %v6578 = vshll.u32 %v6482, 16
        %v6580 = vor.u32 %v6577, %v6578
        %v6581 = vrot.slane %v6577, 4
        %v6583 = vshrl.u32 %v6483, 16
        %v6585 = vrot.slane %v6583, 7
        %v6586 = vshll.u32 %v6483, 16
        %v6588 = vor.u32 %v6585, %v6586
        %v6589 = vsel %vm1065, %v6581, %v6588
        %v6590 = vrot.slane %v6585, 4
        %v6592 = vshrl.u32 %v6484, 16
        %v6594 = vrot.slane %v6592, 7
        %v6595 = vshll.u32 %v6484, 16
        %v6597 = vor.u32 %v6594, %v6595
        %v6598 = vrot.slane %v6594, 4
        %v6600 = vshrl.u32 %v6485, 16
        %v6602 = vrot.slane %v6600, 7
        %v6603 = vshll.u32 %v6485, 16
        %v6605 = vor.u32 %v6602, %v6603
        %v6606 = vsel %vm1065, %v6598, %v6605
        %v6607 = vrot.slane %v6602, 4
        %v6609 = vshrl.u32 %v6486, 16
        %v6611 = vrot.slane %v6609, 7
        %v6612 = vshll.u32 %v6486, 16
        %v6614 = vor.u32 %v6611, %v6612
        %v6615 = vrot.slane %v6611, 4
        %v6617 = vshrl.u32 %v6487, 16
        %v6619 = vrot.slane %v6617, 7
        %v6620 = vshll.u32 %v6487, 16
        %v6622 = vor.u32 %v6619, %v6620
        %v6623 = vsel %vm1065, %v6615, %v6622
        %v6624 = vrot.slane %v6619, 4
        %v6626 = vshrl.u32 %v6488, 16
        %v6628 = vrot.slane %v6626, 7
        %v6629 = vshll.u32 %v6488, 16
        %v6631 = vor.u32 %v6628, %v6629
        %v6632 = vrot.slane %v6628, 4
        %v6634 = vshrl.u32 %v6489, 16
        %v6636 = vrot.slane %v6634, 7
        %v6637 = vshll.u32 %v6489, 16
        %v6639 = vor.u32 %v6636, %v6637
        %v6640 = vsel %vm1065, %v6632, %v6639
        %v6641 = vrot.slane %v6636, 4
        %v6643 = vshrl.u32 %v6490, 16
        %v6645 = vrot.slane %v6643, 7
        %v6646 = vshll.u32 %v6490, 16
        %v6648 = vor.u32 %v6645, %v6646
        %v6649 = vrot.slane %v6645, 4
        %v6651 = vshrl.u32 %v6491, 16
        %v6653 = vrot.slane %v6651, 7
        %v6654 = vshll.u32 %v6491, 16
        %v6656 = vor.u32 %v6653, %v6654
        %v6657 = vsel %vm1065, %v6649, %v6656
        %v6658 = vrot.slane %v6653, 4
        %v6660 = vshrl.u32 %v6492, 16
        %v6662 = vrot.slane %v6660, 7
        %v6663 = vshll.u32 %v6492, 16
        %v6665 = vor.u32 %v6662, %v6663
        %v6666 = vrot.slane %v6662, 4
        %v6668 = vshrl.u32 %v6493, 16
        %v6670 = vrot.slane %v6668, 7
        %v6671 = vshll.u32 %v6493, 16
        %v6673 = vor.u32 %v6670, %v6671
        %v6674 = vsel %vm1065, %v6666, %v6673
        %v6675 = vrot.slane %v6670, 4
        %v6677 = vshrl.u32 %v6494, 16
        %v6679 = vrot.slane %v6677, 7
        %v6680 = vshll.u32 %v6494, 16
        %v6682 = vor.u32 %v6679, %v6680
        %v6683 = vrot.slane %v6679, 4
        %v6685 = vshrl.u32 %v6495, 16
        %v6687 = vrot.slane %v6685, 7
        %v6688 = vshll.u32 %v6495, 16
        %v6690 = vor.u32 %v6687, %v6688
        %v6691 = vsel %vm1065, %v6683, %v6690
        %v6692 = vrot.slane %v6687, 4
        %v6694 = vshrl.u32 %v6496, 16
        %v6696 = vrot.slane %v6694, 7
        %v6697 = vshll.u32 %v6496, 16
        %v6699 = vor.u32 %v6696, %v6697
        %v6700 = vrot.slane %v6696, 4
        %v6702 = vshrl.u32 %v6497, 16
        %v6704 = vrot.slane %v6702, 7
        %v6705 = vshll.u32 %v6497, 16
        %v6707 = vor.u32 %v6704, %v6705
        %v6708 = vsel %vm1065, %v6700, %v6707
        %v6709 = vrot.slane %v6704, 4
        %v6711 = vshrl.u32 %v6498, 16
        %v6713 = vrot.slane %v6711, 7
        %v6714 = vshll.u32 %v6498, 16
        %v6716 = vor.u32 %v6713, %v6714
        %v6717 = vrot.slane %v6713, 4
        %v6719 = vshrl.u32 %v6499, 16
        %v6721 = vrot.slane %v6719, 7
        %v6722 = vshll.u32 %v6499, 16
        %v6724 = vor.u32 %v6721, %v6722
        %v6725 = vsel %vm1065, %v6717, %v6724
        %v6726 = vrot.slane %v6721, 4
        %v6728 = vshrl.u32 %v6500, 16
        %v6730 = vrot.slane %v6728, 7
        %v6731 = vshll.u32 %v6500, 16
        %v6733 = vor.u32 %v6730, %v6731
        %v6734 = vrot.slane %v6730, 4
        %v6736 = vshrl.u32 %v6501, 16
        %v6738 = vrot.slane %v6736, 7
        %v6739 = vshll.u32 %v6501, 16
        %v6741 = vor.u32 %v6738, %v6739
        %v6742 = vsel %vm1065, %v6734, %v6741
        %v6743 = vrot.slane %v6738, 4
        %v6745 = vshrl.u32 %v6502, 16
        %v6747 = vrot.slane %v6745, 7
        %v6748 = vshll.u32 %v6502, 16
        %v6750 = vor.u32 %v6747, %v6748
        %v6751 = vrot.slane %v6747, 4
        %v6753 = vshrl.u32 %v6503, 16
        %v6755 = vrot.slane %v6753, 7
        %v6756 = vshll.u32 %v6503, 16
        %v6758 = vor.u32 %v6755, %v6756
        %v6759 = vsel %vm1065, %v6751, %v6758
        %v6760 = vrot.slane %v6755, 4
        %v6762 = vshrl.u32 %v6504, 16
        %v6764 = vrot.slane %v6762, 7
        %v6765 = vshll.u32 %v6504, 16
        %v6767 = vor.u32 %v6764, %v6765
        %v6768 = vrot.slane %v6764, 4
        %v6770 = vshrl.u32 %v6505, 16
        %v6772 = vrot.slane %v6770, 7
        %v6773 = vshll.u32 %v6505, 16
        %v6775 = vor.u32 %v6772, %v6773
        %v6776 = vsel %vm1065, %v6768, %v6775
        %v6777 = vrot.slane %v6772, 4
        %v6826 = vsel %vm1387, %v6512, %v3414
        %6827 = vst [vmem:[%s866] sm:$0xf] %v6826
        %6828 = vst [vmem:[%s866 + $0x4] sm:$0xf] %v6521
        %v6829 = vld [vmem:[%s866 + $0x8] sm:$0x1]
        %v6830 = vsel %vm869, %v6522, %v6829
        %6831 = vst [vmem:[%s866 + $0x8] sm:$0x1] %v6830
        %v6832 = vld [vmem:[%s866 + $0xc] sm:$0xf]
        %v6833 = vsel %vm1387, %v6529, %v6832
        %6834 = vst [vmem:[%s866 + $0xc] sm:$0xf] %v6833
        %6835 = vst [vmem:[%s866 + $0x10] sm:$0xf] %v6538
        %v6836 = vld [vmem:[%s866 + $0x14] sm:$0x1]
        %v6837 = vsel %vm869, %v6539, %v6836
        %6838 = vst [vmem:[%s866 + $0x14] sm:$0x1] %v6837
        %v6839 = vld [vmem:[%s866 + $0x18] sm:$0xf]
        %v6840 = vsel %vm1387, %v6546, %v6839
        %6841 = vst [vmem:[%s866 + $0x18] sm:$0xf] %v6840
        %6842 = vst [vmem:[%s866 + $0x1c] sm:$0xf] %v6555
        %v6843 = vld [vmem:[%s866 + $0x20] sm:$0x1]
        %v6844 = vsel %vm869, %v6556, %v6843
        %6845 = vst [vmem:[%s866 + $0x20] sm:$0x1] %v6844
        %v6846 = vld [vmem:[%s866 + $0x24] sm:$0xf]
        %v6847 = vsel %vm1387, %v6563, %v6846
        %6848 = vst [vmem:[%s866 + $0x24] sm:$0xf] %v6847
        %6849 = vst [vmem:[%s866 + $0x28] sm:$0xf] %v6572
        %v6850 = vld [vmem:[%s866 + $0x2c] sm:$0x1]
        %v6851 = vsel %vm869, %v6573, %v6850
        %6852 = vst [vmem:[%s866 + $0x2c] sm:$0x1] %v6851
        %v6853 = vld [vmem:[%s866 + $0x30] sm:$0xf]
        %v6854 = vsel %vm1387, %v6580, %v6853
        %6855 = vst [vmem:[%s866 + $0x30] sm:$0xf] %v6854
        %6856 = vst [vmem:[%s866 + $0x34] sm:$0xf] %v6589
        %v6857 = vld [vmem:[%s866 + $0x38] sm:$0x1]
        %v6858 = vsel %vm869, %v6590, %v6857
        %6859 = vst [vmem:[%s866 + $0x38] sm:$0x1] %v6858
        %v6860 = vld [vmem:[%s866 + $0x3c] sm:$0xf]
        %v6861 = vsel %vm1387, %v6597, %v6860
        %6862 = vst [vmem:[%s866 + $0x3c] sm:$0xf] %v6861
        %6863 = vst [vmem:[%s866 + $0x40] sm:$0xf] %v6606
        %v6864 = vld [vmem:[%s866 + $0x44] sm:$0x1]
        %v6865 = vsel %vm869, %v6607, %v6864
        %6866 = vst [vmem:[%s866 + $0x44] sm:$0x1] %v6865
        %v6867 = vld [vmem:[%s866 + $0x48] sm:$0xf]
        %v6868 = vsel %vm1387, %v6614, %v6867
        %6869 = vst [vmem:[%s866 + $0x48] sm:$0xf] %v6868
        %6870 = vst [vmem:[%s866 + $0x4c] sm:$0xf] %v6623
        %v6871 = vld [vmem:[%s866 + $0x50] sm:$0x1]
        %v6872 = vsel %vm869, %v6624, %v6871
        %6873 = vst [vmem:[%s866 + $0x50] sm:$0x1] %v6872
        %v6874 = vld [vmem:[%s866 + $0x54] sm:$0xf]
        %v6875 = vsel %vm1387, %v6631, %v6874
        %6876 = vst [vmem:[%s866 + $0x54] sm:$0xf] %v6875
        %6877 = vst [vmem:[%s866 + $0x58] sm:$0xf] %v6640
        %v6878 = vld [vmem:[%s866 + $0x5c] sm:$0x1]
        %v6879 = vsel %vm869, %v6641, %v6878
        %6880 = vst [vmem:[%s866 + $0x5c] sm:$0x1] %v6879
        %v6881 = vld [vmem:[%s866 + $0x60] sm:$0xf]
        %v6882 = vsel %vm1387, %v6648, %v6881
        %6883 = vst [vmem:[%s866 + $0x60] sm:$0xf] %v6882
        %6884 = vst [vmem:[%s866 + $0x64] sm:$0xf] %v6657
        %v6885 = vld [vmem:[%s866 + $0x68] sm:$0x1]
        %v6886 = vsel %vm869, %v6658, %v6885
        %6887 = vst [vmem:[%s866 + $0x68] sm:$0x1] %v6886
        %v6888 = vld [vmem:[%s866 + $0x6c] sm:$0xf]
        %v6889 = vsel %vm1387, %v6665, %v6888
        %6890 = vst [vmem:[%s866 + $0x6c] sm:$0xf] %v6889
        %6891 = vst [vmem:[%s866 + $0x70] sm:$0xf] %v6674
        %v6892 = vld [vmem:[%s866 + $0x74] sm:$0x1]
        %v6893 = vsel %vm869, %v6675, %v6892
        %6894 = vst [vmem:[%s866 + $0x74] sm:$0x1] %v6893
        %v6895 = vld [vmem:[%s866 + $0x78] sm:$0xf]
        %v6896 = vsel %vm1387, %v6682, %v6895
        %6897 = vst [vmem:[%s866 + $0x78] sm:$0xf] %v6896
        %6898 = vst [vmem:[%s866 + $0x7c] sm:$0xf] %v6691
        %v6899 = vld [vmem:[%s866 + $0x80] sm:$0x1]
        %v6900 = vsel %vm869, %v6692, %v6899
        %6901 = vst [vmem:[%s866 + $0x80] sm:$0x1] %v6900
        %v6902 = vld [vmem:[%s866 + $0x84] sm:$0xf]
        %v6903 = vsel %vm1387, %v6699, %v6902
        %6904 = vst [vmem:[%s866 + $0x84] sm:$0xf] %v6903
        %6905 = vst [vmem:[%s866 + $0x88] sm:$0xf] %v6708
        %v6906 = vld [vmem:[%s866 + $0x8c] sm:$0x1]
        %v6907 = vsel %vm869, %v6709, %v6906
        %6908 = vst [vmem:[%s866 + $0x8c] sm:$0x1] %v6907
        %v6909 = vld [vmem:[%s866 + $0x90] sm:$0xf]
        %v6910 = vsel %vm1387, %v6716, %v6909
        %6911 = vst [vmem:[%s866 + $0x90] sm:$0xf] %v6910
        %6912 = vst [vmem:[%s866 + $0x94] sm:$0xf] %v6725
        %v6913 = vld [vmem:[%s866 + $0x98] sm:$0x1]
        %v6914 = vsel %vm869, %v6726, %v6913
        %6915 = vst [vmem:[%s866 + $0x98] sm:$0x1] %v6914
        %v6916 = vld [vmem:[%s866 + $0x9c] sm:$0xf]
        %v6917 = vsel %vm1387, %v6733, %v6916
        %6918 = vst [vmem:[%s866 + $0x9c] sm:$0xf] %v6917
        %6919 = vst [vmem:[%s866 + $0xa0] sm:$0xf] %v6742
        %v6920 = vld [vmem:[%s866 + $0xa4] sm:$0x1]
        %v6921 = vsel %vm869, %v6743, %v6920
        %6922 = vst [vmem:[%s866 + $0xa4] sm:$0x1] %v6921
        %v6923 = vld [vmem:[%s866 + $0xa8] sm:$0xf]
        %v6924 = vsel %vm1387, %v6750, %v6923
        %6925 = vst [vmem:[%s866 + $0xa8] sm:$0xf] %v6924
        %6926 = vst [vmem:[%s866 + $0xac] sm:$0xf] %v6759
        %v6927 = vld [vmem:[%s866 + $0xb0] sm:$0x1]
        %v6928 = vsel %vm869, %v6760, %v6927
        %6929 = vst [vmem:[%s866 + $0xb0] sm:$0x1] %v6928
        %v6930 = vld [vmem:[%s866 + $0xb4] sm:$0xf]
        %v6931 = vsel %vm1387, %v6767, %v6930
        %6932 = vst [vmem:[%s866 + $0xb4] sm:$0xf] %v6931
        %6933 = vst [vmem:[%s866 + $0xb8] sm:$0xf] %v6776
        %v6934 = vld [vmem:[%s866 + $0xbc] sm:$0x1]
        %v6935 = vsel %vm869, %v6777, %v6934
        %6936 = vst [vmem:[%s866 + $0xbc] sm:$0x1] %v6935
        %v6937 = vld [vmem:[#allocation2] sm:$0xf]
        %v6938 = vld [vmem:[#allocation2 + $0x4] sm:$0xf]
        %v6939 = vld [vmem:[#allocation2 + $0xc] sm:$0xf]
        %v6940 = vld [vmem:[#allocation2 + $0x10] sm:$0xf]
        %v6941 = vld [vmem:[#allocation2 + $0x18] sm:$0xf]
        %v6942 = vld [vmem:[#allocation2 + $0x1c] sm:$0xf]
        %v6943 = vld [vmem:[#allocation2 + $0x24] sm:$0xf]
        %v6944 = vld [vmem:[#allocation2 + $0x28] sm:$0xf]
        %v6945 = vld [vmem:[#allocation2 + $0x30] sm:$0xf]
        %v6946 = vld [vmem:[#allocation2 + $0x34] sm:$0xf]
        %v6947 = vld [vmem:[#allocation2 + $0x3c] sm:$0xf]
        %v6948 = vld [vmem:[#allocation2 + $0x40] sm:$0xf]
        %v6949 = vld [vmem:[#allocation2 + $0x48] sm:$0xf]
        %v6950 = vld [vmem:[#allocation2 + $0x4c] sm:$0xf]
        %v6951 = vld [vmem:[#allocation2 + $0x54] sm:$0xf]
        %v6952 = vld [vmem:[#allocation2 + $0x58] sm:$0xf]
        %v6953 = vld [vmem:[#allocation2 + $0x60] sm:$0xf]
        %v6954 = vld [vmem:[#allocation2 + $0x64] sm:$0xf]
        %v6955 = vld [vmem:[#allocation2 + $0x6c] sm:$0xf]
        %v6956 = vld [vmem:[#allocation2 + $0x70] sm:$0xf]
        %v6957 = vld [vmem:[#allocation2 + $0x78] sm:$0xf]
        %v6958 = vld [vmem:[#allocation2 + $0x7c] sm:$0xf]
        %v6959 = vld [vmem:[#allocation2 + $0x84] sm:$0xf]
        %v6960 = vld [vmem:[#allocation2 + $0x88] sm:$0xf]
        %v6961 = vld [vmem:[#allocation2 + $0x90] sm:$0xf]
        %v6962 = vld [vmem:[#allocation2 + $0x94] sm:$0xf]
        %v6963 = vld [vmem:[#allocation2 + $0x9c] sm:$0xf]
        %v6964 = vld [vmem:[#allocation2 + $0xa0] sm:$0xf]
        %v6965 = vld [vmem:[#allocation2 + $0xa8] sm:$0xf]
        %v6966 = vld [vmem:[#allocation2 + $0xac] sm:$0xf]
        %v6967 = vld [vmem:[#allocation2 + $0xb4] sm:$0xf]
        %v6968 = vld [vmem:[#allocation2 + $0xb8] sm:$0xf]
        %v6969 = vld [vmem:[%s7] sm:$0xf]
        %v6970 = vld [vmem:[%s7 + $0x4] sm:$0xf]
        %v6971 = vld [vmem:[%s7 + $0x8] sm:$0xf]
        %v6972 = vld [vmem:[%s7 + $0xc] sm:$0xf]
        %v6973 = vld [vmem:[%s7 + $0x10] sm:$0xf]
        %v6974 = vld [vmem:[%s7 + $0x14] sm:$0xf]
        %v6975 = vld [vmem:[%s7 + $0x18] sm:$0xf]
        %v6976 = vld [vmem:[%s7 + $0x1c] sm:$0xf]
        %v6977 = vld [vmem:[%s7 + $0x20] sm:$0xf]
        %v6978 = vld [vmem:[%s7 + $0x24] sm:$0xf]
        %v6979 = vld [vmem:[%s7 + $0x28] sm:$0xf]
        %v6980 = vld [vmem:[%s7 + $0x2c] sm:$0xf]
        %v6981 = vld [vmem:[%s7 + $0x30] sm:$0xf]
        %v6982 = vld [vmem:[%s7 + $0x34] sm:$0xf]
        %v6983 = vld [vmem:[%s7 + $0x38] sm:$0xf]
        %v6984 = vld [vmem:[%s7 + $0x3c] sm:$0xf]
        %v6985 = vld [vmem:[#allocation2 + $0x8] sm:$0x1]
        %v6986 = vld [vmem:[#allocation2 + $0x14] sm:$0x1]
        %v6987 = vld [vmem:[#allocation2 + $0x20] sm:$0x1]
        %v6988 = vld [vmem:[#allocation2 + $0x2c] sm:$0x1]
        %v6989 = vld [vmem:[#allocation2 + $0x38] sm:$0x1]
        %v6990 = vld [vmem:[#allocation2 + $0x44] sm:$0x1]
        %v6991 = vld [vmem:[#allocation2 + $0x50] sm:$0x1]
        %v6992 = vld [vmem:[#allocation2 + $0x5c] sm:$0x1]
        %v6993 = vld [vmem:[#allocation2 + $0x68] sm:$0x1]
        %v6994 = vld [vmem:[#allocation2 + $0x74] sm:$0x1]
        %v6995 = vld [vmem:[#allocation2 + $0x80] sm:$0x1]
        %v6996 = vld [vmem:[#allocation2 + $0x8c] sm:$0x1]
        %v6997 = vld [vmem:[#allocation2 + $0x98] sm:$0x1]
        %v6998 = vld [vmem:[#allocation2 + $0xa4] sm:$0x1]
        %v6999 = vld [vmem:[#allocation2 + $0xb0] sm:$0x1]
        %v7000 = vld [vmem:[#allocation2 + $0xbc] sm:$0x1]
        %v7002 = vshrl.u32 %v6937, 16
        %v7004 = vrot.slane %v7002, 4
        %v7005 = vshll.u32 %v6937, 16
        %v7007 = vrot.slane %v7005, 5
        %v7008 = vor.u32 %v7004, %v7007
        %v7009 = vrot.slane %v7008, 4
        %v7011 = vshll.u32 %v6938, 16
        %v7013 = vrot.slane %v7011, 5
        %v7014 = vsel %vm1566, %v7009, %v7013
        %v7015 = vshrl.u32 %v6938, 16
        %v7017 = vrot.slane %v7015, 4
        %v7018 = vor.u32 %v7017, %v7013
        %v7019 = vrot.slane %v7018, 4
        %v7021 = vshll.u32 %v6985, 16
        %v7023 = vrot.slane %v7021, 5
        %v7024 = vsel %vm1566, %v7019, %v7023
        %v7026 = vshrl.u32 %v6939, 16
        %v7028 = vrot.slane %v7026, 4
        %v7029 = vshll.u32 %v6939, 16
        %v7031 = vrot.slane %v7029, 5
        %v7032 = vor.u32 %v7028, %v7031
        %v7033 = vrot.slane %v7032, 4
        %v7035 = vshll.u32 %v6940, 16
        %v7037 = vrot.slane %v7035, 5
        %v7038 = vsel %vm1566, %v7033, %v7037
        %v7039 = vshrl.u32 %v6940, 16
        %v7041 = vrot.slane %v7039, 4
        %v7042 = vor.u32 %v7041, %v7037
        %v7043 = vrot.slane %v7042, 4
        %v7045 = vshll.u32 %v6986, 16
        %v7047 = vrot.slane %v7045, 5
        %v7048 = vsel %vm1566, %v7043, %v7047
        %v7050 = vshrl.u32 %v6941, 16
        %v7052 = vrot.slane %v7050, 4
        %v7053 = vshll.u32 %v6941, 16
        %v7055 = vrot.slane %v7053, 5
        %v7056 = vor.u32 %v7052, %v7055
        %v7057 = vrot.slane %v7056, 4
        %v7059 = vshll.u32 %v6942, 16
        %v7061 = vrot.slane %v7059, 5
        %v7062 = vsel %vm1566, %v7057, %v7061
        %v7063 = vshrl.u32 %v6942, 16
        %v7065 = vrot.slane %v7063, 4
        %v7066 = vor.u32 %v7065, %v7061
        %v7067 = vrot.slane %v7066, 4
        %v7069 = vshll.u32 %v6987, 16
        %v7071 = vrot.slane %v7069, 5
        %v7072 = vsel %vm1566, %v7067, %v7071
        %v7074 = vshrl.u32 %v6943, 16
        %v7076 = vrot.slane %v7074, 4
        %v7077 = vshll.u32 %v6943, 16
        %v7079 = vrot.slane %v7077, 5
        %v7080 = vor.u32 %v7076, %v7079
        %v7081 = vrot.slane %v7080, 4
        %v7083 = vshll.u32 %v6944, 16
        %v7085 = vrot.slane %v7083, 5
        %v7086 = vsel %vm1566, %v7081, %v7085
        %v7087 = vshrl.u32 %v6944, 16
        %v7089 = vrot.slane %v7087, 4
        %v7090 = vor.u32 %v7089, %v7085
        %v7091 = vrot.slane %v7090, 4
        %v7093 = vshll.u32 %v6988, 16
        %v7095 = vrot.slane %v7093, 5
        %v7096 = vsel %vm1566, %v7091, %v7095
        %v7098 = vshrl.u32 %v6945, 16
        %v7100 = vrot.slane %v7098, 4
        %v7101 = vshll.u32 %v6945, 16
        %v7103 = vrot.slane %v7101, 5
        %v7104 = vor.u32 %v7100, %v7103
        %v7105 = vrot.slane %v7104, 4
        %v7107 = vshll.u32 %v6946, 16
        %v7109 = vrot.slane %v7107, 5
        %v7110 = vsel %vm1566, %v7105, %v7109
        %v7111 = vshrl.u32 %v6946, 16
        %v7113 = vrot.slane %v7111, 4
        %v7114 = vor.u32 %v7113, %v7109
        %v7115 = vrot.slane %v7114, 4
        %v7117 = vshll.u32 %v6989, 16
        %v7119 = vrot.slane %v7117, 5
        %v7120 = vsel %vm1566, %v7115, %v7119
        %v7122 = vshrl.u32 %v6947, 16
        %v7124 = vrot.slane %v7122, 4
        %v7125 = vshll.u32 %v6947, 16
        %v7127 = vrot.slane %v7125, 5
        %v7128 = vor.u32 %v7124, %v7127
        %v7129 = vrot.slane %v7128, 4
        %v7131 = vshll.u32 %v6948, 16
        %v7133 = vrot.slane %v7131, 5
        %v7134 = vsel %vm1566, %v7129, %v7133
        %v7135 = vshrl.u32 %v6948, 16
        %v7137 = vrot.slane %v7135, 4
        %v7138 = vor.u32 %v7137, %v7133
        %v7139 = vrot.slane %v7138, 4
        %v7141 = vshll.u32 %v6990, 16
        %v7143 = vrot.slane %v7141, 5
        %v7144 = vsel %vm1566, %v7139, %v7143
        %v7146 = vshrl.u32 %v6949, 16
        %v7148 = vrot.slane %v7146, 4
        %v7149 = vshll.u32 %v6949, 16
        %v7151 = vrot.slane %v7149, 5
        %v7152 = vor.u32 %v7148, %v7151
        %v7153 = vrot.slane %v7152, 4
        %v7155 = vshll.u32 %v6950, 16
        %v7157 = vrot.slane %v7155, 5
        %v7158 = vsel %vm1566, %v7153, %v7157
        %v7159 = vshrl.u32 %v6950, 16
        %v7161 = vrot.slane %v7159, 4
        %v7162 = vor.u32 %v7161, %v7157
        %v7163 = vrot.slane %v7162, 4
        %v7165 = vshll.u32 %v6991, 16
        %v7167 = vrot.slane %v7165, 5
        %v7168 = vsel %vm1566, %v7163, %v7167
        %v7170 = vshrl.u32 %v6951, 16
        %v7172 = vrot.slane %v7170, 4
        %v7173 = vshll.u32 %v6951, 16
        %v7175 = vrot.slane %v7173, 5
        %v7176 = vor.u32 %v7172, %v7175
        %v7177 = vrot.slane %v7176, 4
        %v7179 = vshll.u32 %v6952, 16
        %v7181 = vrot.slane %v7179, 5
        %v7182 = vsel %vm1566, %v7177, %v7181
        %v7183 = vshrl.u32 %v6952, 16
        %v7185 = vrot.slane %v7183, 4
        %v7186 = vor.u32 %v7185, %v7181
        %v7187 = vrot.slane %v7186, 4
        %v7189 = vshll.u32 %v6992, 16
        %v7191 = vrot.slane %v7189, 5
        %v7192 = vsel %vm1566, %v7187, %v7191
        %v7194 = vshrl.u32 %v6953, 16
        %v7196 = vrot.slane %v7194, 4
        %v7197 = vshll.u32 %v6953, 16
        %v7199 = vrot.slane %v7197, 5
        %v7200 = vor.u32 %v7196, %v7199
        %v7201 = vrot.slane %v7200, 4
        %v7203 = vshll.u32 %v6954, 16
        %v7205 = vrot.slane %v7203, 5
        %v7206 = vsel %vm1566, %v7201, %v7205
        %v7207 = vshrl.u32 %v6954, 16
        %v7209 = vrot.slane %v7207, 4
        %v7210 = vor.u32 %v7209, %v7205
        %v7211 = vrot.slane %v7210, 4
        %v7213 = vshll.u32 %v6993, 16
        %v7215 = vrot.slane %v7213, 5
        %v7216 = vsel %vm1566, %v7211, %v7215
        %v7218 = vshrl.u32 %v6955, 16
        %v7220 = vrot.slane %v7218, 4
        %v7221 = vshll.u32 %v6955, 16
        %v7223 = vrot.slane %v7221, 5
        %v7224 = vor.u32 %v7220, %v7223
        %v7225 = vrot.slane %v7224, 4
        %v7227 = vshll.u32 %v6956, 16
        %v7229 = vrot.slane %v7227, 5
        %v7230 = vsel %vm1566, %v7225, %v7229
        %v7231 = vshrl.u32 %v6956, 16
        %v7233 = vrot.slane %v7231, 4
        %v7234 = vor.u32 %v7233, %v7229
        %v7235 = vrot.slane %v7234, 4
        %v7237 = vshll.u32 %v6994, 16
        %v7239 = vrot.slane %v7237, 5
        %v7240 = vsel %vm1566, %v7235, %v7239
        %v7242 = vshrl.u32 %v6957, 16
        %v7244 = vrot.slane %v7242, 4
        %v7245 = vshll.u32 %v6957, 16
        %v7247 = vrot.slane %v7245, 5
        %v7248 = vor.u32 %v7244, %v7247
        %v7249 = vrot.slane %v7248, 4
        %v7251 = vshll.u32 %v6958, 16
        %v7253 = vrot.slane %v7251, 5
        %v7254 = vsel %vm1566, %v7249, %v7253
        %v7255 = vshrl.u32 %v6958, 16
        %v7257 = vrot.slane %v7255, 4
        %v7258 = vor.u32 %v7257, %v7253
        %v7259 = vrot.slane %v7258, 4
        %v7261 = vshll.u32 %v6995, 16
        %v7263 = vrot.slane %v7261, 5
        %v7264 = vsel %vm1566, %v7259, %v7263
        %v7266 = vshrl.u32 %v6959, 16
        %v7268 = vrot.slane %v7266, 4
        %v7269 = vshll.u32 %v6959, 16
        %v7271 = vrot.slane %v7269, 5
        %v7272 = vor.u32 %v7268, %v7271
        %v7273 = vrot.slane %v7272, 4
        %v7275 = vshll.u32 %v6960, 16
        %v7277 = vrot.slane %v7275, 5
        %v7278 = vsel %vm1566, %v7273, %v7277
        %v7279 = vshrl.u32 %v6960, 16
        %v7281 = vrot.slane %v7279, 4
        %v7282 = vor.u32 %v7281, %v7277
        %v7283 = vrot.slane %v7282, 4
        %v7285 = vshll.u32 %v6996, 16
        %v7287 = vrot.slane %v7285, 5
        %v7288 = vsel %vm1566, %v7283, %v7287
        %v7290 = vshrl.u32 %v6961, 16
        %v7292 = vrot.slane %v7290, 4
        %v7293 = vshll.u32 %v6961, 16
        %v7295 = vrot.slane %v7293, 5
        %v7296 = vor.u32 %v7292, %v7295
        %v7297 = vrot.slane %v7296, 4
        %v7299 = vshll.u32 %v6962, 16
        %v7301 = vrot.slane %v7299, 5
        %v7302 = vsel %vm1566, %v7297, %v7301
        %v7303 = vshrl.u32 %v6962, 16
        %v7305 = vrot.slane %v7303, 4
        %v7306 = vor.u32 %v7305, %v7301
        %v7307 = vrot.slane %v7306, 4
        %v7309 = vshll.u32 %v6997, 16
        %v7311 = vrot.slane %v7309, 5
        %v7312 = vsel %vm1566, %v7307, %v7311
        %v7314 = vshrl.u32 %v6963, 16
        %v7316 = vrot.slane %v7314, 4
        %v7317 = vshll.u32 %v6963, 16
        %v7319 = vrot.slane %v7317, 5
        %v7320 = vor.u32 %v7316, %v7319
        %v7321 = vrot.slane %v7320, 4
        %v7323 = vshll.u32 %v6964, 16
        %v7325 = vrot.slane %v7323, 5
        %v7326 = vsel %vm1566, %v7321, %v7325
        %v7327 = vshrl.u32 %v6964, 16
        %v7329 = vrot.slane %v7327, 4
        %v7330 = vor.u32 %v7329, %v7325
        %v7331 = vrot.slane %v7330, 4
        %v7333 = vshll.u32 %v6998, 16
        %v7335 = vrot.slane %v7333, 5
        %v7336 = vsel %vm1566, %v7331, %v7335
        %v7338 = vshrl.u32 %v6965, 16
        %v7340 = vrot.slane %v7338, 4
        %v7341 = vshll.u32 %v6965, 16
        %v7343 = vrot.slane %v7341, 5
        %v7344 = vor.u32 %v7340, %v7343
        %v7345 = vrot.slane %v7344, 4
        %v7347 = vshll.u32 %v6966, 16
        %v7349 = vrot.slane %v7347, 5
        %v7350 = vsel %vm1566, %v7345, %v7349
        %v7351 = vshrl.u32 %v6966, 16
        %v7353 = vrot.slane %v7351, 4
        %v7354 = vor.u32 %v7353, %v7349
        %v7355 = vrot.slane %v7354, 4
        %v7357 = vshll.u32 %v6999, 16
        %v7359 = vrot.slane %v7357, 5
        %v7360 = vsel %vm1566, %v7355, %v7359
        %v7362 = vshrl.u32 %v6967, 16
        %v7364 = vrot.slane %v7362, 4
        %v7365 = vshll.u32 %v6967, 16
        %v7367 = vrot.slane %v7365, 5
        %v7368 = vor.u32 %v7364, %v7367
        %v7369 = vrot.slane %v7368, 4
        %v7371 = vshll.u32 %v6968, 16
        %v7373 = vrot.slane %v7371, 5
        %v7374 = vsel %vm1566, %v7369, %v7373
        %v7375 = vshrl.u32 %v6968, 16
        %v7377 = vrot.slane %v7375, 4
        %v7378 = vor.u32 %v7377, %v7373
        %v7379 = vrot.slane %v7378, 4
        %v7381 = vshll.u32 %v7000, 16
        %v7383 = vrot.slane %v7381, 5
        %v7384 = vsel %vm1566, %v7379, %v7383
        %v7385 = vld [vmem:[%s7 + $0x40] sm:$0xf]
        %v7386 = vld [vmem:[%s7 + $0x44] sm:$0xf]
        %v7387 = vld [vmem:[%s7 + $0x48] sm:$0xf]
        %v7388 = vld [vmem:[%s7 + $0x4c] sm:$0xf]
        %v7389 = vld [vmem:[%s7 + $0x50] sm:$0xf]
        %v7390 = vld [vmem:[%s7 + $0x54] sm:$0xf]
        %v7391 = vld [vmem:[%s7 + $0x58] sm:$0xf]
        %v7392 = vld [vmem:[%s7 + $0x5c] sm:$0xf]
        %v7393 = vld [vmem:[%s7 + $0x60] sm:$0xf]
        %v7394 = vld [vmem:[%s7 + $0x64] sm:$0xf]
        %v7395 = vld [vmem:[%s7 + $0x68] sm:$0xf]
        %v7396 = vld [vmem:[%s7 + $0x6c] sm:$0xf]
        %v7397 = vld [vmem:[%s7 + $0x70] sm:$0xf]
        %v7398 = vld [vmem:[%s7 + $0x74] sm:$0xf]
        %v7399 = vld [vmem:[%s7 + $0x78] sm:$0xf]
        %v7400 = vld [vmem:[%s7 + $0x7c] sm:$0xf]
        %v7401 = vunpack.c.l.b16 %v7014
        %v7402 = vunpack.c.l.b16 %v7024
        %v7403 = vunpack.c.l.b16 %v7038
        %v7404 = vunpack.c.l.b16 %v7048
        %v7405 = vunpack.c.l.b16 %v7062
        %v7406 = vunpack.c.l.b16 %v7072
        %v7407 = vunpack.c.l.b16 %v7086
        %v7408 = vunpack.c.l.b16 %v7096
        %v7409 = vunpack.c.l.b16 %v7110
        %v7410 = vunpack.c.l.b16 %v7120
        %v7411 = vunpack.c.l.b16 %v7134
        %v7412 = vunpack.c.l.b16 %v7144
        %v7413 = vunpack.c.l.b16 %v7158
        %v7414 = vunpack.c.l.b16 %v7168
        %v7415 = vunpack.c.l.b16 %v7182
        %v7416 = vunpack.c.l.b16 %v7192
        %v7417 = vunpack.c.l.b16 %v7206
        %v7418 = vunpack.c.l.b16 %v7216
        %v7419 = vunpack.c.l.b16 %v7230
        %v7420 = vunpack.c.l.b16 %v7240
        %v7421 = vunpack.c.l.b16 %v7254
        %v7422 = vunpack.c.l.b16 %v7264
        %v7423 = vunpack.c.l.b16 %v7278
        %v7424 = vunpack.c.l.b16 %v7288
        %v7425 = vunpack.c.l.b16 %v7302
        %v7426 = vunpack.c.l.b16 %v7312
        %v7427 = vunpack.c.l.b16 %v7326
        %v7428 = vunpack.c.l.b16 %v7336
        %v7429 = vunpack.c.l.b16 %v7350
        %v7430 = vunpack.c.l.b16 %v7360
        %v7431 = vunpack.c.l.b16 %v7374
        %v7432 = vunpack.c.l.b16 %v7384
        %v7433 = vpack.c.b16 %v7402, %v7401
        %v7434 = vpack.c.b16 %v7404, %v7403
        %v7435 = vpack.c.b16 %v7406, %v7405
        %v7436 = vpack.c.b16 %v7408, %v7407
        %v7437 = vpack.c.b16 %v7410, %v7409
        %v7438 = vpack.c.b16 %v7412, %v7411
        %v7439 = vpack.c.b16 %v7414, %v7413
        %v7440 = vpack.c.b16 %v7416, %v7415
        %v7441 = vpack.c.b16 %v7418, %v7417
        %v7442 = vpack.c.b16 %v7420, %v7419
        %v7443 = vpack.c.b16 %v7422, %v7421
        %v7444 = vpack.c.b16 %v7424, %v7423
        %v7445 = vpack.c.b16 %v7426, %v7425
        %v7446 = vpack.c.b16 %v7428, %v7427
        %v7447 = vpack.c.b16 %v7430, %v7429
        %v7448 = vpack.c.b16 %v7432, %v7431
        %v7481 = vunpack.c.l.b16 %v7385
        %v7482 = vunpack.c.l.b16 %v7386
        %v7483 = vunpack.c.l.b16 %v7387
        %v7484 = vunpack.c.l.b16 %v7388
        %v7485 = vunpack.c.l.b16 %v7389
        %v7486 = vunpack.c.l.b16 %v7390
        %v7487 = vunpack.c.l.b16 %v7391
        %v7488 = vunpack.c.l.b16 %v7392
        %v7489 = vunpack.c.l.b16 %v7393
        %v7490 = vunpack.c.l.b16 %v7394
        %v7491 = vunpack.c.l.b16 %v7395
        %v7492 = vunpack.c.l.b16 %v7396
        %v7493 = vunpack.c.l.b16 %v7397
        %v7494 = vunpack.c.l.b16 %v7398
        %v7495 = vunpack.c.l.b16 %v7399
        %v7496 = vunpack.c.l.b16 %v7400
        %v7497 = vpack.c.b16 %v7482, %v7481
        %v7498 = vpack.c.b16 %v7484, %v7483
        %v7499 = vpack.c.b16 %v7486, %v7485
        %v7500 = vpack.c.b16 %v7488, %v7487
        %v7501 = vpack.c.b16 %v7490, %v7489
        %v7502 = vpack.c.b16 %v7492, %v7491
        %v7503 = vpack.c.b16 %v7494, %v7493
        %v7504 = vpack.c.b16 %v7496, %v7495
        %7513 = vmatprep.subr.bf16.mxu0 0
        %7514 = vmatpush1.bf16.msra.mxu0 %v7497
        %7515 = vmatprep.subr.bf16.mxu0 0
        %7516 = vmatpush1.bf16.msra.mxu0 %v7498
        %7517 = vmatprep.subr.bf16.mxu0 0
        %7518 = vmatpush1.bf16.msra.mxu0 %v7499
        %7519 = vmatprep.subr.bf16.mxu0 0
        %7520 = vmatpush1.bf16.msra.mxu0 %v7500
        %7521 = vmatprep.subr.bf16.mxu0 0
        %7522 = vmatpush1.bf16.msra.mxu0 %v7501
        %7523 = vmatprep.subr.bf16.mxu0 0
        %7524 = vmatpush1.bf16.msra.mxu0 %v7502
        %7525 = vmatprep.subr.bf16.mxu0 0
        %7526 = vmatpush1.bf16.msra.mxu0 %v7503
        %7527 = vmatprep.subr.bf16.mxu0 0
        %7528 = vmatpush1.bf16.msra.mxu0 %v7504
        %7529 = vmatprep.subr.bf16.mxu0 0
        %7530 = vmatpush1.bf16.msra.mxu0 0
        %7531 = vmatprep.subr.bf16.mxu0 0
        %7532 = vmatpush1.bf16.msra.mxu0 0
        %7533 = vmatprep.subr.bf16.mxu0 0
        %7534 = vmatpush1.bf16.msra.mxu0 0
        %7535 = vmatprep.subr.bf16.mxu0 0
        %7536 = vmatpush1.bf16.msra.mxu0 0
        %7537 = vmatprep.subr.bf16.mxu0 0
        %7538 = vmatpush1.bf16.msra.mxu0 0
        %7539 = vmatprep.subr.bf16.mxu0 0
        %7540 = vmatpush1.bf16.msra.mxu0 0
        %7541 = vmatprep.subr.bf16.mxu0 0
        %7542 = vmatpush1.bf16.msra.mxu0 0
        %7543 = vmatprep.subr.bf16.mxu0 0
        %7544 = vmatpush1.bf16.msra.mxu0 0
        %7545 = vmatprep.mubr.bf16.mxu0 0
        %7546 = vmatmul.mubr.bf16.gmra.mrb[0].mxu0 %v7433
        %v7547 = vpop.f32.mrb[0].mxu0
        %v7548 = vadd.f32 0.0, %v7547
        %v7549 = vpop.f32.mrb[0].mxu0
        %v7550 = vpop.f32.mrb[0].mxu0
        %v7551 = vadd.f32 0.0, %v7550
        %v7552 = vpop.f32.mrb[0].mxu0
        %7553 = vmatprep.mubr.bf16.mxu0 0
        %7554 = vmatmul.mubr.bf16.gmra.mrb[0].mxu0 %v7434
        %v7555 = vpop.f32.mrb[0].mxu0
        %v7556 = vadd.f32 0.0, %v7555
        %v7557 = vpop.f32.mrb[0].mxu0
        %v7558 = vpop.f32.mrb[0].mxu0
        %v7559 = vadd.f32 0.0, %v7558
        %v7560 = vpop.f32.mrb[0].mxu0
        %7561 = vmatprep.mubr.bf16.mxu0 0
        %7562 = vmatmul.mubr.bf16.gmra.mrb[0].mxu0 %v7435
        %v7563 = vpop.f32.mrb[0].mxu0
        %v7564 = vadd.f32 0.0, %v7563
        %v7565 = vpop.f32.mrb[0].mxu0
        %v7566 = vpop.f32.mrb[0].mxu0
        %v7567 = vadd.f32 0.0, %v7566
        %v7568 = vpop.f32.mrb[0].mxu0
        %7569 = vmatprep.mubr.bf16.mxu0 0
        %7570 = vmatmul.mubr.bf16.gmra.mrb[0].mxu0 %v7436
        %v7571 = vpop.f32.mrb[0].mxu0
        %v7572 = vadd.f32 0.0, %v7571
        %v7573 = vpop.f32.mrb[0].mxu0
        %v7574 = vpop.f32.mrb[0].mxu0
        %v7575 = vadd.f32 0.0, %v7574
        %v7576 = vpop.f32.mrb[0].mxu0
        %7577 = vmatprep.mubr.bf16.mxu0 0
        %7578 = vmatmul.mubr.bf16.gmra.mrb[0].mxu0 %v7437
        %v7579 = vpop.f32.mrb[0].mxu0
        %v7580 = vadd.f32 0.0, %v7579
        %v7581 = vpop.f32.mrb[0].mxu0
        %v7582 = vpop.f32.mrb[0].mxu0
        %v7583 = vadd.f32 0.0, %v7582
        %v7584 = vpop.f32.mrb[0].mxu0
        %7585 = vmatprep.mubr.bf16.mxu0 0
        %7586 = vmatmul.mubr.bf16.gmra.mrb[0].mxu0 %v7438
        %v7587 = vpop.f32.mrb[0].mxu0
        %v7588 = vadd.f32 0.0, %v7587
        %v7589 = vpop.f32.mrb[0].mxu0
        %v7590 = vpop.f32.mrb[0].mxu0
        %v7591 = vadd.f32 0.0, %v7590
        %v7592 = vpop.f32.mrb[0].mxu0
        %7593 = vmatprep.mubr.bf16.mxu0 0
        %7594 = vmatmul.mubr.bf16.gmra.mrb[0].mxu0 %v7439
        %v7595 = vpop.f32.mrb[0].mxu0
        %v7596 = vadd.f32 0.0, %v7595
        %v7597 = vpop.f32.mrb[0].mxu0
        %v7598 = vpop.f32.mrb[0].mxu0
        %v7599 = vadd.f32 0.0, %v7598
        %v7600 = vpop.f32.mrb[0].mxu0
        %7601 = vmatprep.mubr.bf16.mxu0 0
        %7602 = vmatmul.mubr.bf16.gmra.mrb[0].mxu0 %v7440
        %v7603 = vpop.f32.mrb[0].mxu0
        %v7604 = vadd.f32 0.0, %v7603
        %v7605 = vpop.f32.mrb[0].mxu0
        %v7606 = vpop.f32.mrb[0].mxu0
        %v7607 = vadd.f32 0.0, %v7606
        %v7608 = vpop.f32.mrb[0].mxu0
        %7609 = vmatprep.mubr.bf16.mxu0 0
        %7610 = vmatmul.mubr.bf16.gmra.mrb[0].mxu0 %v7441
        %v7611 = vpop.f32.mrb[0].mxu0
        %v7612 = vadd.f32 0.0, %v7611
        %v7613 = vpop.f32.mrb[0].mxu0
        %v7614 = vpop.f32.mrb[0].mxu0
        %v7615 = vadd.f32 0.0, %v7614
        %v7616 = vpop.f32.mrb[0].mxu0
        %7617 = vmatprep.mubr.bf16.mxu0 0
        %7618 = vmatmul.mubr.bf16.gmra.mrb[0].mxu0 %v7442
        %v7619 = vpop.f32.mrb[0].mxu0
        %v7620 = vadd.f32 0.0, %v7619
        %v7621 = vpop.f32.mrb[0].mxu0
        %v7622 = vpop.f32.mrb[0].mxu0
        %v7623 = vadd.f32 0.0, %v7622
        %v7624 = vpop.f32.mrb[0].mxu0
        %7625 = vmatprep.mubr.bf16.mxu0 0
        %7626 = vmatmul.mubr.bf16.gmra.mrb[0].mxu0 %v7443
        %v7627 = vpop.f32.mrb[0].mxu0
        %v7628 = vadd.f32 0.0, %v7627
        %v7629 = vpop.f32.mrb[0].mxu0
        %v7630 = vpop.f32.mrb[0].mxu0
        %v7631 = vadd.f32 0.0, %v7630
        %v7632 = vpop.f32.mrb[0].mxu0
        %7633 = vmatprep.mubr.bf16.mxu0 0
        %7634 = vmatmul.mubr.bf16.gmra.mrb[0].mxu0 %v7444
        %v7635 = vpop.f32.mrb[0].mxu0
        %v7636 = vadd.f32 0.0, %v7635
        %v7637 = vpop.f32.mrb[0].mxu0
        %v7638 = vpop.f32.mrb[0].mxu0
        %v7639 = vadd.f32 0.0, %v7638
        %v7640 = vpop.f32.mrb[0].mxu0
        %7641 = vmatprep.mubr.bf16.mxu0 0
        %7642 = vmatmul.mubr.bf16.gmra.mrb[0].mxu0 %v7445
        %v7643 = vpop.f32.mrb[0].mxu0
        %v7644 = vadd.f32 0.0, %v7643
        %v7645 = vpop.f32.mrb[0].mxu0
        %v7646 = vpop.f32.mrb[0].mxu0
        %v7647 = vadd.f32 0.0, %v7646
        %v7648 = vpop.f32.mrb[0].mxu0
        %7649 = vmatprep.mubr.bf16.mxu0 0
        %7650 = vmatmul.mubr.bf16.gmra.mrb[0].mxu0 %v7446
        %v7651 = vpop.f32.mrb[0].mxu0
        %v7652 = vadd.f32 0.0, %v7651
        %v7653 = vpop.f32.mrb[0].mxu0
        %v7654 = vpop.f32.mrb[0].mxu0
        %v7655 = vadd.f32 0.0, %v7654
        %v7656 = vpop.f32.mrb[0].mxu0
        %7657 = vmatprep.mubr.bf16.mxu0 0
        %7658 = vmatmul.mubr.bf16.gmra.mrb[0].mxu0 %v7447
        %v7659 = vpop.f32.mrb[0].mxu0
        %v7660 = vadd.f32 0.0, %v7659
        %v7661 = vpop.f32.mrb[0].mxu0
        %v7662 = vpop.f32.mrb[0].mxu0
        %v7663 = vadd.f32 0.0, %v7662
        %v7664 = vpop.f32.mrb[0].mxu0
        %7665 = vmatprep.mubr.bf16.mxu0 0
        %7666 = vmatmul.mubr.bf16.gmra.mrb[0].mxu0 %v7448
        %v7667 = vpop.f32.mrb[0].mxu0
        %v7668 = vadd.f32 0.0, %v7667
        %v7669 = vpop.f32.mrb[0].mxu0
        %v7670 = vpop.f32.mrb[0].mxu0
        %v7671 = vadd.f32 0.0, %v7670
        %v7672 = vpop.f32.mrb[0].mxu0
        %7673 = vdwg.mxu0
        %v7706 = vunpack.c.l.b16 %v6937
        %v7707 = vunpack.c.l.b16 %v6938
        %v7708 = vunpack.c.l.b16 %v6939
        %v7709 = vunpack.c.l.b16 %v6940
        %v7710 = vunpack.c.l.b16 %v6941
        %v7711 = vunpack.c.l.b16 %v6942
        %v7712 = vunpack.c.l.b16 %v6943
        %v7713 = vunpack.c.l.b16 %v6944
        %v7714 = vunpack.c.l.b16 %v6945
        %v7715 = vunpack.c.l.b16 %v6946
        %v7716 = vunpack.c.l.b16 %v6947
        %v7717 = vunpack.c.l.b16 %v6948
        %v7718 = vunpack.c.l.b16 %v6949
        %v7719 = vunpack.c.l.b16 %v6950
        %v7720 = vunpack.c.l.b16 %v6951
        %v7721 = vunpack.c.l.b16 %v6952
        %v7722 = vunpack.c.l.b16 %v6953
        %v7723 = vunpack.c.l.b16 %v6954
        %v7724 = vunpack.c.l.b16 %v6955
        %v7725 = vunpack.c.l.b16 %v6956
        %v7726 = vunpack.c.l.b16 %v6957
        %v7727 = vunpack.c.l.b16 %v6958
        %v7728 = vunpack.c.l.b16 %v6959
        %v7729 = vunpack.c.l.b16 %v6960
        %v7730 = vunpack.c.l.b16 %v6961
        %v7731 = vunpack.c.l.b16 %v6962
        %v7732 = vunpack.c.l.b16 %v6963
        %v7733 = vunpack.c.l.b16 %v6964
        %v7734 = vunpack.c.l.b16 %v6965
        %v7735 = vunpack.c.l.b16 %v6966
        %v7736 = vunpack.c.l.b16 %v6967
        %v7737 = vunpack.c.l.b16 %v6968
        %v7738 = vpack.c.b16 %v7707, %v7706
        %v7739 = vpack.c.b16 %v7709, %v7708
        %v7740 = vpack.c.b16 %v7711, %v7710
        %v7741 = vpack.c.b16 %v7713, %v7712
        %v7742 = vpack.c.b16 %v7715, %v7714
        %v7743 = vpack.c.b16 %v7717, %v7716
        %v7744 = vpack.c.b16 %v7719, %v7718
        %v7745 = vpack.c.b16 %v7721, %v7720
        %v7746 = vpack.c.b16 %v7723, %v7722
        %v7747 = vpack.c.b16 %v7725, %v7724
        %v7748 = vpack.c.b16 %v7727, %v7726
        %v7749 = vpack.c.b16 %v7729, %v7728
        %v7750 = vpack.c.b16 %v7731, %v7730
        %v7751 = vpack.c.b16 %v7733, %v7732
        %v7752 = vpack.c.b16 %v7735, %v7734
        %v7753 = vpack.c.b16 %v7737, %v7736
        %v7786 = vunpack.c.l.b16 %v6969
        %v7787 = vunpack.c.l.b16 %v6970
        %v7788 = vunpack.c.l.b16 %v6971
        %v7789 = vunpack.c.l.b16 %v6972
        %v7790 = vunpack.c.l.b16 %v6973
        %v7791 = vunpack.c.l.b16 %v6974
        %v7792 = vunpack.c.l.b16 %v6975
        %v7793 = vunpack.c.l.b16 %v6976
        %v7794 = vunpack.c.l.b16 %v6977
        %v7795 = vunpack.c.l.b16 %v6978
        %v7796 = vunpack.c.l.b16 %v6979
        %v7797 = vunpack.c.l.b16 %v6980
        %v7798 = vunpack.c.l.b16 %v6981
        %v7799 = vunpack.c.l.b16 %v6982
        %v7800 = vunpack.c.l.b16 %v6983
        %v7801 = vunpack.c.l.b16 %v6984
        %v7802 = vpack.c.b16 %v7787, %v7786
        %v7803 = vpack.c.b16 %v7789, %v7788
        %v7804 = vpack.c.b16 %v7791, %v7790
        %v7805 = vpack.c.b16 %v7793, %v7792
        %v7806 = vpack.c.b16 %v7795, %v7794
        %v7807 = vpack.c.b16 %v7797, %v7796
        %v7808 = vpack.c.b16 %v7799, %v7798
        %v7809 = vpack.c.b16 %v7801, %v7800
        %7818 = vmatprep.subr.bf16.mxu0 0
        %7819 = vmatpush1.bf16.msra.mxu0 %v7802
        %7820 = vmatprep.subr.bf16.mxu0 0
        %7821 = vmatpush1.bf16.msra.mxu0 %v7803
        %7822 = vmatprep.subr.bf16.mxu0 0
        %7823 = vmatpush1.bf16.msra.mxu0 %v7804
        %7824 = vmatprep.subr.bf16.mxu0 0
        %7825 = vmatpush1.bf16.msra.mxu0 %v7805
        %7826 = vmatprep.subr.bf16.mxu0 0
        %7827 = vmatpush1.bf16.msra.mxu0 %v7806
        %7828 = vmatprep.subr.bf16.mxu0 0
        %7829 = vmatpush1.bf16.msra.mxu0 %v7807
        %7830 = vmatprep.subr.bf16.mxu0 0
        %7831 = vmatpush1.bf16.msra.mxu0 %v7808
        %7832 = vmatprep.subr.bf16.mxu0 0
        %7833 = vmatpush1.bf16.msra.mxu0 %v7809
        %7834 = vmatprep.subr.bf16.mxu0 0
        %7835 = vmatpush1.bf16.msra.mxu0 0
        %7836 = vmatprep.subr.bf16.mxu0 0
        %7837 = vmatpush1.bf16.msra.mxu0 0
        %7838 = vmatprep.subr.bf16.mxu0 0
        %7839 = vmatpush1.bf16.msra.mxu0 0
        %7840 = vmatprep.subr.bf16.mxu0 0
        %7841 = vmatpush1.bf16.msra.mxu0 0
        %7842 = vmatprep.subr.bf16.mxu0 0
        %7843 = vmatpush1.bf16.msra.mxu0 0
        %7844 = vmatprep.subr.bf16.mxu0 0
        %7845 = vmatpush1.bf16.msra.mxu0 0
        %7846 = vmatprep.subr.bf16.mxu0 0
        %7847 = vmatpush1.bf16.msra.mxu0 0
        %7848 = vmatprep.subr.bf16.mxu0 0
        %7849 = vmatpush1.bf16.msra.mxu0 0
        %7850 = vmatprep.mubr.bf16.mxu0 0
        %7851 = vmatmul.mubr.bf16.gmra.mrb[0].mxu0 %v7738
        %v7852 = vpop.f32.mrb[0].mxu0
        %v7853 = vadd.f32 %v7548, %v7852
        %v7854 = vpop.f32.mrb[0].mxu0
        %v7855 = vpop.f32.mrb[0].mxu0
        %v7856 = vadd.f32 %v7551, %v7855
        %v7857 = vpop.f32.mrb[0].mxu0
        %7858 = vmatprep.mubr.bf16.mxu0 0
        %7859 = vmatmul.mubr.bf16.gmra.mrb[0].mxu0 %v7739
        %v7860 = vpop.f32.mrb[0].mxu0
        %v7861 = vadd.f32 %v7556, %v7860
        %v7862 = vpop.f32.mrb[0].mxu0
        %v7863 = vpop.f32.mrb[0].mxu0
        %v7864 = vadd.f32 %v7559, %v7863
        %v7865 = vpop.f32.mrb[0].mxu0
        %7866 = vmatprep.mubr.bf16.mxu0 0
        %7867 = vmatmul.mubr.bf16.gmra.mrb[0].mxu0 %v7740
        %v7868 = vpop.f32.mrb[0].mxu0
        %v7869 = vadd.f32 %v7564, %v7868
        %v7870 = vpop.f32.mrb[0].mxu0
        %v7871 = vpop.f32.mrb[0].mxu0
        %v7872 = vadd.f32 %v7567, %v7871
        %v7873 = vpop.f32.mrb[0].mxu0
        %7874 = vmatprep.mubr.bf16.mxu0 0
        %7875 = vmatmul.mubr.bf16.gmra.mrb[0].mxu0 %v7741
        %v7876 = vpop.f32.mrb[0].mxu0
        %v7877 = vadd.f32 %v7572, %v7876
        %v7878 = vpop.f32.mrb[0].mxu0
        %v7879 = vpop.f32.mrb[0].mxu0
        %v7880 = vadd.f32 %v7575, %v7879
        %v7881 = vpop.f32.mrb[0].mxu0
        %7882 = vmatprep.mubr.bf16.mxu0 0
        %7883 = vmatmul.mubr.bf16.gmra.mrb[0].mxu0 %v7742
        %v7884 = vpop.f32.mrb[0].mxu0
        %v7885 = vadd.f32 %v7580, %v7884
        %v7886 = vpop.f32.mrb[0].mxu0
        %v7887 = vpop.f32.mrb[0].mxu0
        %v7888 = vadd.f32 %v7583, %v7887
        %v7889 = vpop.f32.mrb[0].mxu0
        %7890 = vmatprep.mubr.bf16.mxu0 0
        %7891 = vmatmul.mubr.bf16.gmra.mrb[0].mxu0 %v7743
        %v7892 = vpop.f32.mrb[0].mxu0
        %v7893 = vadd.f32 %v7588, %v7892
        %v7894 = vpop.f32.mrb[0].mxu0
        %v7895 = vpop.f32.mrb[0].mxu0
        %v7896 = vadd.f32 %v7591, %v7895
        %v7897 = vpop.f32.mrb[0].mxu0
        %7898 = vmatprep.mubr.bf16.mxu0 0
        %7899 = vmatmul.mubr.bf16.gmra.mrb[0].mxu0 %v7744
        %v7900 = vpop.f32.mrb[0].mxu0
        %v7901 = vadd.f32 %v7596, %v7900
        %v7902 = vpop.f32.mrb[0].mxu0
        %v7903 = vpop.f32.mrb[0].mxu0
        %v7904 = vadd.f32 %v7599, %v7903
        %v7905 = vpop.f32.mrb[0].mxu0
        %7906 = vmatprep.mubr.bf16.mxu0 0
        %7907 = vmatmul.mubr.bf16.gmra.mrb[0].mxu0 %v7745
        %v7908 = vpop.f32.mrb[0].mxu0
        %v7909 = vadd.f32 %v7604, %v7908
        %v7910 = vpop.f32.mrb[0].mxu0
        %v7911 = vpop.f32.mrb[0].mxu0
        %v7912 = vadd.f32 %v7607, %v7911
        %v7913 = vpop.f32.mrb[0].mxu0
        %7914 = vmatprep.mubr.bf16.mxu0 0
        %7915 = vmatmul.mubr.bf16.gmra.mrb[0].mxu0 %v7746
        %v7916 = vpop.f32.mrb[0].mxu0
        %v7917 = vadd.f32 %v7612, %v7916
        %v7918 = vpop.f32.mrb[0].mxu0
        %v7919 = vpop.f32.mrb[0].mxu0
        %v7920 = vadd.f32 %v7615, %v7919
        %v7921 = vpop.f32.mrb[0].mxu0
        %7922 = vmatprep.mubr.bf16.mxu0 0
        %7923 = vmatmul.mubr.bf16.gmra.mrb[0].mxu0 %v7747
        %v7924 = vpop.f32.mrb[0].mxu0
        %v7925 = vadd.f32 %v7620, %v7924
        %v7926 = vpop.f32.mrb[0].mxu0
        %v7927 = vpop.f32.mrb[0].mxu0
        %v7928 = vadd.f32 %v7623, %v7927
        %v7929 = vpop.f32.mrb[0].mxu0
        %7930 = vmatprep.mubr.bf16.mxu0 0
        %7931 = vmatmul.mubr.bf16.gmra.mrb[0].mxu0 %v7748
        %v7932 = vpop.f32.mrb[0].mxu0
        %v7933 = vadd.f32 %v7628, %v7932
        %v7934 = vpop.f32.mrb[0].mxu0
        %v7935 = vpop.f32.mrb[0].mxu0
        %v7936 = vadd.f32 %v7631, %v7935
        %v7937 = vpop.f32.mrb[0].mxu0
        %7938 = vmatprep.mubr.bf16.mxu0 0
        %7939 = vmatmul.mubr.bf16.gmra.mrb[0].mxu0 %v7749
        %v7940 = vpop.f32.mrb[0].mxu0
        %v7941 = vadd.f32 %v7636, %v7940
        %v7942 = vpop.f32.mrb[0].mxu0
        %v7943 = vpop.f32.mrb[0].mxu0
        %v7944 = vadd.f32 %v7639, %v7943
        %v7945 = vpop.f32.mrb[0].mxu0
        %7946 = vmatprep.mubr.bf16.mxu0 0
        %7947 = vmatmul.mubr.bf16.gmra.mrb[0].mxu0 %v7750
        %v7948 = vpop.f32.mrb[0].mxu0
        %v7949 = vadd.f32 %v7644, %v7948
        %v7950 = vpop.f32.mrb[0].mxu0
        %v7951 = vpop.f32.mrb[0].mxu0
        %v7952 = vadd.f32 %v7647, %v7951
        %v7953 = vpop.f32.mrb[0].mxu0
        %7954 = vmatprep.mubr.bf16.mxu0 0
        %7955 = vmatmul.mubr.bf16.gmra.mrb[0].mxu0 %v7751
        %v7956 = vpop.f32.mrb[0].mxu0
        %v7957 = vadd.f32 %v7652, %v7956
        %v7958 = vpop.f32.mrb[0].mxu0
        %v7959 = vpop.f32.mrb[0].mxu0
        %v7960 = vadd.f32 %v7655, %v7959
        %v7961 = vpop.f32.mrb[0].mxu0
        %7962 = vmatprep.mubr.bf16.mxu0 0
        %7963 = vmatmul.mubr.bf16.gmra.mrb[0].mxu0 %v7752
        %v7964 = vpop.f32.mrb[0].mxu0
        %v7965 = vadd.f32 %v7660, %v7964
        %v7966 = vpop.f32.mrb[0].mxu0
        %v7967 = vpop.f32.mrb[0].mxu0
        %v7968 = vadd.f32 %v7663, %v7967
        %v7969 = vpop.f32.mrb[0].mxu0
        %7970 = vmatprep.mubr.bf16.mxu0 0
        %7971 = vmatmul.mubr.bf16.gmra.mrb[0].mxu0 %v7753
        %v7972 = vpop.f32.mrb[0].mxu0
        %v7973 = vadd.f32 %v7668, %v7972
        %v7974 = vpop.f32.mrb[0].mxu0
        %v7975 = vpop.f32.mrb[0].mxu0
        %v7976 = vadd.f32 %v7671, %v7975
        %v7977 = vpop.f32.mrb[0].mxu0
        %7978 = vdwg.mxu0
        %v7979 = vld [vmem:[#allocation2] sm:$0xe]
        %v7980 = vld [vmem:[#allocation2 + $0xc] sm:$0xe]
        %v7981 = vld [vmem:[#allocation2 + $0x18] sm:$0xe]
        %v7982 = vld [vmem:[#allocation2 + $0x24] sm:$0xe]
        %v7983 = vld [vmem:[#allocation2 + $0x30] sm:$0xe]
        %v7984 = vld [vmem:[#allocation2 + $0x3c] sm:$0xe]
        %v7985 = vld [vmem:[#allocation2 + $0x48] sm:$0xe]
        %v7986 = vld [vmem:[#allocation2 + $0x54] sm:$0xe]
        %v7987 = vld [vmem:[#allocation2 + $0x60] sm:$0xe]
        %v7988 = vld [vmem:[#allocation2 + $0x6c] sm:$0xe]
        %v7989 = vld [vmem:[#allocation2 + $0x78] sm:$0xe]
        %v7990 = vld [vmem:[#allocation2 + $0x84] sm:$0xe]
        %v7991 = vld [vmem:[#allocation2 + $0x90] sm:$0xe]
        %v7992 = vld [vmem:[#allocation2 + $0x9c] sm:$0xe]
        %v7993 = vld [vmem:[#allocation2 + $0xa8] sm:$0xe]
        %v7994 = vld [vmem:[#allocation2 + $0xb4] sm:$0xe]
        %v8027 = vrot.slane %v7979, 5
        %v8028 = vrot.slane %v8027, 4
        %v8029 = vrot.slane %v6938, 5
        %v8030 = vsel %vm2595, %v8028, %v8029
        %v8031 = vrot.slane %v8029, 4
        %v8032 = vrot.slane %v6985, 5
        %v8033 = vsel %vm2595, %v8031, %v8032
        %v8034 = vrot.slane %v7980, 5
        %v8035 = vrot.slane %v8034, 4
        %v8036 = vrot.slane %v6940, 5
        %v8037 = vsel %vm2595, %v8035, %v8036
        %v8038 = vrot.slane %v8036, 4
        %v8039 = vrot.slane %v6986, 5
        %v8040 = vsel %vm2595, %v8038, %v8039
        %v8041 = vrot.slane %v7981, 5
        %v8042 = vrot.slane %v8041, 4
        %v8043 = vrot.slane %v6942, 5
        %v8044 = vsel %vm2595, %v8042, %v8043
        %v8045 = vrot.slane %v8043, 4
        %v8046 = vrot.slane %v6987, 5
        %v8047 = vsel %vm2595, %v8045, %v8046
        %v8048 = vrot.slane %v7982, 5
        %v8049 = vrot.slane %v8048, 4
        %v8050 = vrot.slane %v6944, 5
        %v8051 = vsel %vm2595, %v8049, %v8050
        %v8052 = vrot.slane %v8050, 4
        %v8053 = vrot.slane %v6988, 5
        %v8054 = vsel %vm2595, %v8052, %v8053
        %v8055 = vrot.slane %v7983, 5
        %v8056 = vrot.slane %v8055, 4
        %v8057 = vrot.slane %v6946, 5
        %v8058 = vsel %vm2595, %v8056, %v8057
        %v8059 = vrot.slane %v8057, 4
        %v8060 = vrot.slane %v6989, 5
        %v8061 = vsel %vm2595, %v8059, %v8060
        %v8062 = vrot.slane %v7984, 5
        %v8063 = vrot.slane %v8062, 4
        %v8064 = vrot.slane %v6948, 5
        %v8065 = vsel %vm2595, %v8063, %v8064
        %v8066 = vrot.slane %v8064, 4
        %v8067 = vrot.slane %v6990, 5
        %v8068 = vsel %vm2595, %v8066, %v8067
        %v8069 = vrot.slane %v7985, 5
        %v8070 = vrot.slane %v8069, 4
        %v8071 = vrot.slane %v6950, 5
        %v8072 = vsel %vm2595, %v8070, %v8071
        %v8073 = vrot.slane %v8071, 4
        %v8074 = vrot.slane %v6991, 5
        %v8075 = vsel %vm2595, %v8073, %v8074
        %v8076 = vrot.slane %v7986, 5
        %v8077 = vrot.slane %v8076, 4
        %v8078 = vrot.slane %v6952, 5
        %v8079 = vsel %vm2595, %v8077, %v8078
        %v8080 = vrot.slane %v8078, 4
        %v8081 = vrot.slane %v6992, 5
        %v8082 = vsel %vm2595, %v8080, %v8081
        %v8083 = vrot.slane %v7987, 5
        %v8084 = vrot.slane %v8083, 4
        %v8085 = vrot.slane %v6954, 5
        %v8086 = vsel %vm2595, %v8084, %v8085
        %v8087 = vrot.slane %v8085, 4
        %v8088 = vrot.slane %v6993, 5
        %v8089 = vsel %vm2595, %v8087, %v8088
        %v8090 = vrot.slane %v7988, 5
        %v8091 = vrot.slane %v8090, 4
        %v8092 = vrot.slane %v6956, 5
        %v8093 = vsel %vm2595, %v8091, %v8092
        %v8094 = vrot.slane %v8092, 4
        %v8095 = vrot.slane %v6994, 5
        %v8096 = vsel %vm2595, %v8094, %v8095
        %v8097 = vrot.slane %v7989, 5
        %v8098 = vrot.slane %v8097, 4
        %v8099 = vrot.slane %v6958, 5
        %v8100 = vsel %vm2595, %v8098, %v8099
        %v8101 = vrot.slane %v8099, 4
        %v8102 = vrot.slane %v6995, 5
        %v8103 = vsel %vm2595, %v8101, %v8102
        %v8104 = vrot.slane %v7990, 5
        %v8105 = vrot.slane %v8104, 4
        %v8106 = vrot.slane %v6960, 5
        %v8107 = vsel %vm2595, %v8105, %v8106
        %v8108 = vrot.slane %v8106, 4
        %v8109 = vrot.slane %v6996, 5
        %v8110 = vsel %vm2595, %v8108, %v8109
        %v8111 = vrot.slane %v7991, 5
        %v8112 = vrot.slane %v8111, 4
        %v8113 = vrot.slane %v6962, 5
        %v8114 = vsel %vm2595, %v8112, %v8113
        %v8115 = vrot.slane %v8113, 4
        %v8116 = vrot.slane %v6997, 5
        %v8117 = vsel %vm2595, %v8115, %v8116
        %v8118 = vrot.slane %v7992, 5
        %v8119 = vrot.slane %v8118, 4
        %v8120 = vrot.slane %v6964, 5
        %v8121 = vsel %vm2595, %v8119, %v8120
        %v8122 = vrot.slane %v8120, 4
        %v8123 = vrot.slane %v6998, 5
        %v8124 = vsel %vm2595, %v8122, %v8123
        %v8125 = vrot.slane %v7993, 5
        %v8126 = vrot.slane %v8125, 4
        %v8127 = vrot.slane %v6966, 5
        %v8128 = vsel %vm2595, %v8126, %v8127
        %v8129 = vrot.slane %v8127, 4
        %v8130 = vrot.slane %v6999, 5
        %v8131 = vsel %vm2595, %v8129, %v8130
        %v8132 = vrot.slane %v7994, 5
        %v8133 = vrot.slane %v8132, 4
        %v8134 = vrot.slane %v6968, 5
        %v8135 = vsel %vm2595, %v8133, %v8134
        %v8136 = vrot.slane %v8134, 4
        %v8137 = vrot.slane %v7000, 5
        %v8138 = vsel %vm2595, %v8136, %v8137
        %v8139 = vld [vmem:[%s7 + $0x80] sm:$0xf]
        %v8140 = vld [vmem:[%s7 + $0x84] sm:$0xf]
        %v8141 = vld [vmem:[%s7 + $0x88] sm:$0xf]
        %v8142 = vld [vmem:[%s7 + $0x8c] sm:$0xf]
        %v8143 = vld [vmem:[%s7 + $0x90] sm:$0xf]
        %v8144 = vld [vmem:[%s7 + $0x94] sm:$0xf]
        %v8145 = vld [vmem:[%s7 + $0x98] sm:$0xf]
        %v8146 = vld [vmem:[%s7 + $0x9c] sm:$0xf]
        %v8147 = vld [vmem:[%s7 + $0xa0] sm:$0xf]
        %v8148 = vld [vmem:[%s7 + $0xa4] sm:$0xf]
        %v8149 = vld [vmem:[%s7 + $0xa8] sm:$0xf]
        %v8150 = vld [vmem:[%s7 + $0xac] sm:$0xf]
        %v8151 = vld [vmem:[%s7 + $0xb0] sm:$0xf]
        %v8152 = vld [vmem:[%s7 + $0xb4] sm:$0xf]
        %v8153 = vld [vmem:[%s7 + $0xb8] sm:$0xf]
        %v8154 = vld [vmem:[%s7 + $0xbc] sm:$0xf]
        %v8155 = vunpack.c.l.b16 %v8030
        %v8156 = vunpack.c.l.b16 %v8033
        %v8157 = vunpack.c.l.b16 %v8037
        %v8158 = vunpack.c.l.b16 %v8040
        %v8159 = vunpack.c.l.b16 %v8044
        %v8160 = vunpack.c.l.b16 %v8047
        %v8161 = vunpack.c.l.b16 %v8051
        %v8162 = vunpack.c.l.b16 %v8054
        %v8163 = vunpack.c.l.b16 %v8058
        %v8164 = vunpack.c.l.b16 %v8061
        %v8165 = vunpack.c.l.b16 %v8065
        %v8166 = vunpack.c.l.b16 %v8068
        %v8167 = vunpack.c.l.b16 %v8072
        %v8168 = vunpack.c.l.b16 %v8075
        %v8169 = vunpack.c.l.b16 %v8079
        %v8170 = vunpack.c.l.b16 %v8082
        %v8171 = vunpack.c.l.b16 %v8086
        %v8172 = vunpack.c.l.b16 %v8089
        %v8173 = vunpack.c.l.b16 %v8093
        %v8174 = vunpack.c.l.b16 %v8096
        %v8175 = vunpack.c.l.b16 %v8100
        %v8176 = vunpack.c.l.b16 %v8103
        %v8177 = vunpack.c.l.b16 %v8107
        %v8178 = vunpack.c.l.b16 %v8110
        %v8179 = vunpack.c.l.b16 %v8114
        %v8180 = vunpack.c.l.b16 %v8117
        %v8181 = vunpack.c.l.b16 %v8121
        %v8182 = vunpack.c.l.b16 %v8124
        %v8183 = vunpack.c.l.b16 %v8128
        %v8184 = vunpack.c.l.b16 %v8131
        %v8185 = vunpack.c.l.b16 %v8135
        %v8186 = vunpack.c.l.b16 %v8138
        %v8187 = vpack.c.b16 %v8156, %v8155
        %v8188 = vpack.c.b16 %v8158, %v8157
        %v8189 = vpack.c.b16 %v8160, %v8159
        %v8190 = vpack.c.b16 %v8162, %v8161
        %v8191 = vpack.c.b16 %v8164, %v8163
        %v8192 = vpack.c.b16 %v8166, %v8165
        %v8193 = vpack.c.b16 %v8168, %v8167
        %v8194 = vpack.c.b16 %v8170, %v8169
        %v8195 = vpack.c.b16 %v8172, %v8171
        %v8196 = vpack.c.b16 %v8174, %v8173
        %v8197 = vpack.c.b16 %v8176, %v8175
        %v8198 = vpack.c.b16 %v8178, %v8177
        %v8199 = vpack.c.b16 %v8180, %v8179
        %v8200 = vpack.c.b16 %v8182, %v8181
        %v8201 = vpack.c.b16 %v8184, %v8183
        %v8202 = vpack.c.b16 %v8186, %v8185
        %v8235 = vunpack.c.l.b16 %v8139
        %v8236 = vunpack.c.l.b16 %v8140
        %v8237 = vunpack.c.l.b16 %v8141
        %v8238 = vunpack.c.l.b16 %v8142
        %v8239 = vunpack.c.l.b16 %v8143
        %v8240 = vunpack.c.l.b16 %v8144
        %v8241 = vunpack.c.l.b16 %v8145
        %v8242 = vunpack.c.l.b16 %v8146
        %v8243 = vunpack.c.l.b16 %v8147
        %v8244 = vunpack.c.l.b16 %v8148
        %v8245 = vunpack.c.l.b16 %v8149
        %v8246 = vunpack.c.l.b16 %v8150
        %v8247 = vunpack.c.l.b16 %v8151
        %v8248 = vunpack.c.l.b16 %v8152
        %v8249 = vunpack.c.l.b16 %v8153
        %v8250 = vunpack.c.l.b16 %v8154
        %v8251 = vpack.c.b16 %v8236, %v8235
        %v8252 = vpack.c.b16 %v8238, %v8237
        %v8253 = vpack.c.b16 %v8240, %v8239
        %v8254 = vpack.c.b16 %v8242, %v8241
        %v8255 = vpack.c.b16 %v8244, %v8243
        %v8256 = vpack.c.b16 %v8246, %v8245
        %v8257 = vpack.c.b16 %v8248, %v8247
        %v8258 = vpack.c.b16 %v8250, %v8249
        %8267 = vmatprep.subr.bf16.mxu0 0
        %8268 = vmatpush1.bf16.msra.mxu0 %v8251
        %8269 = vmatprep.subr.bf16.mxu0 0
        %8270 = vmatpush1.bf16.msra.mxu0 %v8252
        %8271 = vmatprep.subr.bf16.mxu0 0
        %8272 = vmatpush1.bf16.msra.mxu0 %v8253
        %8273 = vmatprep.subr.bf16.mxu0 0
        %8274 = vmatpush1.bf16.msra.mxu0 %v8254
        %8275 = vmatprep.subr.bf16.mxu0 0
        %8276 = vmatpush1.bf16.msra.mxu0 %v8255
        %8277 = vmatprep.subr.bf16.mxu0 0
        %8278 = vmatpush1.bf16.msra.mxu0 %v8256
        %8279 = vmatprep.subr.bf16.mxu0 0
        %8280 = vmatpush1.bf16.msra.mxu0 %v8257
        %8281 = vmatprep.subr.bf16.mxu0 0
        %8282 = vmatpush1.bf16.msra.mxu0 %v8258
        %8283 = vmatprep.subr.bf16.mxu0 0
        %8284 = vmatpush1.bf16.msra.mxu0 0
        %8285 = vmatprep.subr.bf16.mxu0 0
        %8286 = vmatpush1.bf16.msra.mxu0 0
        %8287 = vmatprep.subr.bf16.mxu0 0
        %8288 = vmatpush1.bf16.msra.mxu0 0
        %8289 = vmatprep.subr.bf16.mxu0 0
        %8290 = vmatpush1.bf16.msra.mxu0 0
        %8291 = vmatprep.subr.bf16.mxu0 0
        %8292 = vmatpush1.bf16.msra.mxu0 0
        %8293 = vmatprep.subr.bf16.mxu0 0
        %8294 = vmatpush1.bf16.msra.mxu0 0
        %8295 = vmatprep.subr.bf16.mxu0 0
        %8296 = vmatpush1.bf16.msra.mxu0 0
        %8297 = vmatprep.subr.bf16.mxu0 0
        %8298 = vmatpush1.bf16.msra.mxu0 0
        %8299 = vmatprep.mubr.bf16.mxu0 0
        %8300 = vmatmul.mubr.bf16.gmra.mrb[0].mxu0 %v8187
        %v8301 = vpop.f32.mrb[0].mxu0
        %v8302 = vadd.f32 0.0, %v8301
        %v8303 = vpop.f32.mrb[0].mxu0
        %v8304 = vpop.f32.mrb[0].mxu0
        %v8305 = vadd.f32 0.0, %v8304
        %v8306 = vpop.f32.mrb[0].mxu0
        %8307 = vmatprep.mubr.bf16.mxu0 0
        %8308 = vmatmul.mubr.bf16.gmra.mrb[0].mxu0 %v8188
        %v8309 = vpop.f32.mrb[0].mxu0
        %v8310 = vadd.f32 0.0, %v8309
        %v8311 = vpop.f32.mrb[0].mxu0
        %v8312 = vpop.f32.mrb[0].mxu0
        %v8313 = vadd.f32 0.0, %v8312
        %v8314 = vpop.f32.mrb[0].mxu0
        %8315 = vmatprep.mubr.bf16.mxu0 0
        %8316 = vmatmul.mubr.bf16.gmra.mrb[0].mxu0 %v8189
        %v8317 = vpop.f32.mrb[0].mxu0
        %v8318 = vadd.f32 0.0, %v8317
        %v8319 = vpop.f32.mrb[0].mxu0
        %v8320 = vpop.f32.mrb[0].mxu0
        %v8321 = vadd.f32 0.0, %v8320
        %v8322 = vpop.f32.mrb[0].mxu0
        %8323 = vmatprep.mubr.bf16.mxu0 0
        %8324 = vmatmul.mubr.bf16.gmra.mrb[0].mxu0 %v8190
        %v8325 = vpop.f32.mrb[0].mxu0
        %v8326 = vadd.f32 0.0, %v8325
        %v8327 = vpop.f32.mrb[0].mxu0
        %v8328 = vpop.f32.mrb[0].mxu0
        %v8329 = vadd.f32 0.0, %v8328
        %v8330 = vpop.f32.mrb[0].mxu0
        %8331 = vmatprep.mubr.bf16.mxu0 0
        %8332 = vmatmul.mubr.bf16.gmra.mrb[0].mxu0 %v8191
        %v8333 = vpop.f32.mrb[0].mxu0
        %v8334 = vadd.f32 0.0, %v8333
        %v8335 = vpop.f32.mrb[0].mxu0
        %v8336 = vpop.f32.mrb[0].mxu0
        %v8337 = vadd.f32 0.0, %v8336
        %v8338 = vpop.f32.mrb[0].mxu0
        %8339 = vmatprep.mubr.bf16.mxu0 0
        %8340 = vmatmul.mubr.bf16.gmra.mrb[0].mxu0 %v8192
        %v8341 = vpop.f32.mrb[0].mxu0
        %v8342 = vadd.f32 0.0, %v8341
        %v8343 = vpop.f32.mrb[0].mxu0
        %v8344 = vpop.f32.mrb[0].mxu0
        %v8345 = vadd.f32 0.0, %v8344
        %v8346 = vpop.f32.mrb[0].mxu0
        %8347 = vmatprep.mubr.bf16.mxu0 0
        %8348 = vmatmul.mubr.bf16.gmra.mrb[0].mxu0 %v8193
        %v8349 = vpop.f32.mrb[0].mxu0
        %v8350 = vadd.f32 0.0, %v8349
        %v8351 = vpop.f32.mrb[0].mxu0
        %v8352 = vpop.f32.mrb[0].mxu0
        %v8353 = vadd.f32 0.0, %v8352
        %v8354 = vpop.f32.mrb[0].mxu0
        %8355 = vmatprep.mubr.bf16.mxu0 0
        %8356 = vmatmul.mubr.bf16.gmra.mrb[0].mxu0 %v8194
        %v8357 = vpop.f32.mrb[0].mxu0
        %v8358 = vadd.f32 0.0, %v8357
        %v8359 = vpop.f32.mrb[0].mxu0
        %v8360 = vpop.f32.mrb[0].mxu0
        %v8361 = vadd.f32 0.0, %v8360
        %v8362 = vpop.f32.mrb[0].mxu0
        %8363 = vmatprep.mubr.bf16.mxu0 0
        %8364 = vmatmul.mubr.bf16.gmra.mrb[0].mxu0 %v8195
        %v8365 = vpop.f32.mrb[0].mxu0
        %v8366 = vadd.f32 0.0, %v8365
        %v8367 = vpop.f32.mrb[0].mxu0
        %v8368 = vpop.f32.mrb[0].mxu0
        %v8369 = vadd.f32 0.0, %v8368
        %v8370 = vpop.f32.mrb[0].mxu0
        %8371 = vmatprep.mubr.bf16.mxu0 0
        %8372 = vmatmul.mubr.bf16.gmra.mrb[0].mxu0 %v8196
        %v8373 = vpop.f32.mrb[0].mxu0
        %v8374 = vadd.f32 0.0, %v8373
        %v8375 = vpop.f32.mrb[0].mxu0
        %v8376 = vpop.f32.mrb[0].mxu0
        %v8377 = vadd.f32 0.0, %v8376
        %v8378 = vpop.f32.mrb[0].mxu0
        %8379 = vmatprep.mubr.bf16.mxu0 0
        %8380 = vmatmul.mubr.bf16.gmra.mrb[0].mxu0 %v8197
        %v8381 = vpop.f32.mrb[0].mxu0
        %v8382 = vadd.f32 0.0, %v8381
        %v8383 = vpop.f32.mrb[0].mxu0
        %v8384 = vpop.f32.mrb[0].mxu0
        %v8385 = vadd.f32 0.0, %v8384
        %v8386 = vpop.f32.mrb[0].mxu0
        %8387 = vmatprep.mubr.bf16.mxu0 0
        %8388 = vmatmul.mubr.bf16.gmra.mrb[0].mxu0 %v8198
        %v8389 = vpop.f32.mrb[0].mxu0
        %v8390 = vadd.f32 0.0, %v8389
        %v8391 = vpop.f32.mrb[0].mxu0
        %v8392 = vpop.f32.mrb[0].mxu0
        %v8393 = vadd.f32 0.0, %v8392
        %v8394 = vpop.f32.mrb[0].mxu0
        %8395 = vmatprep.mubr.bf16.mxu0 0
        %8396 = vmatmul.mubr.bf16.gmra.mrb[0].mxu0 %v8199
        %v8397 = vpop.f32.mrb[0].mxu0
        %v8398 = vadd.f32 0.0, %v8397
        %v8399 = vpop.f32.mrb[0].mxu0
        %v8400 = vpop.f32.mrb[0].mxu0
        %v8401 = vadd.f32 0.0, %v8400
        %v8402 = vpop.f32.mrb[0].mxu0
        %8403 = vmatprep.mubr.bf16.mxu0 0
        %8404 = vmatmul.mubr.bf16.gmra.mrb[0].mxu0 %v8200
        %v8405 = vpop.f32.mrb[0].mxu0
        %v8406 = vadd.f32 0.0, %v8405
        %v8407 = vpop.f32.mrb[0].mxu0
        %v8408 = vpop.f32.mrb[0].mxu0
        %v8409 = vadd.f32 0.0, %v8408
        %v8410 = vpop.f32.mrb[0].mxu0
        %8411 = vmatprep.mubr.bf16.mxu0 0
        %8412 = vmatmul.mubr.bf16.gmra.mrb[0].mxu0 %v8201
        %v8413 = vpop.f32.mrb[0].mxu0
        %v8414 = vadd.f32 0.0, %v8413
        %v8415 = vpop.f32.mrb[0].mxu0
        %v8416 = vpop.f32.mrb[0].mxu0
        %v8417 = vadd.f32 0.0, %v8416
        %v8418 = vpop.f32.mrb[0].mxu0
        %8419 = vmatprep.mubr.bf16.mxu0 0
        %8420 = vmatmul.mubr.bf16.gmra.mrb[0].mxu0 %v8202
        %v8421 = vpop.f32.mrb[0].mxu0
        %v8422 = vadd.f32 0.0, %v8421
        %v8423 = vpop.f32.mrb[0].mxu0
        %v8424 = vpop.f32.mrb[0].mxu0
        %v8425 = vadd.f32 0.0, %v8424
        %v8426 = vpop.f32.mrb[0].mxu0
        %8427 = vdwg.mxu0
        %v8428 = vadd.f32 %v7853, %v8302
        %v8429 = vadd.f32 %v7856, %v8305
        %v8430 = vadd.f32 %v7861, %v8310
        %v8431 = vadd.f32 %v7864, %v8313
        %v8432 = vadd.f32 %v7869, %v8318
        %v8433 = vadd.f32 %v7872, %v8321
        %v8434 = vadd.f32 %v7877, %v8326
        %v8435 = vadd.f32 %v7880, %v8329
        %v8436 = vadd.f32 %v7885, %v8334
        %v8437 = vadd.f32 %v7888, %v8337
        %v8438 = vadd.f32 %v7893, %v8342
        %v8439 = vadd.f32 %v7896, %v8345
        %v8440 = vadd.f32 %v7901, %v8350
        %v8441 = vadd.f32 %v7904, %v8353
        %v8442 = vadd.f32 %v7909, %v8358
        %v8443 = vadd.f32 %v7912, %v8361
        %v8444 = vadd.f32 %v7917, %v8366
        %v8445 = vadd.f32 %v7920, %v8369
        %v8446 = vadd.f32 %v7925, %v8374
        %v8447 = vadd.f32 %v7928, %v8377
        %v8448 = vadd.f32 %v7933, %v8382
        %v8449 = vadd.f32 %v7936, %v8385
        %v8450 = vadd.f32 %v7941, %v8390
        %v8451 = vadd.f32 %v7944, %v8393
        %v8452 = vadd.f32 %v7949, %v8398
        %v8453 = vadd.f32 %v7952, %v8401
        %v8454 = vadd.f32 %v7957, %v8406
        %v8455 = vadd.f32 %v7960, %v8409
        %v8456 = vadd.f32 %v7965, %v8414
        %v8457 = vadd.f32 %v7968, %v8417
        %v8458 = vadd.f32 %v7973, %v8422
        %v8459 = vadd.f32 %v7976, %v8425
        %v8460 = vld [vmem:[%s866] sm:$0xf]
        %v8461 = vld [vmem:[%s866 + $0x4] sm:$0xf]
        %v8462 = vld [vmem:[%s866 + $0xc] sm:$0xf]
        %v8463 = vld [vmem:[%s866 + $0x10] sm:$0xf]
        %v8464 = vld [vmem:[%s866 + $0x18] sm:$0xf]
        %v8465 = vld [vmem:[%s866 + $0x1c] sm:$0xf]
        %v8466 = vld [vmem:[%s866 + $0x24] sm:$0xf]
        %v8467 = vld [vmem:[%s866 + $0x28] sm:$0xf]
        %v8468 = vld [vmem:[%s866 + $0x30] sm:$0xf]
        %v8469 = vld [vmem:[%s866 + $0x34] sm:$0xf]
        %v8470 = vld [vmem:[%s866 + $0x3c] sm:$0xf]
        %v8471 = vld [vmem:[%s866 + $0x40] sm:$0xf]
        %v8472 = vld [vmem:[%s866 + $0x48] sm:$0xf]
        %v8473 = vld [vmem:[%s866 + $0x4c] sm:$0xf]
        %v8474 = vld [vmem:[%s866 + $0x54] sm:$0xf]
        %v8475 = vld [vmem:[%s866 + $0x58] sm:$0xf]
        %v8476 = vld [vmem:[%s866 + $0x60] sm:$0xf]
        %v8477 = vld [vmem:[%s866 + $0x64] sm:$0xf]
        %v8478 = vld [vmem:[%s866 + $0x6c] sm:$0xf]
        %v8479 = vld [vmem:[%s866 + $0x70] sm:$0xf]
        %v8480 = vld [vmem:[%s866 + $0x78] sm:$0xf]
        %v8481 = vld [vmem:[%s866 + $0x7c] sm:$0xf]
        %v8482 = vld [vmem:[%s866 + $0x84] sm:$0xf]
        %v8483 = vld [vmem:[%s866 + $0x88] sm:$0xf]
        %v8484 = vld [vmem:[%s866 + $0x90] sm:$0xf]
        %v8485 = vld [vmem:[%s866 + $0x94] sm:$0xf]
        %v8486 = vld [vmem:[%s866 + $0x9c] sm:$0xf]
        %v8487 = vld [vmem:[%s866 + $0xa0] sm:$0xf]
        %v8488 = vld [vmem:[%s866 + $0xa8] sm:$0xf]
        %v8489 = vld [vmem:[%s866 + $0xac] sm:$0xf]
        %v8490 = vld [vmem:[%s866 + $0xb4] sm:$0xf]
        %v8491 = vld [vmem:[%s866 + $0xb8] sm:$0xf]
        %v8492 = vld [vmem:[%s7 + $0xc0] sm:$0xf]
        %v8493 = vld [vmem:[%s7 + $0xc4] sm:$0xf]
        %v8494 = vld [vmem:[%s7 + $0xc8] sm:$0xf]
        %v8495 = vld [vmem:[%s7 + $0xcc] sm:$0xf]
        %v8496 = vld [vmem:[%s7 + $0xd0] sm:$0xf]
        %v8497 = vld [vmem:[%s7 + $0xd4] sm:$0xf]
        %v8498 = vld [vmem:[%s7 + $0xd8] sm:$0xf]
        %v8499 = vld [vmem:[%s7 + $0xdc] sm:$0xf]
        %v8500 = vld [vmem:[%s7 + $0xe0] sm:$0xf]
        %v8501 = vld [vmem:[%s7 + $0xe4] sm:$0xf]
        %v8502 = vld [vmem:[%s7 + $0xe8] sm:$0xf]
        %v8503 = vld [vmem:[%s7 + $0xec] sm:$0xf]
        %v8504 = vld [vmem:[%s7 + $0xf0] sm:$0xf]
        %v8505 = vld [vmem:[%s7 + $0xf4] sm:$0xf]
        %v8506 = vld [vmem:[%s7 + $0xf8] sm:$0xf]
        %v8507 = vld [vmem:[%s7 + $0xfc] sm:$0xf]
        %v8540 = vunpack.c.l.b16 %v8460
        %v8541 = vunpack.c.l.b16 %v8461
        %v8542 = vunpack.c.l.b16 %v8462
        %v8543 = vunpack.c.l.b16 %v8463
        %v8544 = vunpack.c.l.b16 %v8464
        %v8545 = vunpack.c.l.b16 %v8465
        %v8546 = vunpack.c.l.b16 %v8466
        %v8547 = vunpack.c.l.b16 %v8467
        %v8548 = vunpack.c.l.b16 %v8468
        %v8549 = vunpack.c.l.b16 %v8469
        %v8550 = vunpack.c.l.b16 %v8470
        %v8551 = vunpack.c.l.b16 %v8471
        %v8552 = vunpack.c.l.b16 %v8472
        %v8553 = vunpack.c.l.b16 %v8473
        %v8554 = vunpack.c.l.b16 %v8474
        %v8555 = vunpack.c.l.b16 %v8475
        %v8556 = vunpack.c.l.b16 %v8476
        %v8557 = vunpack.c.l.b16 %v8477
        %v8558 = vunpack.c.l.b16 %v8478
        %v8559 = vunpack.c.l.b16 %v8479
        %v8560 = vunpack.c.l.b16 %v8480
        %v8561 = vunpack.c.l.b16 %v8481
        %v8562 = vunpack.c.l.b16 %v8482
        %v8563 = vunpack.c.l.b16 %v8483
        %v8564 = vunpack.c.l.b16 %v8484
        %v8565 = vunpack.c.l.b16 %v8485
        %v8566 = vunpack.c.l.b16 %v8486
        %v8567 = vunpack.c.l.b16 %v8487
        %v8568 = vunpack.c.l.b16 %v8488
        %v8569 = vunpack.c.l.b16 %v8489
        %v8570 = vunpack.c.l.b16 %v8490
        %v8571 = vunpack.c.l.b16 %v8491
        %v8572 = vpack.c.b16 %v8541, %v8540
        %v8573 = vpack.c.b16 %v8543, %v8542
        %v8574 = vpack.c.b16 %v8545, %v8544
        %v8575 = vpack.c.b16 %v8547, %v8546
        %v8576 = vpack.c.b16 %v8549, %v8548
        %v8577 = vpack.c.b16 %v8551, %v8550
        %v8578 = vpack.c.b16 %v8553, %v8552
        %v8579 = vpack.c.b16 %v8555, %v8554
        %v8580 = vpack.c.b16 %v8557, %v8556
        %v8581 = vpack.c.b16 %v8559, %v8558
        %v8582 = vpack.c.b16 %v8561, %v8560
        %v8583 = vpack.c.b16 %v8563, %v8562
        %v8584 = vpack.c.b16 %v8565, %v8564
        %v8585 = vpack.c.b16 %v8567, %v8566
        %v8586 = vpack.c.b16 %v8569, %v8568
        %v8587 = vpack.c.b16 %v8571, %v8570
        %v8620 = vunpack.c.l.b16 %v8492
        %v8621 = vunpack.c.l.b16 %v8493
        %v8622 = vunpack.c.l.b16 %v8494
        %v8623 = vunpack.c.l.b16 %v8495
        %v8624 = vunpack.c.l.b16 %v8496
        %v8625 = vunpack.c.l.b16 %v8497
        %v8626 = vunpack.c.l.b16 %v8498
        %v8627 = vunpack.c.l.b16 %v8499
        %v8628 = vunpack.c.l.b16 %v8500
        %v8629 = vunpack.c.l.b16 %v8501
        %v8630 = vunpack.c.l.b16 %v8502
        %v8631 = vunpack.c.l.b16 %v8503
        %v8632 = vunpack.c.l.b16 %v8504
        %v8633 = vunpack.c.l.b16 %v8505
        %v8634 = vunpack.c.l.b16 %v8506
        %v8635 = vunpack.c.l.b16 %v8507
        %v8636 = vpack.c.b16 %v8621, %v8620
        %v8637 = vpack.c.b16 %v8623, %v8622
        %v8638 = vpack.c.b16 %v8625, %v8624
        %v8639 = vpack.c.b16 %v8627, %v8626
        %v8640 = vpack.c.b16 %v8629, %v8628
        %v8641 = vpack.c.b16 %v8631, %v8630
        %v8642 = vpack.c.b16 %v8633, %v8632
        %v8643 = vpack.c.b16 %v8635, %v8634
        %8652 = vmatprep.subr.bf16.mxu0 0
        %8653 = vmatpush1.bf16.msra.mxu0 %v8636
        %8654 = vmatprep.subr.bf16.mxu0 0
        %8655 = vmatpush1.bf16.msra.mxu0 %v8637
        %8656 = vmatprep.subr.bf16.mxu0 0
        %8657 = vmatpush1.bf16.msra.mxu0 %v8638
        %8658 = vmatprep.subr.bf16.mxu0 0
        %8659 = vmatpush1.bf16.msra.mxu0 %v8639
        %8660 = vmatprep.subr.bf16.mxu0 0
        %8661 = vmatpush1.bf16.msra.mxu0 %v8640
        %8662 = vmatprep.subr.bf16.mxu0 0
        %8663 = vmatpush1.bf16.msra.mxu0 %v8641
        %8664 = vmatprep.subr.bf16.mxu0 0
        %8665 = vmatpush1.bf16.msra.mxu0 %v8642
        %8666 = vmatprep.subr.bf16.mxu0 0
        %8667 = vmatpush1.bf16.msra.mxu0 %v8643
        %8668 = vmatprep.subr.bf16.mxu0 0
        %8669 = vmatpush1.bf16.msra.mxu0 0
        %8670 = vmatprep.subr.bf16.mxu0 0
        %8671 = vmatpush1.bf16.msra.mxu0 0
        %8672 = vmatprep.subr.bf16.mxu0 0
        %8673 = vmatpush1.bf16.msra.mxu0 0
        %8674 = vmatprep.subr.bf16.mxu0 0
        %8675 = vmatpush1.bf16.msra.mxu0 0
        %8676 = vmatprep.subr.bf16.mxu0 0
        %8677 = vmatpush1.bf16.msra.mxu0 0
        %8678 = vmatprep.subr.bf16.mxu0 0
        %8679 = vmatpush1.bf16.msra.mxu0 0
        %8680 = vmatprep.subr.bf16.mxu0 0
        %8681 = vmatpush1.bf16.msra.mxu0 0
        %8682 = vmatprep.subr.bf16.mxu0 0
        %8683 = vmatpush1.bf16.msra.mxu0 0
        %8684 = vmatprep.mubr.bf16.mxu0 0
        %8685 = vmatmul.mubr.bf16.gmra.mrb[0].mxu0 %v8572
        %v8686 = vpop.f32.mrb[0].mxu0
        %v8687 = vadd.f32 0.0, %v8686
        %v8688 = vpop.f32.mrb[0].mxu0
        %v8689 = vpop.f32.mrb[0].mxu0
        %v8690 = vadd.f32 0.0, %v8689
        %v8691 = vpop.f32.mrb[0].mxu0
        %8692 = vmatprep.mubr.bf16.mxu0 0
        %8693 = vmatmul.mubr.bf16.gmra.mrb[0].mxu0 %v8573
        %v8694 = vpop.f32.mrb[0].mxu0
        %v8695 = vadd.f32 0.0, %v8694
        %v8696 = vpop.f32.mrb[0].mxu0
        %v8697 = vpop.f32.mrb[0].mxu0
        %v8698 = vadd.f32 0.0, %v8697
        %v8699 = vpop.f32.mrb[0].mxu0
        %8700 = vmatprep.mubr.bf16.mxu0 0
        %8701 = vmatmul.mubr.bf16.gmra.mrb[0].mxu0 %v8574
        %v8702 = vpop.f32.mrb[0].mxu0
        %v8703 = vadd.f32 0.0, %v8702
        %v8704 = vpop.f32.mrb[0].mxu0
        %v8705 = vpop.f32.mrb[0].mxu0
        %v8706 = vadd.f32 0.0, %v8705
        %v8707 = vpop.f32.mrb[0].mxu0
        %8708 = vmatprep.mubr.bf16.mxu0 0
        %8709 = vmatmul.mubr.bf16.gmra.mrb[0].mxu0 %v8575
        %v8710 = vpop.f32.mrb[0].mxu0
        %v8711 = vadd.f32 0.0, %v8710
        %v8712 = vpop.f32.mrb[0].mxu0
        %v8713 = vpop.f32.mrb[0].mxu0
        %v8714 = vadd.f32 0.0, %v8713
        %v8715 = vpop.f32.mrb[0].mxu0
        %8716 = vmatprep.mubr.bf16.mxu0 0
        %8717 = vmatmul.mubr.bf16.gmra.mrb[0].mxu0 %v8576
        %v8718 = vpop.f32.mrb[0].mxu0
        %v8719 = vadd.f32 0.0, %v8718
        %v8720 = vpop.f32.mrb[0].mxu0
        %v8721 = vpop.f32.mrb[0].mxu0
        %v8722 = vadd.f32 0.0, %v8721
        %v8723 = vpop.f32.mrb[0].mxu0
        %8724 = vmatprep.mubr.bf16.mxu0 0
        %8725 = vmatmul.mubr.bf16.gmra.mrb[0].mxu0 %v8577
        %v8726 = vpop.f32.mrb[0].mxu0
        %v8727 = vadd.f32 0.0, %v8726
        %v8728 = vpop.f32.mrb[0].mxu0
        %v8729 = vpop.f32.mrb[0].mxu0
        %v8730 = vadd.f32 0.0, %v8729
        %v8731 = vpop.f32.mrb[0].mxu0
        %8732 = vmatprep.mubr.bf16.mxu0 0
        %8733 = vmatmul.mubr.bf16.gmra.mrb[0].mxu0 %v8578
        %v8734 = vpop.f32.mrb[0].mxu0
        %v8735 = vadd.f32 0.0, %v8734
        %v8736 = vpop.f32.mrb[0].mxu0
        %v8737 = vpop.f32.mrb[0].mxu0
        %v8738 = vadd.f32 0.0, %v8737
        %v8739 = vpop.f32.mrb[0].mxu0
        %8740 = vmatprep.mubr.bf16.mxu0 0
        %8741 = vmatmul.mubr.bf16.gmra.mrb[0].mxu0 %v8579
        %v8742 = vpop.f32.mrb[0].mxu0
        %v8743 = vadd.f32 0.0, %v8742
        %v8744 = vpop.f32.mrb[0].mxu0
        %v8745 = vpop.f32.mrb[0].mxu0
        %v8746 = vadd.f32 0.0, %v8745
        %v8747 = vpop.f32.mrb[0].mxu0
        %8748 = vmatprep.mubr.bf16.mxu0 0
        %8749 = vmatmul.mubr.bf16.gmra.mrb[0].mxu0 %v8580
        %v8750 = vpop.f32.mrb[0].mxu0
        %v8751 = vadd.f32 0.0, %v8750
        %v8752 = vpop.f32.mrb[0].mxu0
        %v8753 = vpop.f32.mrb[0].mxu0
        %v8754 = vadd.f32 0.0, %v8753
        %v8755 = vpop.f32.mrb[0].mxu0
        %8756 = vmatprep.mubr.bf16.mxu0 0
        %8757 = vmatmul.mubr.bf16.gmra.mrb[0].mxu0 %v8581
        %v8758 = vpop.f32.mrb[0].mxu0
        %v8759 = vadd.f32 0.0, %v8758
        %v8760 = vpop.f32.mrb[0].mxu0
        %v8761 = vpop.f32.mrb[0].mxu0
        %v8762 = vadd.f32 0.0, %v8761
        %v8763 = vpop.f32.mrb[0].mxu0
        %8764 = vmatprep.mubr.bf16.mxu0 0
        %8765 = vmatmul.mubr.bf16.gmra.mrb[0].mxu0 %v8582
        %v8766 = vpop.f32.mrb[0].mxu0
        %v8767 = vadd.f32 0.0, %v8766
        %v8768 = vpop.f32.mrb[0].mxu0
        %v8769 = vpop.f32.mrb[0].mxu0
        %v8770 = vadd.f32 0.0, %v8769
        %v8771 = vpop.f32.mrb[0].mxu0
        %8772 = vmatprep.mubr.bf16.mxu0 0
        %8773 = vmatmul.mubr.bf16.gmra.mrb[0].mxu0 %v8583
        %v8774 = vpop.f32.mrb[0].mxu0
        %v8775 = vadd.f32 0.0, %v8774
        %v8776 = vpop.f32.mrb[0].mxu0
        %v8777 = vpop.f32.mrb[0].mxu0
        %v8778 = vadd.f32 0.0, %v8777
        %v8779 = vpop.f32.mrb[0].mxu0
        %8780 = vmatprep.mubr.bf16.mxu0 0
        %8781 = vmatmul.mubr.bf16.gmra.mrb[0].mxu0 %v8584
        %v8782 = vpop.f32.mrb[0].mxu0
        %v8783 = vadd.f32 0.0, %v8782
        %v8784 = vpop.f32.mrb[0].mxu0
        %v8785 = vpop.f32.mrb[0].mxu0
        %v8786 = vadd.f32 0.0, %v8785
        %v8787 = vpop.f32.mrb[0].mxu0
        %8788 = vmatprep.mubr.bf16.mxu0 0
        %8789 = vmatmul.mubr.bf16.gmra.mrb[0].mxu0 %v8585
        %v8790 = vpop.f32.mrb[0].mxu0
        %v8791 = vadd.f32 0.0, %v8790
        %v8792 = vpop.f32.mrb[0].mxu0
        %v8793 = vpop.f32.mrb[0].mxu0
        %v8794 = vadd.f32 0.0, %v8793
        %v8795 = vpop.f32.mrb[0].mxu0
        %8796 = vmatprep.mubr.bf16.mxu0 0
        %8797 = vmatmul.mubr.bf16.gmra.mrb[0].mxu0 %v8586
        %v8798 = vpop.f32.mrb[0].mxu0
        %v8799 = vadd.f32 0.0, %v8798
        %v8800 = vpop.f32.mrb[0].mxu0
        %v8801 = vpop.f32.mrb[0].mxu0
        %v8802 = vadd.f32 0.0, %v8801
        %v8803 = vpop.f32.mrb[0].mxu0
        %8804 = vmatprep.mubr.bf16.mxu0 0
        %8805 = vmatmul.mubr.bf16.gmra.mrb[0].mxu0 %v8587
        %v8806 = vpop.f32.mrb[0].mxu0
        %v8807 = vadd.f32 0.0, %v8806
        %v8808 = vpop.f32.mrb[0].mxu0
        %v8809 = vpop.f32.mrb[0].mxu0
        %v8810 = vadd.f32 0.0, %v8809
        %v8811 = vpop.f32.mrb[0].mxu0
        %8812 = vdwg.mxu0
        %v8813 = vadd.f32 %v8428, %v8687
        %v8814 = vadd.f32 %v8429, %v8690
        %v8815 = vadd.f32 %v8430, %v8695
        %v8816 = vadd.f32 %v8431, %v8698
        %v8817 = vadd.f32 %v8432, %v8703
        %v8818 = vadd.f32 %v8433, %v8706
        %v8819 = vadd.f32 %v8434, %v8711
        %v8820 = vadd.f32 %v8435, %v8714
        %v8821 = vadd.f32 %v8436, %v8719
        %v8822 = vadd.f32 %v8437, %v8722
        %v8823 = vadd.f32 %v8438, %v8727
        %v8824 = vadd.f32 %v8439, %v8730
        %v8825 = vadd.f32 %v8440, %v8735
        %v8826 = vadd.f32 %v8441, %v8738
        %v8827 = vadd.f32 %v8442, %v8743
        %v8828 = vadd.f32 %v8443, %v8746
        %v8829 = vadd.f32 %v8444, %v8751
        %v8830 = vadd.f32 %v8445, %v8754
        %v8831 = vadd.f32 %v8446, %v8759
        %v8832 = vadd.f32 %v8447, %v8762
        %v8833 = vadd.f32 %v8448, %v8767
        %v8834 = vadd.f32 %v8449, %v8770
        %v8835 = vadd.f32 %v8450, %v8775
        %v8836 = vadd.f32 %v8451, %v8778
        %v8837 = vadd.f32 %v8452, %v8783
        %v8838 = vadd.f32 %v8453, %v8786
        %v8839 = vadd.f32 %v8454, %v8791
        %v8840 = vadd.f32 %v8455, %v8794
        %v8841 = vadd.f32 %v8456, %v8799
        %v8842 = vadd.f32 %v8457, %v8802
        %v8843 = vadd.f32 %v8458, %v8807
        %v8844 = vadd.f32 %v8459, %v8810
        %v8845 = vld [vmem:[%s866] sm:$0xf]
        %v8846 = vld [vmem:[%s866 + $0x4] sm:$0xf]
        %v8847 = vld [vmem:[%s866 + $0x8] sm:$0x1]
        %v8848 = vld [vmem:[%s866 + $0xc] sm:$0xf]
        %v8849 = vld [vmem:[%s866 + $0x10] sm:$0xf]
        %v8850 = vld [vmem:[%s866 + $0x14] sm:$0x1]
        %v8851 = vld [vmem:[%s866 + $0x18] sm:$0xf]
        %v8852 = vld [vmem:[%s866 + $0x1c] sm:$0xf]
        %v8853 = vld [vmem:[%s866 + $0x20] sm:$0x1]
        %v8854 = vld [vmem:[%s866 + $0x24] sm:$0xf]
        %v8855 = vld [vmem:[%s866 + $0x28] sm:$0xf]
        %v8856 = vld [vmem:[%s866 + $0x2c] sm:$0x1]
        %v8857 = vld [vmem:[%s866 + $0x30] sm:$0xf]
        %v8858 = vld [vmem:[%s866 + $0x34] sm:$0xf]
        %v8859 = vld [vmem:[%s866 + $0x38] sm:$0x1]
        %v8860 = vld [vmem:[%s866 + $0x3c] sm:$0xf]
        %v8861 = vld [vmem:[%s866 + $0x40] sm:$0xf]
        %v8862 = vld [vmem:[%s866 + $0x44] sm:$0x1]
        %v8863 = vld [vmem:[%s866 + $0x48] sm:$0xf]
        %v8864 = vld [vmem:[%s866 + $0x4c] sm:$0xf]
        %v8865 = vld [vmem:[%s866 + $0x50] sm:$0x1]
        %v8866 = vld [vmem:[%s866 + $0x54] sm:$0xf]
        %v8867 = vld [vmem:[%s866 + $0x58] sm:$0xf]
        %v8868 = vld [vmem:[%s866 + $0x5c] sm:$0x1]
        %v8869 = vld [vmem:[%s866 + $0x60] sm:$0xf]
        %v8870 = vld [vmem:[%s866 + $0x64] sm:$0xf]
        %v8871 = vld [vmem:[%s866 + $0x68] sm:$0x1]
        %v8872 = vld [vmem:[%s866 + $0x6c] sm:$0xf]
        %v8873 = vld [vmem:[%s866 + $0x70] sm:$0xf]
        %v8874 = vld [vmem:[%s866 + $0x74] sm:$0x1]
        %v8875 = vld [vmem:[%s866 + $0x78] sm:$0xf]
        %v8876 = vld [vmem:[%s866 + $0x7c] sm:$0xf]
        %v8877 = vld [vmem:[%s866 + $0x80] sm:$0x1]
        %v8878 = vld [vmem:[%s866 + $0x84] sm:$0xf]
        %v8879 = vld [vmem:[%s866 + $0x88] sm:$0xf]
        %v8880 = vld [vmem:[%s866 + $0x8c] sm:$0x1]
        %v8881 = vld [vmem:[%s866 + $0x90] sm:$0xf]
        %v8882 = vld [vmem:[%s866 + $0x94] sm:$0xf]
        %v8883 = vld [vmem:[%s866 + $0x98] sm:$0x1]
        %v8884 = vld [vmem:[%s866 + $0x9c] sm:$0xf]
        %v8885 = vld [vmem:[%s866 + $0xa0] sm:$0xf]
        %v8886 = vld [vmem:[%s866 + $0xa4] sm:$0x1]
        %v8887 = vld [vmem:[%s866 + $0xa8] sm:$0xf]
        %v8888 = vld [vmem:[%s866 + $0xac] sm:$0xf]
        %v8889 = vld [vmem:[%s866 + $0xb0] sm:$0x1]
        %v8890 = vld [vmem:[%s866 + $0xb4] sm:$0xf]
        %v8891 = vld [vmem:[%s866 + $0xb8] sm:$0xf]
        %v8892 = vld [vmem:[%s866 + $0xbc] sm:$0x1]
        %v8894 = vshrl.u32 %v8845, 16
        %v8896 = vrot.slane %v8894, 4
        %v8897 = vshll.u32 %v8845, 16
        %v8899 = vrot.slane %v8897, 5
        %v8900 = vor.u32 %v8896, %v8899
        %v8901 = vrot.slane %v8900, 4
        %v8903 = vshll.u32 %v8846, 16
        %v8905 = vrot.slane %v8903, 5
        %v8906 = vsel %vm1566, %v8901, %v8905
        %v8907 = vshrl.u32 %v8846, 16
        %v8909 = vrot.slane %v8907, 4
        %v8910 = vor.u32 %v8909, %v8905
        %v8911 = vrot.slane %v8910, 4
        %v8913 = vshll.u32 %v8847, 16
        %v8915 = vrot.slane %v8913, 5
        %v8916 = vsel %vm1566, %v8911, %v8915
        %v8918 = vshrl.u32 %v8848, 16
        %v8920 = vrot.slane %v8918, 4
        %v8921 = vshll.u32 %v8848, 16
        %v8923 = vrot.slane %v8921, 5
        %v8924 = vor.u32 %v8920, %v8923
        %v8925 = vrot.slane %v8924, 4
        %v8927 = vshll.u32 %v8849, 16
        %v8929 = vrot.slane %v8927, 5
        %v8930 = vsel %vm1566, %v8925, %v8929
        %v8931 = vshrl.u32 %v8849, 16
        %v8933 = vrot.slane %v8931, 4
        %v8934 = vor.u32 %v8933, %v8929
        %v8935 = vrot.slane %v8934, 4
        %v8937 = vshll.u32 %v8850, 16
        %v8939 = vrot.slane %v8937, 5
        %v8940 = vsel %vm1566, %v8935, %v8939
        %v8942 = vshrl.u32 %v8851, 16
        %v8944 = vrot.slane %v8942, 4
        %v8945 = vshll.u32 %v8851, 16
        %v8947 = vrot.slane %v8945, 5
        %v8948 = vor.u32 %v8944, %v8947
        %v8949 = vrot.slane %v8948, 4
        %v8951 = vshll.u32 %v8852, 16
        %v8953 = vrot.slane %v8951, 5
        %v8954 = vsel %vm1566, %v8949, %v8953
        %v8955 = vshrl.u32 %v8852, 16
        %v8957 = vrot.slane %v8955, 4
        %v8958 = vor.u32 %v8957, %v8953
        %v8959 = vrot.slane %v8958, 4
        %v8961 = vshll.u32 %v8853, 16
        %v8963 = vrot.slane %v8961, 5
        %v8964 = vsel %vm1566, %v8959, %v8963
        %v8966 = vshrl.u32 %v8854, 16
        %v8968 = vrot.slane %v8966, 4
        %v8969 = vshll.u32 %v8854, 16
        %v8971 = vrot.slane %v8969, 5
        %v8972 = vor.u32 %v8968, %v8971
        %v8973 = vrot.slane %v8972, 4
        %v8975 = vshll.u32 %v8855, 16
        %v8977 = vrot.slane %v8975, 5
        %v8978 = vsel %vm1566, %v8973, %v8977
        %v8979 = vshrl.u32 %v8855, 16
        %v8981 = vrot.slane %v8979, 4
        %v8982 = vor.u32 %v8981, %v8977
        %v8983 = vrot.slane %v8982, 4
        %v8985 = vshll.u32 %v8856, 16
        %v8987 = vrot.slane %v8985, 5
        %v8988 = vsel %vm1566, %v8983, %v8987
        %v8990 = vshrl.u32 %v8857, 16
        %v8992 = vrot.slane %v8990, 4
        %v8993 = vshll.u32 %v8857, 16
        %v8995 = vrot.slane %v8993, 5
        %v8996 = vor.u32 %v8992, %v8995
        %v8997 = vrot.slane %v8996, 4
        %v8999 = vshll.u32 %v8858, 16
        %v9001 = vrot.slane %v8999, 5
        %v9002 = vsel %vm1566, %v8997, %v9001
        %v9003 = vshrl.u32 %v8858, 16
        %v9005 = vrot.slane %v9003, 4
        %v9006 = vor.u32 %v9005, %v9001
        %v9007 = vrot.slane %v9006, 4
        %v9009 = vshll.u32 %v8859, 16
        %v9011 = vrot.slane %v9009, 5
        %v9012 = vsel %vm1566, %v9007, %v9011
        %v9014 = vshrl.u32 %v8860, 16
        %v9016 = vrot.slane %v9014, 4
        %v9017 = vshll.u32 %v8860, 16
        %v9019 = vrot.slane %v9017, 5
        %v9020 = vor.u32 %v9016, %v9019
        %v9021 = vrot.slane %v9020, 4
        %v9023 = vshll.u32 %v8861, 16
        %v9025 = vrot.slane %v9023, 5
        %v9026 = vsel %vm1566, %v9021, %v9025
        %v9027 = vshrl.u32 %v8861, 16
        %v9029 = vrot.slane %v9027, 4
        %v9030 = vor.u32 %v9029, %v9025
        %v9031 = vrot.slane %v9030, 4
        %v9033 = vshll.u32 %v8862, 16
        %v9035 = vrot.slane %v9033, 5
        %v9036 = vsel %vm1566, %v9031, %v9035
        %v9038 = vshrl.u32 %v8863, 16
        %v9040 = vrot.slane %v9038, 4
        %v9041 = vshll.u32 %v8863, 16
        %v9043 = vrot.slane %v9041, 5
        %v9044 = vor.u32 %v9040, %v9043
        %v9045 = vrot.slane %v9044, 4
        %v9047 = vshll.u32 %v8864, 16
        %v9049 = vrot.slane %v9047, 5
        %v9050 = vsel %vm1566, %v9045, %v9049
        %v9051 = vshrl.u32 %v8864, 16
        %v9053 = vrot.slane %v9051, 4
        %v9054 = vor.u32 %v9053, %v9049
        %v9055 = vrot.slane %v9054, 4
        %v9057 = vshll.u32 %v8865, 16
        %v9059 = vrot.slane %v9057, 5
        %v9060 = vsel %vm1566, %v9055, %v9059
        %v9062 = vshrl.u32 %v8866, 16
        %v9064 = vrot.slane %v9062, 4
        %v9065 = vshll.u32 %v8866, 16
        %v9067 = vrot.slane %v9065, 5
        %v9068 = vor.u32 %v9064, %v9067
        %v9069 = vrot.slane %v9068, 4
        %v9071 = vshll.u32 %v8867, 16
        %v9073 = vrot.slane %v9071, 5
        %v9074 = vsel %vm1566, %v9069, %v9073
        %v9075 = vshrl.u32 %v8867, 16
        %v9077 = vrot.slane %v9075, 4
        %v9078 = vor.u32 %v9077, %v9073
        %v9079 = vrot.slane %v9078, 4
        %v9081 = vshll.u32 %v8868, 16
        %v9083 = vrot.slane %v9081, 5
        %v9084 = vsel %vm1566, %v9079, %v9083
        %v9086 = vshrl.u32 %v8869, 16
        %v9088 = vrot.slane %v9086, 4
        %v9089 = vshll.u32 %v8869, 16
        %v9091 = vrot.slane %v9089, 5
        %v9092 = vor.u32 %v9088, %v9091
        %v9093 = vrot.slane %v9092, 4
        %v9095 = vshll.u32 %v8870, 16
        %v9097 = vrot.slane %v9095, 5
        %v9098 = vsel %vm1566, %v9093, %v9097
        %v9099 = vshrl.u32 %v8870, 16
        %v9101 = vrot.slane %v9099, 4
        %v9102 = vor.u32 %v9101, %v9097
        %v9103 = vrot.slane %v9102, 4
        %v9105 = vshll.u32 %v8871, 16
        %v9107 = vrot.slane %v9105, 5
        %v9108 = vsel %vm1566, %v9103, %v9107
        %v9110 = vshrl.u32 %v8872, 16
        %v9112 = vrot.slane %v9110, 4
        %v9113 = vshll.u32 %v8872, 16
        %v9115 = vrot.slane %v9113, 5
        %v9116 = vor.u32 %v9112, %v9115
        %v9117 = vrot.slane %v9116, 4
        %v9119 = vshll.u32 %v8873, 16
        %v9121 = vrot.slane %v9119, 5
        %v9122 = vsel %vm1566, %v9117, %v9121
        %v9123 = vshrl.u32 %v8873, 16
        %v9125 = vrot.slane %v9123, 4
        %v9126 = vor.u32 %v9125, %v9121
        %v9127 = vrot.slane %v9126, 4
        %v9129 = vshll.u32 %v8874, 16
        %v9131 = vrot.slane %v9129, 5
        %v9132 = vsel %vm1566, %v9127, %v9131
        %v9134 = vshrl.u32 %v8875, 16
        %v9136 = vrot.slane %v9134, 4
        %v9137 = vshll.u32 %v8875, 16
        %v9139 = vrot.slane %v9137, 5
        %v9140 = vor.u32 %v9136, %v9139
        %v9141 = vrot.slane %v9140, 4
        %v9143 = vshll.u32 %v8876, 16
        %v9145 = vrot.slane %v9143, 5
        %v9146 = vsel %vm1566, %v9141, %v9145
        %v9147 = vshrl.u32 %v8876, 16
        %v9149 = vrot.slane %v9147, 4
        %v9150 = vor.u32 %v9149, %v9145
        %v9151 = vrot.slane %v9150, 4
        %v9153 = vshll.u32 %v8877, 16
        %v9155 = vrot.slane %v9153, 5
        %v9156 = vsel %vm1566, %v9151, %v9155
        %v9158 = vshrl.u32 %v8878, 16
        %v9160 = vrot.slane %v9158, 4
        %v9161 = vshll.u32 %v8878, 16
        %v9163 = vrot.slane %v9161, 5
        %v9164 = vor.u32 %v9160, %v9163
        %v9165 = vrot.slane %v9164, 4
        %v9167 = vshll.u32 %v8879, 16
        %v9169 = vrot.slane %v9167, 5
        %v9170 = vsel %vm1566, %v9165, %v9169
        %v9171 = vshrl.u32 %v8879, 16
        %v9173 = vrot.slane %v9171, 4
        %v9174 = vor.u32 %v9173, %v9169
        %v9175 = vrot.slane %v9174, 4
        %v9177 = vshll.u32 %v8880, 16
        %v9179 = vrot.slane %v9177, 5
        %v9180 = vsel %vm1566, %v9175, %v9179
        %v9182 = vshrl.u32 %v8881, 16
        %v9184 = vrot.slane %v9182, 4
        %v9185 = vshll.u32 %v8881, 16
        %v9187 = vrot.slane %v9185, 5
        %v9188 = vor.u32 %v9184, %v9187
        %v9189 = vrot.slane %v9188, 4
        %v9191 = vshll.u32 %v8882, 16
        %v9193 = vrot.slane %v9191, 5
        %v9194 = vsel %vm1566, %v9189, %v9193
        %v9195 = vshrl.u32 %v8882, 16
        %v9197 = vrot.slane %v9195, 4
        %v9198 = vor.u32 %v9197, %v9193
        %v9199 = vrot.slane %v9198, 4
        %v9201 = vshll.u32 %v8883, 16
        %v9203 = vrot.slane %v9201, 5
        %v9204 = vsel %vm1566, %v9199, %v9203
        %v9206 = vshrl.u32 %v8884, 16
        %v9208 = vrot.slane %v9206, 4
        %v9209 = vshll.u32 %v8884, 16
        %v9211 = vrot.slane %v9209, 5
        %v9212 = vor.u32 %v9208, %v9211
        %v9213 = vrot.slane %v9212, 4
        %v9215 = vshll.u32 %v8885, 16
        %v9217 = vrot.slane %v9215, 5
        %v9218 = vsel %vm1566, %v9213, %v9217
        %v9219 = vshrl.u32 %v8885, 16
        %v9221 = vrot.slane %v9219, 4
        %v9222 = vor.u32 %v9221, %v9217
        %v9223 = vrot.slane %v9222, 4
        %v9225 = vshll.u32 %v8886, 16
        %v9227 = vrot.slane %v9225, 5
        %v9228 = vsel %vm1566, %v9223, %v9227
        %v9230 = vshrl.u32 %v8887, 16
        %v9232 = vrot.slane %v9230, 4
        %v9233 = vshll.u32 %v8887, 16
        %v9235 = vrot.slane %v9233, 5
        %v9236 = vor.u32 %v9232, %v9235
        %v9237 = vrot.slane %v9236, 4
        %v9239 = vshll.u32 %v8888, 16
        %v9241 = vrot.slane %v9239, 5
        %v9242 = vsel %vm1566, %v9237, %v9241
        %v9243 = vshrl.u32 %v8888, 16
        %v9245 = vrot.slane %v9243, 4
        %v9246 = vor.u32 %v9245, %v9241
        %v9247 = vrot.slane %v9246, 4
        %v9249 = vshll.u32 %v8889, 16
        %v9251 = vrot.slane %v9249, 5
        %v9252 = vsel %vm1566, %v9247, %v9251
        %v9254 = vshrl.u32 %v8890, 16
        %v9256 = vrot.slane %v9254, 4
        %v9257 = vshll.u32 %v8890, 16
        %v9259 = vrot.slane %v9257, 5
        %v9260 = vor.u32 %v9256, %v9259
        %v9261 = vrot.slane %v9260, 4
        %v9263 = vshll.u32 %v8891, 16
        %v9265 = vrot.slane %v9263, 5
        %v9266 = vsel %vm1566, %v9261, %v9265
        %v9267 = vshrl.u32 %v8891, 16
        %v9269 = vrot.slane %v9267, 4
        %v9270 = vor.u32 %v9269, %v9265
        %v9271 = vrot.slane %v9270, 4
        %v9273 = vshll.u32 %v8892, 16
        %v9275 = vrot.slane %v9273, 5
        %v9276 = vsel %vm1566, %v9271, %v9275
        %v9277 = vld [vmem:[%s7 + $0x100] sm:$0xf]
        %v9278 = vld [vmem:[%s7 + $0x104] sm:$0xf]
        %v9279 = vld [vmem:[%s7 + $0x108] sm:$0xf]
        %v9280 = vld [vmem:[%s7 + $0x10c] sm:$0xf]
        %v9281 = vld [vmem:[%s7 + $0x110] sm:$0xf]
        %v9282 = vld [vmem:[%s7 + $0x114] sm:$0xf]
        %v9283 = vld [vmem:[%s7 + $0x118] sm:$0xf]
        %v9284 = vld [vmem:[%s7 + $0x11c] sm:$0xf]
        %v9285 = vld [vmem:[%s7 + $0x120] sm:$0xf]
        %v9286 = vld [vmem:[%s7 + $0x124] sm:$0xf]
        %v9287 = vld [vmem:[%s7 + $0x128] sm:$0xf]
        %v9288 = vld [vmem:[%s7 + $0x12c] sm:$0xf]
        %v9289 = vld [vmem:[%s7 + $0x130] sm:$0xf]
        %v9290 = vld [vmem:[%s7 + $0x134] sm:$0xf]
        %v9291 = vld [vmem:[%s7 + $0x138] sm:$0xf]
        %v9292 = vld [vmem:[%s7 + $0x13c] sm:$0xf]
        %v9293 = vunpack.c.l.b16 %v8906
        %v9294 = vunpack.c.l.b16 %v8916
        %v9295 = vunpack.c.l.b16 %v8930
        %v9296 = vunpack.c.l.b16 %v8940
        %v9297 = vunpack.c.l.b16 %v8954
        %v9298 = vunpack.c.l.b16 %v8964
        %v9299 = vunpack.c.l.b16 %v8978
        %v9300 = vunpack.c.l.b16 %v8988
        %v9301 = vunpack.c.l.b16 %v9002
        %v9302 = vunpack.c.l.b16 %v9012
        %v9303 = vunpack.c.l.b16 %v9026
        %v9304 = vunpack.c.l.b16 %v9036
        %v9305 = vunpack.c.l.b16 %v9050
        %v9306 = vunpack.c.l.b16 %v9060
        %v9307 = vunpack.c.l.b16 %v9074
        %v9308 = vunpack.c.l.b16 %v9084
        %v9309 = vunpack.c.l.b16 %v9098
        %v9310 = vunpack.c.l.b16 %v9108
        %v9311 = vunpack.c.l.b16 %v9122
        %v9312 = vunpack.c.l.b16 %v9132
        %v9313 = vunpack.c.l.b16 %v9146
        %v9314 = vunpack.c.l.b16 %v9156
        %v9315 = vunpack.c.l.b16 %v9170
        %v9316 = vunpack.c.l.b16 %v9180
        %v9317 = vunpack.c.l.b16 %v9194
        %v9318 = vunpack.c.l.b16 %v9204
        %v9319 = vunpack.c.l.b16 %v9218
        %v9320 = vunpack.c.l.b16 %v9228
        %v9321 = vunpack.c.l.b16 %v9242
        %v9322 = vunpack.c.l.b16 %v9252
        %v9323 = vunpack.c.l.b16 %v9266
        %v9324 = vunpack.c.l.b16 %v9276
        %v9325 = vpack.c.b16 %v9294, %v9293
        %v9326 = vpack.c.b16 %v9296, %v9295
        %v9327 = vpack.c.b16 %v9298, %v9297
        %v9328 = vpack.c.b16 %v9300, %v9299
        %v9329 = vpack.c.b16 %v9302, %v9301
        %v9330 = vpack.c.b16 %v9304, %v9303
        %v9331 = vpack.c.b16 %v9306, %v9305
        %v9332 = vpack.c.b16 %v9308, %v9307
        %v9333 = vpack.c.b16 %v9310, %v9309
        %v9334 = vpack.c.b16 %v9312, %v9311
        %v9335 = vpack.c.b16 %v9314, %v9313
        %v9336 = vpack.c.b16 %v9316, %v9315
        %v9337 = vpack.c.b16 %v9318, %v9317
        %v9338 = vpack.c.b16 %v9320, %v9319
        %v9339 = vpack.c.b16 %v9322, %v9321
        %v9340 = vpack.c.b16 %v9324, %v9323
        %v9373 = vunpack.c.l.b16 %v9277
        %v9374 = vunpack.c.l.b16 %v9278
        %v9375 = vunpack.c.l.b16 %v9279
        %v9376 = vunpack.c.l.b16 %v9280
        %v9377 = vunpack.c.l.b16 %v9281
        %v9378 = vunpack.c.l.b16 %v9282
        %v9379 = vunpack.c.l.b16 %v9283
        %v9380 = vunpack.c.l.b16 %v9284
        %v9381 = vunpack.c.l.b16 %v9285
        %v9382 = vunpack.c.l.b16 %v9286
        %v9383 = vunpack.c.l.b16 %v9287
        %v9384 = vunpack.c.l.b16 %v9288
        %v9385 = vunpack.c.l.b16 %v9289
        %v9386 = vunpack.c.l.b16 %v9290
        %v9387 = vunpack.c.l.b16 %v9291
        %v9388 = vunpack.c.l.b16 %v9292
        %v9389 = vpack.c.b16 %v9374, %v9373
        %v9390 = vpack.c.b16 %v9376, %v9375
        %v9391 = vpack.c.b16 %v9378, %v9377
        %v9392 = vpack.c.b16 %v9380, %v9379
        %v9393 = vpack.c.b16 %v9382, %v9381
        %v9394 = vpack.c.b16 %v9384, %v9383
        %v9395 = vpack.c.b16 %v9386, %v9385
        %v9396 = vpack.c.b16 %v9388, %v9387
        %9405 = vmatprep.subr.bf16.mxu0 0
        %9406 = vmatpush1.bf16.msra.mxu0 %v9389
        %9407 = vmatprep.subr.bf16.mxu0 0
        %9408 = vmatpush1.bf16.msra.mxu0 %v9390
        %9409 = vmatprep.subr.bf16.mxu0 0
        %9410 = vmatpush1.bf16.msra.mxu0 %v9391
        %9411 = vmatprep.subr.bf16.mxu0 0
        %9412 = vmatpush1.bf16.msra.mxu0 %v9392
        %9413 = vmatprep.subr.bf16.mxu0 0
        %9414 = vmatpush1.bf16.msra.mxu0 %v9393
        %9415 = vmatprep.subr.bf16.mxu0 0
        %9416 = vmatpush1.bf16.msra.mxu0 %v9394
        %9417 = vmatprep.subr.bf16.mxu0 0
        %9418 = vmatpush1.bf16.msra.mxu0 %v9395
        %9419 = vmatprep.subr.bf16.mxu0 0
        %9420 = vmatpush1.bf16.msra.mxu0 %v9396
        %9421 = vmatprep.subr.bf16.mxu0 0
        %9422 = vmatpush1.bf16.msra.mxu0 0
        %9423 = vmatprep.subr.bf16.mxu0 0
        %9424 = vmatpush1.bf16.msra.mxu0 0
        %9425 = vmatprep.subr.bf16.mxu0 0
        %9426 = vmatpush1.bf16.msra.mxu0 0
        %9427 = vmatprep.subr.bf16.mxu0 0
        %9428 = vmatpush1.bf16.msra.mxu0 0
        %9429 = vmatprep.subr.bf16.mxu0 0
        %9430 = vmatpush1.bf16.msra.mxu0 0
        %9431 = vmatprep.subr.bf16.mxu0 0
        %9432 = vmatpush1.bf16.msra.mxu0 0
        %9433 = vmatprep.subr.bf16.mxu0 0
        %9434 = vmatpush1.bf16.msra.mxu0 0
        %9435 = vmatprep.subr.bf16.mxu0 0
        %9436 = vmatpush1.bf16.msra.mxu0 0
        %9437 = vmatprep.mubr.bf16.mxu0 0
        %9438 = vmatmul.mubr.bf16.gmra.mrb[0].mxu0 %v9325
        %v9439 = vpop.f32.mrb[0].mxu0
        %v9440 = vadd.f32 0.0, %v9439
        %v9441 = vpop.f32.mrb[0].mxu0
        %v9442 = vpop.f32.mrb[0].mxu0
        %v9443 = vadd.f32 0.0, %v9442
        %v9444 = vpop.f32.mrb[0].mxu0
        %9445 = vmatprep.mubr.bf16.mxu0 0
        %9446 = vmatmul.mubr.bf16.gmra.mrb[0].mxu0 %v9326
        %v9447 = vpop.f32.mrb[0].mxu0
        %v9448 = vadd.f32 0.0, %v9447
        %v9449 = vpop.f32.mrb[0].mxu0
        %v9450 = vpop.f32.mrb[0].mxu0
        %v9451 = vadd.f32 0.0, %v9450
        %v9452 = vpop.f32.mrb[0].mxu0
        %9453 = vmatprep.mubr.bf16.mxu0 0
        %9454 = vmatmul.mubr.bf16.gmra.mrb[0].mxu0 %v9327
        %v9455 = vpop.f32.mrb[0].mxu0
        %v9456 = vadd.f32 0.0, %v9455
        %v9457 = vpop.f32.mrb[0].mxu0
        %v9458 = vpop.f32.mrb[0].mxu0
        %v9459 = vadd.f32 0.0, %v9458
        %v9460 = vpop.f32.mrb[0].mxu0
        %9461 = vmatprep.mubr.bf16.mxu0 0
        %9462 = vmatmul.mubr.bf16.gmra.mrb[0].mxu0 %v9328
        %v9463 = vpop.f32.mrb[0].mxu0
        %v9464 = vadd.f32 0.0, %v9463
        %v9465 = vpop.f32.mrb[0].mxu0
        %v9466 = vpop.f32.mrb[0].mxu0
        %v9467 = vadd.f32 0.0, %v9466
        %v9468 = vpop.f32.mrb[0].mxu0
        %9469 = vmatprep.mubr.bf16.mxu0 0
        %9470 = vmatmul.mubr.bf16.gmra.mrb[0].mxu0 %v9329
        %v9471 = vpop.f32.mrb[0].mxu0
        %v9472 = vadd.f32 0.0, %v9471
        %v9473 = vpop.f32.mrb[0].mxu0
        %v9474 = vpop.f32.mrb[0].mxu0
        %v9475 = vadd.f32 0.0, %v9474
        %v9476 = vpop.f32.mrb[0].mxu0
        %9477 = vmatprep.mubr.bf16.mxu0 0
        %9478 = vmatmul.mubr.bf16.gmra.mrb[0].mxu0 %v9330
        %v9479 = vpop.f32.mrb[0].mxu0
        %v9480 = vadd.f32 0.0, %v9479
        %v9481 = vpop.f32.mrb[0].mxu0
        %v9482 = vpop.f32.mrb[0].mxu0
        %v9483 = vadd.f32 0.0, %v9482
        %v9484 = vpop.f32.mrb[0].mxu0
        %9485 = vmatprep.mubr.bf16.mxu0 0
        %9486 = vmatmul.mubr.bf16.gmra.mrb[0].mxu0 %v9331
        %v9487 = vpop.f32.mrb[0].mxu0
        %v9488 = vadd.f32 0.0, %v9487
        %v9489 = vpop.f32.mrb[0].mxu0
        %v9490 = vpop.f32.mrb[0].mxu0
        %v9491 = vadd.f32 0.0, %v9490
        %v9492 = vpop.f32.mrb[0].mxu0
        %9493 = vmatprep.mubr.bf16.mxu0 0
        %9494 = vmatmul.mubr.bf16.gmra.mrb[0].mxu0 %v9332
        %v9495 = vpop.f32.mrb[0].mxu0
        %v9496 = vadd.f32 0.0, %v9495
        %v9497 = vpop.f32.mrb[0].mxu0
        %v9498 = vpop.f32.mrb[0].mxu0
        %v9499 = vadd.f32 0.0, %v9498
        %v9500 = vpop.f32.mrb[0].mxu0
        %9501 = vmatprep.mubr.bf16.mxu0 0
        %9502 = vmatmul.mubr.bf16.gmra.mrb[0].mxu0 %v9333
        %v9503 = vpop.f32.mrb[0].mxu0
        %v9504 = vadd.f32 0.0, %v9503
        %v9505 = vpop.f32.mrb[0].mxu0
        %v9506 = vpop.f32.mrb[0].mxu0
        %v9507 = vadd.f32 0.0, %v9506
        %v9508 = vpop.f32.mrb[0].mxu0
        %9509 = vmatprep.mubr.bf16.mxu0 0
        %9510 = vmatmul.mubr.bf16.gmra.mrb[0].mxu0 %v9334
        %v9511 = vpop.f32.mrb[0].mxu0
        %v9512 = vadd.f32 0.0, %v9511
        %v9513 = vpop.f32.mrb[0].mxu0
        %v9514 = vpop.f32.mrb[0].mxu0
        %v9515 = vadd.f32 0.0, %v9514
        %v9516 = vpop.f32.mrb[0].mxu0
        %9517 = vmatprep.mubr.bf16.mxu0 0
        %9518 = vmatmul.mubr.bf16.gmra.mrb[0].mxu0 %v9335
        %v9519 = vpop.f32.mrb[0].mxu0
        %v9520 = vadd.f32 0.0, %v9519
        %v9521 = vpop.f32.mrb[0].mxu0
        %v9522 = vpop.f32.mrb[0].mxu0
        %v9523 = vadd.f32 0.0, %v9522
        %v9524 = vpop.f32.mrb[0].mxu0
        %9525 = vmatprep.mubr.bf16.mxu0 0
        %9526 = vmatmul.mubr.bf16.gmra.mrb[0].mxu0 %v9336
        %v9527 = vpop.f32.mrb[0].mxu0
        %v9528 = vadd.f32 0.0, %v9527
        %v9529 = vpop.f32.mrb[0].mxu0
        %v9530 = vpop.f32.mrb[0].mxu0
        %v9531 = vadd.f32 0.0, %v9530
        %v9532 = vpop.f32.mrb[0].mxu0
        %9533 = vmatprep.mubr.bf16.mxu0 0
        %9534 = vmatmul.mubr.bf16.gmra.mrb[0].mxu0 %v9337
        %v9535 = vpop.f32.mrb[0].mxu0
        %v9536 = vadd.f32 0.0, %v9535
        %v9537 = vpop.f32.mrb[0].mxu0
        %v9538 = vpop.f32.mrb[0].mxu0
        %v9539 = vadd.f32 0.0, %v9538
        %v9540 = vpop.f32.mrb[0].mxu0
        %9541 = vmatprep.mubr.bf16.mxu0 0
        %9542 = vmatmul.mubr.bf16.gmra.mrb[0].mxu0 %v9338
        %v9543 = vpop.f32.mrb[0].mxu0
        %v9544 = vadd.f32 0.0, %v9543
        %v9545 = vpop.f32.mrb[0].mxu0
        %v9546 = vpop.f32.mrb[0].mxu0
        %v9547 = vadd.f32 0.0, %v9546
        %v9548 = vpop.f32.mrb[0].mxu0
        %9549 = vmatprep.mubr.bf16.mxu0 0
        %9550 = vmatmul.mubr.bf16.gmra.mrb[0].mxu0 %v9339
        %v9551 = vpop.f32.mrb[0].mxu0
        %v9552 = vadd.f32 0.0, %v9551
        %v9553 = vpop.f32.mrb[0].mxu0
        %v9554 = vpop.f32.mrb[0].mxu0
        %v9555 = vadd.f32 0.0, %v9554
        %v9556 = vpop.f32.mrb[0].mxu0
        %9557 = vmatprep.mubr.bf16.mxu0 0
        %9558 = vmatmul.mubr.bf16.gmra.mrb[0].mxu0 %v9340
        %v9559 = vpop.f32.mrb[0].mxu0
        %v9560 = vadd.f32 0.0, %v9559
        %v9561 = vpop.f32.mrb[0].mxu0
        %v9562 = vpop.f32.mrb[0].mxu0
        %v9563 = vadd.f32 0.0, %v9562
        %v9564 = vpop.f32.mrb[0].mxu0
        %9565 = vdwg.mxu0
        %v9566 = vadd.f32 %v8813, %v9440
        %v9567 = vadd.f32 %v8814, %v9443
        %v9568 = vadd.f32 %v8815, %v9448
        %v9569 = vadd.f32 %v8816, %v9451
        %v9570 = vadd.f32 %v8817, %v9456
        %v9571 = vadd.f32 %v8818, %v9459
        %v9572 = vadd.f32 %v8819, %v9464
        %v9573 = vadd.f32 %v8820, %v9467
        %v9574 = vadd.f32 %v8821, %v9472
        %v9575 = vadd.f32 %v8822, %v9475
        %v9576 = vadd.f32 %v8823, %v9480
        %v9577 = vadd.f32 %v8824, %v9483
        %v9578 = vadd.f32 %v8825, %v9488
        %v9579 = vadd.f32 %v8826, %v9491
        %v9580 = vadd.f32 %v8827, %v9496
        %v9581 = vadd.f32 %v8828, %v9499
        %v9582 = vadd.f32 %v8829, %v9504
        %v9583 = vadd.f32 %v8830, %v9507
        %v9584 = vadd.f32 %v8831, %v9512
        %v9585 = vadd.f32 %v8832, %v9515
        %v9586 = vadd.f32 %v8833, %v9520
        %v9587 = vadd.f32 %v8834, %v9523
        %v9588 = vadd.f32 %v8835, %v9528
        %v9589 = vadd.f32 %v8836, %v9531
        %v9590 = vadd.f32 %v8837, %v9536
        %v9591 = vadd.f32 %v8838, %v9539
        %v9592 = vadd.f32 %v8839, %v9544
        %v9593 = vadd.f32 %v8840, %v9547
        %v9594 = vadd.f32 %v8841, %v9552
        %v9595 = vadd.f32 %v8842, %v9555
        %v9596 = vadd.f32 %v8843, %v9560
        %v9597 = vadd.f32 %v8844, %v9563
        %v9598 = vld [vmem:[%s866] sm:$0xe]
        %v9599 = vld [vmem:[%s866 + $0xc] sm:$0xe]
        %v9600 = vld [vmem:[%s866 + $0x18] sm:$0xe]
        %v9601 = vld [vmem:[%s866 + $0x24] sm:$0xe]
        %v9602 = vld [vmem:[%s866 + $0x30] sm:$0xe]
        %v9603 = vld [vmem:[%s866 + $0x3c] sm:$0xe]
        %v9604 = vld [vmem:[%s866 + $0x48] sm:$0xe]
        %v9605 = vld [vmem:[%s866 + $0x54] sm:$0xe]
        %v9606 = vld [vmem:[%s866 + $0x60] sm:$0xe]
        %v9607 = vld [vmem:[%s866 + $0x6c] sm:$0xe]
        %v9608 = vld [vmem:[%s866 + $0x78] sm:$0xe]
        %v9609 = vld [vmem:[%s866 + $0x84] sm:$0xe]
        %v9610 = vld [vmem:[%s866 + $0x90] sm:$0xe]
        %v9611 = vld [vmem:[%s866 + $0x9c] sm:$0xe]
        %v9612 = vld [vmem:[%s866 + $0xa8] sm:$0xe]
        %v9613 = vld [vmem:[%s866 + $0xb4] sm:$0xe]
        %v9662 = vrot.slane %v9598, 5
        %v9663 = vrot.slane %v9662, 4
        %v9664 = vrot.slane %v8846, 5
        %v9665 = vsel %vm2595, %v9663, %v9664
        %v9666 = vrot.slane %v9664, 4
        %v9667 = vrot.slane %v8847, 5
        %v9668 = vsel %vm2595, %v9666, %v9667
        %v9669 = vrot.slane %v9599, 5
        %v9670 = vrot.slane %v9669, 4
        %v9671 = vrot.slane %v8849, 5
        %v9672 = vsel %vm2595, %v9670, %v9671
        %v9673 = vrot.slane %v9671, 4
        %v9674 = vrot.slane %v8850, 5
        %v9675 = vsel %vm2595, %v9673, %v9674
        %v9676 = vrot.slane %v9600, 5
        %v9677 = vrot.slane %v9676, 4
        %v9678 = vrot.slane %v8852, 5
        %v9679 = vsel %vm2595, %v9677, %v9678
        %v9680 = vrot.slane %v9678, 4
        %v9681 = vrot.slane %v8853, 5
        %v9682 = vsel %vm2595, %v9680, %v9681
        %v9683 = vrot.slane %v9601, 5
        %v9684 = vrot.slane %v9683, 4
        %v9685 = vrot.slane %v8855, 5
        %v9686 = vsel %vm2595, %v9684, %v9685
        %v9687 = vrot.slane %v9685, 4
        %v9688 = vrot.slane %v8856, 5
        %v9689 = vsel %vm2595, %v9687, %v9688
        %v9690 = vrot.slane %v9602, 5
        %v9691 = vrot.slane %v9690, 4
        %v9692 = vrot.slane %v8858, 5
        %v9693 = vsel %vm2595, %v9691, %v9692
        %v9694 = vrot.slane %v9692, 4
        %v9695 = vrot.slane %v8859, 5
        %v9696 = vsel %vm2595, %v9694, %v9695
        %v9697 = vrot.slane %v9603, 5
        %v9698 = vrot.slane %v9697, 4
        %v9699 = vrot.slane %v8861, 5
        %v9700 = vsel %vm2595, %v9698, %v9699
        %v9701 = vrot.slane %v9699, 4
        %v9702 = vrot.slane %v8862, 5
        %v9703 = vsel %vm2595, %v9701, %v9702
        %v9704 = vrot.slane %v9604, 5
        %v9705 = vrot.slane %v9704, 4
        %v9706 = vrot.slane %v8864, 5
        %v9707 = vsel %vm2595, %v9705, %v9706
        %v9708 = vrot.slane %v9706, 4
        %v9709 = vrot.slane %v8865, 5
        %v9710 = vsel %vm2595, %v9708, %v9709
        %v9711 = vrot.slane %v9605, 5
        %v9712 = vrot.slane %v9711, 4
        %v9713 = vrot.slane %v8867, 5
        %v9714 = vsel %vm2595, %v9712, %v9713
        %v9715 = vrot.slane %v9713, 4
        %v9716 = vrot.slane %v8868, 5
        %v9717 = vsel %vm2595, %v9715, %v9716
        %v9718 = vrot.slane %v9606, 5
        %v9719 = vrot.slane %v9718, 4
        %v9720 = vrot.slane %v8870, 5
        %v9721 = vsel %vm2595, %v9719, %v9720
        %v9722 = vrot.slane %v9720, 4
        %v9723 = vrot.slane %v8871, 5
        %v9724 = vsel %vm2595, %v9722, %v9723
        %v9725 = vrot.slane %v9607, 5
        %v9726 = vrot.slane %v9725, 4
        %v9727 = vrot.slane %v8873, 5
        %v9728 = vsel %vm2595, %v9726, %v9727
        %v9729 = vrot.slane %v9727, 4
        %v9730 = vrot.slane %v8874, 5
        %v9731 = vsel %vm2595, %v9729, %v9730
        %v9732 = vrot.slane %v9608, 5
        %v9733 = vrot.slane %v9732, 4
        %v9734 = vrot.slane %v8876, 5
        %v9735 = vsel %vm2595, %v9733, %v9734
        %v9736 = vrot.slane %v9734, 4
        %v9737 = vrot.slane %v8877, 5
        %v9738 = vsel %vm2595, %v9736, %v9737
        %v9739 = vrot.slane %v9609, 5
        %v9740 = vrot.slane %v9739, 4
        %v9741 = vrot.slane %v8879, 5
        %v9742 = vsel %vm2595, %v9740, %v9741
        %v9743 = vrot.slane %v9741, 4
        %v9744 = vrot.slane %v8880, 5
        %v9745 = vsel %vm2595, %v9743, %v9744
        %v9746 = vrot.slane %v9610, 5
        %v9747 = vrot.slane %v9746, 4
        %v9748 = vrot.slane %v8882, 5
        %v9749 = vsel %vm2595, %v9747, %v9748
        %v9750 = vrot.slane %v9748, 4
        %v9751 = vrot.slane %v8883, 5
        %v9752 = vsel %vm2595, %v9750, %v9751
        %v9753 = vrot.slane %v9611, 5
        %v9754 = vrot.slane %v9753, 4
        %v9755 = vrot.slane %v8885, 5
        %v9756 = vsel %vm2595, %v9754, %v9755
        %v9757 = vrot.slane %v9755, 4
        %v9758 = vrot.slane %v8886, 5
        %v9759 = vsel %vm2595, %v9757, %v9758
        %v9760 = vrot.slane %v9612, 5
        %v9761 = vrot.slane %v9760, 4
        %v9762 = vrot.slane %v8888, 5
        %v9763 = vsel %vm2595, %v9761, %v9762
        %v9764 = vrot.slane %v9762, 4
        %v9765 = vrot.slane %v8889, 5
        %v9766 = vsel %vm2595, %v9764, %v9765
        %v9767 = vrot.slane %v9613, 5
        %v9768 = vrot.slane %v9767, 4
        %v9769 = vrot.slane %v8891, 5
        %v9770 = vsel %vm2595, %v9768, %v9769
        %v9771 = vrot.slane %v9769, 4
        %v9772 = vrot.slane %v8892, 5
        %v9773 = vsel %vm2595, %v9771, %v9772
        %v9774 = vld [vmem:[%s7 + $0x140] sm:$0xf]
        %v9775 = vld [vmem:[%s7 + $0x144] sm:$0xf]
        %v9776 = vld [vmem:[%s7 + $0x148] sm:$0xf]
        %v9777 = vld [vmem:[%s7 + $0x14c] sm:$0xf]
        %v9778 = vld [vmem:[%s7 + $0x150] sm:$0xf]
        %v9779 = vld [vmem:[%s7 + $0x154] sm:$0xf]
        %v9780 = vld [vmem:[%s7 + $0x158] sm:$0xf]
        %v9781 = vld [vmem:[%s7 + $0x15c] sm:$0xf]
        %v9782 = vld [vmem:[%s7 + $0x160] sm:$0xf]
        %v9783 = vld [vmem:[%s7 + $0x164] sm:$0xf]
        %v9784 = vld [vmem:[%s7 + $0x168] sm:$0xf]
        %v9785 = vld [vmem:[%s7 + $0x16c] sm:$0xf]
        %v9786 = vld [vmem:[%s7 + $0x170] sm:$0xf]
        %v9787 = vld [vmem:[%s7 + $0x174] sm:$0xf]
        %v9788 = vld [vmem:[%s7 + $0x178] sm:$0xf]
        %v9789 = vld [vmem:[%s7 + $0x17c] sm:$0xf]
        %v9790 = vunpack.c.l.b16 %v9665
        %v9791 = vunpack.c.l.b16 %v9668
        %v9792 = vunpack.c.l.b16 %v9672
        %v9793 = vunpack.c.l.b16 %v9675
        %v9794 = vunpack.c.l.b16 %v9679
        %v9795 = vunpack.c.l.b16 %v9682
        %v9796 = vunpack.c.l.b16 %v9686
        %v9797 = vunpack.c.l.b16 %v9689
        %v9798 = vunpack.c.l.b16 %v9693
        %v9799 = vunpack.c.l.b16 %v9696
        %v9800 = vunpack.c.l.b16 %v9700
        %v9801 = vunpack.c.l.b16 %v9703
        %v9802 = vunpack.c.l.b16 %v9707
        %v9803 = vunpack.c.l.b16 %v9710
        %v9804 = vunpack.c.l.b16 %v9714
        %v9805 = vunpack.c.l.b16 %v9717
        %v9806 = vunpack.c.l.b16 %v9721
        %v9807 = vunpack.c.l.b16 %v9724
        %v9808 = vunpack.c.l.b16 %v9728
        %v9809 = vunpack.c.l.b16 %v9731
        %v9810 = vunpack.c.l.b16 %v9735
        %v9811 = vunpack.c.l.b16 %v9738
        %v9812 = vunpack.c.l.b16 %v9742
        %v9813 = vunpack.c.l.b16 %v9745
        %v9814 = vunpack.c.l.b16 %v9749
        %v9815 = vunpack.c.l.b16 %v9752
        %v9816 = vunpack.c.l.b16 %v9756
        %v9817 = vunpack.c.l.b16 %v9759
        %v9818 = vunpack.c.l.b16 %v9763
        %v9819 = vunpack.c.l.b16 %v9766
        %v9820 = vunpack.c.l.b16 %v9770
        %v9821 = vunpack.c.l.b16 %v9773
        %v9822 = vpack.c.b16 %v9791, %v9790
        %v9823 = vpack.c.b16 %v9793, %v9792
        %v9824 = vpack.c.b16 %v9795, %v9794
        %v9825 = vpack.c.b16 %v9797, %v9796
        %v9826 = vpack.c.b16 %v9799, %v9798
        %v9827 = vpack.c.b16 %v9801, %v9800
        %v9828 = vpack.c.b16 %v9803, %v9802
        %v9829 = vpack.c.b16 %v9805, %v9804
        %v9830 = vpack.c.b16 %v9807, %v9806
        %v9831 = vpack.c.b16 %v9809, %v9808
        %v9832 = vpack.c.b16 %v9811, %v9810
        %v9833 = vpack.c.b16 %v9813, %v9812
        %v9834 = vpack.c.b16 %v9815, %v9814
        %v9835 = vpack.c.b16 %v9817, %v9816
        %v9836 = vpack.c.b16 %v9819, %v9818
        %v9837 = vpack.c.b16 %v9821, %v9820
        %v9870 = vunpack.c.l.b16 %v9774
        %v9871 = vunpack.c.l.b16 %v9775
        %v9872 = vunpack.c.l.b16 %v9776
        %v9873 = vunpack.c.l.b16 %v9777
        %v9874 = vunpack.c.l.b16 %v9778
        %v9875 = vunpack.c.l.b16 %v9779
        %v9876 = vunpack.c.l.b16 %v9780
        %v9877 = vunpack.c.l.b16 %v9781
        %v9878 = vunpack.c.l.b16 %v9782
        %v9879 = vunpack.c.l.b16 %v9783
        %v9880 = vunpack.c.l.b16 %v9784
        %v9881 = vunpack.c.l.b16 %v9785
        %v9882 = vunpack.c.l.b16 %v9786
        %v9883 = vunpack.c.l.b16 %v9787
        %v9884 = vunpack.c.l.b16 %v9788
        %v9885 = vunpack.c.l.b16 %v9789
        %v9886 = vpack.c.b16 %v9871, %v9870
        %v9887 = vpack.c.b16 %v9873, %v9872
        %v9888 = vpack.c.b16 %v9875, %v9874
        %v9889 = vpack.c.b16 %v9877, %v9876
        %v9890 = vpack.c.b16 %v9879, %v9878
        %v9891 = vpack.c.b16 %v9881, %v9880
        %v9892 = vpack.c.b16 %v9883, %v9882
        %v9893 = vpack.c.b16 %v9885, %v9884
        %9902 = vmatprep.subr.bf16.mxu0 0
        %9903 = vmatpush1.bf16.msra.mxu0 %v9886
        %9904 = vmatprep.subr.bf16.mxu0 0
        %9905 = vmatpush1.bf16.msra.mxu0 %v9887
        %9906 = vmatprep.subr.bf16.mxu0 0
        %9907 = vmatpush1.bf16.msra.mxu0 %v9888
        %9908 = vmatprep.subr.bf16.mxu0 0
        %9909 = vmatpush1.bf16.msra.mxu0 %v9889
        %9910 = vmatprep.subr.bf16.mxu0 0
        %9911 = vmatpush1.bf16.msra.mxu0 %v9890
        %9912 = vmatprep.subr.bf16.mxu0 0
        %9913 = vmatpush1.bf16.msra.mxu0 %v9891
        %9914 = vmatprep.subr.bf16.mxu0 0
        %9915 = vmatpush1.bf16.msra.mxu0 %v9892
        %9916 = vmatprep.subr.bf16.mxu0 0
        %9917 = vmatpush1.bf16.msra.mxu0 %v9893
        %9918 = vmatprep.subr.bf16.mxu0 0
        %9919 = vmatpush1.bf16.msra.mxu0 0
        %9920 = vmatprep.subr.bf16.mxu0 0
        %9921 = vmatpush1.bf16.msra.mxu0 0
        %9922 = vmatprep.subr.bf16.mxu0 0
        %9923 = vmatpush1.bf16.msra.mxu0 0
        %9924 = vmatprep.subr.bf16.mxu0 0
        %9925 = vmatpush1.bf16.msra.mxu0 0
        %9926 = vmatprep.subr.bf16.mxu0 0
        %9927 = vmatpush1.bf16.msra.mxu0 0
        %9928 = vmatprep.subr.bf16.mxu0 0
        %9929 = vmatpush1.bf16.msra.mxu0 0
        %9930 = vmatprep.subr.bf16.mxu0 0
        %9931 = vmatpush1.bf16.msra.mxu0 0
        %9932 = vmatprep.subr.bf16.mxu0 0
        %9933 = vmatpush1.bf16.msra.mxu0 0
        %9934 = vmatprep.mubr.bf16.mxu0 0
        %9935 = vmatmul.mubr.bf16.gmra.mrb[0].mxu0 %v9822
        %v9936 = vpop.f32.mrb[0].mxu0
        %v9937 = vadd.f32 0.0, %v9936
        %v9938 = vpop.f32.mrb[0].mxu0
        %v9939 = vpop.f32.mrb[0].mxu0
        %v9940 = vadd.f32 0.0, %v9939
        %v9941 = vpop.f32.mrb[0].mxu0
        %9942 = vmatprep.mubr.bf16.mxu0 0
        %9943 = vmatmul.mubr.bf16.gmra.mrb[0].mxu0 %v9823
        %v9944 = vpop.f32.mrb[0].mxu0
        %v9945 = vadd.f32 0.0, %v9944
        %v9946 = vpop.f32.mrb[0].mxu0
        %v9947 = vpop.f32.mrb[0].mxu0
        %v9948 = vadd.f32 0.0, %v9947
        %v9949 = vpop.f32.mrb[0].mxu0
        %9950 = vmatprep.mubr.bf16.mxu0 0
        %9951 = vmatmul.mubr.bf16.gmra.mrb[0].mxu0 %v9824
        %v9952 = vpop.f32.mrb[0].mxu0
        %v9953 = vadd.f32 0.0, %v9952
        %v9954 = vpop.f32.mrb[0].mxu0
        %v9955 = vpop.f32.mrb[0].mxu0
        %v9956 = vadd.f32 0.0, %v9955
        %v9957 = vpop.f32.mrb[0].mxu0
        %9958 = vmatprep.mubr.bf16.mxu0 0
        %9959 = vmatmul.mubr.bf16.gmra.mrb[0].mxu0 %v9825
        %v9960 = vpop.f32.mrb[0].mxu0
        %v9961 = vadd.f32 0.0, %v9960
        %v9962 = vpop.f32.mrb[0].mxu0
        %v9963 = vpop.f32.mrb[0].mxu0
        %v9964 = vadd.f32 0.0, %v9963
        %v9965 = vpop.f32.mrb[0].mxu0
        %9966 = vmatprep.mubr.bf16.mxu0 0
        %9967 = vmatmul.mubr.bf16.gmra.mrb[0].mxu0 %v9826
        %v9968 = vpop.f32.mrb[0].mxu0
        %v9969 = vadd.f32 0.0, %v9968
        %v9970 = vpop.f32.mrb[0].mxu0
        %v9971 = vpop.f32.mrb[0].mxu0
        %v9972 = vadd.f32 0.0, %v9971
        %v9973 = vpop.f32.mrb[0].mxu0
        %9974 = vmatprep.mubr.bf16.mxu0 0
        %9975 = vmatmul.mubr.bf16.gmra.mrb[0].mxu0 %v9827
        %v9976 = vpop.f32.mrb[0].mxu0
        %v9977 = vadd.f32 0.0, %v9976
        %v9978 = vpop.f32.mrb[0].mxu0
        %v9979 = vpop.f32.mrb[0].mxu0
        %v9980 = vadd.f32 0.0, %v9979
        %v9981 = vpop.f32.mrb[0].mxu0
        %9982 = vmatprep.mubr.bf16.mxu0 0
        %9983 = vmatmul.mubr.bf16.gmra.mrb[0].mxu0 %v9828
        %v9984 = vpop.f32.mrb[0].mxu0
        %v9985 = vadd.f32 0.0, %v9984
        %v9986 = vpop.f32.mrb[0].mxu0
        %v9987 = vpop.f32.mrb[0].mxu0
        %v9988 = vadd.f32 0.0, %v9987
        %v9989 = vpop.f32.mrb[0].mxu0
        %9990 = vmatprep.mubr.bf16.mxu0 0
        %9991 = vmatmul.mubr.bf16.gmra.mrb[0].mxu0 %v9829
        %v9992 = vpop.f32.mrb[0].mxu0
        %v9993 = vadd.f32 0.0, %v9992
        %v9994 = vpop.f32.mrb[0].mxu0
        %v9995 = vpop.f32.mrb[0].mxu0
        %v9996 = vadd.f32 0.0, %v9995
        %v9997 = vpop.f32.mrb[0].mxu0
        %9998 = vmatprep.mubr.bf16.mxu0 0
        %9999 = vmatmul.mubr.bf16.gmra.mrb[0].mxu0 %v9830
        %v10000 = vpop.f32.mrb[0].mxu0
        %v10001 = vadd.f32 0.0, %v10000
        %v10002 = vpop.f32.mrb[0].mxu0
        %v10003 = vpop.f32.mrb[0].mxu0
        %v10004 = vadd.f32 0.0, %v10003
        %v10005 = vpop.f32.mrb[0].mxu0
        %10006 = vmatprep.mubr.bf16.mxu0 0
        %10007 = vmatmul.mubr.bf16.gmra.mrb[0].mxu0 %v9831
        %v10008 = vpop.f32.mrb[0].mxu0
        %v10009 = vadd.f32 0.0, %v10008
        %v10010 = vpop.f32.mrb[0].mxu0
        %v10011 = vpop.f32.mrb[0].mxu0
        %v10012 = vadd.f32 0.0, %v10011
        %v10013 = vpop.f32.mrb[0].mxu0
        %10014 = vmatprep.mubr.bf16.mxu0 0
        %10015 = vmatmul.mubr.bf16.gmra.mrb[0].mxu0 %v9832
        %v10016 = vpop.f32.mrb[0].mxu0
        %v10017 = vadd.f32 0.0, %v10016
        %v10018 = vpop.f32.mrb[0].mxu0
        %v10019 = vpop.f32.mrb[0].mxu0
        %v10020 = vadd.f32 0.0, %v10019
        %v10021 = vpop.f32.mrb[0].mxu0
        %10022 = vmatprep.mubr.bf16.mxu0 0
        %10023 = vmatmul.mubr.bf16.gmra.mrb[0].mxu0 %v9833
        %v10024 = vpop.f32.mrb[0].mxu0
        %v10025 = vadd.f32 0.0, %v10024
        %v10026 = vpop.f32.mrb[0].mxu0
        %v10027 = vpop.f32.mrb[0].mxu0
        %v10028 = vadd.f32 0.0, %v10027
        %v10029 = vpop.f32.mrb[0].mxu0
        %10030 = vmatprep.mubr.bf16.mxu0 0
        %10031 = vmatmul.mubr.bf16.gmra.mrb[0].mxu0 %v9834
        %v10032 = vpop.f32.mrb[0].mxu0
        %v10033 = vadd.f32 0.0, %v10032
        %v10034 = vpop.f32.mrb[0].mxu0
        %v10035 = vpop.f32.mrb[0].mxu0
        %v10036 = vadd.f32 0.0, %v10035
        %v10037 = vpop.f32.mrb[0].mxu0
        %10038 = vmatprep.mubr.bf16.mxu0 0
        %10039 = vmatmul.mubr.bf16.gmra.mrb[0].mxu0 %v9835
        %v10040 = vpop.f32.mrb[0].mxu0
        %v10041 = vadd.f32 0.0, %v10040
        %v10042 = vpop.f32.mrb[0].mxu0
        %v10043 = vpop.f32.mrb[0].mxu0
        %v10044 = vadd.f32 0.0, %v10043
        %v10045 = vpop.f32.mrb[0].mxu0
        %10046 = vmatprep.mubr.bf16.mxu0 0
        %10047 = vmatmul.mubr.bf16.gmra.mrb[0].mxu0 %v9836
        %v10048 = vpop.f32.mrb[0].mxu0
        %v10049 = vadd.f32 0.0, %v10048
        %v10050 = vpop.f32.mrb[0].mxu0
        %v10051 = vpop.f32.mrb[0].mxu0
        %v10052 = vadd.f32 0.0, %v10051
        %v10053 = vpop.f32.mrb[0].mxu0
        %10054 = vmatprep.mubr.bf16.mxu0 0
        %10055 = vmatmul.mubr.bf16.gmra.mrb[0].mxu0 %v9837
        %v10056 = vpop.f32.mrb[0].mxu0
        %v10057 = vadd.f32 0.0, %v10056
        %v10058 = vpop.f32.mrb[0].mxu0
        %v10059 = vpop.f32.mrb[0].mxu0
        %v10060 = vadd.f32 0.0, %v10059
        %v10061 = vpop.f32.mrb[0].mxu0
        %10062 = vdwg.mxu0
        %v10063 = vadd.f32 %v9566, %v9937
        %v10064 = vadd.f32 %v9567, %v9940
        %v10065 = vadd.f32 %v9568, %v9945
        %v10066 = vadd.f32 %v9569, %v9948
        %v10067 = vadd.f32 %v9570, %v9953
        %v10068 = vadd.f32 %v9571, %v9956
        %v10069 = vadd.f32 %v9572, %v9961
        %v10070 = vadd.f32 %v9573, %v9964
        %v10071 = vadd.f32 %v9574, %v9969
        %v10072 = vadd.f32 %v9575, %v9972
        %v10073 = vadd.f32 %v9576, %v9977
        %v10074 = vadd.f32 %v9577, %v9980
        %v10075 = vadd.f32 %v9578, %v9985
        %v10076 = vadd.f32 %v9579, %v9988
        %v10077 = vadd.f32 %v9580, %v9993
        %v10078 = vadd.f32 %v9581, %v9996
        %v10079 = vadd.f32 %v9582, %v10001
        %v10080 = vadd.f32 %v9583, %v10004
        %v10081 = vadd.f32 %v9584, %v10009
        %v10082 = vadd.f32 %v9585, %v10012
        %v10083 = vadd.f32 %v9586, %v10017
        %v10084 = vadd.f32 %v9587, %v10020
        %v10085 = vadd.f32 %v9588, %v10025
        %v10086 = vadd.f32 %v9589, %v10028
        %v10087 = vadd.f32 %v9590, %v10033
        %v10088 = vadd.f32 %v9591, %v10036
        %v10089 = vadd.f32 %v9592, %v10041
        %v10090 = vadd.f32 %v9593, %v10044
        %v10091 = vadd.f32 %v9594, %v10049
        %v10092 = vadd.f32 %v9595, %v10052
        %v10093 = vadd.f32 %v9596, %v10057
        %v10094 = vadd.f32 %v9597, %v10060
        %v10095 = vld [vmem:[%s4664] sm:$0xf]
        %v10096 = vld [vmem:[%s4664 + $0x4] sm:$0xf]
        %v10097 = vld [vmem:[%s4664 + $0xc] sm:$0xf]
        %v10098 = vld [vmem:[%s4664 + $0x10] sm:$0xf]
        %v10099 = vld [vmem:[%s4664 + $0x18] sm:$0xf]
        %v10100 = vld [vmem:[%s4664 + $0x1c] sm:$0xf]
        %v10101 = vld [vmem:[%s4664 + $0x24] sm:$0xf]
        %v10102 = vld [vmem:[%s4664 + $0x28] sm:$0xf]
        %v10103 = vld [vmem:[%s4664 + $0x30] sm:$0xf]
        %v10104 = vld [vmem:[%s4664 + $0x34] sm:$0xf]
        %v10105 = vld [vmem:[%s4664 + $0x3c] sm:$0xf]
        %v10106 = vld [vmem:[%s4664 + $0x40] sm:$0xf]
        %v10107 = vld [vmem:[%s4664 + $0x48] sm:$0xf]
        %v10108 = vld [vmem:[%s4664 + $0x4c] sm:$0xf]
        %v10109 = vld [vmem:[%s4664 + $0x54] sm:$0xf]
        %v10110 = vld [vmem:[%s4664 + $0x58] sm:$0xf]
        %v10111 = vld [vmem:[%s4664 + $0x60] sm:$0xf]
        %v10112 = vld [vmem:[%s4664 + $0x64] sm:$0xf]
        %v10113 = vld [vmem:[%s4664 + $0x6c] sm:$0xf]
        %v10114 = vld [vmem:[%s4664 + $0x70] sm:$0xf]
        %v10115 = vld [vmem:[%s4664 + $0x78] sm:$0xf]
        %v10116 = vld [vmem:[%s4664 + $0x7c] sm:$0xf]
        %v10117 = vld [vmem:[%s4664 + $0x84] sm:$0xf]
        %v10118 = vld [vmem:[%s4664 + $0x88] sm:$0xf]
        %v10119 = vld [vmem:[%s4664 + $0x90] sm:$0xf]
        %v10120 = vld [vmem:[%s4664 + $0x94] sm:$0xf]
        %v10121 = vld [vmem:[%s4664 + $0x9c] sm:$0xf]
        %v10122 = vld [vmem:[%s4664 + $0xa0] sm:$0xf]
        %v10123 = vld [vmem:[%s4664 + $0xa8] sm:$0xf]
        %v10124 = vld [vmem:[%s4664 + $0xac] sm:$0xf]
        %v10125 = vld [vmem:[%s4664 + $0xb4] sm:$0xf]
        %v10126 = vld [vmem:[%s4664 + $0xb8] sm:$0xf]
        %v10127 = vld [vmem:[%s7 + $0x180] sm:$0xf]
        %v10128 = vld [vmem:[%s7 + $0x184] sm:$0xf]
        %v10129 = vld [vmem:[%s7 + $0x188] sm:$0xf]
        %v10130 = vld [vmem:[%s7 + $0x18c] sm:$0xf]
        %v10131 = vld [vmem:[%s7 + $0x190] sm:$0xf]
        %v10132 = vld [vmem:[%s7 + $0x194] sm:$0xf]
        %v10133 = vld [vmem:[%s7 + $0x198] sm:$0xf]
        %v10134 = vld [vmem:[%s7 + $0x19c] sm:$0xf]
        %v10135 = vld [vmem:[%s7 + $0x1a0] sm:$0xf]
        %v10136 = vld [vmem:[%s7 + $0x1a4] sm:$0xf]
        %v10137 = vld [vmem:[%s7 + $0x1a8] sm:$0xf]
        %v10138 = vld [vmem:[%s7 + $0x1ac] sm:$0xf]
        %v10139 = vld [vmem:[%s7 + $0x1b0] sm:$0xf]
        %v10140 = vld [vmem:[%s7 + $0x1b4] sm:$0xf]
        %v10141 = vld [vmem:[%s7 + $0x1b8] sm:$0xf]
        %v10142 = vld [vmem:[%s7 + $0x1bc] sm:$0xf]
        %v10175 = vunpack.c.l.b16 %v10095
        %v10176 = vunpack.c.l.b16 %v10096
        %v10177 = vunpack.c.l.b16 %v10097
        %v10178 = vunpack.c.l.b16 %v10098
        %v10179 = vunpack.c.l.b16 %v10099
        %v10180 = vunpack.c.l.b16 %v10100
        %v10181 = vunpack.c.l.b16 %v10101
        %v10182 = vunpack.c.l.b16 %v10102
        %v10183 = vunpack.c.l.b16 %v10103
        %v10184 = vunpack.c.l.b16 %v10104
        %v10185 = vunpack.c.l.b16 %v10105
        %v10186 = vunpack.c.l.b16 %v10106
        %v10187 = vunpack.c.l.b16 %v10107
        %v10188 = vunpack.c.l.b16 %v10108
        %v10189 = vunpack.c.l.b16 %v10109
        %v10190 = vunpack.c.l.b16 %v10110
        %v10191 = vunpack.c.l.b16 %v10111
        %v10192 = vunpack.c.l.b16 %v10112
        %v10193 = vunpack.c.l.b16 %v10113
        %v10194 = vunpack.c.l.b16 %v10114
        %v10195 = vunpack.c.l.b16 %v10115
        %v10196 = vunpack.c.l.b16 %v10116
        %v10197 = vunpack.c.l.b16 %v10117
        %v10198 = vunpack.c.l.b16 %v10118
        %v10199 = vunpack.c.l.b16 %v10119
        %v10200 = vunpack.c.l.b16 %v10120
        %v10201 = vunpack.c.l.b16 %v10121
        %v10202 = vunpack.c.l.b16 %v10122
        %v10203 = vunpack.c.l.b16 %v10123
        %v10204 = vunpack.c.l.b16 %v10124
        %v10205 = vunpack.c.l.b16 %v10125
        %v10206 = vunpack.c.l.b16 %v10126
        %v10207 = vpack.c.b16 %v10176, %v10175
        %v10208 = vpack.c.b16 %v10178, %v10177
        %v10209 = vpack.c.b16 %v10180, %v10179
        %v10210 = vpack.c.b16 %v10182, %v10181
        %v10211 = vpack.c.b16 %v10184, %v10183
        %v10212 = vpack.c.b16 %v10186, %v10185
        %v10213 = vpack.c.b16 %v10188, %v10187
        %v10214 = vpack.c.b16 %v10190, %v10189
        %v10215 = vpack.c.b16 %v10192, %v10191
        %v10216 = vpack.c.b16 %v10194, %v10193
        %v10217 = vpack.c.b16 %v10196, %v10195
        %v10218 = vpack.c.b16 %v10198, %v10197
        %v10219 = vpack.c.b16 %v10200, %v10199
        %v10220 = vpack.c.b16 %v10202, %v10201
        %v10221 = vpack.c.b16 %v10204, %v10203
        %v10222 = vpack.c.b16 %v10206, %v10205
        %v10255 = vunpack.c.l.b16 %v10127
        %v10256 = vunpack.c.l.b16 %v10128
        %v10257 = vunpack.c.l.b16 %v10129
        %v10258 = vunpack.c.l.b16 %v10130
        %v10259 = vunpack.c.l.b16 %v10131
        %v10260 = vunpack.c.l.b16 %v10132
        %v10261 = vunpack.c.l.b16 %v10133
        %v10262 = vunpack.c.l.b16 %v10134
        %v10263 = vunpack.c.l.b16 %v10135
        %v10264 = vunpack.c.l.b16 %v10136
        %v10265 = vunpack.c.l.b16 %v10137
        %v10266 = vunpack.c.l.b16 %v10138
        %v10267 = vunpack.c.l.b16 %v10139
        %v10268 = vunpack.c.l.b16 %v10140
        %v10269 = vunpack.c.l.b16 %v10141
        %v10270 = vunpack.c.l.b16 %v10142
        %v10271 = vpack.c.b16 %v10256, %v10255
        %v10272 = vpack.c.b16 %v10258, %v10257
        %v10273 = vpack.c.b16 %v10260, %v10259
        %v10274 = vpack.c.b16 %v10262, %v10261
        %v10275 = vpack.c.b16 %v10264, %v10263
        %v10276 = vpack.c.b16 %v10266, %v10265
        %v10277 = vpack.c.b16 %v10268, %v10267
        %v10278 = vpack.c.b16 %v10270, %v10269
        %10287 = vmatprep.subr.bf16.mxu0 0
        %10288 = vmatpush1.bf16.msra.mxu0 %v10271
        %10289 = vmatprep.subr.bf16.mxu0 0
        %10290 = vmatpush1.bf16.msra.mxu0 %v10272
        %10291 = vmatprep.subr.bf16.mxu0 0
        %10292 = vmatpush1.bf16.msra.mxu0 %v10273
        %10293 = vmatprep.subr.bf16.mxu0 0
        %10294 = vmatpush1.bf16.msra.mxu0 %v10274
        %10295 = vmatprep.subr.bf16.mxu0 0
        %10296 = vmatpush1.bf16.msra.mxu0 %v10275
        %10297 = vmatprep.subr.bf16.mxu0 0
        %10298 = vmatpush1.bf16.msra.mxu0 %v10276
        %10299 = vmatprep.subr.bf16.mxu0 0
        %10300 = vmatpush1.bf16.msra.mxu0 %v10277
        %10301 = vmatprep.subr.bf16.mxu0 0
        %10302 = vmatpush1.bf16.msra.mxu0 %v10278
        %10303 = vmatprep.subr.bf16.mxu0 0
        %10304 = vmatpush1.bf16.msra.mxu0 0
        %10305 = vmatprep.subr.bf16.mxu0 0
        %10306 = vmatpush1.bf16.msra.mxu0 0
        %10307 = vmatprep.subr.bf16.mxu0 0
        %10308 = vmatpush1.bf16.msra.mxu0 0
        %10309 = vmatprep.subr.bf16.mxu0 0
        %10310 = vmatpush1.bf16.msra.mxu0 0
        %10311 = vmatprep.subr.bf16.mxu0 0
        %10312 = vmatpush1.bf16.msra.mxu0 0
        %10313 = vmatprep.subr.bf16.mxu0 0
        %10314 = vmatpush1.bf16.msra.mxu0 0
        %10315 = vmatprep.subr.bf16.mxu0 0
        %10316 = vmatpush1.bf16.msra.mxu0 0
        %10317 = vmatprep.subr.bf16.mxu0 0
        %10318 = vmatpush1.bf16.msra.mxu0 0
        %10319 = vmatprep.mubr.bf16.mxu0 0
        %10320 = vmatmul.mubr.bf16.gmra.mrb[0].mxu0 %v10207
        %v10321 = vpop.f32.mrb[0].mxu0
        %v10322 = vadd.f32 0.0, %v10321
        %v10323 = vpop.f32.mrb[0].mxu0
        %v10324 = vpop.f32.mrb[0].mxu0
        %v10325 = vadd.f32 0.0, %v10324
        %v10326 = vpop.f32.mrb[0].mxu0
        %10327 = vmatprep.mubr.bf16.mxu0 0
        %10328 = vmatmul.mubr.bf16.gmra.mrb[0].mxu0 %v10208
        %v10329 = vpop.f32.mrb[0].mxu0
        %v10330 = vadd.f32 0.0, %v10329
        %v10331 = vpop.f32.mrb[0].mxu0
        %v10332 = vpop.f32.mrb[0].mxu0
        %v10333 = vadd.f32 0.0, %v10332
        %v10334 = vpop.f32.mrb[0].mxu0
        %10335 = vmatprep.mubr.bf16.mxu0 0
        %10336 = vmatmul.mubr.bf16.gmra.mrb[0].mxu0 %v10209
        %v10337 = vpop.f32.mrb[0].mxu0
        %v10338 = vadd.f32 0.0, %v10337
        %v10339 = vpop.f32.mrb[0].mxu0
        %v10340 = vpop.f32.mrb[0].mxu0
        %v10341 = vadd.f32 0.0, %v10340
        %v10342 = vpop.f32.mrb[0].mxu0
        %10343 = vmatprep.mubr.bf16.mxu0 0
        %10344 = vmatmul.mubr.bf16.gmra.mrb[0].mxu0 %v10210
        %v10345 = vpop.f32.mrb[0].mxu0
        %v10346 = vadd.f32 0.0, %v10345
        %v10347 = vpop.f32.mrb[0].mxu0
        %v10348 = vpop.f32.mrb[0].mxu0
        %v10349 = vadd.f32 0.0, %v10348
        %v10350 = vpop.f32.mrb[0].mxu0
        %10351 = vmatprep.mubr.bf16.mxu0 0
        %10352 = vmatmul.mubr.bf16.gmra.mrb[0].mxu0 %v10211
        %v10353 = vpop.f32.mrb[0].mxu0
        %v10354 = vadd.f32 0.0, %v10353
        %v10355 = vpop.f32.mrb[0].mxu0
        %v10356 = vpop.f32.mrb[0].mxu0
        %v10357 = vadd.f32 0.0, %v10356
        %v10358 = vpop.f32.mrb[0].mxu0
        %10359 = vmatprep.mubr.bf16.mxu0 0
        %10360 = vmatmul.mubr.bf16.gmra.mrb[0].mxu0 %v10212
        %v10361 = vpop.f32.mrb[0].mxu0
        %v10362 = vadd.f32 0.0, %v10361
        %v10363 = vpop.f32.mrb[0].mxu0
        %v10364 = vpop.f32.mrb[0].mxu0
        %v10365 = vadd.f32 0.0, %v10364
        %v10366 = vpop.f32.mrb[0].mxu0
        %10367 = vmatprep.mubr.bf16.mxu0 0
        %10368 = vmatmul.mubr.bf16.gmra.mrb[0].mxu0 %v10213
        %v10369 = vpop.f32.mrb[0].mxu0
        %v10370 = vadd.f32 0.0, %v10369
        %v10371 = vpop.f32.mrb[0].mxu0
        %v10372 = vpop.f32.mrb[0].mxu0
        %v10373 = vadd.f32 0.0, %v10372
        %v10374 = vpop.f32.mrb[0].mxu0
        %10375 = vmatprep.mubr.bf16.mxu0 0
        %10376 = vmatmul.mubr.bf16.gmra.mrb[0].mxu0 %v10214
        %v10377 = vpop.f32.mrb[0].mxu0
        %v10378 = vadd.f32 0.0, %v10377
        %v10379 = vpop.f32.mrb[0].mxu0
        %v10380 = vpop.f32.mrb[0].mxu0
        %v10381 = vadd.f32 0.0, %v10380
        %v10382 = vpop.f32.mrb[0].mxu0
        %10383 = vmatprep.mubr.bf16.mxu0 0
        %10384 = vmatmul.mubr.bf16.gmra.mrb[0].mxu0 %v10215
        %v10385 = vpop.f32.mrb[0].mxu0
        %v10386 = vadd.f32 0.0, %v10385
        %v10387 = vpop.f32.mrb[0].mxu0
        %v10388 = vpop.f32.mrb[0].mxu0
        %v10389 = vadd.f32 0.0, %v10388
        %v10390 = vpop.f32.mrb[0].mxu0
        %10391 = vmatprep.mubr.bf16.mxu0 0
        %10392 = vmatmul.mubr.bf16.gmra.mrb[0].mxu0 %v10216
        %v10393 = vpop.f32.mrb[0].mxu0
        %v10394 = vadd.f32 0.0, %v10393
        %v10395 = vpop.f32.mrb[0].mxu0
        %v10396 = vpop.f32.mrb[0].mxu0
        %v10397 = vadd.f32 0.0, %v10396
        %v10398 = vpop.f32.mrb[0].mxu0
        %10399 = vmatprep.mubr.bf16.mxu0 0
        %10400 = vmatmul.mubr.bf16.gmra.mrb[0].mxu0 %v10217
        %v10401 = vpop.f32.mrb[0].mxu0
        %v10402 = vadd.f32 0.0, %v10401
        %v10403 = vpop.f32.mrb[0].mxu0
        %v10404 = vpop.f32.mrb[0].mxu0
        %v10405 = vadd.f32 0.0, %v10404
        %v10406 = vpop.f32.mrb[0].mxu0
        %10407 = vmatprep.mubr.bf16.mxu0 0
        %10408 = vmatmul.mubr.bf16.gmra.mrb[0].mxu0 %v10218
        %v10409 = vpop.f32.mrb[0].mxu0
        %v10410 = vadd.f32 0.0, %v10409
        %v10411 = vpop.f32.mrb[0].mxu0
        %v10412 = vpop.f32.mrb[0].mxu0
        %v10413 = vadd.f32 0.0, %v10412
        %v10414 = vpop.f32.mrb[0].mxu0
        %10415 = vmatprep.mubr.bf16.mxu0 0
        %10416 = vmatmul.mubr.bf16.gmra.mrb[0].mxu0 %v10219
        %v10417 = vpop.f32.mrb[0].mxu0
        %v10418 = vadd.f32 0.0, %v10417
        %v10419 = vpop.f32.mrb[0].mxu0
        %v10420 = vpop.f32.mrb[0].mxu0
        %v10421 = vadd.f32 0.0, %v10420
        %v10422 = vpop.f32.mrb[0].mxu0
        %10423 = vmatprep.mubr.bf16.mxu0 0
        %10424 = vmatmul.mubr.bf16.gmra.mrb[0].mxu0 %v10220
        %v10425 = vpop.f32.mrb[0].mxu0
        %v10426 = vadd.f32 0.0, %v10425
        %v10427 = vpop.f32.mrb[0].mxu0
        %v10428 = vpop.f32.mrb[0].mxu0
        %v10429 = vadd.f32 0.0, %v10428
        %v10430 = vpop.f32.mrb[0].mxu0
        %10431 = vmatprep.mubr.bf16.mxu0 0
        %10432 = vmatmul.mubr.bf16.gmra.mrb[0].mxu0 %v10221
        %v10433 = vpop.f32.mrb[0].mxu0
        %v10434 = vadd.f32 0.0, %v10433
        %v10435 = vpop.f32.mrb[0].mxu0
        %v10436 = vpop.f32.mrb[0].mxu0
        %v10437 = vadd.f32 0.0, %v10436
        %v10438 = vpop.f32.mrb[0].mxu0
        %10439 = vmatprep.mubr.bf16.mxu0 0
        %10440 = vmatmul.mubr.bf16.gmra.mrb[0].mxu0 %v10222
        %v10441 = vpop.f32.mrb[0].mxu0
        %v10442 = vadd.f32 0.0, %v10441
        %v10443 = vpop.f32.mrb[0].mxu0
        %v10444 = vpop.f32.mrb[0].mxu0
        %v10445 = vadd.f32 0.0, %v10444
        %v10446 = vpop.f32.mrb[0].mxu0
        %10447 = vdwg.mxu0
        %v10448 = vadd.f32 %v10063, %v10322
        %v10449 = vadd.f32 %v10064, %v10325
        %v10450 = vadd.f32 %v10065, %v10330
        %v10451 = vadd.f32 %v10066, %v10333
        %v10452 = vadd.f32 %v10067, %v10338
        %v10453 = vadd.f32 %v10068, %v10341
        %v10454 = vadd.f32 %v10069, %v10346
        %v10455 = vadd.f32 %v10070, %v10349
        %v10456 = vadd.f32 %v10071, %v10354
        %v10457 = vadd.f32 %v10072, %v10357
        %v10458 = vadd.f32 %v10073, %v10362
        %v10459 = vadd.f32 %v10074, %v10365
        %v10460 = vadd.f32 %v10075, %v10370
        %v10461 = vadd.f32 %v10076, %v10373
        %v10462 = vadd.f32 %v10077, %v10378
        %v10463 = vadd.f32 %v10078, %v10381
        %v10464 = vadd.f32 %v10079, %v10386
        %v10465 = vadd.f32 %v10080, %v10389
        %v10466 = vadd.f32 %v10081, %v10394
        %v10467 = vadd.f32 %v10082, %v10397
        %v10468 = vadd.f32 %v10083, %v10402
        %v10469 = vadd.f32 %v10084, %v10405
        %v10470 = vadd.f32 %v10085, %v10410
        %v10471 = vadd.f32 %v10086, %v10413
        %v10472 = vadd.f32 %v10087, %v10418
        %v10473 = vadd.f32 %v10088, %v10421
        %v10474 = vadd.f32 %v10089, %v10426
        %v10475 = vadd.f32 %v10090, %v10429
        %v10476 = vadd.f32 %v10091, %v10434
        %v10477 = vadd.f32 %v10092, %v10437
        %v10478 = vadd.f32 %v10093, %v10442
        %v10479 = vadd.f32 %v10094, %v10445
        %v10480 = vld [vmem:[%s4664] sm:$0xf]
        %v10481 = vld [vmem:[%s4664 + $0x4] sm:$0xf]
        %v10482 = vld [vmem:[%s4664 + $0x8] sm:$0x1]
        %v10483 = vld [vmem:[%s4664 + $0xc] sm:$0xf]
        %v10484 = vld [vmem:[%s4664 + $0x10] sm:$0xf]
        %v10485 = vld [vmem:[%s4664 + $0x14] sm:$0x1]
        %v10486 = vld [vmem:[%s4664 + $0x18] sm:$0xf]
        %v10487 = vld [vmem:[%s4664 + $0x1c] sm:$0xf]
        %v10488 = vld [vmem:[%s4664 + $0x20] sm:$0x1]
        %v10489 = vld [vmem:[%s4664 + $0x24] sm:$0xf]
        %v10490 = vld [vmem:[%s4664 + $0x28] sm:$0xf]
        %v10491 = vld [vmem:[%s4664 + $0x2c] sm:$0x1]
        %v10492 = vld [vmem:[%s4664 + $0x30] sm:$0xf]
        %v10493 = vld [vmem:[%s4664 + $0x34] sm:$0xf]
        %v10494 = vld [vmem:[%s4664 + $0x38] sm:$0x1]
        %v10495 = vld [vmem:[%s4664 + $0x3c] sm:$0xf]
        %v10496 = vld [vmem:[%s4664 + $0x40] sm:$0xf]
        %v10497 = vld [vmem:[%s4664 + $0x44] sm:$0x1]
        %v10498 = vld [vmem:[%s4664 + $0x48] sm:$0xf]
        %v10499 = vld [vmem:[%s4664 + $0x4c] sm:$0xf]
        %v10500 = vld [vmem:[%s4664 + $0x50] sm:$0x1]
        %v10501 = vld [vmem:[%s4664 + $0x54] sm:$0xf]
        %v10502 = vld [vmem:[%s4664 + $0x58] sm:$0xf]
        %v10503 = vld [vmem:[%s4664 + $0x5c] sm:$0x1]
        %v10504 = vld [vmem:[%s4664 + $0x60] sm:$0xf]
        %v10505 = vld [vmem:[%s4664 + $0x64] sm:$0xf]
        %v10506 = vld [vmem:[%s4664 + $0x68] sm:$0x1]
        %v10507 = vld [vmem:[%s4664 + $0x6c] sm:$0xf]
        %v10508 = vld [vmem:[%s4664 + $0x70] sm:$0xf]
        %v10509 = vld [vmem:[%s4664 + $0x74] sm:$0x1]
        %v10510 = vld [vmem:[%s4664 + $0x78] sm:$0xf]
        %v10511 = vld [vmem:[%s4664 + $0x7c] sm:$0xf]
        %v10512 = vld [vmem:[%s4664 + $0x80] sm:$0x1]
        %v10513 = vld [vmem:[%s4664 + $0x84] sm:$0xf]
        %v10514 = vld [vmem:[%s4664 + $0x88] sm:$0xf]
        %v10515 = vld [vmem:[%s4664 + $0x8c] sm:$0x1]
        %v10516 = vld [vmem:[%s4664 + $0x90] sm:$0xf]
        %v10517 = vld [vmem:[%s4664 + $0x94] sm:$0xf]
        %v10518 = vld [vmem:[%s4664 + $0x98] sm:$0x1]
        %v10519 = vld [vmem:[%s4664 + $0x9c] sm:$0xf]
        %v10520 = vld [vmem:[%s4664 + $0xa0] sm:$0xf]
        %v10521 = vld [vmem:[%s4664 + $0xa4] sm:$0x1]
        %v10522 = vld [vmem:[%s4664 + $0xa8] sm:$0xf]
        %v10523 = vld [vmem:[%s4664 + $0xac] sm:$0xf]
        %v10524 = vld [vmem:[%s4664 + $0xb0] sm:$0x1]
        %v10525 = vld [vmem:[%s4664 + $0xb4] sm:$0xf]
        %v10526 = vld [vmem:[%s4664 + $0xb8] sm:$0xf]
        %v10527 = vld [vmem:[%s4664 + $0xbc] sm:$0x1]
        %v10529 = vshrl.u32 %v10480, 16
        %v10531 = vrot.slane %v10529, 4
        %v10532 = vshll.u32 %v10480, 16
        %v10534 = vrot.slane %v10532, 5
        %v10535 = vor.u32 %v10531, %v10534
        %v10536 = vrot.slane %v10535, 4
        %v10538 = vshll.u32 %v10481, 16
        %v10540 = vrot.slane %v10538, 5
        %v10541 = vsel %vm1566, %v10536, %v10540
        %v10542 = vshrl.u32 %v10481, 16
        %v10544 = vrot.slane %v10542, 4
        %v10545 = vor.u32 %v10544, %v10540
        %v10546 = vrot.slane %v10545, 4
        %v10548 = vshll.u32 %v10482, 16
        %v10550 = vrot.slane %v10548, 5
        %v10551 = vsel %vm1566, %v10546, %v10550
        %v10553 = vshrl.u32 %v10483, 16
        %v10555 = vrot.slane %v10553, 4
        %v10556 = vshll.u32 %v10483, 16
        %v10558 = vrot.slane %v10556, 5
        %v10559 = vor.u32 %v10555, %v10558
        %v10560 = vrot.slane %v10559, 4
        %v10562 = vshll.u32 %v10484, 16
        %v10564 = vrot.slane %v10562, 5
        %v10565 = vsel %vm1566, %v10560, %v10564
        %v10566 = vshrl.u32 %v10484, 16
        %v10568 = vrot.slane %v10566, 4
        %v10569 = vor.u32 %v10568, %v10564
        %v10570 = vrot.slane %v10569, 4
        %v10572 = vshll.u32 %v10485, 16
        %v10574 = vrot.slane %v10572, 5
        %v10575 = vsel %vm1566, %v10570, %v10574
        %v10577 = vshrl.u32 %v10486, 16
        %v10579 = vrot.slane %v10577, 4
        %v10580 = vshll.u32 %v10486, 16
        %v10582 = vrot.slane %v10580, 5
        %v10583 = vor.u32 %v10579, %v10582
        %v10584 = vrot.slane %v10583, 4
        %v10586 = vshll.u32 %v10487, 16
        %v10588 = vrot.slane %v10586, 5
        %v10589 = vsel %vm1566, %v10584, %v10588
        %v10590 = vshrl.u32 %v10487, 16
        %v10592 = vrot.slane %v10590, 4
        %v10593 = vor.u32 %v10592, %v10588
        %v10594 = vrot.slane %v10593, 4
        %v10596 = vshll.u32 %v10488, 16
        %v10598 = vrot.slane %v10596, 5
        %v10599 = vsel %vm1566, %v10594, %v10598
        %v10601 = vshrl.u32 %v10489, 16
        %v10603 = vrot.slane %v10601, 4
        %v10604 = vshll.u32 %v10489, 16
        %v10606 = vrot.slane %v10604, 5
        %v10607 = vor.u32 %v10603, %v10606
        %v10608 = vrot.slane %v10607, 4
        %v10610 = vshll.u32 %v10490, 16
        %v10612 = vrot.slane %v10610, 5
        %v10613 = vsel %vm1566, %v10608, %v10612
        %v10614 = vshrl.u32 %v10490, 16
        %v10616 = vrot.slane %v10614, 4
        %v10617 = vor.u32 %v10616, %v10612
        %v10618 = vrot.slane %v10617, 4
        %v10620 = vshll.u32 %v10491, 16
        %v10622 = vrot.slane %v10620, 5
        %v10623 = vsel %vm1566, %v10618, %v10622
        %v10625 = vshrl.u32 %v10492, 16
        %v10627 = vrot.slane %v10625, 4
        %v10628 = vshll.u32 %v10492, 16
        %v10630 = vrot.slane %v10628, 5
        %v10631 = vor.u32 %v10627, %v10630
        %v10632 = vrot.slane %v10631, 4
        %v10634 = vshll.u32 %v10493, 16
        %v10636 = vrot.slane %v10634, 5
        %v10637 = vsel %vm1566, %v10632, %v10636
        %v10638 = vshrl.u32 %v10493, 16
        %v10640 = vrot.slane %v10638, 4
        %v10641 = vor.u32 %v10640, %v10636
        %v10642 = vrot.slane %v10641, 4
        %v10644 = vshll.u32 %v10494, 16
        %v10646 = vrot.slane %v10644, 5
        %v10647 = vsel %vm1566, %v10642, %v10646
        %v10649 = vshrl.u32 %v10495, 16
        %v10651 = vrot.slane %v10649, 4
        %v10652 = vshll.u32 %v10495, 16
        %v10654 = vrot.slane %v10652, 5
        %v10655 = vor.u32 %v10651, %v10654
        %v10656 = vrot.slane %v10655, 4
        %v10658 = vshll.u32 %v10496, 16
        %v10660 = vrot.slane %v10658, 5
        %v10661 = vsel %vm1566, %v10656, %v10660
        %v10662 = vshrl.u32 %v10496, 16
        %v10664 = vrot.slane %v10662, 4
        %v10665 = vor.u32 %v10664, %v10660
        %v10666 = vrot.slane %v10665, 4
        %v10668 = vshll.u32 %v10497, 16
        %v10670 = vrot.slane %v10668, 5
        %v10671 = vsel %vm1566, %v10666, %v10670
        %v10673 = vshrl.u32 %v10498, 16
        %v10675 = vrot.slane %v10673, 4
        %v10676 = vshll.u32 %v10498, 16
        %v10678 = vrot.slane %v10676, 5
        %v10679 = vor.u32 %v10675, %v10678
        %v10680 = vrot.slane %v10679, 4
        %v10682 = vshll.u32 %v10499, 16
        %v10684 = vrot.slane %v10682, 5
        %v10685 = vsel %vm1566, %v10680, %v10684
        %v10686 = vshrl.u32 %v10499, 16
        %v10688 = vrot.slane %v10686, 4
        %v10689 = vor.u32 %v10688, %v10684
        %v10690 = vrot.slane %v10689, 4
        %v10692 = vshll.u32 %v10500, 16
        %v10694 = vrot.slane %v10692, 5
        %v10695 = vsel %vm1566, %v10690, %v10694
        %v10697 = vshrl.u32 %v10501, 16
        %v10699 = vrot.slane %v10697, 4
        %v10700 = vshll.u32 %v10501, 16
        %v10702 = vrot.slane %v10700, 5
        %v10703 = vor.u32 %v10699, %v10702
        %v10704 = vrot.slane %v10703, 4
        %v10706 = vshll.u32 %v10502, 16
        %v10708 = vrot.slane %v10706, 5
        %v10709 = vsel %vm1566, %v10704, %v10708
        %v10710 = vshrl.u32 %v10502, 16
        %v10712 = vrot.slane %v10710, 4
        %v10713 = vor.u32 %v10712, %v10708
        %v10714 = vrot.slane %v10713, 4
        %v10716 = vshll.u32 %v10503, 16
        %v10718 = vrot.slane %v10716, 5
        %v10719 = vsel %vm1566, %v10714, %v10718
        %v10721 = vshrl.u32 %v10504, 16
        %v10723 = vrot.slane %v10721, 4
        %v10724 = vshll.u32 %v10504, 16
        %v10726 = vrot.slane %v10724, 5
        %v10727 = vor.u32 %v10723, %v10726
        %v10728 = vrot.slane %v10727, 4
        %v10730 = vshll.u32 %v10505, 16
        %v10732 = vrot.slane %v10730, 5
        %v10733 = vsel %vm1566, %v10728, %v10732
        %v10734 = vshrl.u32 %v10505, 16
        %v10736 = vrot.slane %v10734, 4
        %v10737 = vor.u32 %v10736, %v10732
        %v10738 = vrot.slane %v10737, 4
        %v10740 = vshll.u32 %v10506, 16
        %v10742 = vrot.slane %v10740, 5
        %v10743 = vsel %vm1566, %v10738, %v10742
        %v10745 = vshrl.u32 %v10507, 16
        %v10747 = vrot.slane %v10745, 4
        %v10748 = vshll.u32 %v10507, 16
        %v10750 = vrot.slane %v10748, 5
        %v10751 = vor.u32 %v10747, %v10750
        %v10752 = vrot.slane %v10751, 4
        %v10754 = vshll.u32 %v10508, 16
        %v10756 = vrot.slane %v10754, 5
        %v10757 = vsel %vm1566, %v10752, %v10756
        %v10758 = vshrl.u32 %v10508, 16
        %v10760 = vrot.slane %v10758, 4
        %v10761 = vor.u32 %v10760, %v10756
        %v10762 = vrot.slane %v10761, 4
        %v10764 = vshll.u32 %v10509, 16
        %v10766 = vrot.slane %v10764, 5
        %v10767 = vsel %vm1566, %v10762, %v10766
        %v10769 = vshrl.u32 %v10510, 16
        %v10771 = vrot.slane %v10769, 4
        %v10772 = vshll.u32 %v10510, 16
        %v10774 = vrot.slane %v10772, 5
        %v10775 = vor.u32 %v10771, %v10774
        %v10776 = vrot.slane %v10775, 4
        %v10778 = vshll.u32 %v10511, 16
        %v10780 = vrot.slane %v10778, 5
        %v10781 = vsel %vm1566, %v10776, %v10780
        %v10782 = vshrl.u32 %v10511, 16
        %v10784 = vrot.slane %v10782, 4
        %v10785 = vor.u32 %v10784, %v10780
        %v10786 = vrot.slane %v10785, 4
        %v10788 = vshll.u32 %v10512, 16
        %v10790 = vrot.slane %v10788, 5
        %v10791 = vsel %vm1566, %v10786, %v10790
        %v10793 = vshrl.u32 %v10513, 16
        %v10795 = vrot.slane %v10793, 4
        %v10796 = vshll.u32 %v10513, 16
        %v10798 = vrot.slane %v10796, 5
        %v10799 = vor.u32 %v10795, %v10798
        %v10800 = vrot.slane %v10799, 4
        %v10802 = vshll.u32 %v10514, 16
        %v10804 = vrot.slane %v10802, 5
        %v10805 = vsel %vm1566, %v10800, %v10804
        %v10806 = vshrl.u32 %v10514, 16
        %v10808 = vrot.slane %v10806, 4
        %v10809 = vor.u32 %v10808, %v10804
        %v10810 = vrot.slane %v10809, 4
        %v10812 = vshll.u32 %v10515, 16
        %v10814 = vrot.slane %v10812, 5
        %v10815 = vsel %vm1566, %v10810, %v10814
        %v10817 = vshrl.u32 %v10516, 16
        %v10819 = vrot.slane %v10817, 4
        %v10820 = vshll.u32 %v10516, 16
        %v10822 = vrot.slane %v10820, 5
        %v10823 = vor.u32 %v10819, %v10822
        %v10824 = vrot.slane %v10823, 4
        %v10826 = vshll.u32 %v10517, 16
        %v10828 = vrot.slane %v10826, 5
        %v10829 = vsel %vm1566, %v10824, %v10828
        %v10830 = vshrl.u32 %v10517, 16
        %v10832 = vrot.slane %v10830, 4
        %v10833 = vor.u32 %v10832, %v10828
        %v10834 = vrot.slane %v10833, 4
        %v10836 = vshll.u32 %v10518, 16
        %v10838 = vrot.slane %v10836, 5
        %v10839 = vsel %vm1566, %v10834, %v10838
        %v10841 = vshrl.u32 %v10519, 16
        %v10843 = vrot.slane %v10841, 4
        %v10844 = vshll.u32 %v10519, 16
        %v10846 = vrot.slane %v10844, 5
        %v10847 = vor.u32 %v10843, %v10846
        %v10848 = vrot.slane %v10847, 4
        %v10850 = vshll.u32 %v10520, 16
        %v10852 = vrot.slane %v10850, 5
        %v10853 = vsel %vm1566, %v10848, %v10852
        %v10854 = vshrl.u32 %v10520, 16
        %v10856 = vrot.slane %v10854, 4
        %v10857 = vor.u32 %v10856, %v10852
        %v10858 = vrot.slane %v10857, 4
        %v10860 = vshll.u32 %v10521, 16
        %v10862 = vrot.slane %v10860, 5
        %v10863 = vsel %vm1566, %v10858, %v10862
        %v10865 = vshrl.u32 %v10522, 16
        %v10867 = vrot.slane %v10865, 4
        %v10868 = vshll.u32 %v10522, 16
        %v10870 = vrot.slane %v10868, 5
        %v10871 = vor.u32 %v10867, %v10870
        %v10872 = vrot.slane %v10871, 4
        %v10874 = vshll.u32 %v10523, 16
        %v10876 = vrot.slane %v10874, 5
        %v10877 = vsel %vm1566, %v10872, %v10876
        %v10878 = vshrl.u32 %v10523, 16
        %v10880 = vrot.slane %v10878, 4
        %v10881 = vor.u32 %v10880, %v10876
        %v10882 = vrot.slane %v10881, 4
        %v10884 = vshll.u32 %v10524, 16
        %v10886 = vrot.slane %v10884, 5
        %v10887 = vsel %vm1566, %v10882, %v10886
        %v10889 = vshrl.u32 %v10525, 16
        %v10891 = vrot.slane %v10889, 4
        %v10892 = vshll.u32 %v10525, 16
        %v10894 = vrot.slane %v10892, 5
        %v10895 = vor.u32 %v10891, %v10894
        %v10896 = vrot.slane %v10895, 4
        %v10898 = vshll.u32 %v10526, 16
        %v10900 = vrot.slane %v10898, 5
        %v10901 = vsel %vm1566, %v10896, %v10900
        %v10902 = vshrl.u32 %v10526, 16
        %v10904 = vrot.slane %v10902, 4
        %v10905 = vor.u32 %v10904, %v10900
        %v10906 = vrot.slane %v10905, 4
        %v10908 = vshll.u32 %v10527, 16
        %v10910 = vrot.slane %v10908, 5
        %v10911 = vsel %vm1566, %v10906, %v10910
        %v10912 = vld [vmem:[%s7 + $0x1c0] sm:$0xf]
        %v10913 = vld [vmem:[%s7 + $0x1c4] sm:$0xf]
        %v10914 = vld [vmem:[%s7 + $0x1c8] sm:$0xf]
        %v10915 = vld [vmem:[%s7 + $0x1cc] sm:$0xf]
        %v10916 = vld [vmem:[%s7 + $0x1d0] sm:$0xf]
        %v10917 = vld [vmem:[%s7 + $0x1d4] sm:$0xf]
        %v10918 = vld [vmem:[%s7 + $0x1d8] sm:$0xf]
        %v10919 = vld [vmem:[%s7 + $0x1dc] sm:$0xf]
        %v10920 = vld [vmem:[%s7 + $0x1e0] sm:$0xf]
        %v10921 = vld [vmem:[%s7 + $0x1e4] sm:$0xf]
        %v10922 = vld [vmem:[%s7 + $0x1e8] sm:$0xf]
        %v10923 = vld [vmem:[%s7 + $0x1ec] sm:$0xf]
        %v10924 = vld [vmem:[%s7 + $0x1f0] sm:$0xf]
        %v10925 = vld [vmem:[%s7 + $0x1f4] sm:$0xf]
        %v10926 = vld [vmem:[%s7 + $0x1f8] sm:$0xf]
        %v10927 = vld [vmem:[%s7 + $0x1fc] sm:$0xf]
        %v10928 = vunpack.c.l.b16 %v10541
        %v10929 = vunpack.c.l.b16 %v10551
        %v10930 = vunpack.c.l.b16 %v10565
        %v10931 = vunpack.c.l.b16 %v10575
        %v10932 = vunpack.c.l.b16 %v10589
        %v10933 = vunpack.c.l.b16 %v10599
        %v10934 = vunpack.c.l.b16 %v10613
        %v10935 = vunpack.c.l.b16 %v10623
        %v10936 = vunpack.c.l.b16 %v10637
        %v10937 = vunpack.c.l.b16 %v10647
        %v10938 = vunpack.c.l.b16 %v10661
        %v10939 = vunpack.c.l.b16 %v10671
        %v10940 = vunpack.c.l.b16 %v10685
        %v10941 = vunpack.c.l.b16 %v10695
        %v10942 = vunpack.c.l.b16 %v10709
        %v10943 = vunpack.c.l.b16 %v10719
        %v10944 = vunpack.c.l.b16 %v10733
        %v10945 = vunpack.c.l.b16 %v10743
        %v10946 = vunpack.c.l.b16 %v10757
        %v10947 = vunpack.c.l.b16 %v10767
        %v10948 = vunpack.c.l.b16 %v10781
        %v10949 = vunpack.c.l.b16 %v10791
        %v10950 = vunpack.c.l.b16 %v10805
        %v10951 = vunpack.c.l.b16 %v10815
        %v10952 = vunpack.c.l.b16 %v10829
        %v10953 = vunpack.c.l.b16 %v10839
        %v10954 = vunpack.c.l.b16 %v10853
        %v10955 = vunpack.c.l.b16 %v10863
        %v10956 = vunpack.c.l.b16 %v10877
        %v10957 = vunpack.c.l.b16 %v10887
        %v10958 = vunpack.c.l.b16 %v10901
        %v10959 = vunpack.c.l.b16 %v10911
        %v10960 = vpack.c.b16 %v10929, %v10928
        %v10961 = vpack.c.b16 %v10931, %v10930
        %v10962 = vpack.c.b16 %v10933, %v10932
        %v10963 = vpack.c.b16 %v10935, %v10934
        %v10964 = vpack.c.b16 %v10937, %v10936
        %v10965 = vpack.c.b16 %v10939, %v10938
        %v10966 = vpack.c.b16 %v10941, %v10940
        %v10967 = vpack.c.b16 %v10943, %v10942
        %v10968 = vpack.c.b16 %v10945, %v10944
        %v10969 = vpack.c.b16 %v10947, %v10946
        %v10970 = vpack.c.b16 %v10949, %v10948
        %v10971 = vpack.c.b16 %v10951, %v10950
        %v10972 = vpack.c.b16 %v10953, %v10952
        %v10973 = vpack.c.b16 %v10955, %v10954
        %v10974 = vpack.c.b16 %v10957, %v10956
        %v10975 = vpack.c.b16 %v10959, %v10958
        %v11008 = vunpack.c.l.b16 %v10912
        %v11009 = vunpack.c.l.b16 %v10913
        %v11010 = vunpack.c.l.b16 %v10914
        %v11011 = vunpack.c.l.b16 %v10915
        %v11012 = vunpack.c.l.b16 %v10916
        %v11013 = vunpack.c.l.b16 %v10917
        %v11014 = vunpack.c.l.b16 %v10918
        %v11015 = vunpack.c.l.b16 %v10919
        %v11016 = vunpack.c.l.b16 %v10920
        %v11017 = vunpack.c.l.b16 %v10921
        %v11018 = vunpack.c.l.b16 %v10922
        %v11019 = vunpack.c.l.b16 %v10923
        %v11020 = vunpack.c.l.b16 %v10924
        %v11021 = vunpack.c.l.b16 %v10925
        %v11022 = vunpack.c.l.b16 %v10926
        %v11023 = vunpack.c.l.b16 %v10927
        %v11024 = vpack.c.b16 %v11009, %v11008
        %v11025 = vpack.c.b16 %v11011, %v11010
        %v11026 = vpack.c.b16 %v11013, %v11012
        %v11027 = vpack.c.b16 %v11015, %v11014
        %v11028 = vpack.c.b16 %v11017, %v11016
        %v11029 = vpack.c.b16 %v11019, %v11018
        %v11030 = vpack.c.b16 %v11021, %v11020
        %v11031 = vpack.c.b16 %v11023, %v11022
        %11040 = vmatprep.subr.bf16.mxu0 0
        %11041 = vmatpush1.bf16.msra.mxu0 %v11024
        %11042 = vmatprep.subr.bf16.mxu0 0
        %11043 = vmatpush1.bf16.msra.mxu0 %v11025
        %11044 = vmatprep.subr.bf16.mxu0 0
        %11045 = vmatpush1.bf16.msra.mxu0 %v11026
        %11046 = vmatprep.subr.bf16.mxu0 0
        %11047 = vmatpush1.bf16.msra.mxu0 %v11027
        %11048 = vmatprep.subr.bf16.mxu0 0
        %11049 = vmatpush1.bf16.msra.mxu0 %v11028
        %11050 = vmatprep.subr.bf16.mxu0 0
        %11051 = vmatpush1.bf16.msra.mxu0 %v11029
        %11052 = vmatprep.subr.bf16.mxu0 0
        %11053 = vmatpush1.bf16.msra.mxu0 %v11030
        %11054 = vmatprep.subr.bf16.mxu0 0
        %11055 = vmatpush1.bf16.msra.mxu0 %v11031
        %11056 = vmatprep.subr.bf16.mxu0 0
        %11057 = vmatpush1.bf16.msra.mxu0 0
        %11058 = vmatprep.subr.bf16.mxu0 0
        %11059 = vmatpush1.bf16.msra.mxu0 0
        %11060 = vmatprep.subr.bf16.mxu0 0
        %11061 = vmatpush1.bf16.msra.mxu0 0
        %11062 = vmatprep.subr.bf16.mxu0 0
        %11063 = vmatpush1.bf16.msra.mxu0 0
        %11064 = vmatprep.subr.bf16.mxu0 0
        %11065 = vmatpush1.bf16.msra.mxu0 0
        %11066 = vmatprep.subr.bf16.mxu0 0
        %11067 = vmatpush1.bf16.msra.mxu0 0
        %11068 = vmatprep.subr.bf16.mxu0 0
        %11069 = vmatpush1.bf16.msra.mxu0 0
        %11070 = vmatprep.subr.bf16.mxu0 0
        %11071 = vmatpush1.bf16.msra.mxu0 0
        %11072 = vmatprep.mubr.bf16.mxu0 0
        %11073 = vmatmul.mubr.bf16.gmra.mrb[0].mxu0 %v10960
        %v11074 = vpop.f32.mrb[0].mxu0
        %v11075 = vadd.f32 0.0, %v11074
        %v11076 = vpop.f32.mrb[0].mxu0
        %v11077 = vpop.f32.mrb[0].mxu0
        %v11078 = vadd.f32 0.0, %v11077
        %v11079 = vpop.f32.mrb[0].mxu0
        %11080 = vmatprep.mubr.bf16.mxu0 0
        %11081 = vmatmul.mubr.bf16.gmra.mrb[0].mxu0 %v10961
        %v11082 = vpop.f32.mrb[0].mxu0
        %v11083 = vadd.f32 0.0, %v11082
        %v11084 = vpop.f32.mrb[0].mxu0
        %v11085 = vpop.f32.mrb[0].mxu0
        %v11086 = vadd.f32 0.0, %v11085
        %v11087 = vpop.f32.mrb[0].mxu0
        %11088 = vmatprep.mubr.bf16.mxu0 0
        %11089 = vmatmul.mubr.bf16.gmra.mrb[0].mxu0 %v10962
        %v11090 = vpop.f32.mrb[0].mxu0
        %v11091 = vadd.f32 0.0, %v11090
        %v11092 = vpop.f32.mrb[0].mxu0
        %v11093 = vpop.f32.mrb[0].mxu0
        %v11094 = vadd.f32 0.0, %v11093
        %v11095 = vpop.f32.mrb[0].mxu0
        %11096 = vmatprep.mubr.bf16.mxu0 0
        %11097 = vmatmul.mubr.bf16.gmra.mrb[0].mxu0 %v10963
        %v11098 = vpop.f32.mrb[0].mxu0
        %v11099 = vadd.f32 0.0, %v11098
        %v11100 = vpop.f32.mrb[0].mxu0
        %v11101 = vpop.f32.mrb[0].mxu0
        %v11102 = vadd.f32 0.0, %v11101
        %v11103 = vpop.f32.mrb[0].mxu0
        %11104 = vmatprep.mubr.bf16.mxu0 0
        %11105 = vmatmul.mubr.bf16.gmra.mrb[0].mxu0 %v10964
        %v11106 = vpop.f32.mrb[0].mxu0
        %v11107 = vadd.f32 0.0, %v11106
        %v11108 = vpop.f32.mrb[0].mxu0
        %v11109 = vpop.f32.mrb[0].mxu0
        %v11110 = vadd.f32 0.0, %v11109
        %v11111 = vpop.f32.mrb[0].mxu0
        %11112 = vmatprep.mubr.bf16.mxu0 0
        %11113 = vmatmul.mubr.bf16.gmra.mrb[0].mxu0 %v10965
        %v11114 = vpop.f32.mrb[0].mxu0
        %v11115 = vadd.f32 0.0, %v11114
        %v11116 = vpop.f32.mrb[0].mxu0
        %v11117 = vpop.f32.mrb[0].mxu0
        %v11118 = vadd.f32 0.0, %v11117
        %v11119 = vpop.f32.mrb[0].mxu0
        %11120 = vmatprep.mubr.bf16.mxu0 0
        %11121 = vmatmul.mubr.bf16.gmra.mrb[0].mxu0 %v10966
        %v11122 = vpop.f32.mrb[0].mxu0
        %v11123 = vadd.f32 0.0, %v11122
        %v11124 = vpop.f32.mrb[0].mxu0
        %v11125 = vpop.f32.mrb[0].mxu0
        %v11126 = vadd.f32 0.0, %v11125
        %v11127 = vpop.f32.mrb[0].mxu0
        %11128 = vmatprep.mubr.bf16.mxu0 0
        %11129 = vmatmul.mubr.bf16.gmra.mrb[0].mxu0 %v10967
        %v11130 = vpop.f32.mrb[0].mxu0
        %v11131 = vadd.f32 0.0, %v11130
        %v11132 = vpop.f32.mrb[0].mxu0
        %v11133 = vpop.f32.mrb[0].mxu0
        %v11134 = vadd.f32 0.0, %v11133
        %v11135 = vpop.f32.mrb[0].mxu0
        %11136 = vmatprep.mubr.bf16.mxu0 0
        %11137 = vmatmul.mubr.bf16.gmra.mrb[0].mxu0 %v10968
        %v11138 = vpop.f32.mrb[0].mxu0
        %v11139 = vadd.f32 0.0, %v11138
        %v11140 = vpop.f32.mrb[0].mxu0
        %v11141 = vpop.f32.mrb[0].mxu0
        %v11142 = vadd.f32 0.0, %v11141
        %v11143 = vpop.f32.mrb[0].mxu0
        %11144 = vmatprep.mubr.bf16.mxu0 0
        %11145 = vmatmul.mubr.bf16.gmra.mrb[0].mxu0 %v10969
        %v11146 = vpop.f32.mrb[0].mxu0
        %v11147 = vadd.f32 0.0, %v11146
        %v11148 = vpop.f32.mrb[0].mxu0
        %v11149 = vpop.f32.mrb[0].mxu0
        %v11150 = vadd.f32 0.0, %v11149
        %v11151 = vpop.f32.mrb[0].mxu0
        %11152 = vmatprep.mubr.bf16.mxu0 0
        %11153 = vmatmul.mubr.bf16.gmra.mrb[0].mxu0 %v10970
        %v11154 = vpop.f32.mrb[0].mxu0
        %v11155 = vadd.f32 0.0, %v11154
        %v11156 = vpop.f32.mrb[0].mxu0
        %v11157 = vpop.f32.mrb[0].mxu0
        %v11158 = vadd.f32 0.0, %v11157
        %v11159 = vpop.f32.mrb[0].mxu0
        %11160 = vmatprep.mubr.bf16.mxu0 0
        %11161 = vmatmul.mubr.bf16.gmra.mrb[0].mxu0 %v10971
        %v11162 = vpop.f32.mrb[0].mxu0
        %v11163 = vadd.f32 0.0, %v11162
        %v11164 = vpop.f32.mrb[0].mxu0
        %v11165 = vpop.f32.mrb[0].mxu0
        %v11166 = vadd.f32 0.0, %v11165
        %v11167 = vpop.f32.mrb[0].mxu0
        %11168 = vmatprep.mubr.bf16.mxu0 0
        %11169 = vmatmul.mubr.bf16.gmra.mrb[0].mxu0 %v10972
        %v11170 = vpop.f32.mrb[0].mxu0
        %v11171 = vadd.f32 0.0, %v11170
        %v11172 = vpop.f32.mrb[0].mxu0
        %v11173 = vpop.f32.mrb[0].mxu0
        %v11174 = vadd.f32 0.0, %v11173
        %v11175 = vpop.f32.mrb[0].mxu0
        %11176 = vmatprep.mubr.bf16.mxu0 0
        %11177 = vmatmul.mubr.bf16.gmra.mrb[0].mxu0 %v10973
        %v11178 = vpop.f32.mrb[0].mxu0
        %v11179 = vadd.f32 0.0, %v11178
        %v11180 = vpop.f32.mrb[0].mxu0
        %v11181 = vpop.f32.mrb[0].mxu0
        %v11182 = vadd.f32 0.0, %v11181
        %v11183 = vpop.f32.mrb[0].mxu0
        %11184 = vmatprep.mubr.bf16.mxu0 0
        %11185 = vmatmul.mubr.bf16.gmra.mrb[0].mxu0 %v10974
        %v11186 = vpop.f32.mrb[0].mxu0
        %v11187 = vadd.f32 0.0, %v11186
        %v11188 = vpop.f32.mrb[0].mxu0
        %v11189 = vpop.f32.mrb[0].mxu0
        %v11190 = vadd.f32 0.0, %v11189
        %v11191 = vpop.f32.mrb[0].mxu0
        %11192 = vmatprep.mubr.bf16.mxu0 0
        %11193 = vmatmul.mubr.bf16.gmra.mrb[0].mxu0 %v10975
        %v11194 = vpop.f32.mrb[0].mxu0
        %v11195 = vadd.f32 0.0, %v11194
        %v11196 = vpop.f32.mrb[0].mxu0
        %v11197 = vpop.f32.mrb[0].mxu0
        %v11198 = vadd.f32 0.0, %v11197
        %v11199 = vpop.f32.mrb[0].mxu0
        %11200 = vdwg.mxu0
        %v11201 = vadd.f32 %v10448, %v11075
        %v11202 = vadd.f32 %v10449, %v11078
        %v11203 = vadd.f32 %v10450, %v11083
        %v11204 = vadd.f32 %v10451, %v11086
        %v11205 = vadd.f32 %v10452, %v11091
        %v11206 = vadd.f32 %v10453, %v11094
        %v11207 = vadd.f32 %v10454, %v11099
        %v11208 = vadd.f32 %v10455, %v11102
        %v11209 = vadd.f32 %v10456, %v11107
        %v11210 = vadd.f32 %v10457, %v11110
        %v11211 = vadd.f32 %v10458, %v11115
        %v11212 = vadd.f32 %v10459, %v11118
        %v11213 = vadd.f32 %v10460, %v11123
        %v11214 = vadd.f32 %v10461, %v11126
        %v11215 = vadd.f32 %v10462, %v11131
        %v11216 = vadd.f32 %v10463, %v11134
        %v11217 = vadd.f32 %v10464, %v11139
        %v11218 = vadd.f32 %v10465, %v11142
        %v11219 = vadd.f32 %v10466, %v11147
        %v11220 = vadd.f32 %v10467, %v11150
        %v11221 = vadd.f32 %v10468, %v11155
        %v11222 = vadd.f32 %v10469, %v11158
        %v11223 = vadd.f32 %v10470, %v11163
        %v11224 = vadd.f32 %v10471, %v11166
        %v11225 = vadd.f32 %v10472, %v11171
        %v11226 = vadd.f32 %v10473, %v11174
        %v11227 = vadd.f32 %v10474, %v11179
        %v11228 = vadd.f32 %v10475, %v11182
        %v11229 = vadd.f32 %v10476, %v11187
        %v11230 = vadd.f32 %v10477, %v11190
        %v11231 = vadd.f32 %v10478, %v11195
        %v11232 = vadd.f32 %v10479, %v11198
        %v11233 = vld [vmem:[%s4664] sm:$0xe]
        %v11234 = vld [vmem:[%s4664 + $0xc] sm:$0xe]
        %v11235 = vld [vmem:[%s4664 + $0x18] sm:$0xe]
        %v11236 = vld [vmem:[%s4664 + $0x24] sm:$0xe]
        %v11237 = vld [vmem:[%s4664 + $0x30] sm:$0xe]
        %v11238 = vld [vmem:[%s4664 + $0x3c] sm:$0xe]
        %v11239 = vld [vmem:[%s4664 + $0x48] sm:$0xe]
        %v11240 = vld [vmem:[%s4664 + $0x54] sm:$0xe]
        %v11241 = vld [vmem:[%s4664 + $0x60] sm:$0xe]
        %v11242 = vld [vmem:[%s4664 + $0x6c] sm:$0xe]
        %v11243 = vld [vmem:[%s4664 + $0x78] sm:$0xe]
        %v11244 = vld [vmem:[%s4664 + $0x84] sm:$0xe]
        %v11245 = vld [vmem:[%s4664 + $0x90] sm:$0xe]
        %v11246 = vld [vmem:[%s4664 + $0x9c] sm:$0xe]
        %v11247 = vld [vmem:[%s4664 + $0xa8] sm:$0xe]
        %v11248 = vld [vmem:[%s4664 + $0xb4] sm:$0xe]
        %v11297 = vrot.slane %v11233, 5
        %v11298 = vrot.slane %v11297, 4
        %v11299 = vrot.slane %v10481, 5
        %v11300 = vsel %vm2595, %v11298, %v11299
        %v11301 = vrot.slane %v11299, 4
        %v11302 = vrot.slane %v10482, 5
        %v11303 = vsel %vm2595, %v11301, %v11302
        %v11304 = vrot.slane %v11234, 5
        %v11305 = vrot.slane %v11304, 4
        %v11306 = vrot.slane %v10484, 5
        %v11307 = vsel %vm2595, %v11305, %v11306
        %v11308 = vrot.slane %v11306, 4
        %v11309 = vrot.slane %v10485, 5
        %v11310 = vsel %vm2595, %v11308, %v11309
        %v11311 = vrot.slane %v11235, 5
        %v11312 = vrot.slane %v11311, 4
        %v11313 = vrot.slane %v10487, 5
        %v11314 = vsel %vm2595, %v11312, %v11313
        %v11315 = vrot.slane %v11313, 4
        %v11316 = vrot.slane %v10488, 5
        %v11317 = vsel %vm2595, %v11315, %v11316
        %v11318 = vrot.slane %v11236, 5
        %v11319 = vrot.slane %v11318, 4
        %v11320 = vrot.slane %v10490, 5
        %v11321 = vsel %vm2595, %v11319, %v11320
        %v11322 = vrot.slane %v11320, 4
        %v11323 = vrot.slane %v10491, 5
        %v11324 = vsel %vm2595, %v11322, %v11323
        %v11325 = vrot.slane %v11237, 5
        %v11326 = vrot.slane %v11325, 4
        %v11327 = vrot.slane %v10493, 5
        %v11328 = vsel %vm2595, %v11326, %v11327
        %v11329 = vrot.slane %v11327, 4
        %v11330 = vrot.slane %v10494, 5
        %v11331 = vsel %vm2595, %v11329, %v11330
        %v11332 = vrot.slane %v11238, 5
        %v11333 = vrot.slane %v11332, 4
        %v11334 = vrot.slane %v10496, 5
        %v11335 = vsel %vm2595, %v11333, %v11334
        %v11336 = vrot.slane %v11334, 4
        %v11337 = vrot.slane %v10497, 5
        %v11338 = vsel %vm2595, %v11336, %v11337
        %v11339 = vrot.slane %v11239, 5
        %v11340 = vrot.slane %v11339, 4
        %v11341 = vrot.slane %v10499, 5
        %v11342 = vsel %vm2595, %v11340, %v11341
        %v11343 = vrot.slane %v11341, 4
        %v11344 = vrot.slane %v10500, 5
        %v11345 = vsel %vm2595, %v11343, %v11344
        %v11346 = vrot.slane %v11240, 5
        %v11347 = vrot.slane %v11346, 4
        %v11348 = vrot.slane %v10502, 5
        %v11349 = vsel %vm2595, %v11347, %v11348
        %v11350 = vrot.slane %v11348, 4
        %v11351 = vrot.slane %v10503, 5
        %v11352 = vsel %vm2595, %v11350, %v11351
        %v11353 = vrot.slane %v11241, 5
        %v11354 = vrot.slane %v11353, 4
        %v11355 = vrot.slane %v10505, 5
        %v11356 = vsel %vm2595, %v11354, %v11355
        %v11357 = vrot.slane %v11355, 4
        %v11358 = vrot.slane %v10506, 5
        %v11359 = vsel %vm2595, %v11357, %v11358
        %v11360 = vrot.slane %v11242, 5
        %v11361 = vrot.slane %v11360, 4
        %v11362 = vrot.slane %v10508, 5
        %v11363 = vsel %vm2595, %v11361, %v11362
        %v11364 = vrot.slane %v11362, 4
        %v11365 = vrot.slane %v10509, 5
        %v11366 = vsel %vm2595, %v11364, %v11365
        %v11367 = vrot.slane %v11243, 5
        %v11368 = vrot.slane %v11367, 4
        %v11369 = vrot.slane %v10511, 5
        %v11370 = vsel %vm2595, %v11368, %v11369
        %v11371 = vrot.slane %v11369, 4
        %v11372 = vrot.slane %v10512, 5
        %v11373 = vsel %vm2595, %v11371, %v11372
        %v11374 = vrot.slane %v11244, 5
        %v11375 = vrot.slane %v11374, 4
        %v11376 = vrot.slane %v10514, 5
        %v11377 = vsel %vm2595, %v11375, %v11376
        %v11378 = vrot.slane %v11376, 4
        %v11379 = vrot.slane %v10515, 5
        %v11380 = vsel %vm2595, %v11378, %v11379
        %v11381 = vrot.slane %v11245, 5
        %v11382 = vrot.slane %v11381, 4
        %v11383 = vrot.slane %v10517, 5
        %v11384 = vsel %vm2595, %v11382, %v11383
        %v11385 = vrot.slane %v11383, 4
        %v11386 = vrot.slane %v10518, 5
        %v11387 = vsel %vm2595, %v11385, %v11386
        %v11388 = vrot.slane %v11246, 5
        %v11389 = vrot.slane %v11388, 4
        %v11390 = vrot.slane %v10520, 5
        %v11391 = vsel %vm2595, %v11389, %v11390
        %v11392 = vrot.slane %v11390, 4
        %v11393 = vrot.slane %v10521, 5
        %v11394 = vsel %vm2595, %v11392, %v11393
        %v11395 = vrot.slane %v11247, 5
        %v11396 = vrot.slane %v11395, 4
        %v11397 = vrot.slane %v10523, 5
        %v11398 = vsel %vm2595, %v11396, %v11397
        %v11399 = vrot.slane %v11397, 4
        %v11400 = vrot.slane %v10524, 5
        %v11401 = vsel %vm2595, %v11399, %v11400
        %v11402 = vrot.slane %v11248, 5
        %v11403 = vrot.slane %v11402, 4
        %v11404 = vrot.slane %v10526, 5
        %v11405 = vsel %vm2595, %v11403, %v11404
        %v11406 = vrot.slane %v11404, 4
        %v11407 = vrot.slane %v10527, 5
        %v11408 = vsel %vm2595, %v11406, %v11407
        %v11409 = vld [vmem:[%s7 + $0x200] sm:$0xf]
        %v11410 = vld [vmem:[%s7 + $0x204] sm:$0xf]
        %v11411 = vld [vmem:[%s7 + $0x208] sm:$0xf]
        %v11412 = vld [vmem:[%s7 + $0x20c] sm:$0xf]
        %v11413 = vld [vmem:[%s7 + $0x210] sm:$0xf]
        %v11414 = vld [vmem:[%s7 + $0x214] sm:$0xf]
        %v11415 = vld [vmem:[%s7 + $0x218] sm:$0xf]
        %v11416 = vld [vmem:[%s7 + $0x21c] sm:$0xf]
        %v11417 = vld [vmem:[%s7 + $0x220] sm:$0xf]
        %v11418 = vld [vmem:[%s7 + $0x224] sm:$0xf]
        %v11419 = vld [vmem:[%s7 + $0x228] sm:$0xf]
        %v11420 = vld [vmem:[%s7 + $0x22c] sm:$0xf]
        %v11421 = vld [vmem:[%s7 + $0x230] sm:$0xf]
        %v11422 = vld [vmem:[%s7 + $0x234] sm:$0xf]
        %v11423 = vld [vmem:[%s7 + $0x238] sm:$0xf]
        %v11424 = vld [vmem:[%s7 + $0x23c] sm:$0xf]
        %v11425 = vunpack.c.l.b16 %v11300
        %v11426 = vunpack.c.l.b16 %v11303
        %v11427 = vunpack.c.l.b16 %v11307
        %v11428 = vunpack.c.l.b16 %v11310
        %v11429 = vunpack.c.l.b16 %v11314
        %v11430 = vunpack.c.l.b16 %v11317
        %v11431 = vunpack.c.l.b16 %v11321
        %v11432 = vunpack.c.l.b16 %v11324
        %v11433 = vunpack.c.l.b16 %v11328
        %v11434 = vunpack.c.l.b16 %v11331
        %v11435 = vunpack.c.l.b16 %v11335
        %v11436 = vunpack.c.l.b16 %v11338
        %v11437 = vunpack.c.l.b16 %v11342
        %v11438 = vunpack.c.l.b16 %v11345
        %v11439 = vunpack.c.l.b16 %v11349
        %v11440 = vunpack.c.l.b16 %v11352
        %v11441 = vunpack.c.l.b16 %v11356
        %v11442 = vunpack.c.l.b16 %v11359
        %v11443 = vunpack.c.l.b16 %v11363
        %v11444 = vunpack.c.l.b16 %v11366
        %v11445 = vunpack.c.l.b16 %v11370
        %v11446 = vunpack.c.l.b16 %v11373
        %v11447 = vunpack.c.l.b16 %v11377
        %v11448 = vunpack.c.l.b16 %v11380
        %v11449 = vunpack.c.l.b16 %v11384
        %v11450 = vunpack.c.l.b16 %v11387
        %v11451 = vunpack.c.l.b16 %v11391
        %v11452 = vunpack.c.l.b16 %v11394
        %v11453 = vunpack.c.l.b16 %v11398
        %v11454 = vunpack.c.l.b16 %v11401
        %v11455 = vunpack.c.l.b16 %v11405
        %v11456 = vunpack.c.l.b16 %v11408
        %v11457 = vpack.c.b16 %v11426, %v11425
        %v11458 = vpack.c.b16 %v11428, %v11427
        %v11459 = vpack.c.b16 %v11430, %v11429
        %v11460 = vpack.c.b16 %v11432, %v11431
        %v11461 = vpack.c.b16 %v11434, %v11433
        %v11462 = vpack.c.b16 %v11436, %v11435
        %v11463 = vpack.c.b16 %v11438, %v11437
        %v11464 = vpack.c.b16 %v11440, %v11439
        %v11465 = vpack.c.b16 %v11442, %v11441
        %v11466 = vpack.c.b16 %v11444, %v11443
        %v11467 = vpack.c.b16 %v11446, %v11445
        %v11468 = vpack.c.b16 %v11448, %v11447
        %v11469 = vpack.c.b16 %v11450, %v11449
        %v11470 = vpack.c.b16 %v11452, %v11451
        %v11471 = vpack.c.b16 %v11454, %v11453
        %v11472 = vpack.c.b16 %v11456, %v11455
        %v11505 = vunpack.c.l.b16 %v11409
        %v11506 = vunpack.c.l.b16 %v11410
        %v11507 = vunpack.c.l.b16 %v11411
        %v11508 = vunpack.c.l.b16 %v11412
        %v11509 = vunpack.c.l.b16 %v11413
        %v11510 = vunpack.c.l.b16 %v11414
        %v11511 = vunpack.c.l.b16 %v11415
        %v11512 = vunpack.c.l.b16 %v11416
        %v11513 = vunpack.c.l.b16 %v11417
        %v11514 = vunpack.c.l.b16 %v11418
        %v11515 = vunpack.c.l.b16 %v11419
        %v11516 = vunpack.c.l.b16 %v11420
        %v11517 = vunpack.c.l.b16 %v11421
        %v11518 = vunpack.c.l.b16 %v11422
        %v11519 = vunpack.c.l.b16 %v11423
        %v11520 = vunpack.c.l.b16 %v11424
        %v11521 = vpack.c.b16 %v11506, %v11505
        %v11522 = vpack.c.b16 %v11508, %v11507
        %v11523 = vpack.c.b16 %v11510, %v11509
        %v11524 = vpack.c.b16 %v11512, %v11511
        %v11525 = vpack.c.b16 %v11514, %v11513
        %v11526 = vpack.c.b16 %v11516, %v11515
        %v11527 = vpack.c.b16 %v11518, %v11517
        %v11528 = vpack.c.b16 %v11520, %v11519
        %11537 = vmatprep.subr.bf16.mxu0 0
        %11538 = vmatpush1.bf16.msra.mxu0 %v11521
        %11539 = vmatprep.subr.bf16.mxu0 0
        %11540 = vmatpush1.bf16.msra.mxu0 %v11522
        %11541 = vmatprep.subr.bf16.mxu0 0
        %11542 = vmatpush1.bf16.msra.mxu0 %v11523
        %11543 = vmatprep.subr.bf16.mxu0 0
        %11544 = vmatpush1.bf16.msra.mxu0 %v11524
        %11545 = vmatprep.subr.bf16.mxu0 0
        %11546 = vmatpush1.bf16.msra.mxu0 %v11525
        %11547 = vmatprep.subr.bf16.mxu0 0
        %11548 = vmatpush1.bf16.msra.mxu0 %v11526
        %11549 = vmatprep.subr.bf16.mxu0 0
        %11550 = vmatpush1.bf16.msra.mxu0 %v11527
        %11551 = vmatprep.subr.bf16.mxu0 0
        %11552 = vmatpush1.bf16.msra.mxu0 %v11528
        %11553 = vmatprep.subr.bf16.mxu0 0
        %11554 = vmatpush1.bf16.msra.mxu0 0
        %11555 = vmatprep.subr.bf16.mxu0 0
        %11556 = vmatpush1.bf16.msra.mxu0 0
        %11557 = vmatprep.subr.bf16.mxu0 0
        %11558 = vmatpush1.bf16.msra.mxu0 0
        %11559 = vmatprep.subr.bf16.mxu0 0
        %11560 = vmatpush1.bf16.msra.mxu0 0
        %11561 = vmatprep.subr.bf16.mxu0 0
        %11562 = vmatpush1.bf16.msra.mxu0 0
        %11563 = vmatprep.subr.bf16.mxu0 0
        %11564 = vmatpush1.bf16.msra.mxu0 0
        %11565 = vmatprep.subr.bf16.mxu0 0
        %11566 = vmatpush1.bf16.msra.mxu0 0
        %11567 = vmatprep.subr.bf16.mxu0 0
        %11568 = vmatpush1.bf16.msra.mxu0 0
        %11569 = vmatprep.mubr.bf16.mxu0 0
        %11570 = vmatmul.mubr.bf16.gmra.mrb[0].mxu0 %v11457
        %v11571 = vpop.f32.mrb[0].mxu0
        %v11572 = vadd.f32 0.0, %v11571
        %v11573 = vpop.f32.mrb[0].mxu0
        %v11574 = vpop.f32.mrb[0].mxu0
        %v11575 = vadd.f32 0.0, %v11574
        %v11576 = vpop.f32.mrb[0].mxu0
        %11577 = vmatprep.mubr.bf16.mxu0 0
        %11578 = vmatmul.mubr.bf16.gmra.mrb[0].mxu0 %v11458
        %v11579 = vpop.f32.mrb[0].mxu0
        %v11580 = vadd.f32 0.0, %v11579
        %v11581 = vpop.f32.mrb[0].mxu0
        %v11582 = vpop.f32.mrb[0].mxu0
        %v11583 = vadd.f32 0.0, %v11582
        %v11584 = vpop.f32.mrb[0].mxu0
        %11585 = vmatprep.mubr.bf16.mxu0 0
        %11586 = vmatmul.mubr.bf16.gmra.mrb[0].mxu0 %v11459
        %v11587 = vpop.f32.mrb[0].mxu0
        %v11588 = vadd.f32 0.0, %v11587
        %v11589 = vpop.f32.mrb[0].mxu0
        %v11590 = vpop.f32.mrb[0].mxu0
        %v11591 = vadd.f32 0.0, %v11590
        %v11592 = vpop.f32.mrb[0].mxu0
        %11593 = vmatprep.mubr.bf16.mxu0 0
        %11594 = vmatmul.mubr.bf16.gmra.mrb[0].mxu0 %v11460
        %v11595 = vpop.f32.mrb[0].mxu0
        %v11596 = vadd.f32 0.0, %v11595
        %v11597 = vpop.f32.mrb[0].mxu0
        %v11598 = vpop.f32.mrb[0].mxu0
        %v11599 = vadd.f32 0.0, %v11598
        %v11600 = vpop.f32.mrb[0].mxu0
        %11601 = vmatprep.mubr.bf16.mxu0 0
        %11602 = vmatmul.mubr.bf16.gmra.mrb[0].mxu0 %v11461
        %v11603 = vpop.f32.mrb[0].mxu0
        %v11604 = vadd.f32 0.0, %v11603
        %v11605 = vpop.f32.mrb[0].mxu0
        %v11606 = vpop.f32.mrb[0].mxu0
        %v11607 = vadd.f32 0.0, %v11606
        %v11608 = vpop.f32.mrb[0].mxu0
        %11609 = vmatprep.mubr.bf16.mxu0 0
        %11610 = vmatmul.mubr.bf16.gmra.mrb[0].mxu0 %v11462
        %v11611 = vpop.f32.mrb[0].mxu0
        %v11612 = vadd.f32 0.0, %v11611
        %v11613 = vpop.f32.mrb[0].mxu0
        %v11614 = vpop.f32.mrb[0].mxu0
        %v11615 = vadd.f32 0.0, %v11614
        %v11616 = vpop.f32.mrb[0].mxu0
        %11617 = vmatprep.mubr.bf16.mxu0 0
        %11618 = vmatmul.mubr.bf16.gmra.mrb[0].mxu0 %v11463
        %v11619 = vpop.f32.mrb[0].mxu0
        %v11620 = vadd.f32 0.0, %v11619
        %v11621 = vpop.f32.mrb[0].mxu0
        %v11622 = vpop.f32.mrb[0].mxu0
        %v11623 = vadd.f32 0.0, %v11622
        %v11624 = vpop.f32.mrb[0].mxu0
        %11625 = vmatprep.mubr.bf16.mxu0 0
        %11626 = vmatmul.mubr.bf16.gmra.mrb[0].mxu0 %v11464
        %v11627 = vpop.f32.mrb[0].mxu0
        %v11628 = vadd.f32 0.0, %v11627
        %v11629 = vpop.f32.mrb[0].mxu0
        %v11630 = vpop.f32.mrb[0].mxu0
        %v11631 = vadd.f32 0.0, %v11630
        %v11632 = vpop.f32.mrb[0].mxu0
        %11633 = vmatprep.mubr.bf16.mxu0 0
        %11634 = vmatmul.mubr.bf16.gmra.mrb[0].mxu0 %v11465
        %v11635 = vpop.f32.mrb[0].mxu0
        %v11636 = vadd.f32 0.0, %v11635
        %v11637 = vpop.f32.mrb[0].mxu0
        %v11638 = vpop.f32.mrb[0].mxu0
        %v11639 = vadd.f32 0.0, %v11638
        %v11640 = vpop.f32.mrb[0].mxu0
        %11641 = vmatprep.mubr.bf16.mxu0 0
        %11642 = vmatmul.mubr.bf16.gmra.mrb[0].mxu0 %v11466
        %v11643 = vpop.f32.mrb[0].mxu0
        %v11644 = vadd.f32 0.0, %v11643
        %v11645 = vpop.f32.mrb[0].mxu0
        %v11646 = vpop.f32.mrb[0].mxu0
        %v11647 = vadd.f32 0.0, %v11646
        %v11648 = vpop.f32.mrb[0].mxu0
        %11649 = vmatprep.mubr.bf16.mxu0 0
        %11650 = vmatmul.mubr.bf16.gmra.mrb[0].mxu0 %v11467
        %v11651 = vpop.f32.mrb[0].mxu0
        %v11652 = vadd.f32 0.0, %v11651
        %v11653 = vpop.f32.mrb[0].mxu0
        %v11654 = vpop.f32.mrb[0].mxu0
        %v11655 = vadd.f32 0.0, %v11654
        %v11656 = vpop.f32.mrb[0].mxu0
        %11657 = vmatprep.mubr.bf16.mxu0 0
        %11658 = vmatmul.mubr.bf16.gmra.mrb[0].mxu0 %v11468
        %v11659 = vpop.f32.mrb[0].mxu0
        %v11660 = vadd.f32 0.0, %v11659
        %v11661 = vpop.f32.mrb[0].mxu0
        %v11662 = vpop.f32.mrb[0].mxu0
        %v11663 = vadd.f32 0.0, %v11662
        %v11664 = vpop.f32.mrb[0].mxu0
        %11665 = vmatprep.mubr.bf16.mxu0 0
        %11666 = vmatmul.mubr.bf16.gmra.mrb[0].mxu0 %v11469
        %v11667 = vpop.f32.mrb[0].mxu0
        %v11668 = vadd.f32 0.0, %v11667
        %v11669 = vpop.f32.mrb[0].mxu0
        %v11670 = vpop.f32.mrb[0].mxu0
        %v11671 = vadd.f32 0.0, %v11670
        %v11672 = vpop.f32.mrb[0].mxu0
        %11673 = vmatprep.mubr.bf16.mxu0 0
        %11674 = vmatmul.mubr.bf16.gmra.mrb[0].mxu0 %v11470
        %v11675 = vpop.f32.mrb[0].mxu0
        %v11676 = vadd.f32 0.0, %v11675
        %v11677 = vpop.f32.mrb[0].mxu0
        %v11678 = vpop.f32.mrb[0].mxu0
        %v11679 = vadd.f32 0.0, %v11678
        %v11680 = vpop.f32.mrb[0].mxu0
        %11681 = vmatprep.mubr.bf16.mxu0 0
        %11682 = vmatmul.mubr.bf16.gmra.mrb[0].mxu0 %v11471
        %v11683 = vpop.f32.mrb[0].mxu0
        %v11684 = vadd.f32 0.0, %v11683
        %v11685 = vpop.f32.mrb[0].mxu0
        %v11686 = vpop.f32.mrb[0].mxu0
        %v11687 = vadd.f32 0.0, %v11686
        %v11688 = vpop.f32.mrb[0].mxu0
        %11689 = vmatprep.mubr.bf16.mxu0 0
        %11690 = vmatmul.mubr.bf16.gmra.mrb[0].mxu0 %v11472
        %v11691 = vpop.f32.mrb[0].mxu0
        %v11692 = vadd.f32 0.0, %v11691
        %v11693 = vpop.f32.mrb[0].mxu0
        %v11694 = vpop.f32.mrb[0].mxu0
        %v11695 = vadd.f32 0.0, %v11694
        %v11696 = vpop.f32.mrb[0].mxu0
        %11697 = vdwg.mxu0
        %v11698 = vadd.f32 %v11201, %v11572
        %v11699 = vadd.f32 %v11202, %v11575
        %v11700 = vadd.f32 %v11203, %v11580
        %v11701 = vadd.f32 %v11204, %v11583
        %v11702 = vadd.f32 %v11205, %v11588
        %v11703 = vadd.f32 %v11206, %v11591
        %v11704 = vadd.f32 %v11207, %v11596
        %v11705 = vadd.f32 %v11208, %v11599
        %v11706 = vadd.f32 %v11209, %v11604
        %v11707 = vadd.f32 %v11210, %v11607
        %v11708 = vadd.f32 %v11211, %v11612
        %v11709 = vadd.f32 %v11212, %v11615
        %v11710 = vadd.f32 %v11213, %v11620
        %v11711 = vadd.f32 %v11214, %v11623
        %v11712 = vadd.f32 %v11215, %v11628
        %v11713 = vadd.f32 %v11216, %v11631
        %v11714 = vadd.f32 %v11217, %v11636
        %v11715 = vadd.f32 %v11218, %v11639
        %v11716 = vadd.f32 %v11219, %v11644
        %v11717 = vadd.f32 %v11220, %v11647
        %v11718 = vadd.f32 %v11221, %v11652
        %v11719 = vadd.f32 %v11222, %v11655
        %v11720 = vadd.f32 %v11223, %v11660
        %v11721 = vadd.f32 %v11224, %v11663
        %v11722 = vadd.f32 %v11225, %v11668
        %v11723 = vadd.f32 %v11226, %v11671
        %v11724 = vadd.f32 %v11227, %v11676
        %v11725 = vadd.f32 %v11228, %v11679
        %v11726 = vadd.f32 %v11229, %v11684
        %v11727 = vadd.f32 %v11230, %v11687
        %v11728 = vadd.f32 %v11231, %v11692
        %v11729 = vadd.f32 %v11232, %v11695
        %v11730 = vld [vmem:[%s8] sm:$0x1]
        %v11732 = vlaneseq
        %v11733 = vshrl.u32 %v11732, 7
        %v11734 = vsub.s32 0, %v11733
        %v11735 = vrot.slane %v11730, %v11734
        %v11737 = vadd.f32 %v11698, %v11735
        %v11738 = vadd.f32 %v11699, %v11735
        %v11739 = vadd.f32 %v11700, %v11735
        %v11740 = vadd.f32 %v11701, %v11735
        %v11741 = vadd.f32 %v11702, %v11735
        %v11742 = vadd.f32 %v11703, %v11735
        %v11743 = vadd.f32 %v11704, %v11735
        %v11744 = vadd.f32 %v11705, %v11735
        %v11745 = vadd.f32 %v11706, %v11735
        %v11746 = vadd.f32 %v11707, %v11735
        %v11747 = vadd.f32 %v11708, %v11735
        %v11748 = vadd.f32 %v11709, %v11735
        %v11749 = vadd.f32 %v11710, %v11735
        %v11750 = vadd.f32 %v11711, %v11735
        %v11751 = vadd.f32 %v11712, %v11735
        %v11752 = vadd.f32 %v11713, %v11735
        %v11753 = vadd.f32 %v11714, %v11735
        %v11754 = vadd.f32 %v11715, %v11735
        %v11755 = vadd.f32 %v11716, %v11735
        %v11756 = vadd.f32 %v11717, %v11735
        %v11757 = vadd.f32 %v11718, %v11735
        %v11758 = vadd.f32 %v11719, %v11735
        %v11759 = vadd.f32 %v11720, %v11735
        %v11760 = vadd.f32 %v11721, %v11735
        %v11761 = vadd.f32 %v11722, %v11735
        %v11762 = vadd.f32 %v11723, %v11735
        %v11763 = vadd.f32 %v11724, %v11735
        %v11764 = vadd.f32 %v11725, %v11735
        %v11765 = vadd.f32 %v11726, %v11735
        %v11766 = vadd.f32 %v11727, %v11735
        %v11767 = vadd.f32 %v11728, %v11735
        %v11768 = vadd.f32 %v11729, %v11735
        %v11769 = vmax.f32 %v11737, 0.0
        %v11770 = vmax.f32 %v11738, 0.0
        %v11771 = vmax.f32 %v11739, 0.0
        %v11772 = vmax.f32 %v11740, 0.0
        %v11773 = vmax.f32 %v11741, 0.0
        %v11774 = vmax.f32 %v11742, 0.0
        %v11775 = vmax.f32 %v11743, 0.0
        %v11776 = vmax.f32 %v11744, 0.0
        %v11777 = vmax.f32 %v11745, 0.0
        %v11778 = vmax.f32 %v11746, 0.0
        %v11779 = vmax.f32 %v11747, 0.0
        %v11780 = vmax.f32 %v11748, 0.0
        %v11781 = vmax.f32 %v11749, 0.0
        %v11782 = vmax.f32 %v11750, 0.0
        %v11783 = vmax.f32 %v11751, 0.0
        %v11784 = vmax.f32 %v11752, 0.0
        %v11785 = vmax.f32 %v11753, 0.0
        %v11786 = vmax.f32 %v11754, 0.0
        %v11787 = vmax.f32 %v11755, 0.0
        %v11788 = vmax.f32 %v11756, 0.0
        %v11789 = vmax.f32 %v11757, 0.0
        %v11790 = vmax.f32 %v11758, 0.0
        %v11791 = vmax.f32 %v11759, 0.0
        %v11792 = vmax.f32 %v11760, 0.0
        %v11793 = vmax.f32 %v11761, 0.0
        %v11794 = vmax.f32 %v11762, 0.0
        %v11795 = vmax.f32 %v11763, 0.0
        %v11796 = vmax.f32 %v11764, 0.0
        %v11797 = vmax.f32 %v11765, 0.0
        %v11798 = vmax.f32 %v11766, 0.0
        %v11799 = vmax.f32 %v11767, 0.0
        %v11800 = vmax.f32 %v11768, 0.0
        %v11801 = vld [vmem:[%s9] sm:$0x1]
        %v11803 = vlaneseq
        %v11804 = vshrl.u32 %v11803, 7
        %v11805 = vsub.s32 0, %v11804
        %v11806 = vrot.slane %v11801, %v11805
        %v11808 = vadd.f32 %v11769, %v11806
        %v11809 = vadd.f32 %v11770, %v11806
        %v11810 = vadd.f32 %v11771, %v11806
        %v11811 = vadd.f32 %v11772, %v11806
        %v11812 = vadd.f32 %v11773, %v11806
        %v11813 = vadd.f32 %v11774, %v11806
        %v11814 = vadd.f32 %v11775, %v11806
        %v11815 = vadd.f32 %v11776, %v11806
        %v11816 = vadd.f32 %v11777, %v11806
        %v11817 = vadd.f32 %v11778, %v11806
        %v11818 = vadd.f32 %v11779, %v11806
        %v11819 = vadd.f32 %v11780, %v11806
        %v11820 = vadd.f32 %v11781, %v11806
        %v11821 = vadd.f32 %v11782, %v11806
        %v11822 = vadd.f32 %v11783, %v11806
        %v11823 = vadd.f32 %v11784, %v11806
        %v11824 = vadd.f32 %v11785, %v11806
        %v11825 = vadd.f32 %v11786, %v11806
        %v11826 = vadd.f32 %v11787, %v11806
        %v11827 = vadd.f32 %v11788, %v11806
        %v11828 = vadd.f32 %v11789, %v11806
        %v11829 = vadd.f32 %v11790, %v11806
        %v11830 = vadd.f32 %v11791, %v11806
        %v11831 = vadd.f32 %v11792, %v11806
        %v11832 = vadd.f32 %v11793, %v11806
        %v11833 = vadd.f32 %v11794, %v11806
        %v11834 = vadd.f32 %v11795, %v11806
        %v11835 = vadd.f32 %v11796, %v11806
        %v11836 = vadd.f32 %v11797, %v11806
        %v11837 = vadd.f32 %v11798, %v11806
        %v11838 = vadd.f32 %v11799, %v11806
        %v11839 = vadd.f32 %v11800, %v11806
        %v11840 = vadd.f32 %v11808, %v632
        %v11841 = vadd.f32 %v11809, %v636
        %v11842 = vadd.f32 %v11810, %v642
        %v11843 = vadd.f32 %v11811, %v646
        %v11844 = vadd.f32 %v11812, %v652
        %v11845 = vadd.f32 %v11813, %v656
        %v11846 = vadd.f32 %v11814, %v662
        %v11847 = vadd.f32 %v11815, %v666
        %v11848 = vadd.f32 %v11816, %v672
        %v11849 = vadd.f32 %v11817, %v676
        %v11850 = vadd.f32 %v11818, %v682
        %v11851 = vadd.f32 %v11819, %v686
        %v11852 = vadd.f32 %v11820, %v692
        %v11853 = vadd.f32 %v11821, %v696
        %v11854 = vadd.f32 %v11822, %v702
        %v11855 = vadd.f32 %v11823, %v706
        %v11856 = vadd.f32 %v11824, %v712
        %v11857 = vadd.f32 %v11825, %v716
        %v11858 = vadd.f32 %v11826, %v722
        %v11859 = vadd.f32 %v11827, %v726
        %v11860 = vadd.f32 %v11828, %v732
        %v11861 = vadd.f32 %v11829, %v736
        %v11862 = vadd.f32 %v11830, %v742
        %v11863 = vadd.f32 %v11831, %v746
        %v11864 = vadd.f32 %v11832, %v752
        %v11865 = vadd.f32 %v11833, %v756
        %v11866 = vadd.f32 %v11834, %v762
        %v11867 = vadd.f32 %v11835, %v766
        %v11868 = vadd.f32 %v11836, %v772
        %v11869 = vadd.f32 %v11837, %v776
        %v11870 = vadd.f32 %v11838, %v782
        %v11871 = vadd.f32 %v11839, %v786
        %11872 = vst [vmem:[%s352] sm:$0xff] %v11840
        %11873 = vst [vmem:[%s352 + $0x8] sm:$0xff] %v11841
        %11874 = vst [vmem:[%s352 + $0x10] sm:$0xff] %v11842
        %11875 = vst [vmem:[%s352 + $0x18] sm:$0xff] %v11843
        %11876 = vst [vmem:[%s352 + $0x20] sm:$0xff] %v11844
        %11877 = vst [vmem:[%s352 + $0x28] sm:$0xff] %v11845
        %11878 = vst [vmem:[%s352 + $0x30] sm:$0xff] %v11846
        %11879 = vst [vmem:[%s352 + $0x38] sm:$0xff] %v11847
        %11880 = vst [vmem:[%s352 + $0x40] sm:$0xff] %v11848
        %11881 = vst [vmem:[%s352 + $0x48] sm:$0xff] %v11849
        %11882 = vst [vmem:[%s352 + $0x50] sm:$0xff] %v11850
        %11883 = vst [vmem:[%s352 + $0x58] sm:$0xff] %v11851
        %11884 = vst [vmem:[%s352 + $0x60] sm:$0xff] %v11852
        %11885 = vst [vmem:[%s352 + $0x68] sm:$0xff] %v11853
        %11886 = vst [vmem:[%s352 + $0x70] sm:$0xff] %v11854
        %11887 = vst [vmem:[%s352 + $0x78] sm:$0xff] %v11855
        %11888 = vst [vmem:[%s352 + $0x80] sm:$0xff] %v11856
        %11889 = vst [vmem:[%s352 + $0x88] sm:$0xff] %v11857
        %11890 = vst [vmem:[%s352 + $0x90] sm:$0xff] %v11858
        %11891 = vst [vmem:[%s352 + $0x98] sm:$0xff] %v11859
        %11892 = vst [vmem:[%s352 + $0xa0] sm:$0xff] %v11860
        %11893 = vst [vmem:[%s352 + $0xa8] sm:$0xff] %v11861
        %11894 = vst [vmem:[%s352 + $0xb0] sm:$0xff] %v11862
        %11895 = vst [vmem:[%s352 + $0xb8] sm:$0xff] %v11863
        %11896 = vst [vmem:[%s352 + $0xc0] sm:$0xff] %v11864
        %11897 = vst [vmem:[%s352 + $0xc8] sm:$0xff] %v11865
        %11898 = vst [vmem:[%s352 + $0xd0] sm:$0xff] %v11866
        %11899 = vst [vmem:[%s352 + $0xd8] sm:$0xff] %v11867
        %11900 = vst [vmem:[%s352 + $0xe0] sm:$0xff] %v11868
        %11901 = vst [vmem:[%s352 + $0xe8] sm:$0xff] %v11869
        %11902 = vst [vmem:[%s352 + $0xf0] sm:$0xff] %v11870
        %11903 = vst [vmem:[%s352 + $0xf8] sm:$0xff] %v11871
        %s11904 = sand.u32 %s247, 1
        %s11905 = scalar_lea.sflag [#allocation4], %s11904
        %s11906 = sand.u32 %s247, 1
        %s11907 = smul.addr %s11906, 256
        %s11908 = scalar_lea.vmem [#allocation3], %s11907
        // Predicated region
        $region61: #{resblock_forward.1} parent=59 // pred_check
          %p11909 = pneg %p257
        $region62: #{resblock_forward.1} parent=59 // pred_check_branch
          %11911 = sbr.rel (%p11909) target = $region64
        $region63: #{resblock_forward.1} parent=59 // pred_region
          %s11913 = ssub.s32 4096, 4096
          %11914 = vsyncadd %s11905, %s11913
          %s11915 = smul.addr %s24, 32
          %s11916 = smul.addr %s11915, 128
          %s11917 = scalar_lea.hbm %s10, %s11916
          %s11918 = sshll.u32 %s11908, 4
          %s11919 = int_to_ptr.vmem [resolvable:$true] %s11918
          %11924 = dma.vmem_to_hbm [thread:$0]  %s11919, 4096, %s11917, %s11905, 128, 128, 8
        $region64: #{resblock_forward.1} parent=59 // pred_fallthru
          _
      $region60: #{resblock_forward.1} parent=5 // pred_fallthru
        _
      %p11925 = scmp.le.s32.totalorder 2, %s19
      // Predicated region
      $region65: #{resblock_forward.1} parent=5 // pred_check
        %p11926 = pneg %p11925
      $region66: #{resblock_forward.1} parent=5 // pred_check_branch
        %11928 = sbr.rel (%p11926) target = $region68
      $region67: #{resblock_forward.1} parent=5 // pred_region
        %s11929 = ssub.s32 %s19, 2
        // Predicated region
        $region69: #{resblock_forward.1} parent=67 // pred_check
          %p11930 = pneg %p263
        $region70: #{resblock_forward.1} parent=67 // pred_check_branch
          %11932 = sbr.rel (%p11930) target = $region72
        $region71: #{resblock_forward.1} parent=67 // pred_region
          %s11933 = sand.u32 %s248, 1
          %s11934 = scalar_lea.sflag [#allocation4], %s11933
          %s11935 = sand.u32 %s248, 1
          %s11936 = smul.addr %s11935, 256
          %s11937 = scalar_lea.vmem [#allocation3], %s11936
          %11938 = dma.done %s11934, 4096
        $region72: #{resblock_forward.1} parent=67 // pred_fallthru
          _
      $region68: #{resblock_forward.1} parent=5 // pred_fallthru
        _
    $region6: #{resblock_forward.1} parent=1 // loop_footer
      %s23 = sadd.s32 1, %s19
    $region7: #{resblock_forward.1} parent=1 // loop_footer_branch
      %18 = sbr.rel target = $region3
    $region8: #{resblock_forward.1} parent=1 // loop_exit
      _
    %11939 = vsyncpa [#allocation4], 1
    %s11940 = scalar_lea.sflag [#allocation4], 1
    %11941 = vsyncpa %s11940, 1

</llo_original>
